<compile_context>
chip_gen: v7x
topology: tpu7x:2x2x1
jax: 0.10.0
libtpu: 0.0.40
codegen_flags: <defaults>
</compile_context>

<pallas_src>
import math
from functools import partial

import jax
import jax.numpy as jnp
from jax import lax
from jax.experimental import pallas as pl
from jax.experimental.pallas import tpu as pltpu

# ---------------- model constants ----------------
EMBED_DIM = 32
N_HEADS = 8
HEAD_DIM = EMBED_DIM // N_HEADS          # 4
N_LAYERS = 3
FF_HIDDEN = 512
PROJ_DIM = 8
BN_EPS = 1e-5

SHIP_FEAT = 5
AST_FEAT = 5
MIN_FEAT = 2
FEAT_PACK = SHIP_FEAT + AST_FEAT + MIN_FEAT   # 12
FEAT_PAD = 16                                  # packed feature width (12 -> 16)
OUT_LANES = 128                                # lane-dense output / weight slab width

# packed-slab layout constants
QKV_LANES = 3 * EMBED_DIM        # 96 (lanes 96:128 of w_attn hold Wo)
FF_SLAB_ROWS = 40                # 32 wf1 rows + 6 bias/BN rows, padded to sublane mult.
ROW_BF1 = 32
ROW_BN1_G = 33
ROW_BN1_B = 34
ROW_BN2_G = 35
ROW_BN2_B = 36
ROW_BF2 = 37


def _vmem():
    return pl.BlockSpec(memory_space=pltpu.MemorySpace.VMEM)


# ---------------- the fused Pallas kernel ----------------
def encoder_kernel(x_ref, w_misc_ref, w_attn_ref, ff1_ref, wf2_ref, o_ref,
                   *, n_real, n_pad):
    inv_n = 1.0 / float(n_real)
    scale = 1.0 / math.sqrt(HEAD_DIM)

    # masks for the padded (n_real -> n_pad) node rows
    row_ids = lax.broadcasted_iota(jnp.int32, (n_pad, 1), 0)
    row_mask = (row_ids < n_real).astype(jnp.float32)                       # (n_pad, 1)
    key_ids = lax.broadcasted_iota(jnp.int32, (1, 1, n_pad), 2)
    key_bias = jnp.where(key_ids < n_real, 0.0, -1e30).astype(jnp.float32)  # (1, 1, n_pad)

    # fused block-diagonal input projection: one MXU op for ship/asteroid/mineral.
    # x's padded rows are zero, so h's padded rows are exactly zero.
    w_in = w_misc_ref[0, 0:FEAT_PAD, 0:EMBED_DIM]                            # (16, 32)
    h = jnp.dot(x_ref[...], w_in, preferred_element_type=jnp.float32)        # (n_pad, 32)

    def batch_norm(z, gamma, beta):
        # training-mode BN over the n_real real rows only (biased variance),
        # folded into a single affine (z*a + b); mask on entry and on exit only.
        z = z * row_mask
        m = jnp.sum(z, axis=0, keepdims=True) * inv_n
        d = (z - m) * row_mask
        var = jnp.sum(d * d, axis=0, keepdims=True) * inv_n
        a = lax.rsqrt(var + BN_EPS) * gamma
        b = beta - m * a
        return (z * a + b) * row_mask     # exit mask keeps padded rows exactly zero

    for l in range(N_LAYERS):                       # static unroll over the 3 layers
        wqkv_l = w_attn_ref[l, :, 0:QKV_LANES]                        # (32, 96)
        wo_l = w_attn_ref[l, :, QKV_LANES:QKV_LANES + EMBED_DIM]      # (32, 32)
        wf1_l = ff1_ref[l, 0:EMBED_DIM, :]                            # (32, 512)
        bf1_l = ff1_ref[l, ROW_BF1:ROW_BF1 + 1, :]                    # (1, 512)
        bn1_g = ff1_ref[l, ROW_BN1_G:ROW_BN1_G + 1, 0:EMBED_DIM]      # (1, 32)
        bn1_b = ff1_ref[l, ROW_BN1_B:ROW_BN1_B + 1, 0:EMBED_DIM]
        bn2_g = ff1_ref[l, ROW_BN2_G:ROW_BN2_G + 1, 0:EMBED_DIM]
        bn2_b = ff1_ref[l, ROW_BN2_B:ROW_BN2_B + 1, 0:EMBED_DIM]
        bf2_l = ff1_ref[l, ROW_BF2:ROW_BF2 + 1, 0:EMBED_DIM]
        wf2_l = wf2_ref[l]                                            # (512, 32)

        # ---- multi-head attention ----
        # single lane-dense QKV matmul: lanes 0:32 = Q (head-major), 32:64 = K, 64:96 = V
        qkv = jnp.dot(h, wqkv_l, preferred_element_type=jnp.float32)  # (n_pad, 96)
        q3 = jnp.stack(
            [qkv[:, hd * HEAD_DIM:(hd + 1) * HEAD_DIM] for hd in range(N_HEADS)],
            axis=0)                                                    # (8, n_pad, 4)
        k3 = jnp.stack(
            [qkv[:, EMBED_DIM + hd * HEAD_DIM:EMBED_DIM + (hd + 1) * HEAD_DIM]
             for hd in range(N_HEADS)], axis=0)
        v3 = jnp.stack(
            [qkv[:, 2 * EMBED_DIM + hd * HEAD_DIM:2 * EMBED_DIM + (hd + 1) * HEAD_DIM]
             for hd in range(N_HEADS)], axis=0)

        s = jnp.einsum('hqd,hkd->hqk', q3, k3,
                       preferred_element_type=jnp.float32) * scale + key_bias
        s = s - jnp.max(s, axis=-1, keepdims=True)
        p = jnp.exp(s)
        p = p * pl.reciprocal(jnp.sum(p, axis=-1, keepdims=True), approx=True)
        o3 = jnp.einsum('hqk,hkd->hqd', p, v3,
                        preferred_element_type=jnp.float32)            # (8, n_pad, 4)

        # concat heads into one lane-dense slab, single (32,32) output projection
        o_cat = jnp.concatenate([o3[hd] for hd in range(N_HEADS)], axis=1)  # (n_pad, 32)
        mha = jnp.dot(o_cat, wo_l, preferred_element_type=jnp.float32)      # (n_pad, 32)

        # skip + batch norm
        h1 = batch_norm(h + mha, bn1_g, bn1_b)

        # ---- feed forward 32 -> 512 -> 32 (all f32; kernel is latency-bound) ----
        f = jnp.dot(h1, wf1_l, preferred_element_type=jnp.float32) + bf1_l
        f = jnp.maximum(f, 0.0)
        f = jnp.dot(f, wf2_l, preferred_element_type=jnp.float32) + bf2_l

        # skip + batch norm
        h = batch_norm(h1 + f, bn2_g, bn2_b)

    # ---- output projections into one lane-dense (n_pad, 128) slab ----
    graph = jnp.sum(h, axis=0, keepdims=True) * inv_n                       # (1, 32)
    obj_part = jnp.dot(h, w_misc_ref[1],
                       preferred_element_type=jnp.float32)                  # cols 0:8
    g_part = jnp.dot(graph, w_misc_ref[2],
                     preferred_element_type=jnp.float32)                    # cols 8:16
    o_ref[...] = obj_part + g_part


# ---------------- deterministic parameter init ----------------
def _dense(key, fan_in, fan_out):
    # weights stored as (in, out) so kernels compute x @ W directly
    return (jax.random.normal(key, (fan_in, fan_out), jnp.float32)
            * (1.0 / math.sqrt(fan_in)))


def init_params(key):
    keys = iter(jax.random.split(key, 32))

    # encoder input projections (bias=False), packed block-diagonally
    ship_w = _dense(next(keys), SHIP_FEAT, EMBED_DIM)
    ast_w = _dense(next(keys), AST_FEAT, EMBED_DIM)
    min_w = _dense(next(keys), MIN_FEAT, EMBED_DIM)
    w_in = jnp.zeros((FEAT_PAD, EMBED_DIM), jnp.float32)
    w_in = w_in.at[0:SHIP_FEAT].set(ship_w)
    w_in = w_in.at[SHIP_FEAT:SHIP_FEAT + AST_FEAT].set(ast_w)
    w_in = w_in.at[SHIP_FEAT + AST_FEAT:FEAT_PACK].set(min_w)

    # attention weights: lanes 0:96 = [Wq | Wk | Wv] (head-major), lanes 96:128 = Wo
    w_attn = jnp.zeros((N_LAYERS, EMBED_DIM, OUT_LANES), jnp.float32)
    # FF-1 slab: rows 0:32 = W_ff1, row 32 = b_ff1, rows 33:37 = BN1 g/b, BN2 g/b, b_ff2
    ff1 = jnp.zeros((N_LAYERS, FF_SLAB_ROWS, FF_HIDDEN), jnp.float32)
    wf2 = jnp.zeros((N_LAYERS, FF_HIDDEN, EMBED_DIM), jnp.float32)
    for l in range(N_LAYERS):
        wq = _dense(next(keys), EMBED_DIM, EMBED_DIM)
        wk = _dense(next(keys), EMBED_DIM, EMBED_DIM)
        wv = _dense(next(keys), EMBED_DIM, EMBED_DIM)
        wo = _dense(next(keys), EMBED_DIM, EMBED_DIM)
        w_attn = w_attn.at[l, :, 0:EMBED_DIM].set(wq)
        w_attn = w_attn.at[l, :, EMBED_DIM:2 * EMBED_DIM].set(wk)
        w_attn = w_attn.at[l, :, 2 * EMBED_DIM:3 * EMBED_DIM].set(wv)
        w_attn = w_attn.at[l, :, 3 * EMBED_DIM:4 * EMBED_DIM].set(wo)

        ff1 = ff1.at[l, 0:EMBED_DIM, :].set(_dense(next(keys), EMBED_DIM, FF_HIDDEN))
        # b_ff1 = 0 (row 32), BN gammas = 1, BN betas = 0, b_ff2 = 0
        ff1 = ff1.at[l, ROW_BN1_G, 0:EMBED_DIM].set(1.0)
        ff1 = ff1.at[l, ROW_BN2_G, 0:EMBED_DIM].set(1.0)

        wf2 = wf2.at[l].set(_dense(next(keys), FF_HIDDEN, EMBED_DIM))

    # output projections (bias=False) + input projection, packed lane-dense
    obj_w = _dense(next(keys), EMBED_DIM, PROJ_DIM)
    graph_w = _dense(next(keys), EMBED_DIM, PROJ_DIM)
    w_misc = jnp.zeros((3, EMBED_DIM, OUT_LANES), jnp.float32)
    w_misc = w_misc.at[0, 0:FEAT_PAD, 0:EMBED_DIM].set(w_in)      # input proj
    w_misc = w_misc.at[1, :, 0:PROJ_DIM].set(obj_w)               # obj proj -> cols 0:8
    w_misc = w_misc.at[2, :, PROJ_DIM:2 * PROJ_DIM].set(graph_w)  # graph proj -> cols 8:16

    return {
        "w_misc": w_misc,   # (3, 32, 128)
        "w_attn": w_attn,   # (3, 32, 128)
        "ff1": ff1,         # (3, 40, 512)
        "wf2": wf2,         # (3, 512, 32)
    }


def _pad_rows(n):
    return max(8, ((n + 7) // 8) * 8)


# ---------------- forward pass: one fused pallas_call ----------------
@jax.jit
def encoder_forward(params, ship_data, asteroids_data, minerals_data):
    na = asteroids_data.shape[0]
    nm = minerals_data.shape[0]
    n_real = 1 + na + nm
    n_pad = _pad_rows(n_real)

    # pack all objects into one block-diagonal feature matrix (layout plumbing)
    x = jnp.zeros((n_pad, FEAT_PAD), jnp.float32)
    x = x.at[0, 0:SHIP_FEAT].set(ship_data.reshape(-1))
    x = x.at[1:1 + na, SHIP_FEAT:SHIP_FEAT + AST_FEAT].set(asteroids_data)
    x = x.at[1 + na:1 + na + nm,
             SHIP_FEAT + AST_FEAT:FEAT_PACK].set(minerals_data)

    kernel = partial(encoder_kernel, n_real=n_real, n_pad=n_pad)
    out = pl.pallas_call(
        kernel,
        out_shape=jax.ShapeDtypeStruct((n_pad, OUT_LANES), jnp.float32),
        in_specs=[_vmem()] * 5,
        out_specs=_vmem(),
    )(x, params["w_misc"], params["w_attn"], params["ff1"], params["wf2"])

    obj_embeds = out[:n_real, 0:PROJ_DIM]                 # (N, 8)
    graph_embeds = out[0, PROJ_DIM:2 * PROJ_DIM]          # (8,)
    return obj_embeds, graph_embeds


# ---------------- main ----------------
if __name__ == "__main__":
    key = jax.random.PRNGKey(0)
    k_ship, k_ast, k_min = jax.random.split(key, 3)

    num_asteroids = 8
    num_minerals = 4

    ship_data = jax.random.normal(k_ship, (SHIP_FEAT,), jnp.float32)              # (5,)
    asteroids_data = jax.random.normal(k_ast, (num_asteroids, AST_FEAT), jnp.float32)
    minerals_data = jax.random.normal(k_min, (num_minerals, MIN_FEAT), jnp.float32)

    params = init_params(jax.random.PRNGKey(42))

    obj_embeds, graph_embeds = encoder_forward(
        params, ship_data, asteroids_data, minerals_data)
    jax.block_until_ready((obj_embeds, graph_embeds))

    n_nodes = 1 + num_asteroids + num_minerals
    assert obj_embeds.shape == (n_nodes, PROJ_DIM)
    assert graph_embeds.shape == (PROJ_DIM,)
    assert bool(jnp.all(jnp.isfinite(obj_embeds)))
    assert bool(jnp.all(jnp.isfinite(graph_embeds)))
    print("KERNEL_OK")
</pallas_src>

<mosaic_0001>
module attributes {stable_mosaic.version = 11 : i64} {
  func.func @encoder_kernel(%arg0: memref<16x16xf32, #tpu.memory_space<vmem>>, %arg1: memref<3x32x128xf32, #tpu.memory_space<vmem>>, %arg2: memref<3x32x128xf32, #tpu.memory_space<vmem>>, %arg3: memref<3x40x512xf32, #tpu.memory_space<vmem>>, %arg4: memref<3x512x32xf32, #tpu.memory_space<vmem>>, %arg5: memref<16x128xf32, #tpu.memory_space<vmem>>) attributes {dimension_semantics = [], scalar_prefetch = 0 : i64, scratch_operands = 0 : i64, tpu.core_type = #tpu.core_type<tc>} {
    %0 = tpu.iota {dimensions = array<i32: 0>} : vector<16x1xi32>
    %c13_i32 = arith.constant 13 : i32
    %1 = vector.broadcast %c13_i32 : i32 to vector<16x1xi32>
    %2 = arith.cmpi slt, %0, %1 : vector<16x1xi32>
    %3 = arith.extui %2 : vector<16x1xi1> to vector<16x1xi32>
    %4 = arith.sitofp %3 : vector<16x1xi32> to vector<16x1xf32>
    %5 = tpu.iota {dimensions = array<i32: 2>} : vector<1x1x16xi32>
    %c13_i32_0 = arith.constant 13 : i32
    %6 = vector.broadcast %c13_i32_0 : i32 to vector<1x1x16xi32>
    %7 = arith.cmpi slt, %5, %6 : vector<1x1x16xi32>
    %cst = arith.constant 0.000000e+00 : f32
    %cst_1 = arith.constant -1.000000e+30 : f32
    %8 = vector.broadcast %cst : f32 to vector<1x1x16xf32>
    %9 = vector.broadcast %cst_1 : f32 to vector<1x1x16xf32>
    %10 = arith.select %7, %8, %9 : vector<1x1x16xi1>, vector<1x1x16xf32>
    %c0 = arith.constant 0 : index
    %c0_2 = arith.constant 0 : index
    %c0_3 = arith.constant 0 : index
    %11 = vector.load %arg1[%c0, %c0_2, %c0_3] : memref<3x32x128xf32, #tpu.memory_space<vmem>>, vector<1x16x32xf32>
    %12 = vector.shape_cast %11 : vector<1x16x32xf32> to vector<16x32xf32>
    %c0_4 = arith.constant 0 : index
    %c0_5 = arith.constant 0 : index
    %13 = vector.load %arg0[%c0_4, %c0_5] : memref<16x16xf32, #tpu.memory_space<vmem>>, vector<16x16xf32>
    %cst_6 = arith.constant dense<0.000000e+00> : vector<16x32xf32>
    %14 = tpu.matmul %13, %12, %cst_6 {dimension_numbers = #tpu.dot_dimension_numbers<[1], [0], [0], [1], [0, 0, 1, 1], [], []>} : vector<16x16xf32>, vector<16x32xf32>, vector<16x32xf32> -> vector<16x32xf32>
    %c0_7 = arith.constant 0 : index
    %c0_8 = arith.constant 0 : index
    %c0_9 = arith.constant 0 : index
    %15 = vector.load %arg2[%c0_7, %c0_8, %c0_9] : memref<3x32x128xf32, #tpu.memory_space<vmem>>, vector<1x32x96xf32>
    %16 = vector.shape_cast %15 : vector<1x32x96xf32> to vector<32x96xf32>
    %c0_10 = arith.constant 0 : index
    %c0_11 = arith.constant 0 : index
    %c96 = arith.constant 96 : index
    %17 = vector.load %arg2[%c0_10, %c0_11, %c96] : memref<3x32x128xf32, #tpu.memory_space<vmem>>, vector<1x32x32xf32>
    %18 = vector.shape_cast %17 : vector<1x32x32xf32> to vector<32x32xf32>
    %c0_12 = arith.constant 0 : index
    %c0_13 = arith.constant 0 : index
    %c0_14 = arith.constant 0 : index
    %19 = vector.load %arg3[%c0_12, %c0_13, %c0_14] : memref<3x40x512xf32, #tpu.memory_space<vmem>>, vector<1x32x512xf32>
    %20 = vector.shape_cast %19 : vector<1x32x512xf32> to vector<32x512xf32>
    %c0_15 = arith.constant 0 : index
    %c32 = arith.constant 32 : index
    %c0_16 = arith.constant 0 : index
    %21 = vector.load %arg3[%c0_15, %c32, %c0_16] : memref<3x40x512xf32, #tpu.memory_space<vmem>>, vector<1x1x512xf32>
    %22 = vector.shape_cast %21 : vector<1x1x512xf32> to vector<1x512xf32>
    %c0_17 = arith.constant 0 : index
    %c33 = arith.constant 33 : index
    %c0_18 = arith.constant 0 : index
    %23 = vector.load %arg3[%c0_17, %c33, %c0_18] : memref<3x40x512xf32, #tpu.memory_space<vmem>>, vector<1x1x32xf32>
    %24 = vector.shape_cast %23 : vector<1x1x32xf32> to vector<1x32xf32>
    %c0_19 = arith.constant 0 : index
    %c34 = arith.constant 34 : index
    %c0_20 = arith.constant 0 : index
    %25 = vector.load %arg3[%c0_19, %c34, %c0_20] : memref<3x40x512xf32, #tpu.memory_space<vmem>>, vector<1x1x32xf32>
    %26 = vector.shape_cast %25 : vector<1x1x32xf32> to vector<1x32xf32>
    %c0_21 = arith.constant 0 : index
    %c35 = arith.constant 35 : index
    %c0_22 = arith.constant 0 : index
    %27 = vector.load %arg3[%c0_21, %c35, %c0_22] : memref<3x40x512xf32, #tpu.memory_space<vmem>>, vector<1x1x32xf32>
    %28 = vector.shape_cast %27 : vector<1x1x32xf32> to vector<1x32xf32>
    %c0_23 = arith.constant 0 : index
    %c36 = arith.constant 36 : index
    %c0_24 = arith.constant 0 : index
    %29 = vector.load %arg3[%c0_23, %c36, %c0_24] : memref<3x40x512xf32, #tpu.memory_space<vmem>>, vector<1x1x32xf32>
    %30 = vector.shape_cast %29 : vector<1x1x32xf32> to vector<1x32xf32>
    %c0_25 = arith.constant 0 : index
    %c37 = arith.constant 37 : index
    %c0_26 = arith.constant 0 : index
    %31 = vector.load %arg3[%c0_25, %c37, %c0_26] : memref<3x40x512xf32, #tpu.memory_space<vmem>>, vector<1x1x32xf32>
    %32 = vector.shape_cast %31 : vector<1x1x32xf32> to vector<1x32xf32>
    %c0_27 = arith.constant 0 : index
    %c0_28 = arith.constant 0 : index
    %c0_29 = arith.constant 0 : index
    %33 = vector.load %arg4[%c0_27, %c0_28, %c0_29] : memref<3x512x32xf32, #tpu.memory_space<vmem>>, vector<1x512x32xf32>
    %34 = vector.shape_cast %33 : vector<1x512x32xf32> to vector<512x32xf32>
    %cst_30 = arith.constant dense<0.000000e+00> : vector<16x96xf32>
    %35 = tpu.matmul %14, %16, %cst_30 {dimension_numbers = #tpu.dot_dimension_numbers<[1], [0], [0], [1], [0, 0, 1, 1], [], []>} : vector<16x32xf32>, vector<32x96xf32>, vector<16x96xf32> -> vector<16x96xf32>
    %36 = vector.extract_strided_slice %35 {offsets = [0, 0], sizes = [16, 4], strides = [1, 1]} : vector<16x96xf32> to vector<16x4xf32>
    %37 = vector.extract_strided_slice %35 {offsets = [0, 4], sizes = [16, 4], strides = [1, 1]} : vector<16x96xf32> to vector<16x4xf32>
    %38 = vector.extract_strided_slice %35 {offsets = [0, 8], sizes = [16, 4], strides = [1, 1]} : vector<16x96xf32> to vector<16x4xf32>
    %39 = vector.extract_strided_slice %35 {offsets = [0, 12], sizes = [16, 4], strides = [1, 1]} : vector<16x96xf32> to vector<16x4xf32>
    %40 = vector.extract_strided_slice %35 {offsets = [0, 16], sizes = [16, 4], strides = [1, 1]} : vector<16x96xf32> to vector<16x4xf32>
    %41 = vector.extract_strided_slice %35 {offsets = [0, 20], sizes = [16, 4], strides = [1, 1]} : vector<16x96xf32> to vector<16x4xf32>
    %42 = vector.extract_strided_slice %35 {offsets = [0, 24], sizes = [16, 4], strides = [1, 1]} : vector<16x96xf32> to vector<16x4xf32>
    %43 = vector.extract_strided_slice %35 {offsets = [0, 28], sizes = [16, 4], strides = [1, 1]} : vector<16x96xf32> to vector<16x4xf32>
    %44 = vector.shape_cast %36 : vector<16x4xf32> to vector<1x16x4xf32>
    %45 = vector.shape_cast %37 : vector<16x4xf32> to vector<1x16x4xf32>
    %46 = vector.shape_cast %38 : vector<16x4xf32> to vector<1x16x4xf32>
    %47 = vector.shape_cast %39 : vector<16x4xf32> to vector<1x16x4xf32>
    %48 = vector.shape_cast %40 : vector<16x4xf32> to vector<1x16x4xf32>
    %49 = vector.shape_cast %41 : vector<16x4xf32> to vector<1x16x4xf32>
    %50 = vector.shape_cast %42 : vector<16x4xf32> to vector<1x16x4xf32>
    %51 = vector.shape_cast %43 : vector<16x4xf32> to vector<1x16x4xf32>
    %52 = tpu.concatenate %44, %45, %46, %47, %48, %49, %50, %51 in 0 : vector<1x16x4xf32>, vector<1x16x4xf32>, vector<1x16x4xf32>, vector<1x16x4xf32>, vector<1x16x4xf32>, vector<1x16x4xf32>, vector<1x16x4xf32>, vector<1x16x4xf32> -> vector<8x16x4xf32>
    %53 = vector.extract_strided_slice %35 {offsets = [0, 32], sizes = [16, 4], strides = [1, 1]} : vector<16x96xf32> to vector<16x4xf32>
    %54 = vector.extract_strided_slice %35 {offsets = [0, 36], sizes = [16, 4], strides = [1, 1]} : vector<16x96xf32> to vector<16x4xf32>
    %55 = vector.extract_strided_slice %35 {offsets = [0, 40], sizes = [16, 4], strides = [1, 1]} : vector<16x96xf32> to vector<16x4xf32>
    %56 = vector.extract_strided_slice %35 {offsets = [0, 44], sizes = [16, 4], strides = [1, 1]} : vector<16x96xf32> to vector<16x4xf32>
    %57 = vector.extract_strided_slice %35 {offsets = [0, 48], sizes = [16, 4], strides = [1, 1]} : vector<16x96xf32> to vector<16x4xf32>
    %58 = vector.extract_strided_slice %35 {offsets = [0, 52], sizes = [16, 4], strides = [1, 1]} : vector<16x96xf32> to vector<16x4xf32>
    %59 = vector.extract_strided_slice %35 {offsets = [0, 56], sizes = [16, 4], strides = [1, 1]} : vector<16x96xf32> to vector<16x4xf32>
    %60 = vector.extract_strided_slice %35 {offsets = [0, 60], sizes = [16, 4], strides = [1, 1]} : vector<16x96xf32> to vector<16x4xf32>
    %61 = vector.shape_cast %53 : vector<16x4xf32> to vector<1x16x4xf32>
    %62 = vector.shape_cast %54 : vector<16x4xf32> to vector<1x16x4xf32>
    %63 = vector.shape_cast %55 : vector<16x4xf32> to vector<1x16x4xf32>
    %64 = vector.shape_cast %56 : vector<16x4xf32> to vector<1x16x4xf32>
    %65 = vector.shape_cast %57 : vector<16x4xf32> to vector<1x16x4xf32>
    %66 = vector.shape_cast %58 : vector<16x4xf32> to vector<1x16x4xf32>
    %67 = vector.shape_cast %59 : vector<16x4xf32> to vector<1x16x4xf32>
    %68 = vector.shape_cast %60 : vector<16x4xf32> to vector<1x16x4xf32>
    %69 = tpu.concatenate %61, %62, %63, %64, %65, %66, %67, %68 in 0 : vector<1x16x4xf32>, vector<1x16x4xf32>, vector<1x16x4xf32>, vector<1x16x4xf32>, vector<1x16x4xf32>, vector<1x16x4xf32>, vector<1x16x4xf32>, vector<1x16x4xf32> -> vector<8x16x4xf32>
    %70 = vector.extract_strided_slice %35 {offsets = [0, 64], sizes = [16, 4], strides = [1, 1]} : vector<16x96xf32> to vector<16x4xf32>
    %71 = vector.extract_strided_slice %35 {offsets = [0, 68], sizes = [16, 4], strides = [1, 1]} : vector<16x96xf32> to vector<16x4xf32>
    %72 = vector.extract_strided_slice %35 {offsets = [0, 72], sizes = [16, 4], strides = [1, 1]} : vector<16x96xf32> to vector<16x4xf32>
    %73 = vector.extract_strided_slice %35 {offsets = [0, 76], sizes = [16, 4], strides = [1, 1]} : vector<16x96xf32> to vector<16x4xf32>
    %74 = vector.extract_strided_slice %35 {offsets = [0, 80], sizes = [16, 4], strides = [1, 1]} : vector<16x96xf32> to vector<16x4xf32>
    %75 = vector.extract_strided_slice %35 {offsets = [0, 84], sizes = [16, 4], strides = [1, 1]} : vector<16x96xf32> to vector<16x4xf32>
    %76 = vector.extract_strided_slice %35 {offsets = [0, 88], sizes = [16, 4], strides = [1, 1]} : vector<16x96xf32> to vector<16x4xf32>
    %77 = vector.extract_strided_slice %35 {offsets = [0, 92], sizes = [16, 4], strides = [1, 1]} : vector<16x96xf32> to vector<16x4xf32>
    %78 = vector.shape_cast %70 : vector<16x4xf32> to vector<1x16x4xf32>
    %79 = vector.shape_cast %71 : vector<16x4xf32> to vector<1x16x4xf32>
    %80 = vector.shape_cast %72 : vector<16x4xf32> to vector<1x16x4xf32>
    %81 = vector.shape_cast %73 : vector<16x4xf32> to vector<1x16x4xf32>
    %82 = vector.shape_cast %74 : vector<16x4xf32> to vector<1x16x4xf32>
    %83 = vector.shape_cast %75 : vector<16x4xf32> to vector<1x16x4xf32>
    %84 = vector.shape_cast %76 : vector<16x4xf32> to vector<1x16x4xf32>
    %85 = vector.shape_cast %77 : vector<16x4xf32> to vector<1x16x4xf32>
    %86 = tpu.concatenate %78, %79, %80, %81, %82, %83, %84, %85 in 0 : vector<1x16x4xf32>, vector<1x16x4xf32>, vector<1x16x4xf32>, vector<1x16x4xf32>, vector<1x16x4xf32>, vector<1x16x4xf32>, vector<1x16x4xf32>, vector<1x16x4xf32> -> vector<8x16x4xf32>
    "tpu.trace_start"() <{level = 10 : i32, message = "hqd,hkd->hqk"}> : () -> ()
    %cst_31 = arith.constant dense<0.000000e+00> : vector<8x16x16xf32>
    %87 = tpu.matmul %52, %69, %cst_31 {dimension_numbers = #tpu.dot_dimension_numbers<[2], [2], [1], [1], [0, 0, 0, 1, 1, 1], [0], [0]>} : vector<8x16x4xf32>, vector<8x16x4xf32>, vector<8x16x16xf32> -> vector<8x16x16xf32>
    "tpu.trace_stop"() : () -> ()
    %cst_32 = arith.constant 5.000000e-01 : f32
    %88 = vector.broadcast %cst_32 : f32 to vector<8x16x16xf32>
    %89 = arith.mulf %87, %88 : vector<8x16x16xf32>
    %90 = vector.broadcast %10 : vector<1x1x16xf32> to vector<8x16x16xf32>
    %91 = arith.addf %89, %90 : vector<8x16x16xf32>
    %cst_33 = arith.constant dense<0xFF800000> : vector<8x16xf32>
    %92 = vector.multi_reduction <maximumf>, %91, %cst_33 [2] : vector<8x16x16xf32> to vector<8x16xf32>
    %93 = vector.shape_cast %92 : vector<8x16xf32> to vector<8x16x1xf32>
    %94 = vector.broadcast %93 : vector<8x16x1xf32> to vector<8x16x16xf32>
    %95 = arith.subf %91, %94 : vector<8x16x16xf32>
    %96 = math.exp %95 : vector<8x16x16xf32>
    %cst_34 = arith.constant dense<0.000000e+00> : vector<8x16xf32>
    %97 = vector.multi_reduction <add>, %96, %cst_34 [2] : vector<8x16x16xf32> to vector<8x16xf32>
    %98 = vector.shape_cast %97 : vector<8x16xf32> to vector<8x16x1xf32>
    %99 = tpu.reciprocal %98 {approx = true} : vector<8x16x1xf32> -> vector<8x16x1xf32>
    %100 = vector.broadcast %99 : vector<8x16x1xf32> to vector<8x16x16xf32>
    %101 = arith.mulf %96, %100 : vector<8x16x16xf32>
    "tpu.trace_start"() <{level = 10 : i32, message = "hqk,hkd->hqd"}> : () -> ()
    %cst_35 = arith.constant dense<0.000000e+00> : vector<8x16x4xf32>
    %102 = tpu.matmul %101, %86, %cst_35 {dimension_numbers = #tpu.dot_dimension_numbers<[2], [1], [1], [2], [0, 0, 0, 1, 1, 2], [0], [0]>} : vector<8x16x16xf32>, vector<8x16x4xf32>, vector<8x16x4xf32> -> vector<8x16x4xf32>
    "tpu.trace_stop"() : () -> ()
    %103 = vector.extract_strided_slice %102 {offsets = [0, 0, 0], sizes = [1, 16, 4], strides = [1, 1, 1]} : vector<8x16x4xf32> to vector<1x16x4xf32>
    %104 = vector.shape_cast %103 : vector<1x16x4xf32> to vector<16x4xf32>
    %105 = vector.extract_strided_slice %102 {offsets = [1, 0, 0], sizes = [1, 16, 4], strides = [1, 1, 1]} : vector<8x16x4xf32> to vector<1x16x4xf32>
    %106 = vector.shape_cast %105 : vector<1x16x4xf32> to vector<16x4xf32>
    %107 = vector.extract_strided_slice %102 {offsets = [2, 0, 0], sizes = [1, 16, 4], strides = [1, 1, 1]} : vector<8x16x4xf32> to vector<1x16x4xf32>
    %108 = vector.shape_cast %107 : vector<1x16x4xf32> to vector<16x4xf32>
    %109 = vector.extract_strided_slice %102 {offsets = [3, 0, 0], sizes = [1, 16, 4], strides = [1, 1, 1]} : vector<8x16x4xf32> to vector<1x16x4xf32>
    %110 = vector.shape_cast %109 : vector<1x16x4xf32> to vector<16x4xf32>
    %111 = vector.extract_strided_slice %102 {offsets = [4, 0, 0], sizes = [1, 16, 4], strides = [1, 1, 1]} : vector<8x16x4xf32> to vector<1x16x4xf32>
    %112 = vector.shape_cast %111 : vector<1x16x4xf32> to vector<16x4xf32>
    %113 = vector.extract_strided_slice %102 {offsets = [5, 0, 0], sizes = [1, 16, 4], strides = [1, 1, 1]} : vector<8x16x4xf32> to vector<1x16x4xf32>
    %114 = vector.shape_cast %113 : vector<1x16x4xf32> to vector<16x4xf32>
    %115 = vector.extract_strided_slice %102 {offsets = [6, 0, 0], sizes = [1, 16, 4], strides = [1, 1, 1]} : vector<8x16x4xf32> to vector<1x16x4xf32>
    %116 = vector.shape_cast %115 : vector<1x16x4xf32> to vector<16x4xf32>
    %117 = vector.extract_strided_slice %102 {offsets = [7, 0, 0], sizes = [1, 16, 4], strides = [1, 1, 1]} : vector<8x16x4xf32> to vector<1x16x4xf32>
    %118 = vector.shape_cast %117 : vector<1x16x4xf32> to vector<16x4xf32>
    %119 = tpu.concatenate %104, %106, %108, %110, %112, %114, %116, %118 in 1 : vector<16x4xf32>, vector<16x4xf32>, vector<16x4xf32>, vector<16x4xf32>, vector<16x4xf32>, vector<16x4xf32>, vector<16x4xf32>, vector<16x4xf32> -> vector<16x32xf32>
    %cst_36 = arith.constant dense<0.000000e+00> : vector<16x32xf32>
    %120 = tpu.matmul %119, %18, %cst_36 {dimension_numbers = #tpu.dot_dimension_numbers<[1], [0], [0], [1], [0, 0, 1, 1], [], []>} : vector<16x32xf32>, vector<32x32xf32>, vector<16x32xf32> -> vector<16x32xf32>
    %121 = arith.addf %14, %120 : vector<16x32xf32>
    %122 = vector.broadcast %4 : vector<16x1xf32> to vector<16x32xf32>
    %123 = arith.mulf %121, %122 : vector<16x32xf32>
    %cst_37 = arith.constant dense<0.000000e+00> : vector<32xf32>
    %124 = vector.multi_reduction <add>, %123, %cst_37 [0] : vector<16x32xf32> to vector<32xf32>
    %125 = vector.shape_cast %124 : vector<32xf32> to vector<1x32xf32>
    %cst_38 = arith.constant 0.0769230798 : f32
    %126 = vector.broadcast %cst_38 : f32 to vector<1x32xf32>
    %127 = arith.mulf %125, %126 : vector<1x32xf32>
    %128 = vector.broadcast %127 : vector<1x32xf32> to vector<16x32xf32>
    %129 = arith.subf %123, %128 : vector<16x32xf32>
    %130 = vector.broadcast %4 : vector<16x1xf32> to vector<16x32xf32>
    %131 = arith.mulf %129, %130 : vector<16x32xf32>
    %132 = arith.mulf %131, %131 : vector<16x32xf32>
    %cst_39 = arith.constant dense<0.000000e+00> : vector<32xf32>
    %133 = vector.multi_reduction <add>, %132, %cst_39 [0] : vector<16x32xf32> to vector<32xf32>
    %134 = vector.shape_cast %133 : vector<32xf32> to vector<1x32xf32>
    %cst_40 = arith.constant 0.0769230798 : f32
    %135 = vector.broadcast %cst_40 : f32 to vector<1x32xf32>
    %136 = arith.mulf %134, %135 : vector<1x32xf32>
    %cst_41 = arith.constant 9.99999974E-6 : f32
    %137 = vector.broadcast %cst_41 : f32 to vector<1x32xf32>
    %138 = arith.addf %136, %137 : vector<1x32xf32>
    %139 = math.rsqrt %138 : vector<1x32xf32>
    %140 = arith.mulf %139, %24 : vector<1x32xf32>
    %141 = arith.mulf %127, %140 : vector<1x32xf32>
    %142 = arith.subf %26, %141 : vector<1x32xf32>
    %143 = vector.broadcast %140 : vector<1x32xf32> to vector<16x32xf32>
    %144 = arith.mulf %123, %143 : vector<16x32xf32>
    %145 = vector.broadcast %142 : vector<1x32xf32> to vector<16x32xf32>
    %146 = arith.addf %144, %145 : vector<16x32xf32>
    %147 = vector.broadcast %4 : vector<16x1xf32> to vector<16x32xf32>
    %148 = arith.mulf %146, %147 : vector<16x32xf32>
    %cst_42 = arith.constant dense<0.000000e+00> : vector<16x512xf32>
    %149 = tpu.matmul %148, %20, %cst_42 {dimension_numbers = #tpu.dot_dimension_numbers<[1], [0], [0], [1], [0, 0, 1, 1], [], []>} : vector<16x32xf32>, vector<32x512xf32>, vector<16x512xf32> -> vector<16x512xf32>
    %150 = vector.broadcast %22 : vector<1x512xf32> to vector<16x512xf32>
    %151 = arith.addf %149, %150 : vector<16x512xf32>
    %cst_43 = arith.constant 0.000000e+00 : f32
    %152 = vector.broadcast %cst_43 : f32 to vector<16x512xf32>
    %153 = arith.maximumf %151, %152 : vector<16x512xf32>
    %cst_44 = arith.constant dense<0.000000e+00> : vector<16x32xf32>
    %154 = tpu.matmul %153, %34, %cst_44 {dimension_numbers = #tpu.dot_dimension_numbers<[1], [0], [0], [1], [0, 0, 1, 1], [], []>} : vector<16x512xf32>, vector<512x32xf32>, vector<16x32xf32> -> vector<16x32xf32>
    %155 = vector.broadcast %32 : vector<1x32xf32> to vector<16x32xf32>
    %156 = arith.addf %154, %155 : vector<16x32xf32>
    %157 = arith.addf %148, %156 : vector<16x32xf32>
    %158 = vector.broadcast %4 : vector<16x1xf32> to vector<16x32xf32>
    %159 = arith.mulf %157, %158 : vector<16x32xf32>
    %cst_45 = arith.constant dense<0.000000e+00> : vector<32xf32>
    %160 = vector.multi_reduction <add>, %159, %cst_45 [0] : vector<16x32xf32> to vector<32xf32>
    %161 = vector.shape_cast %160 : vector<32xf32> to vector<1x32xf32>
    %cst_46 = arith.constant 0.0769230798 : f32
    %162 = vector.broadcast %cst_46 : f32 to vector<1x32xf32>
    %163 = arith.mulf %161, %162 : vector<1x32xf32>
    %164 = vector.broadcast %163 : vector<1x32xf32> to vector<16x32xf32>
    %165 = arith.subf %159, %164 : vector<16x32xf32>
    %166 = vector.broadcast %4 : vector<16x1xf32> to vector<16x32xf32>
    %167 = arith.mulf %165, %166 : vector<16x32xf32>
    %168 = arith.mulf %167, %167 : vector<16x32xf32>
    %cst_47 = arith.constant dense<0.000000e+00> : vector<32xf32>
    %169 = vector.multi_reduction <add>, %168, %cst_47 [0] : vector<16x32xf32> to vector<32xf32>
    %170 = vector.shape_cast %169 : vector<32xf32> to vector<1x32xf32>
    %cst_48 = arith.constant 0.0769230798 : f32
    %171 = vector.broadcast %cst_48 : f32 to vector<1x32xf32>
    %172 = arith.mulf %170, %171 : vector<1x32xf32>
    %cst_49 = arith.constant 9.99999974E-6 : f32
    %173 = vector.broadcast %cst_49 : f32 to vector<1x32xf32>
    %174 = arith.addf %172, %173 : vector<1x32xf32>
    %175 = math.rsqrt %174 : vector<1x32xf32>
    %176 = arith.mulf %175, %28 : vector<1x32xf32>
    %177 = arith.mulf %163, %176 : vector<1x32xf32>
    %178 = arith.subf %30, %177 : vector<1x32xf32>
    %179 = vector.broadcast %176 : vector<1x32xf32> to vector<16x32xf32>
    %180 = arith.mulf %159, %179 : vector<16x32xf32>
    %181 = vector.broadcast %178 : vector<1x32xf32> to vector<16x32xf32>
    %182 = arith.addf %180, %181 : vector<16x32xf32>
    %183 = vector.broadcast %4 : vector<16x1xf32> to vector<16x32xf32>
    %184 = arith.mulf %182, %183 : vector<16x32xf32>
    %c1 = arith.constant 1 : index
    %c0_50 = arith.constant 0 : index
    %c0_51 = arith.constant 0 : index
    %185 = vector.load %arg2[%c1, %c0_50, %c0_51] : memref<3x32x128xf32, #tpu.memory_space<vmem>>, vector<1x32x96xf32>
    %186 = vector.shape_cast %185 : vector<1x32x96xf32> to vector<32x96xf32>
    %c1_52 = arith.constant 1 : index
    %c0_53 = arith.constant 0 : index
    %c96_54 = arith.constant 96 : index
    %187 = vector.load %arg2[%c1_52, %c0_53, %c96_54] : memref<3x32x128xf32, #tpu.memory_space<vmem>>, vector<1x32x32xf32>
    %188 = vector.shape_cast %187 : vector<1x32x32xf32> to vector<32x32xf32>
    %c1_55 = arith.constant 1 : index
    %c0_56 = arith.constant 0 : index
    %c0_57 = arith.constant 0 : index
    %189 = vector.load %arg3[%c1_55, %c0_56, %c0_57] : memref<3x40x512xf32, #tpu.memory_space<vmem>>, vector<1x32x512xf32>
    %190 = vector.shape_cast %189 : vector<1x32x512xf32> to vector<32x512xf32>
    %c1_58 = arith.constant 1 : index
    %c32_59 = arith.constant 32 : index
    %c0_60 = arith.constant 0 : index
    %191 = vector.load %arg3[%c1_58, %c32_59, %c0_60] : memref<3x40x512xf32, #tpu.memory_space<vmem>>, vector<1x1x512xf32>
    %192 = vector.shape_cast %191 : vector<1x1x512xf32> to vector<1x512xf32>
    %c1_61 = arith.constant 1 : index
    %c33_62 = arith.constant 33 : index
    %c0_63 = arith.constant 0 : index
    %193 = vector.load %arg3[%c1_61, %c33_62, %c0_63] : memref<3x40x512xf32, #tpu.memory_space<vmem>>, vector<1x1x32xf32>
    %194 = vector.shape_cast %193 : vector<1x1x32xf32> to vector<1x32xf32>
    %c1_64 = arith.constant 1 : index
    %c34_65 = arith.constant 34 : index
    %c0_66 = arith.constant 0 : index
    %195 = vector.load %arg3[%c1_64, %c34_65, %c0_66] : memref<3x40x512xf32, #tpu.memory_space<vmem>>, vector<1x1x32xf32>
    %196 = vector.shape_cast %195 : vector<1x1x32xf32> to vector<1x32xf32>
    %c1_67 = arith.constant 1 : index
    %c35_68 = arith.constant 35 : index
    %c0_69 = arith.constant 0 : index
    %197 = vector.load %arg3[%c1_67, %c35_68, %c0_69] : memref<3x40x512xf32, #tpu.memory_space<vmem>>, vector<1x1x32xf32>
    %198 = vector.shape_cast %197 : vector<1x1x32xf32> to vector<1x32xf32>
    %c1_70 = arith.constant 1 : index
    %c36_71 = arith.constant 36 : index
    %c0_72 = arith.constant 0 : index
    %199 = vector.load %arg3[%c1_70, %c36_71, %c0_72] : memref<3x40x512xf32, #tpu.memory_space<vmem>>, vector<1x1x32xf32>
    %200 = vector.shape_cast %199 : vector<1x1x32xf32> to vector<1x32xf32>
    %c1_73 = arith.constant 1 : index
    %c37_74 = arith.constant 37 : index
    %c0_75 = arith.constant 0 : index
    %201 = vector.load %arg3[%c1_73, %c37_74, %c0_75] : memref<3x40x512xf32, #tpu.memory_space<vmem>>, vector<1x1x32xf32>
    %202 = vector.shape_cast %201 : vector<1x1x32xf32> to vector<1x32xf32>
    %c1_76 = arith.constant 1 : index
    %c0_77 = arith.constant 0 : index
    %c0_78 = arith.constant 0 : index
    %203 = vector.load %arg4[%c1_76, %c0_77, %c0_78] : memref<3x512x32xf32, #tpu.memory_space<vmem>>, vector<1x512x32xf32>
    %204 = vector.shape_cast %203 : vector<1x512x32xf32> to vector<512x32xf32>
    %cst_79 = arith.constant dense<0.000000e+00> : vector<16x96xf32>
    %205 = tpu.matmul %184, %186, %cst_79 {dimension_numbers = #tpu.dot_dimension_numbers<[1], [0], [0], [1], [0, 0, 1, 1], [], []>} : vector<16x32xf32>, vector<32x96xf32>, vector<16x96xf32> -> vector<16x96xf32>
    %206 = vector.extract_strided_slice %205 {offsets = [0, 0], sizes = [16, 4], strides = [1, 1]} : vector<16x96xf32> to vector<16x4xf32>
    %207 = vector.extract_strided_slice %205 {offsets = [0, 4], sizes = [16, 4], strides = [1, 1]} : vector<16x96xf32> to vector<16x4xf32>
    %208 = vector.extract_strided_slice %205 {offsets = [0, 8], sizes = [16, 4], strides = [1, 1]} : vector<16x96xf32> to vector<16x4xf32>
    %209 = vector.extract_strided_slice %205 {offsets = [0, 12], sizes = [16, 4], strides = [1, 1]} : vector<16x96xf32> to vector<16x4xf32>
    %210 = vector.extract_strided_slice %205 {offsets = [0, 16], sizes = [16, 4], strides = [1, 1]} : vector<16x96xf32> to vector<16x4xf32>
    %211 = vector.extract_strided_slice %205 {offsets = [0, 20], sizes = [16, 4], strides = [1, 1]} : vector<16x96xf32> to vector<16x4xf32>
    %212 = vector.extract_strided_slice %205 {offsets = [0, 24], sizes = [16, 4], strides = [1, 1]} : vector<16x96xf32> to vector<16x4xf32>
    %213 = vector.extract_strided_slice %205 {offsets = [0, 28], sizes = [16, 4], strides = [1, 1]} : vector<16x96xf32> to vector<16x4xf32>
    %214 = vector.shape_cast %206 : vector<16x4xf32> to vector<1x16x4xf32>
    %215 = vector.shape_cast %207 : vector<16x4xf32> to vector<1x16x4xf32>
    %216 = vector.shape_cast %208 : vector<16x4xf32> to vector<1x16x4xf32>
    %217 = vector.shape_cast %209 : vector<16x4xf32> to vector<1x16x4xf32>
    %218 = vector.shape_cast %210 : vector<16x4xf32> to vector<1x16x4xf32>
    %219 = vector.shape_cast %211 : vector<16x4xf32> to vector<1x16x4xf32>
    %220 = vector.shape_cast %212 : vector<16x4xf32> to vector<1x16x4xf32>
    %221 = vector.shape_cast %213 : vector<16x4xf32> to vector<1x16x4xf32>
    %222 = tpu.concatenate %214, %215, %216, %217, %218, %219, %220, %221 in 0 : vector<1x16x4xf32>, vector<1x16x4xf32>, vector<1x16x4xf32>, vector<1x16x4xf32>, vector<1x16x4xf32>, vector<1x16x4xf32>, vector<1x16x4xf32>, vector<1x16x4xf32> -> vector<8x16x4xf32>
    %223 = vector.extract_strided_slice %205 {offsets = [0, 32], sizes = [16, 4], strides = [1, 1]} : vector<16x96xf32> to vector<16x4xf32>
    %224 = vector.extract_strided_slice %205 {offsets = [0, 36], sizes = [16, 4], strides = [1, 1]} : vector<16x96xf32> to vector<16x4xf32>
    %225 = vector.extract_strided_slice %205 {offsets = [0, 40], sizes = [16, 4], strides = [1, 1]} : vector<16x96xf32> to vector<16x4xf32>
    %226 = vector.extract_strided_slice %205 {offsets = [0, 44], sizes = [16, 4], strides = [1, 1]} : vector<16x96xf32> to vector<16x4xf32>
    %227 = vector.extract_strided_slice %205 {offsets = [0, 48], sizes = [16, 4], strides = [1, 1]} : vector<16x96xf32> to vector<16x4xf32>
    %228 = vector.extract_strided_slice %205 {offsets = [0, 52], sizes = [16, 4], strides = [1, 1]} : vector<16x96xf32> to vector<16x4xf32>
    %229 = vector.extract_strided_slice %205 {offsets = [0, 56], sizes = [16, 4], strides = [1, 1]} : vector<16x96xf32> to vector<16x4xf32>
    %230 = vector.extract_strided_slice %205 {offsets = [0, 60], sizes = [16, 4], strides = [1, 1]} : vector<16x96xf32> to vector<16x4xf32>
    %231 = vector.shape_cast %223 : vector<16x4xf32> to vector<1x16x4xf32>
    %232 = vector.shape_cast %224 : vector<16x4xf32> to vector<1x16x4xf32>
    %233 = vector.shape_cast %225 : vector<16x4xf32> to vector<1x16x4xf32>
    %234 = vector.shape_cast %226 : vector<16x4xf32> to vector<1x16x4xf32>
    %235 = vector.shape_cast %227 : vector<16x4xf32> to vector<1x16x4xf32>
    %236 = vector.shape_cast %228 : vector<16x4xf32> to vector<1x16x4xf32>
    %237 = vector.shape_cast %229 : vector<16x4xf32> to vector<1x16x4xf32>
    %238 = vector.shape_cast %230 : vector<16x4xf32> to vector<1x16x4xf32>
    %239 = tpu.concatenate %231, %232, %233, %234, %235, %236, %237, %238 in 0 : vector<1x16x4xf32>, vector<1x16x4xf32>, vector<1x16x4xf32>, vector<1x16x4xf32>, vector<1x16x4xf32>, vector<1x16x4xf32>, vector<1x16x4xf32>, vector<1x16x4xf32> -> vector<8x16x4xf32>
    %240 = vector.extract_strided_slice %205 {offsets = [0, 64], sizes = [16, 4], strides = [1, 1]} : vector<16x96xf32> to vector<16x4xf32>
    %241 = vector.extract_strided_slice %205 {offsets = [0, 68], sizes = [16, 4], strides = [1, 1]} : vector<16x96xf32> to vector<16x4xf32>
    %242 = vector.extract_strided_slice %205 {offsets = [0, 72], sizes = [16, 4], strides = [1, 1]} : vector<16x96xf32> to vector<16x4xf32>
    %243 = vector.extract_strided_slice %205 {offsets = [0, 76], sizes = [16, 4], strides = [1, 1]} : vector<16x96xf32> to vector<16x4xf32>
    %244 = vector.extract_strided_slice %205 {offsets = [0, 80], sizes = [16, 4], strides = [1, 1]} : vector<16x96xf32> to vector<16x4xf32>
    %245 = vector.extract_strided_slice %205 {offsets = [0, 84], sizes = [16, 4], strides = [1, 1]} : vector<16x96xf32> to vector<16x4xf32>
    %246 = vector.extract_strided_slice %205 {offsets = [0, 88], sizes = [16, 4], strides = [1, 1]} : vector<16x96xf32> to vector<16x4xf32>
    %247 = vector.extract_strided_slice %205 {offsets = [0, 92], sizes = [16, 4], strides = [1, 1]} : vector<16x96xf32> to vector<16x4xf32>
    %248 = vector.shape_cast %240 : vector<16x4xf32> to vector<1x16x4xf32>
    %249 = vector.shape_cast %241 : vector<16x4xf32> to vector<1x16x4xf32>
    %250 = vector.shape_cast %242 : vector<16x4xf32> to vector<1x16x4xf32>
    %251 = vector.shape_cast %243 : vector<16x4xf32> to vector<1x16x4xf32>
    %252 = vector.shape_cast %244 : vector<16x4xf32> to vector<1x16x4xf32>
    %253 = vector.shape_cast %245 : vector<16x4xf32> to vector<1x16x4xf32>
    %254 = vector.shape_cast %246 : vector<16x4xf32> to vector<1x16x4xf32>
    %255 = vector.shape_cast %247 : vector<16x4xf32> to vector<1x16x4xf32>
    %256 = tpu.concatenate %248, %249, %250, %251, %252, %253, %254, %255 in 0 : vector<1x16x4xf32>, vector<1x16x4xf32>, vector<1x16x4xf32>, vector<1x16x4xf32>, vector<1x16x4xf32>, vector<1x16x4xf32>, vector<1x16x4xf32>, vector<1x16x4xf32> -> vector<8x16x4xf32>
    "tpu.trace_start"() <{level = 10 : i32, message = "hqd,hkd->hqk"}> : () -> ()
    %cst_80 = arith.constant dense<0.000000e+00> : vector<8x16x16xf32>
    %257 = tpu.matmul %222, %239, %cst_80 {dimension_numbers = #tpu.dot_dimension_numbers<[2], [2], [1], [1], [0, 0, 0, 1, 1, 1], [0], [0]>} : vector<8x16x4xf32>, vector<8x16x4xf32>, vector<8x16x16xf32> -> vector<8x16x16xf32>
    "tpu.trace_stop"() : () -> ()
    %cst_81 = arith.constant 5.000000e-01 : f32
    %258 = vector.broadcast %cst_81 : f32 to vector<8x16x16xf32>
    %259 = arith.mulf %257, %258 : vector<8x16x16xf32>
    %260 = vector.broadcast %10 : vector<1x1x16xf32> to vector<8x16x16xf32>
    %261 = arith.addf %259, %260 : vector<8x16x16xf32>
    %cst_82 = arith.constant dense<0xFF800000> : vector<8x16xf32>
    %262 = vector.multi_reduction <maximumf>, %261, %cst_82 [2] : vector<8x16x16xf32> to vector<8x16xf32>
    %263 = vector.shape_cast %262 : vector<8x16xf32> to vector<8x16x1xf32>
    %264 = vector.broadcast %263 : vector<8x16x1xf32> to vector<8x16x16xf32>
    %265 = arith.subf %261, %264 : vector<8x16x16xf32>
    %266 = math.exp %265 : vector<8x16x16xf32>
    %cst_83 = arith.constant dense<0.000000e+00> : vector<8x16xf32>
    %267 = vector.multi_reduction <add>, %266, %cst_83 [2] : vector<8x16x16xf32> to vector<8x16xf32>
    %268 = vector.shape_cast %267 : vector<8x16xf32> to vector<8x16x1xf32>
    %269 = tpu.reciprocal %268 {approx = true} : vector<8x16x1xf32> -> vector<8x16x1xf32>
    %270 = vector.broadcast %269 : vector<8x16x1xf32> to vector<8x16x16xf32>
    %271 = arith.mulf %266, %270 : vector<8x16x16xf32>
    "tpu.trace_start"() <{level = 10 : i32, message = "hqk,hkd->hqd"}> : () -> ()
    %cst_84 = arith.constant dense<0.000000e+00> : vector<8x16x4xf32>
    %272 = tpu.matmul %271, %256, %cst_84 {dimension_numbers = #tpu.dot_dimension_numbers<[2], [1], [1], [2], [0, 0, 0, 1, 1, 2], [0], [0]>} : vector<8x16x16xf32>, vector<8x16x4xf32>, vector<8x16x4xf32> -> vector<8x16x4xf32>
    "tpu.trace_stop"() : () -> ()
    %273 = vector.extract_strided_slice %272 {offsets = [0, 0, 0], sizes = [1, 16, 4], strides = [1, 1, 1]} : vector<8x16x4xf32> to vector<1x16x4xf32>
    %274 = vector.shape_cast %273 : vector<1x16x4xf32> to vector<16x4xf32>
    %275 = vector.extract_strided_slice %272 {offsets = [1, 0, 0], sizes = [1, 16, 4], strides = [1, 1, 1]} : vector<8x16x4xf32> to vector<1x16x4xf32>
    %276 = vector.shape_cast %275 : vector<1x16x4xf32> to vector<16x4xf32>
    %277 = vector.extract_strided_slice %272 {offsets = [2, 0, 0], sizes = [1, 16, 4], strides = [1, 1, 1]} : vector<8x16x4xf32> to vector<1x16x4xf32>
    %278 = vector.shape_cast %277 : vector<1x16x4xf32> to vector<16x4xf32>
    %279 = vector.extract_strided_slice %272 {offsets = [3, 0, 0], sizes = [1, 16, 4], strides = [1, 1, 1]} : vector<8x16x4xf32> to vector<1x16x4xf32>
    %280 = vector.shape_cast %279 : vector<1x16x4xf32> to vector<16x4xf32>
    %281 = vector.extract_strided_slice %272 {offsets = [4, 0, 0], sizes = [1, 16, 4], strides = [1, 1, 1]} : vector<8x16x4xf32> to vector<1x16x4xf32>
    %282 = vector.shape_cast %281 : vector<1x16x4xf32> to vector<16x4xf32>
    %283 = vector.extract_strided_slice %272 {offsets = [5, 0, 0], sizes = [1, 16, 4], strides = [1, 1, 1]} : vector<8x16x4xf32> to vector<1x16x4xf32>
    %284 = vector.shape_cast %283 : vector<1x16x4xf32> to vector<16x4xf32>
    %285 = vector.extract_strided_slice %272 {offsets = [6, 0, 0], sizes = [1, 16, 4], strides = [1, 1, 1]} : vector<8x16x4xf32> to vector<1x16x4xf32>
    %286 = vector.shape_cast %285 : vector<1x16x4xf32> to vector<16x4xf32>
    %287 = vector.extract_strided_slice %272 {offsets = [7, 0, 0], sizes = [1, 16, 4], strides = [1, 1, 1]} : vector<8x16x4xf32> to vector<1x16x4xf32>
    %288 = vector.shape_cast %287 : vector<1x16x4xf32> to vector<16x4xf32>
    %289 = tpu.concatenate %274, %276, %278, %280, %282, %284, %286, %288 in 1 : vector<16x4xf32>, vector<16x4xf32>, vector<16x4xf32>, vector<16x4xf32>, vector<16x4xf32>, vector<16x4xf32>, vector<16x4xf32>, vector<16x4xf32> -> vector<16x32xf32>
    %cst_85 = arith.constant dense<0.000000e+00> : vector<16x32xf32>
    %290 = tpu.matmul %289, %188, %cst_85 {dimension_numbers = #tpu.dot_dimension_numbers<[1], [0], [0], [1], [0, 0, 1, 1], [], []>} : vector<16x32xf32>, vector<32x32xf32>, vector<16x32xf32> -> vector<16x32xf32>
    %291 = arith.addf %184, %290 : vector<16x32xf32>
    %292 = vector.broadcast %4 : vector<16x1xf32> to vector<16x32xf32>
    %293 = arith.mulf %291, %292 : vector<16x32xf32>
    %cst_86 = arith.constant dense<0.000000e+00> : vector<32xf32>
    %294 = vector.multi_reduction <add>, %293, %cst_86 [0] : vector<16x32xf32> to vector<32xf32>
    %295 = vector.shape_cast %294 : vector<32xf32> to vector<1x32xf32>
    %cst_87 = arith.constant 0.0769230798 : f32
    %296 = vector.broadcast %cst_87 : f32 to vector<1x32xf32>
    %297 = arith.mulf %295, %296 : vector<1x32xf32>
    %298 = vector.broadcast %297 : vector<1x32xf32> to vector<16x32xf32>
    %299 = arith.subf %293, %298 : vector<16x32xf32>
    %300 = vector.broadcast %4 : vector<16x1xf32> to vector<16x32xf32>
    %301 = arith.mulf %299, %300 : vector<16x32xf32>
    %302 = arith.mulf %301, %301 : vector<16x32xf32>
    %cst_88 = arith.constant dense<0.000000e+00> : vector<32xf32>
    %303 = vector.multi_reduction <add>, %302, %cst_88 [0] : vector<16x32xf32> to vector<32xf32>
    %304 = vector.shape_cast %303 : vector<32xf32> to vector<1x32xf32>
    %cst_89 = arith.constant 0.0769230798 : f32
    %305 = vector.broadcast %cst_89 : f32 to vector<1x32xf32>
    %306 = arith.mulf %304, %305 : vector<1x32xf32>
    %cst_90 = arith.constant 9.99999974E-6 : f32
    %307 = vector.broadcast %cst_90 : f32 to vector<1x32xf32>
    %308 = arith.addf %306, %307 : vector<1x32xf32>
    %309 = math.rsqrt %308 : vector<1x32xf32>
    %310 = arith.mulf %309, %194 : vector<1x32xf32>
    %311 = arith.mulf %297, %310 : vector<1x32xf32>
    %312 = arith.subf %196, %311 : vector<1x32xf32>
    %313 = vector.broadcast %310 : vector<1x32xf32> to vector<16x32xf32>
    %314 = arith.mulf %293, %313 : vector<16x32xf32>
    %315 = vector.broadcast %312 : vector<1x32xf32> to vector<16x32xf32>
    %316 = arith.addf %314, %315 : vector<16x32xf32>
    %317 = vector.broadcast %4 : vector<16x1xf32> to vector<16x32xf32>
    %318 = arith.mulf %316, %317 : vector<16x32xf32>
    %cst_91 = arith.constant dense<0.000000e+00> : vector<16x512xf32>
    %319 = tpu.matmul %318, %190, %cst_91 {dimension_numbers = #tpu.dot_dimension_numbers<[1], [0], [0], [1], [0, 0, 1, 1], [], []>} : vector<16x32xf32>, vector<32x512xf32>, vector<16x512xf32> -> vector<16x512xf32>
    %320 = vector.broadcast %192 : vector<1x512xf32> to vector<16x512xf32>
    %321 = arith.addf %319, %320 : vector<16x512xf32>
    %cst_92 = arith.constant 0.000000e+00 : f32
    %322 = vector.broadcast %cst_92 : f32 to vector<16x512xf32>
    %323 = arith.maximumf %321, %322 : vector<16x512xf32>
    %cst_93 = arith.constant dense<0.000000e+00> : vector<16x32xf32>
    %324 = tpu.matmul %323, %204, %cst_93 {dimension_numbers = #tpu.dot_dimension_numbers<[1], [0], [0], [1], [0, 0, 1, 1], [], []>} : vector<16x512xf32>, vector<512x32xf32>, vector<16x32xf32> -> vector<16x32xf32>
    %325 = vector.broadcast %202 : vector<1x32xf32> to vector<16x32xf32>
    %326 = arith.addf %324, %325 : vector<16x32xf32>
    %327 = arith.addf %318, %326 : vector<16x32xf32>
    %328 = vector.broadcast %4 : vector<16x1xf32> to vector<16x32xf32>
    %329 = arith.mulf %327, %328 : vector<16x32xf32>
    %cst_94 = arith.constant dense<0.000000e+00> : vector<32xf32>
    %330 = vector.multi_reduction <add>, %329, %cst_94 [0] : vector<16x32xf32> to vector<32xf32>
    %331 = vector.shape_cast %330 : vector<32xf32> to vector<1x32xf32>
    %cst_95 = arith.constant 0.0769230798 : f32
    %332 = vector.broadcast %cst_95 : f32 to vector<1x32xf32>
    %333 = arith.mulf %331, %332 : vector<1x32xf32>
    %334 = vector.broadcast %333 : vector<1x32xf32> to vector<16x32xf32>
    %335 = arith.subf %329, %334 : vector<16x32xf32>
    %336 = vector.broadcast %4 : vector<16x1xf32> to vector<16x32xf32>
    %337 = arith.mulf %335, %336 : vector<16x32xf32>
    %338 = arith.mulf %337, %337 : vector<16x32xf32>
    %cst_96 = arith.constant dense<0.000000e+00> : vector<32xf32>
    %339 = vector.multi_reduction <add>, %338, %cst_96 [0] : vector<16x32xf32> to vector<32xf32>
    %340 = vector.shape_cast %339 : vector<32xf32> to vector<1x32xf32>
    %cst_97 = arith.constant 0.0769230798 : f32
    %341 = vector.broadcast %cst_97 : f32 to vector<1x32xf32>
    %342 = arith.mulf %340, %341 : vector<1x32xf32>
    %cst_98 = arith.constant 9.99999974E-6 : f32
    %343 = vector.broadcast %cst_98 : f32 to vector<1x32xf32>
    %344 = arith.addf %342, %343 : vector<1x32xf32>
    %345 = math.rsqrt %344 : vector<1x32xf32>
    %346 = arith.mulf %345, %198 : vector<1x32xf32>
    %347 = arith.mulf %333, %346 : vector<1x32xf32>
    %348 = arith.subf %200, %347 : vector<1x32xf32>
    %349 = vector.broadcast %346 : vector<1x32xf32> to vector<16x32xf32>
    %350 = arith.mulf %329, %349 : vector<16x32xf32>
    %351 = vector.broadcast %348 : vector<1x32xf32> to vector<16x32xf32>
    %352 = arith.addf %350, %351 : vector<16x32xf32>
    %353 = vector.broadcast %4 : vector<16x1xf32> to vector<16x32xf32>
    %354 = arith.mulf %352, %353 : vector<16x32xf32>
    %c2 = arith.constant 2 : index
    %c0_99 = arith.constant 0 : index
    %c0_100 = arith.constant 0 : index
    %355 = vector.load %arg2[%c2, %c0_99, %c0_100] : memref<3x32x128xf32, #tpu.memory_space<vmem>>, vector<1x32x96xf32>
    %356 = vector.shape_cast %355 : vector<1x32x96xf32> to vector<32x96xf32>
    %c2_101 = arith.constant 2 : index
    %c0_102 = arith.constant 0 : index
    %c96_103 = arith.constant 96 : index
    %357 = vector.load %arg2[%c2_101, %c0_102, %c96_103] : memref<3x32x128xf32, #tpu.memory_space<vmem>>, vector<1x32x32xf32>
    %358 = vector.shape_cast %357 : vector<1x32x32xf32> to vector<32x32xf32>
    %c2_104 = arith.constant 2 : index
    %c0_105 = arith.constant 0 : index
    %c0_106 = arith.constant 0 : index
    %359 = vector.load %arg3[%c2_104, %c0_105, %c0_106] : memref<3x40x512xf32, #tpu.memory_space<vmem>>, vector<1x32x512xf32>
    %360 = vector.shape_cast %359 : vector<1x32x512xf32> to vector<32x512xf32>
    %c2_107 = arith.constant 2 : index
    %c32_108 = arith.constant 32 : index
    %c0_109 = arith.constant 0 : index
    %361 = vector.load %arg3[%c2_107, %c32_108, %c0_109] : memref<3x40x512xf32, #tpu.memory_space<vmem>>, vector<1x1x512xf32>
    %362 = vector.shape_cast %361 : vector<1x1x512xf32> to vector<1x512xf32>
    %c2_110 = arith.constant 2 : index
    %c33_111 = arith.constant 33 : index
    %c0_112 = arith.constant 0 : index
    %363 = vector.load %arg3[%c2_110, %c33_111, %c0_112] : memref<3x40x512xf32, #tpu.memory_space<vmem>>, vector<1x1x32xf32>
    %364 = vector.shape_cast %363 : vector<1x1x32xf32> to vector<1x32xf32>
    %c2_113 = arith.constant 2 : index
    %c34_114 = arith.constant 34 : index
    %c0_115 = arith.constant 0 : index
    %365 = vector.load %arg3[%c2_113, %c34_114, %c0_115] : memref<3x40x512xf32, #tpu.memory_space<vmem>>, vector<1x1x32xf32>
    %366 = vector.shape_cast %365 : vector<1x1x32xf32> to vector<1x32xf32>
    %c2_116 = arith.constant 2 : index
    %c35_117 = arith.constant 35 : index
    %c0_118 = arith.constant 0 : index
    %367 = vector.load %arg3[%c2_116, %c35_117, %c0_118] : memref<3x40x512xf32, #tpu.memory_space<vmem>>, vector<1x1x32xf32>
    %368 = vector.shape_cast %367 : vector<1x1x32xf32> to vector<1x32xf32>
    %c2_119 = arith.constant 2 : index
    %c36_120 = arith.constant 36 : index
    %c0_121 = arith.constant 0 : index
    %369 = vector.load %arg3[%c2_119, %c36_120, %c0_121] : memref<3x40x512xf32, #tpu.memory_space<vmem>>, vector<1x1x32xf32>
    %370 = vector.shape_cast %369 : vector<1x1x32xf32> to vector<1x32xf32>
    %c2_122 = arith.constant 2 : index
    %c37_123 = arith.constant 37 : index
    %c0_124 = arith.constant 0 : index
    %371 = vector.load %arg3[%c2_122, %c37_123, %c0_124] : memref<3x40x512xf32, #tpu.memory_space<vmem>>, vector<1x1x32xf32>
    %372 = vector.shape_cast %371 : vector<1x1x32xf32> to vector<1x32xf32>
    %c2_125 = arith.constant 2 : index
    %c0_126 = arith.constant 0 : index
    %c0_127 = arith.constant 0 : index
    %373 = vector.load %arg4[%c2_125, %c0_126, %c0_127] : memref<3x512x32xf32, #tpu.memory_space<vmem>>, vector<1x512x32xf32>
    %374 = vector.shape_cast %373 : vector<1x512x32xf32> to vector<512x32xf32>
    %cst_128 = arith.constant dense<0.000000e+00> : vector<16x96xf32>
    %375 = tpu.matmul %354, %356, %cst_128 {dimension_numbers = #tpu.dot_dimension_numbers<[1], [0], [0], [1], [0, 0, 1, 1], [], []>} : vector<16x32xf32>, vector<32x96xf32>, vector<16x96xf32> -> vector<16x96xf32>
    %376 = vector.extract_strided_slice %375 {offsets = [0, 0], sizes = [16, 4], strides = [1, 1]} : vector<16x96xf32> to vector<16x4xf32>
    %377 = vector.extract_strided_slice %375 {offsets = [0, 4], sizes = [16, 4], strides = [1, 1]} : vector<16x96xf32> to vector<16x4xf32>
    %378 = vector.extract_strided_slice %375 {offsets = [0, 8], sizes = [16, 4], strides = [1, 1]} : vector<16x96xf32> to vector<16x4xf32>
    %379 = vector.extract_strided_slice %375 {offsets = [0, 12], sizes = [16, 4], strides = [1, 1]} : vector<16x96xf32> to vector<16x4xf32>
    %380 = vector.extract_strided_slice %375 {offsets = [0, 16], sizes = [16, 4], strides = [1, 1]} : vector<16x96xf32> to vector<16x4xf32>
    %381 = vector.extract_strided_slice %375 {offsets = [0, 20], sizes = [16, 4], strides = [1, 1]} : vector<16x96xf32> to vector<16x4xf32>
    %382 = vector.extract_strided_slice %375 {offsets = [0, 24], sizes = [16, 4], strides = [1, 1]} : vector<16x96xf32> to vector<16x4xf32>
    %383 = vector.extract_strided_slice %375 {offsets = [0, 28], sizes = [16, 4], strides = [1, 1]} : vector<16x96xf32> to vector<16x4xf32>
    %384 = vector.shape_cast %376 : vector<16x4xf32> to vector<1x16x4xf32>
    %385 = vector.shape_cast %377 : vector<16x4xf32> to vector<1x16x4xf32>
    %386 = vector.shape_cast %378 : vector<16x4xf32> to vector<1x16x4xf32>
    %387 = vector.shape_cast %379 : vector<16x4xf32> to vector<1x16x4xf32>
    %388 = vector.shape_cast %380 : vector<16x4xf32> to vector<1x16x4xf32>
    %389 = vector.shape_cast %381 : vector<16x4xf32> to vector<1x16x4xf32>
    %390 = vector.shape_cast %382 : vector<16x4xf32> to vector<1x16x4xf32>
    %391 = vector.shape_cast %383 : vector<16x4xf32> to vector<1x16x4xf32>
    %392 = tpu.concatenate %384, %385, %386, %387, %388, %389, %390, %391 in 0 : vector<1x16x4xf32>, vector<1x16x4xf32>, vector<1x16x4xf32>, vector<1x16x4xf32>, vector<1x16x4xf32>, vector<1x16x4xf32>, vector<1x16x4xf32>, vector<1x16x4xf32> -> vector<8x16x4xf32>
    %393 = vector.extract_strided_slice %375 {offsets = [0, 32], sizes = [16, 4], strides = [1, 1]} : vector<16x96xf32> to vector<16x4xf32>
    %394 = vector.extract_strided_slice %375 {offsets = [0, 36], sizes = [16, 4], strides = [1, 1]} : vector<16x96xf32> to vector<16x4xf32>
    %395 = vector.extract_strided_slice %375 {offsets = [0, 40], sizes = [16, 4], strides = [1, 1]} : vector<16x96xf32> to vector<16x4xf32>
    %396 = vector.extract_strided_slice %375 {offsets = [0, 44], sizes = [16, 4], strides = [1, 1]} : vector<16x96xf32> to vector<16x4xf32>
    %397 = vector.extract_strided_slice %375 {offsets = [0, 48], sizes = [16, 4], strides = [1, 1]} : vector<16x96xf32> to vector<16x4xf32>
    %398 = vector.extract_strided_slice %375 {offsets = [0, 52], sizes = [16, 4], strides = [1, 1]} : vector<16x96xf32> to vector<16x4xf32>
    %399 = vector.extract_strided_slice %375 {offsets = [0, 56], sizes = [16, 4], strides = [1, 1]} : vector<16x96xf32> to vector<16x4xf32>
    %400 = vector.extract_strided_slice %375 {offsets = [0, 60], sizes = [16, 4], strides = [1, 1]} : vector<16x96xf32> to vector<16x4xf32>
    %401 = vector.shape_cast %393 : vector<16x4xf32> to vector<1x16x4xf32>
    %402 = vector.shape_cast %394 : vector<16x4xf32> to vector<1x16x4xf32>
    %403 = vector.shape_cast %395 : vector<16x4xf32> to vector<1x16x4xf32>
    %404 = vector.shape_cast %396 : vector<16x4xf32> to vector<1x16x4xf32>
    %405 = vector.shape_cast %397 : vector<16x4xf32> to vector<1x16x4xf32>
    %406 = vector.shape_cast %398 : vector<16x4xf32> to vector<1x16x4xf32>
    %407 = vector.shape_cast %399 : vector<16x4xf32> to vector<1x16x4xf32>
    %408 = vector.shape_cast %400 : vector<16x4xf32> to vector<1x16x4xf32>
    %409 = tpu.concatenate %401, %402, %403, %404, %405, %406, %407, %408 in 0 : vector<1x16x4xf32>, vector<1x16x4xf32>, vector<1x16x4xf32>, vector<1x16x4xf32>, vector<1x16x4xf32>, vector<1x16x4xf32>, vector<1x16x4xf32>, vector<1x16x4xf32> -> vector<8x16x4xf32>
    %410 = vector.extract_strided_slice %375 {offsets = [0, 64], sizes = [16, 4], strides = [1, 1]} : vector<16x96xf32> to vector<16x4xf32>
    %411 = vector.extract_strided_slice %375 {offsets = [0, 68], sizes = [16, 4], strides = [1, 1]} : vector<16x96xf32> to vector<16x4xf32>
    %412 = vector.extract_strided_slice %375 {offsets = [0, 72], sizes = [16, 4], strides = [1, 1]} : vector<16x96xf32> to vector<16x4xf32>
    %413 = vector.extract_strided_slice %375 {offsets = [0, 76], sizes = [16, 4], strides = [1, 1]} : vector<16x96xf32> to vector<16x4xf32>
    %414 = vector.extract_strided_slice %375 {offsets = [0, 80], sizes = [16, 4], strides = [1, 1]} : vector<16x96xf32> to vector<16x4xf32>
    %415 = vector.extract_strided_slice %375 {offsets = [0, 84], sizes = [16, 4], strides = [1, 1]} : vector<16x96xf32> to vector<16x4xf32>
    %416 = vector.extract_strided_slice %375 {offsets = [0, 88], sizes = [16, 4], strides = [1, 1]} : vector<16x96xf32> to vector<16x4xf32>
    %417 = vector.extract_strided_slice %375 {offsets = [0, 92], sizes = [16, 4], strides = [1, 1]} : vector<16x96xf32> to vector<16x4xf32>
    %418 = vector.shape_cast %410 : vector<16x4xf32> to vector<1x16x4xf32>
    %419 = vector.shape_cast %411 : vector<16x4xf32> to vector<1x16x4xf32>
    %420 = vector.shape_cast %412 : vector<16x4xf32> to vector<1x16x4xf32>
    %421 = vector.shape_cast %413 : vector<16x4xf32> to vector<1x16x4xf32>
    %422 = vector.shape_cast %414 : vector<16x4xf32> to vector<1x16x4xf32>
    %423 = vector.shape_cast %415 : vector<16x4xf32> to vector<1x16x4xf32>
    %424 = vector.shape_cast %416 : vector<16x4xf32> to vector<1x16x4xf32>
    %425 = vector.shape_cast %417 : vector<16x4xf32> to vector<1x16x4xf32>
    %426 = tpu.concatenate %418, %419, %420, %421, %422, %423, %424, %425 in 0 : vector<1x16x4xf32>, vector<1x16x4xf32>, vector<1x16x4xf32>, vector<1x16x4xf32>, vector<1x16x4xf32>, vector<1x16x4xf32>, vector<1x16x4xf32>, vector<1x16x4xf32> -> vector<8x16x4xf32>
    "tpu.trace_start"() <{level = 10 : i32, message = "hqd,hkd->hqk"}> : () -> ()
    %cst_129 = arith.constant dense<0.000000e+00> : vector<8x16x16xf32>
    %427 = tpu.matmul %392, %409, %cst_129 {dimension_numbers = #tpu.dot_dimension_numbers<[2], [2], [1], [1], [0, 0, 0, 1, 1, 1], [0], [0]>} : vector<8x16x4xf32>, vector<8x16x4xf32>, vector<8x16x16xf32> -> vector<8x16x16xf32>
    "tpu.trace_stop"() : () -> ()
    %cst_130 = arith.constant 5.000000e-01 : f32
    %428 = vector.broadcast %cst_130 : f32 to vector<8x16x16xf32>
    %429 = arith.mulf %427, %428 : vector<8x16x16xf32>
    %430 = vector.broadcast %10 : vector<1x1x16xf32> to vector<8x16x16xf32>
    %431 = arith.addf %429, %430 : vector<8x16x16xf32>
    %cst_131 = arith.constant dense<0xFF800000> : vector<8x16xf32>
    %432 = vector.multi_reduction <maximumf>, %431, %cst_131 [2] : vector<8x16x16xf32> to vector<8x16xf32>
    %433 = vector.shape_cast %432 : vector<8x16xf32> to vector<8x16x1xf32>
    %434 = vector.broadcast %433 : vector<8x16x1xf32> to vector<8x16x16xf32>
    %435 = arith.subf %431, %434 : vector<8x16x16xf32>
    %436 = math.exp %435 : vector<8x16x16xf32>
    %cst_132 = arith.constant dense<0.000000e+00> : vector<8x16xf32>
    %437 = vector.multi_reduction <add>, %436, %cst_132 [2] : vector<8x16x16xf32> to vector<8x16xf32>
    %438 = vector.shape_cast %437 : vector<8x16xf32> to vector<8x16x1xf32>
    %439 = tpu.reciprocal %438 {approx = true} : vector<8x16x1xf32> -> vector<8x16x1xf32>
    %440 = vector.broadcast %439 : vector<8x16x1xf32> to vector<8x16x16xf32>
    %441 = arith.mulf %436, %440 : vector<8x16x16xf32>
    "tpu.trace_start"() <{level = 10 : i32, message = "hqk,hkd->hqd"}> : () -> ()
    %cst_133 = arith.constant dense<0.000000e+00> : vector<8x16x4xf32>
    %442 = tpu.matmul %441, %426, %cst_133 {dimension_numbers = #tpu.dot_dimension_numbers<[2], [1], [1], [2], [0, 0, 0, 1, 1, 2], [0], [0]>} : vector<8x16x16xf32>, vector<8x16x4xf32>, vector<8x16x4xf32> -> vector<8x16x4xf32>
    "tpu.trace_stop"() : () -> ()
    %443 = vector.extract_strided_slice %442 {offsets = [0, 0, 0], sizes = [1, 16, 4], strides = [1, 1, 1]} : vector<8x16x4xf32> to vector<1x16x4xf32>
    %444 = vector.shape_cast %443 : vector<1x16x4xf32> to vector<16x4xf32>
    %445 = vector.extract_strided_slice %442 {offsets = [1, 0, 0], sizes = [1, 16, 4], strides = [1, 1, 1]} : vector<8x16x4xf32> to vector<1x16x4xf32>
    %446 = vector.shape_cast %445 : vector<1x16x4xf32> to vector<16x4xf32>
    %447 = vector.extract_strided_slice %442 {offsets = [2, 0, 0], sizes = [1, 16, 4], strides = [1, 1, 1]} : vector<8x16x4xf32> to vector<1x16x4xf32>
    %448 = vector.shape_cast %447 : vector<1x16x4xf32> to vector<16x4xf32>
    %449 = vector.extract_strided_slice %442 {offsets = [3, 0, 0], sizes = [1, 16, 4], strides = [1, 1, 1]} : vector<8x16x4xf32> to vector<1x16x4xf32>
    %450 = vector.shape_cast %449 : vector<1x16x4xf32> to vector<16x4xf32>
    %451 = vector.extract_strided_slice %442 {offsets = [4, 0, 0], sizes = [1, 16, 4], strides = [1, 1, 1]} : vector<8x16x4xf32> to vector<1x16x4xf32>
    %452 = vector.shape_cast %451 : vector<1x16x4xf32> to vector<16x4xf32>
    %453 = vector.extract_strided_slice %442 {offsets = [5, 0, 0], sizes = [1, 16, 4], strides = [1, 1, 1]} : vector<8x16x4xf32> to vector<1x16x4xf32>
    %454 = vector.shape_cast %453 : vector<1x16x4xf32> to vector<16x4xf32>
    %455 = vector.extract_strided_slice %442 {offsets = [6, 0, 0], sizes = [1, 16, 4], strides = [1, 1, 1]} : vector<8x16x4xf32> to vector<1x16x4xf32>
    %456 = vector.shape_cast %455 : vector<1x16x4xf32> to vector<16x4xf32>
    %457 = vector.extract_strided_slice %442 {offsets = [7, 0, 0], sizes = [1, 16, 4], strides = [1, 1, 1]} : vector<8x16x4xf32> to vector<1x16x4xf32>
    %458 = vector.shape_cast %457 : vector<1x16x4xf32> to vector<16x4xf32>
    %459 = tpu.concatenate %444, %446, %448, %450, %452, %454, %456, %458 in 1 : vector<16x4xf32>, vector<16x4xf32>, vector<16x4xf32>, vector<16x4xf32>, vector<16x4xf32>, vector<16x4xf32>, vector<16x4xf32>, vector<16x4xf32> -> vector<16x32xf32>
    %cst_134 = arith.constant dense<0.000000e+00> : vector<16x32xf32>
    %460 = tpu.matmul %459, %358, %cst_134 {dimension_numbers = #tpu.dot_dimension_numbers<[1], [0], [0], [1], [0, 0, 1, 1], [], []>} : vector<16x32xf32>, vector<32x32xf32>, vector<16x32xf32> -> vector<16x32xf32>
    %461 = arith.addf %354, %460 : vector<16x32xf32>
    %462 = vector.broadcast %4 : vector<16x1xf32> to vector<16x32xf32>
    %463 = arith.mulf %461, %462 : vector<16x32xf32>
    %cst_135 = arith.constant dense<0.000000e+00> : vector<32xf32>
    %464 = vector.multi_reduction <add>, %463, %cst_135 [0] : vector<16x32xf32> to vector<32xf32>
    %465 = vector.shape_cast %464 : vector<32xf32> to vector<1x32xf32>
    %cst_136 = arith.constant 0.0769230798 : f32
    %466 = vector.broadcast %cst_136 : f32 to vector<1x32xf32>
    %467 = arith.mulf %465, %466 : vector<1x32xf32>
    %468 = vector.broadcast %467 : vector<1x32xf32> to vector<16x32xf32>
    %469 = arith.subf %463, %468 : vector<16x32xf32>
    %470 = vector.broadcast %4 : vector<16x1xf32> to vector<16x32xf32>
    %471 = arith.mulf %469, %470 : vector<16x32xf32>
    %472 = arith.mulf %471, %471 : vector<16x32xf32>
    %cst_137 = arith.constant dense<0.000000e+00> : vector<32xf32>
    %473 = vector.multi_reduction <add>, %472, %cst_137 [0] : vector<16x32xf32> to vector<32xf32>
    %474 = vector.shape_cast %473 : vector<32xf32> to vector<1x32xf32>
    %cst_138 = arith.constant 0.0769230798 : f32
    %475 = vector.broadcast %cst_138 : f32 to vector<1x32xf32>
    %476 = arith.mulf %474, %475 : vector<1x32xf32>
    %cst_139 = arith.constant 9.99999974E-6 : f32
    %477 = vector.broadcast %cst_139 : f32 to vector<1x32xf32>
    %478 = arith.addf %476, %477 : vector<1x32xf32>
    %479 = math.rsqrt %478 : vector<1x32xf32>
    %480 = arith.mulf %479, %364 : vector<1x32xf32>
    %481 = arith.mulf %467, %480 : vector<1x32xf32>
    %482 = arith.subf %366, %481 : vector<1x32xf32>
    %483 = vector.broadcast %480 : vector<1x32xf32> to vector<16x32xf32>
    %484 = arith.mulf %463, %483 : vector<16x32xf32>
    %485 = vector.broadcast %482 : vector<1x32xf32> to vector<16x32xf32>
    %486 = arith.addf %484, %485 : vector<16x32xf32>
    %487 = vector.broadcast %4 : vector<16x1xf32> to vector<16x32xf32>
    %488 = arith.mulf %486, %487 : vector<16x32xf32>
    %cst_140 = arith.constant dense<0.000000e+00> : vector<16x512xf32>
    %489 = tpu.matmul %488, %360, %cst_140 {dimension_numbers = #tpu.dot_dimension_numbers<[1], [0], [0], [1], [0, 0, 1, 1], [], []>} : vector<16x32xf32>, vector<32x512xf32>, vector<16x512xf32> -> vector<16x512xf32>
    %490 = vector.broadcast %362 : vector<1x512xf32> to vector<16x512xf32>
    %491 = arith.addf %489, %490 : vector<16x512xf32>
    %cst_141 = arith.constant 0.000000e+00 : f32
    %492 = vector.broadcast %cst_141 : f32 to vector<16x512xf32>
    %493 = arith.maximumf %491, %492 : vector<16x512xf32>
    %cst_142 = arith.constant dense<0.000000e+00> : vector<16x32xf32>
    %494 = tpu.matmul %493, %374, %cst_142 {dimension_numbers = #tpu.dot_dimension_numbers<[1], [0], [0], [1], [0, 0, 1, 1], [], []>} : vector<16x512xf32>, vector<512x32xf32>, vector<16x32xf32> -> vector<16x32xf32>
    %495 = vector.broadcast %372 : vector<1x32xf32> to vector<16x32xf32>
    %496 = arith.addf %494, %495 : vector<16x32xf32>
    %497 = arith.addf %488, %496 : vector<16x32xf32>
    %498 = vector.broadcast %4 : vector<16x1xf32> to vector<16x32xf32>
    %499 = arith.mulf %497, %498 : vector<16x32xf32>
    %cst_143 = arith.constant dense<0.000000e+00> : vector<32xf32>
    %500 = vector.multi_reduction <add>, %499, %cst_143 [0] : vector<16x32xf32> to vector<32xf32>
    %501 = vector.shape_cast %500 : vector<32xf32> to vector<1x32xf32>
    %cst_144 = arith.constant 0.0769230798 : f32
    %502 = vector.broadcast %cst_144 : f32 to vector<1x32xf32>
    %503 = arith.mulf %501, %502 : vector<1x32xf32>
    %504 = vector.broadcast %503 : vector<1x32xf32> to vector<16x32xf32>
    %505 = arith.subf %499, %504 : vector<16x32xf32>
    %506 = vector.broadcast %4 : vector<16x1xf32> to vector<16x32xf32>
    %507 = arith.mulf %505, %506 : vector<16x32xf32>
    %508 = arith.mulf %507, %507 : vector<16x32xf32>
    %cst_145 = arith.constant dense<0.000000e+00> : vector<32xf32>
    %509 = vector.multi_reduction <add>, %508, %cst_145 [0] : vector<16x32xf32> to vector<32xf32>
    %510 = vector.shape_cast %509 : vector<32xf32> to vector<1x32xf32>
    %cst_146 = arith.constant 0.0769230798 : f32
    %511 = vector.broadcast %cst_146 : f32 to vector<1x32xf32>
    %512 = arith.mulf %510, %511 : vector<1x32xf32>
    %cst_147 = arith.constant 9.99999974E-6 : f32
    %513 = vector.broadcast %cst_147 : f32 to vector<1x32xf32>
    %514 = arith.addf %512, %513 : vector<1x32xf32>
    %515 = math.rsqrt %514 : vector<1x32xf32>
    %516 = arith.mulf %515, %368 : vector<1x32xf32>
    %517 = arith.mulf %503, %516 : vector<1x32xf32>
    %518 = arith.subf %370, %517 : vector<1x32xf32>
    %519 = vector.broadcast %516 : vector<1x32xf32> to vector<16x32xf32>
    %520 = arith.mulf %499, %519 : vector<16x32xf32>
    %521 = vector.broadcast %518 : vector<1x32xf32> to vector<16x32xf32>
    %522 = arith.addf %520, %521 : vector<16x32xf32>
    %523 = vector.broadcast %4 : vector<16x1xf32> to vector<16x32xf32>
    %524 = arith.mulf %522, %523 : vector<16x32xf32>
    %cst_148 = arith.constant dense<0.000000e+00> : vector<32xf32>
    %525 = vector.multi_reduction <add>, %524, %cst_148 [0] : vector<16x32xf32> to vector<32xf32>
    %526 = vector.shape_cast %525 : vector<32xf32> to vector<1x32xf32>
    %cst_149 = arith.constant 0.0769230798 : f32
    %527 = vector.broadcast %cst_149 : f32 to vector<1x32xf32>
    %528 = arith.mulf %526, %527 : vector<1x32xf32>
    %c1_150 = arith.constant 1 : index
    %c0_151 = arith.constant 0 : index
    %c0_152 = arith.constant 0 : index
    %529 = vector.load %arg1[%c1_150, %c0_151, %c0_152] : memref<3x32x128xf32, #tpu.memory_space<vmem>>, vector<1x32x128xf32>
    %530 = vector.shape_cast %529 : vector<1x32x128xf32> to vector<32x128xf32>
    %cst_153 = arith.constant dense<0.000000e+00> : vector<16x128xf32>
    %531 = tpu.matmul %524, %530, %cst_153 {dimension_numbers = #tpu.dot_dimension_numbers<[1], [0], [0], [1], [0, 0, 1, 1], [], []>} : vector<16x32xf32>, vector<32x128xf32>, vector<16x128xf32> -> vector<16x128xf32>
    %c2_154 = arith.constant 2 : index
    %c0_155 = arith.constant 0 : index
    %c0_156 = arith.constant 0 : index
    %532 = vector.load %arg1[%c2_154, %c0_155, %c0_156] : memref<3x32x128xf32, #tpu.memory_space<vmem>>, vector<1x32x128xf32>
    %533 = vector.shape_cast %532 : vector<1x32x128xf32> to vector<32x128xf32>
    %cst_157 = arith.constant dense<0.000000e+00> : vector<1x128xf32>
    %534 = tpu.matmul %528, %533, %cst_157 {dimension_numbers = #tpu.dot_dimension_numbers<[1], [0], [0], [1], [0, 0, 1, 1], [], []>} : vector<1x32xf32>, vector<32x128xf32>, vector<1x128xf32> -> vector<1x128xf32>
    %535 = vector.broadcast %534 : vector<1x128xf32> to vector<16x128xf32>
    %536 = arith.addf %531, %535 : vector<16x128xf32>
    %c0_158 = arith.constant 0 : index
    %c0_159 = arith.constant 0 : index
    %537 = vector.load %arg5[%c0_158, %c0_159] : memref<16x128xf32, #tpu.memory_space<vmem>>, vector<16x128xf32>
    tpu.vector_store %arg5[%c0_158, %c0_159], %536 {strides = array<i32>} : memref<16x128xf32, #tpu.memory_space<vmem>>, vector<16x128xf32>,
    return
  }
}

</mosaic_0001>

<llo_original>
// kernel: encoder_forward.1
$region0: #{encoder_forward.1}
  #allocation0 [shape = 'u32[]', space=smem, size = 0x4, offset = 0x4, fixed_abs, tag = 'smem constant byte address 0x4 - core index']
  #allocation1 [shape = 'u32[144,128]{1,0:T(1,128)}', space=vmem, size = 0x12000, scoped, tag = 'internal scratch']
  %s0 = inlined_call_operand.vmem [shape: f32[16,16], index: 0, kind: input, shape index: {}]
  %s1 = inlined_call_operand.vmem [shape: f32[3,32,128], index: 1, kind: input, shape index: {}]
  %s2 = inlined_call_operand.vmem [shape: f32[3,32,128], index: 2, kind: input, shape index: {}]
  %s3 = inlined_call_operand.vmem [shape: f32[3,40,512], index: 3, kind: input, shape index: {}]
  %s4 = inlined_call_operand.vmem [shape: f32[3,512,32], index: 4, kind: input, shape index: {}]
  %s5 = inlined_call_operand.vmem [shape: f32[16,128], index: 5, kind: output, shape index: {}]
  %s6 = sld [smem:[#allocation0]]
  $region30: #{encoder_forward.1} parent=0
    _
  %s8 = ssub.s32 1, %s6
  %s9 = scalar_select 0, %s8, %s6
  // Predicated region
  $region2: #{encoder_forward.1} parent=0 // pred_check
    _
  $region3: #{encoder_forward.1} parent=0 // pred_check_branch
    %11 = sbr.rel (0) target = $region5
  $region4: #{encoder_forward.1} parent=0 // pred_region
    _
  $region5: #{encoder_forward.1} parent=0 // pred_fallthru
    _
  // Predicated region
  $region6: #{encoder_forward.1} parent=0 // pred_check
    _
  $region7: #{encoder_forward.1} parent=0 // pred_check_branch
    %13 = sbr.rel (0) target = $region9
  $region8: #{encoder_forward.1} parent=0 // pred_region
    _
  $region9: #{encoder_forward.1} parent=0 // pred_fallthru
    _
  // Predicated region
  $region10: #{encoder_forward.1} parent=0 // pred_check
    _
  $region11: #{encoder_forward.1} parent=0 // pred_check_branch
    %15 = sbr.rel (0) target = $region13
  $region12: #{encoder_forward.1} parent=0 // pred_region
    _
  $region13: #{encoder_forward.1} parent=0 // pred_fallthru
    _
  // Predicated region
  $region14: #{encoder_forward.1} parent=0 // pred_check
    _
  $region15: #{encoder_forward.1} parent=0 // pred_check_branch
    %17 = sbr.rel (0) target = $region17
  $region16: #{encoder_forward.1} parent=0 // pred_region
    _
  $region17: #{encoder_forward.1} parent=0 // pred_fallthru
    _
  // Predicated region
  $region18: #{encoder_forward.1} parent=0 // pred_check
    _
  $region19: #{encoder_forward.1} parent=0 // pred_check_branch
    %19 = sbr.rel (0) target = $region21
  $region20: #{encoder_forward.1} parent=0 // pred_region
    _
  $region21: #{encoder_forward.1} parent=0 // pred_fallthru
    _
  %v20 = vlaneseq
  %v21 = vshrl.u32 %v20, 7
  %v22 = vadd.s32 %v21, 8
  %vm23 = vcmp.lt.s32.totalorder %v21, 13
  %vm24 = vcmp.lt.s32.totalorder %v22, 13
  %v25 = vsel %vm23, 1, 0
  %v26 = vsel %vm24, 1, 0
  %v27 = vcvt.s32.f32 %v25
  %v28 = vcvt.s32.f32 %v26
  %v29 = vlaneseq
  %v30 = vand.u32 %v29, 127
  %vm31 = vcmp.lt.s32.totalorder %v30, 13
  %v32 = vsel %vm31, 0.0, -1e+30
  %v33 = vld [vmem:[%s1] sm:$0xff]
  %v34 = vld [vmem:[%s1 + $0x8] sm:$0xff]
  %v35 = vld [vmem:[%s0] sm:$0xff]
  %v36 = vld [vmem:[%s0 + $0x8] sm:$0xff]
  %vm37 = vcmask 130048
  %v39 = vsel %vm37, %v35, 0
  %v42 = vsel %vm37, %v36, 0
  %44 = vmatprep.subr.mxu0 0.0
  %45 = vmatpush1.msra.mxu0 %v33
  %46 = vmatprep.subr.mxu0 0.0
  %47 = vmatpush1.msra.mxu0 %v34
  %48 = vmatprep.subr.mxu0 0.0
  %49 = vmatpush1.msra.mxu0 0.0
  %50 = vmatprep.subr.mxu0 0.0
  %51 = vmatpush1.msra.mxu0 0.0
  %52 = vmatprep.subr.mxu0 0.0
  %53 = vmatpush1.msra.mxu0 0.0
  %54 = vmatprep.subr.mxu0 0.0
  %55 = vmatpush1.msra.mxu0 0.0
  %56 = vmatprep.subr.mxu0 0.0
  %57 = vmatpush1.msra.mxu0 0.0
  %58 = vmatprep.subr.mxu0 0.0
  %59 = vmatpush1.msra.mxu0 0.0
  %60 = vmatprep.subr.mxu0 0.0
  %61 = vmatpush1.msra.mxu0 0.0
  %62 = vmatprep.subr.mxu0 0.0
  %63 = vmatpush1.msra.mxu0 0.0
  %64 = vmatprep.subr.mxu0 0.0
  %65 = vmatpush1.msra.mxu0 0.0
  %66 = vmatprep.subr.mxu0 0.0
  %67 = vmatpush1.msra.mxu0 0.0
  %68 = vmatprep.subr.mxu0 0.0
  %69 = vmatpush1.msra.mxu0 0.0
  %70 = vmatprep.subr.mxu0 0.0
  %71 = vmatpush1.msra.mxu0 0.0
  %72 = vmatprep.subr.mxu0 0.0
  %73 = vmatpush1.msra.mxu0 0.0
  %74 = vmatprep.subr.mxu0 0.0
  %75 = vmatpush1.msra.mxu0 0.0
  %76 = vmatprep.subr.mxu0 0.0
  %77 = vmatpush1.msra.mxu0 0.0
  %78 = vmatprep.subr.mxu0 0.0
  %79 = vmatpush1.msra.mxu0 0.0
  %80 = vmatprep.subr.mxu0 0.0
  %81 = vmatpush1.msra.mxu0 0.0
  %82 = vmatprep.subr.mxu0 0.0
  %83 = vmatpush1.msra.mxu0 0.0
  %84 = vmatprep.subr.mxu0 0.0
  %85 = vmatpush1.msra.mxu0 0.0
  %86 = vmatprep.subr.mxu0 0.0
  %87 = vmatpush1.msra.mxu0 0.0
  %88 = vmatprep.subr.mxu0 0.0
  %89 = vmatpush1.msra.mxu0 0.0
  %90 = vmatprep.subr.mxu0 0.0
  %91 = vmatpush1.msra.mxu0 0.0
  %92 = vmatprep.subr.mxu0 0.0
  %93 = vmatpush1.msra.mxu0 0.0
  %94 = vmatprep.subr.mxu0 0.0
  %95 = vmatpush1.msra.mxu0 0.0
  %96 = vmatprep.subr.mxu0 0.0
  %97 = vmatpush1.msra.mxu0 0.0
  %98 = vmatprep.subr.mxu0 0.0
  %99 = vmatpush1.msra.mxu0 0.0
  %100 = vmatprep.subr.mxu0 0.0
  %101 = vmatpush1.msra.mxu0 0.0
  %102 = vmatprep.subr.mxu0 0.0
  %103 = vmatpush1.msra.mxu0 0.0
  %104 = vmatprep.subr.mxu0 0.0
  %105 = vmatpush1.msra.mxu0 0.0
  %106 = vmatprep.subr.mxu0 0.0
  %107 = vmatpush1.msra.mxu0 0.0
  %108 = vmatprep.mubr.f32.mxu0 0.0
  %109 = vmatmul.mubr.f32.gmra.mrb[0].mxu0 %v39
  %v110 = vpop.f32.mrb[0].mxu0
  %v111 = vadd.f32 0.0, %v110
  %v112 = vpop.f32.mrb[0].mxu0
  %113 = vmatprep.mubr.f32.mxu0 0.0
  %114 = vmatmul.mubr.f32.gmra.mrb[0].mxu0 %v42
  %v115 = vpop.f32.mrb[0].mxu0
  %v116 = vadd.f32 0.0, %v115
  %v117 = vpop.f32.mrb[0].mxu0
  %118 = vdwg.mxu0
  %v119 = vld [vmem:[%s2] sm:$0xff]
  %v120 = vld [vmem:[%s2 + $0x8] sm:$0xff]
  %v121 = vld [vmem:[%s2 + $0x10] sm:$0xff]
  %v122 = vld [vmem:[%s2 + $0x18] sm:$0xff]
  %v123 = vld [vmem:[%s3] sm:$0xff]
  %v124 = vld [vmem:[%s3 + $0x8] sm:$0xff]
  %v125 = vld [vmem:[%s3 + $0x10] sm:$0xff]
  %v126 = vld [vmem:[%s3 + $0x18] sm:$0xff]
  %v127 = vld [vmem:[%s3 + $0x20] sm:$0xff]
  %v128 = vld [vmem:[%s3 + $0x28] sm:$0xff]
  %v129 = vld [vmem:[%s3 + $0x30] sm:$0xff]
  %v130 = vld [vmem:[%s3 + $0x38] sm:$0xff]
  %v131 = vld [vmem:[%s3 + $0x40] sm:$0xff]
  %v132 = vld [vmem:[%s3 + $0x48] sm:$0xff]
  %v133 = vld [vmem:[%s3 + $0x50] sm:$0xff]
  %v134 = vld [vmem:[%s3 + $0x58] sm:$0xff]
  %v135 = vld [vmem:[%s3 + $0x60] sm:$0xff]
  %v136 = vld [vmem:[%s3 + $0x68] sm:$0xff]
  %v137 = vld [vmem:[%s3 + $0x70] sm:$0xff]
  %v138 = vld [vmem:[%s3 + $0x78] sm:$0xff]
  %s139 = scalar_lea.vmem %s3, 128
  %v140 = vld [vmem:[%s139] ss:$8 sm:$0xf]
  %v141 = vld [vmem:[%s3 + $0x81] ss:$0 sm:$0xff]
  %v142 = vld [vmem:[%s3 + $0x82] ss:$0 sm:$0xff]
  %v143 = vld [vmem:[%s3 + $0x83] ss:$0 sm:$0xff]
  %v144 = vld [vmem:[%s3 + $0x84] ss:$0 sm:$0xff]
  %v145 = vld [vmem:[%s3 + $0x85] ss:$0 sm:$0xff]
  %v146 = vld [vmem:[%s4] sm:$0xff]
  %v147 = vld [vmem:[%s4 + $0x8] sm:$0xff]
  %v148 = vld [vmem:[%s4 + $0x10] sm:$0xff]
  %v149 = vld [vmem:[%s4 + $0x18] sm:$0xff]
  %v150 = vld [vmem:[%s4 + $0x20] sm:$0xff]
  %v151 = vld [vmem:[%s4 + $0x28] sm:$0xff]
  %v152 = vld [vmem:[%s4 + $0x30] sm:$0xff]
  %v153 = vld [vmem:[%s4 + $0x38] sm:$0xff]
  %v154 = vld [vmem:[%s4 + $0x40] sm:$0xff]
  %v155 = vld [vmem:[%s4 + $0x48] sm:$0xff]
  %v156 = vld [vmem:[%s4 + $0x50] sm:$0xff]
  %v157 = vld [vmem:[%s4 + $0x58] sm:$0xff]
  %v158 = vld [vmem:[%s4 + $0x60] sm:$0xff]
  %v159 = vld [vmem:[%s4 + $0x68] sm:$0xff]
  %v160 = vld [vmem:[%s4 + $0x70] sm:$0xff]
  %v161 = vld [vmem:[%s4 + $0x78] sm:$0xff]
  %v162 = vld [vmem:[%s4 + $0x80] sm:$0xff]
  %v163 = vld [vmem:[%s4 + $0x88] sm:$0xff]
  %v164 = vld [vmem:[%s4 + $0x90] sm:$0xff]
  %v165 = vld [vmem:[%s4 + $0x98] sm:$0xff]
  %v166 = vld [vmem:[%s4 + $0xa0] sm:$0xff]
  %v167 = vld [vmem:[%s4 + $0xa8] sm:$0xff]
  %v168 = vld [vmem:[%s4 + $0xb0] sm:$0xff]
  %v169 = vld [vmem:[%s4 + $0xb8] sm:$0xff]
  %v170 = vld [vmem:[%s4 + $0xc0] sm:$0xff]
  %v171 = vld [vmem:[%s4 + $0xc8] sm:$0xff]
  %v172 = vld [vmem:[%s4 + $0xd0] sm:$0xff]
  %v173 = vld [vmem:[%s4 + $0xd8] sm:$0xff]
  %v174 = vld [vmem:[%s4 + $0xe0] sm:$0xff]
  %v175 = vld [vmem:[%s4 + $0xe8] sm:$0xff]
  %v176 = vld [vmem:[%s4 + $0xf0] sm:$0xff]
  %v177 = vld [vmem:[%s4 + $0xf8] sm:$0xff]
  %v178 = vld [vmem:[%s4 + $0x100] sm:$0xff]
  %v179 = vld [vmem:[%s4 + $0x108] sm:$0xff]
  %v180 = vld [vmem:[%s4 + $0x110] sm:$0xff]
  %v181 = vld [vmem:[%s4 + $0x118] sm:$0xff]
  %v182 = vld [vmem:[%s4 + $0x120] sm:$0xff]
  %v183 = vld [vmem:[%s4 + $0x128] sm:$0xff]
  %v184 = vld [vmem:[%s4 + $0x130] sm:$0xff]
  %v185 = vld [vmem:[%s4 + $0x138] sm:$0xff]
  %v186 = vld [vmem:[%s4 + $0x140] sm:$0xff]
  %v187 = vld [vmem:[%s4 + $0x148] sm:$0xff]
  %v188 = vld [vmem:[%s4 + $0x150] sm:$0xff]
  %v189 = vld [vmem:[%s4 + $0x158] sm:$0xff]
  %v190 = vld [vmem:[%s4 + $0x160] sm:$0xff]
  %v191 = vld [vmem:[%s4 + $0x168] sm:$0xff]
  %v192 = vld [vmem:[%s4 + $0x170] sm:$0xff]
  %v193 = vld [vmem:[%s4 + $0x178] sm:$0xff]
  %v194 = vld [vmem:[%s4 + $0x180] sm:$0xff]
  %v195 = vld [vmem:[%s4 + $0x188] sm:$0xff]
  %v196 = vld [vmem:[%s4 + $0x190] sm:$0xff]
  %v197 = vld [vmem:[%s4 + $0x198] sm:$0xff]
  %v198 = vld [vmem:[%s4 + $0x1a0] sm:$0xff]
  %v199 = vld [vmem:[%s4 + $0x1a8] sm:$0xff]
  %v200 = vld [vmem:[%s4 + $0x1b0] sm:$0xff]
  %v201 = vld [vmem:[%s4 + $0x1b8] sm:$0xff]
  %v202 = vld [vmem:[%s4 + $0x1c0] sm:$0xff]
  %v203 = vld [vmem:[%s4 + $0x1c8] sm:$0xff]
  %v204 = vld [vmem:[%s4 + $0x1d0] sm:$0xff]
  %v205 = vld [vmem:[%s4 + $0x1d8] sm:$0xff]
  %v206 = vld [vmem:[%s4 + $0x1e0] sm:$0xff]
  %v207 = vld [vmem:[%s4 + $0x1e8] sm:$0xff]
  %v208 = vld [vmem:[%s4 + $0x1f0] sm:$0xff]
  %v209 = vld [vmem:[%s4 + $0x1f8] sm:$0xff]
  %vm210 = vcmask 261120
  %v212 = vsel %vm210, %v111, 0
  %v215 = vsel %vm210, %v116, 0
  %217 = vmatprep.subr.mxu0 0.0
  %218 = vmatpush1.msra.mxu0 %v119
  %219 = vmatprep.subr.mxu0 0.0
  %220 = vmatpush1.msra.mxu0 %v120
  %221 = vmatprep.subr.mxu0 0.0
  %222 = vmatpush1.msra.mxu0 %v121
  %223 = vmatprep.subr.mxu0 0.0
  %224 = vmatpush1.msra.mxu0 %v122
  %225 = vmatprep.subr.mxu0 0.0
  %226 = vmatpush1.msra.mxu0 0.0
  %227 = vmatprep.subr.mxu0 0.0
  %228 = vmatpush1.msra.mxu0 0.0
  %229 = vmatprep.subr.mxu0 0.0
  %230 = vmatpush1.msra.mxu0 0.0
  %231 = vmatprep.subr.mxu0 0.0
  %232 = vmatpush1.msra.mxu0 0.0
  %233 = vmatprep.subr.mxu0 0.0
  %234 = vmatpush1.msra.mxu0 0.0
  %235 = vmatprep.subr.mxu0 0.0
  %236 = vmatpush1.msra.mxu0 0.0
  %237 = vmatprep.subr.mxu0 0.0
  %238 = vmatpush1.msra.mxu0 0.0
  %239 = vmatprep.subr.mxu0 0.0
  %240 = vmatpush1.msra.mxu0 0.0
  %241 = vmatprep.subr.mxu0 0.0
  %242 = vmatpush1.msra.mxu0 0.0
  %243 = vmatprep.subr.mxu0 0.0
  %244 = vmatpush1.msra.mxu0 0.0
  %245 = vmatprep.subr.mxu0 0.0
  %246 = vmatpush1.msra.mxu0 0.0
  %247 = vmatprep.subr.mxu0 0.0
  %248 = vmatpush1.msra.mxu0 0.0
  %249 = vmatprep.subr.mxu0 0.0
  %250 = vmatpush1.msra.mxu0 0.0
  %251 = vmatprep.subr.mxu0 0.0
  %252 = vmatpush1.msra.mxu0 0.0
  %253 = vmatprep.subr.mxu0 0.0
  %254 = vmatpush1.msra.mxu0 0.0
  %255 = vmatprep.subr.mxu0 0.0
  %256 = vmatpush1.msra.mxu0 0.0
  %257 = vmatprep.subr.mxu0 0.0
  %258 = vmatpush1.msra.mxu0 0.0
  %259 = vmatprep.subr.mxu0 0.0
  %260 = vmatpush1.msra.mxu0 0.0
  %261 = vmatprep.subr.mxu0 0.0
  %262 = vmatpush1.msra.mxu0 0.0
  %263 = vmatprep.subr.mxu0 0.0
  %264 = vmatpush1.msra.mxu0 0.0
  %265 = vmatprep.subr.mxu0 0.0
  %266 = vmatpush1.msra.mxu0 0.0
  %267 = vmatprep.subr.mxu0 0.0
  %268 = vmatpush1.msra.mxu0 0.0
  %269 = vmatprep.subr.mxu0 0.0
  %270 = vmatpush1.msra.mxu0 0.0
  %271 = vmatprep.subr.mxu0 0.0
  %272 = vmatpush1.msra.mxu0 0.0
  %273 = vmatprep.subr.mxu0 0.0
  %274 = vmatpush1.msra.mxu0 0.0
  %275 = vmatprep.subr.mxu0 0.0
  %276 = vmatpush1.msra.mxu0 0.0
  %277 = vmatprep.subr.mxu0 0.0
  %278 = vmatpush1.msra.mxu0 0.0
  %279 = vmatprep.subr.mxu0 0.0
  %280 = vmatpush1.msra.mxu0 0.0
  %281 = vmatprep.mubr.f32.mxu0 0.0
  %282 = vmatmul.mubr.f32.gmra.mrb[0].mxu0 %v212
  %v283 = vpop.f32.mrb[0].mxu0
  %v284 = vadd.f32 0.0, %v283
  %v285 = vpop.f32.mrb[0].mxu0
  %286 = vmatprep.mubr.f32.mxu0 0.0
  %287 = vmatmul.mubr.f32.gmra.mrb[0].mxu0 %v215
  %v288 = vpop.f32.mrb[0].mxu0
  %v289 = vadd.f32 0.0, %v288
  %v290 = vpop.f32.mrb[0].mxu0
  %291 = vdwg.mxu0
  %294 = vrot.lane.b32.xlu0 %v284, 124
  %v295 = vpop.permute.xlu0 %294
  %296 = vrot.lane.b32.xlu0 %v289, 124
  %v297 = vpop.permute.xlu0 %296
  %298 = vrot.lane.b32.xlu0 %v284, 120
  %v299 = vpop.permute.xlu0 %298
  %300 = vrot.lane.b32.xlu0 %v289, 120
  %v301 = vpop.permute.xlu0 %300
  %302 = vrot.lane.b32.xlu0 %v284, 116
  %v303 = vpop.permute.xlu0 %302
  %304 = vrot.lane.b32.xlu0 %v289, 116
  %v305 = vpop.permute.xlu0 %304
  %306 = vrot.lane.b32.xlu0 %v284, 112
  %v307 = vpop.permute.xlu0 %306
  %308 = vrot.lane.b32.xlu0 %v289, 112
  %v309 = vpop.permute.xlu0 %308
  %310 = vrot.lane.b32.xlu0 %v284, 108
  %v311 = vpop.permute.xlu0 %310
  %312 = vrot.lane.b32.xlu0 %v289, 108
  %v313 = vpop.permute.xlu0 %312
  %314 = vrot.lane.b32.xlu0 %v284, 104
  %v315 = vpop.permute.xlu0 %314
  %316 = vrot.lane.b32.xlu0 %v289, 104
  %v317 = vpop.permute.xlu0 %316
  %318 = vrot.lane.b32.xlu0 %v284, 100
  %v319 = vpop.permute.xlu0 %318
  %320 = vrot.lane.b32.xlu0 %v289, 100
  %v321 = vpop.permute.xlu0 %320
  %322 = vrot.lane.b32.xlu0 %v284, 96
  %v323 = vpop.permute.xlu0 %322
  %324 = vrot.lane.b32.xlu0 %v289, 96
  %v325 = vpop.permute.xlu0 %324
  %vm326 = vcmask 31744
  %v327 = vsel %vm326, %v284, 0
  %v329 = vsel %vm326, %v289, 0
  %v331 = vsel %vm326, %v323, 0
  %v333 = vsel %vm326, %v325, 0
  %335 = vmatprep.subr.mxu0 0.0
  %336 = vmatpush1.xpose.msra.mxu0 %v331
  %337 = vmatprep.subr.mxu0 0.0
  %338 = vmatpush1.xpose.msra.mxu0 %v333
  %339 = vmatprep.subr.mxu0 0.0
  %340 = vmatpush1.xpose.msra.mxu0 0.0
  %341 = vmatprep.subr.mxu0 0.0
  %342 = vmatpush1.xpose.msra.mxu0 0.0
  %343 = vmatprep.subr.mxu0 0.0
  %344 = vmatpush1.xpose.msra.mxu0 0.0
  %345 = vmatprep.subr.mxu0 0.0
  %346 = vmatpush1.xpose.msra.mxu0 0.0
  %347 = vmatprep.subr.mxu0 0.0
  %348 = vmatpush1.xpose.msra.mxu0 0.0
  %349 = vmatprep.subr.mxu0 0.0
  %350 = vmatpush1.xpose.msra.mxu0 0.0
  %351 = vmatprep.subr.mxu0 0.0
  %352 = vmatpush1.xpose.msra.mxu0 0.0
  %353 = vmatprep.subr.mxu0 0.0
  %354 = vmatpush1.xpose.msra.mxu0 0.0
  %355 = vmatprep.subr.mxu0 0.0
  %356 = vmatpush1.xpose.msra.mxu0 0.0
  %357 = vmatprep.subr.mxu0 0.0
  %358 = vmatpush1.xpose.msra.mxu0 0.0
  %359 = vmatprep.subr.mxu0 0.0
  %360 = vmatpush1.xpose.msra.mxu0 0.0
  %361 = vmatprep.subr.mxu0 0.0
  %362 = vmatpush1.xpose.msra.mxu0 0.0
  %363 = vmatprep.subr.mxu0 0.0
  %364 = vmatpush1.xpose.msra.mxu0 0.0
  %365 = vmatprep.subr.mxu0 0.0
  %366 = vmatpush1.xpose.msra.mxu0 0.0
  %367 = vmatprep.subr.mxu0 0.0
  %368 = vmatpush1.xpose.msra.mxu0 0.0
  %369 = vmatprep.subr.mxu0 0.0
  %370 = vmatpush1.xpose.msra.mxu0 0.0
  %371 = vmatprep.subr.mxu0 0.0
  %372 = vmatpush1.xpose.msra.mxu0 0.0
  %373 = vmatprep.subr.mxu0 0.0
  %374 = vmatpush1.xpose.msra.mxu0 0.0
  %375 = vmatprep.subr.mxu0 0.0
  %376 = vmatpush1.xpose.msra.mxu0 0.0
  %377 = vmatprep.subr.mxu0 0.0
  %378 = vmatpush1.xpose.msra.mxu0 0.0
  %379 = vmatprep.subr.mxu0 0.0
  %380 = vmatpush1.xpose.msra.mxu0 0.0
  %381 = vmatprep.subr.mxu0 0.0
  %382 = vmatpush1.xpose.msra.mxu0 0.0
  %383 = vmatprep.subr.mxu0 0.0
  %384 = vmatpush1.xpose.msra.mxu0 0.0
  %385 = vmatprep.subr.mxu0 0.0
  %386 = vmatpush1.xpose.msra.mxu0 0.0
  %387 = vmatprep.subr.mxu0 0.0
  %388 = vmatpush1.xpose.msra.mxu0 0.0
  %389 = vmatprep.subr.mxu0 0.0
  %390 = vmatpush1.xpose.msra.mxu0 0.0
  %391 = vmatprep.subr.mxu0 0.0
  %392 = vmatpush1.xpose.msra.mxu0 0.0
  %393 = vmatprep.subr.mxu0 0.0
  %394 = vmatpush1.xpose.msra.mxu0 0.0
  %395 = vmatprep.subr.mxu0 0.0
  %396 = vmatpush1.xpose.msra.mxu0 0.0
  %397 = vmatprep.subr.mxu0 0.0
  %398 = vmatpush1.xpose.msra.mxu0 0.0
  %399 = vmatprep.mubr.f32.mxu0 0.0
  %400 = vmatmul.mubr.f32.gmra.mrb[0].mxu0 %v327
  %v401 = vpop.f32.mrb[0].mxu0
  %v402 = vadd.f32 0.0, %v401
  %v403 = vpop.f32.mrb[0].mxu0
  %404 = vmatprep.mubr.f32.mxu0 0.0
  %405 = vmatmul.mubr.f32.gmra.mrb[0].mxu0 %v329
  %v406 = vpop.f32.mrb[0].mxu0
  %v407 = vadd.f32 0.0, %v406
  %v408 = vpop.f32.mrb[0].mxu0
  %409 = vdwg.mxu0
  %410 = vrot.lane.b32.xlu0 %v295, 96
  %v411 = vpop.permute.xlu0 %410
  %412 = vrot.lane.b32.xlu0 %v297, 96
  %v413 = vpop.permute.xlu0 %412
  %v414 = vsel %vm326, %v295, 0
  %v416 = vsel %vm326, %v297, 0
  %v418 = vsel %vm326, %v411, 0
  %v420 = vsel %vm326, %v413, 0
  %422 = vmatprep.subr.mxu0 0.0
  %423 = vmatpush1.xpose.msra.mxu0 %v418
  %424 = vmatprep.subr.mxu0 0.0
  %425 = vmatpush1.xpose.msra.mxu0 %v420
  %426 = vmatprep.subr.mxu0 0.0
  %427 = vmatpush1.xpose.msra.mxu0 0.0
  %428 = vmatprep.subr.mxu0 0.0
  %429 = vmatpush1.xpose.msra.mxu0 0.0
  %430 = vmatprep.subr.mxu0 0.0
  %431 = vmatpush1.xpose.msra.mxu0 0.0
  %432 = vmatprep.subr.mxu0 0.0
  %433 = vmatpush1.xpose.msra.mxu0 0.0
  %434 = vmatprep.subr.mxu0 0.0
  %435 = vmatpush1.xpose.msra.mxu0 0.0
  %436 = vmatprep.subr.mxu0 0.0
  %437 = vmatpush1.xpose.msra.mxu0 0.0
  %438 = vmatprep.subr.mxu0 0.0
  %439 = vmatpush1.xpose.msra.mxu0 0.0
  %440 = vmatprep.subr.mxu0 0.0
  %441 = vmatpush1.xpose.msra.mxu0 0.0
  %442 = vmatprep.subr.mxu0 0.0
  %443 = vmatpush1.xpose.msra.mxu0 0.0
  %444 = vmatprep.subr.mxu0 0.0
  %445 = vmatpush1.xpose.msra.mxu0 0.0
  %446 = vmatprep.subr.mxu0 0.0
  %447 = vmatpush1.xpose.msra.mxu0 0.0
  %448 = vmatprep.subr.mxu0 0.0
  %449 = vmatpush1.xpose.msra.mxu0 0.0
  %450 = vmatprep.subr.mxu0 0.0
  %451 = vmatpush1.xpose.msra.mxu0 0.0
  %452 = vmatprep.subr.mxu0 0.0
  %453 = vmatpush1.xpose.msra.mxu0 0.0
  %454 = vmatprep.subr.mxu0 0.0
  %455 = vmatpush1.xpose.msra.mxu0 0.0
  %456 = vmatprep.subr.mxu0 0.0
  %457 = vmatpush1.xpose.msra.mxu0 0.0
  %458 = vmatprep.subr.mxu0 0.0
  %459 = vmatpush1.xpose.msra.mxu0 0.0
  %460 = vmatprep.subr.mxu0 0.0
  %461 = vmatpush1.xpose.msra.mxu0 0.0
  %462 = vmatprep.subr.mxu0 0.0
  %463 = vmatpush1.xpose.msra.mxu0 0.0
  %464 = vmatprep.subr.mxu0 0.0
  %465 = vmatpush1.xpose.msra.mxu0 0.0
  %466 = vmatprep.subr.mxu0 0.0
  %467 = vmatpush1.xpose.msra.mxu0 0.0
  %468 = vmatprep.subr.mxu0 0.0
  %469 = vmatpush1.xpose.msra.mxu0 0.0
  %470 = vmatprep.subr.mxu0 0.0
  %471 = vmatpush1.xpose.msra.mxu0 0.0
  %472 = vmatprep.subr.mxu0 0.0
  %473 = vmatpush1.xpose.msra.mxu0 0.0
  %474 = vmatprep.subr.mxu0 0.0
  %475 = vmatpush1.xpose.msra.mxu0 0.0
  %476 = vmatprep.subr.mxu0 0.0
  %477 = vmatpush1.xpose.msra.mxu0 0.0
  %478 = vmatprep.subr.mxu0 0.0
  %479 = vmatpush1.xpose.msra.mxu0 0.0
  %480 = vmatprep.subr.mxu0 0.0
  %481 = vmatpush1.xpose.msra.mxu0 0.0
  %482 = vmatprep.subr.mxu0 0.0
  %483 = vmatpush1.xpose.msra.mxu0 0.0
  %484 = vmatprep.subr.mxu0 0.0
  %485 = vmatpush1.xpose.msra.mxu0 0.0
  %486 = vmatprep.mubr.f32.mxu0 0.0
  %487 = vmatmul.mubr.f32.gmra.mrb[0].mxu0 %v414
  %v488 = vpop.f32.mrb[0].mxu0
  %v489 = vadd.f32 0.0, %v488
  %v490 = vpop.f32.mrb[0].mxu0
  %491 = vmatprep.mubr.f32.mxu0 0.0
  %492 = vmatmul.mubr.f32.gmra.mrb[0].mxu0 %v416
  %v493 = vpop.f32.mrb[0].mxu0
  %v494 = vadd.f32 0.0, %v493
  %v495 = vpop.f32.mrb[0].mxu0
  %496 = vdwg.mxu0
  %497 = vrot.lane.b32.xlu0 %v299, 96
  %v498 = vpop.permute.xlu0 %497
  %499 = vrot.lane.b32.xlu0 %v301, 96
  %v500 = vpop.permute.xlu0 %499
  %v501 = vsel %vm326, %v299, 0
  %v503 = vsel %vm326, %v301, 0
  %v505 = vsel %vm326, %v498, 0
  %v507 = vsel %vm326, %v500, 0
  %509 = vmatprep.subr.mxu0 0.0
  %510 = vmatpush1.xpose.msra.mxu0 %v505
  %511 = vmatprep.subr.mxu0 0.0
  %512 = vmatpush1.xpose.msra.mxu0 %v507
  %513 = vmatprep.subr.mxu0 0.0
  %514 = vmatpush1.xpose.msra.mxu0 0.0
  %515 = vmatprep.subr.mxu0 0.0
  %516 = vmatpush1.xpose.msra.mxu0 0.0
  %517 = vmatprep.subr.mxu0 0.0
  %518 = vmatpush1.xpose.msra.mxu0 0.0
  %519 = vmatprep.subr.mxu0 0.0
  %520 = vmatpush1.xpose.msra.mxu0 0.0
  %521 = vmatprep.subr.mxu0 0.0
  %522 = vmatpush1.xpose.msra.mxu0 0.0
  %523 = vmatprep.subr.mxu0 0.0
  %524 = vmatpush1.xpose.msra.mxu0 0.0
  %525 = vmatprep.subr.mxu0 0.0
  %526 = vmatpush1.xpose.msra.mxu0 0.0
  %527 = vmatprep.subr.mxu0 0.0
  %528 = vmatpush1.xpose.msra.mxu0 0.0
  %529 = vmatprep.subr.mxu0 0.0
  %530 = vmatpush1.xpose.msra.mxu0 0.0
  %531 = vmatprep.subr.mxu0 0.0
  %532 = vmatpush1.xpose.msra.mxu0 0.0
  %533 = vmatprep.subr.mxu0 0.0
  %534 = vmatpush1.xpose.msra.mxu0 0.0
  %535 = vmatprep.subr.mxu0 0.0
  %536 = vmatpush1.xpose.msra.mxu0 0.0
  %537 = vmatprep.subr.mxu0 0.0
  %538 = vmatpush1.xpose.msra.mxu0 0.0
  %539 = vmatprep.subr.mxu0 0.0
  %540 = vmatpush1.xpose.msra.mxu0 0.0
  %541 = vmatprep.subr.mxu0 0.0
  %542 = vmatpush1.xpose.msra.mxu0 0.0
  %543 = vmatprep.subr.mxu0 0.0
  %544 = vmatpush1.xpose.msra.mxu0 0.0
  %545 = vmatprep.subr.mxu0 0.0
  %546 = vmatpush1.xpose.msra.mxu0 0.0
  %547 = vmatprep.subr.mxu0 0.0
  %548 = vmatpush1.xpose.msra.mxu0 0.0
  %549 = vmatprep.subr.mxu0 0.0
  %550 = vmatpush1.xpose.msra.mxu0 0.0
  %551 = vmatprep.subr.mxu0 0.0
  %552 = vmatpush1.xpose.msra.mxu0 0.0
  %553 = vmatprep.subr.mxu0 0.0
  %554 = vmatpush1.xpose.msra.mxu0 0.0
  %555 = vmatprep.subr.mxu0 0.0
  %556 = vmatpush1.xpose.msra.mxu0 0.0
  %557 = vmatprep.subr.mxu0 0.0
  %558 = vmatpush1.xpose.msra.mxu0 0.0
  %559 = vmatprep.subr.mxu0 0.0
  %560 = vmatpush1.xpose.msra.mxu0 0.0
  %561 = vmatprep.subr.mxu0 0.0
  %562 = vmatpush1.xpose.msra.mxu0 0.0
  %563 = vmatprep.subr.mxu0 0.0
  %564 = vmatpush1.xpose.msra.mxu0 0.0
  %565 = vmatprep.subr.mxu0 0.0
  %566 = vmatpush1.xpose.msra.mxu0 0.0
  %567 = vmatprep.subr.mxu0 0.0
  %568 = vmatpush1.xpose.msra.mxu0 0.0
  %569 = vmatprep.subr.mxu0 0.0
  %570 = vmatpush1.xpose.msra.mxu0 0.0
  %571 = vmatprep.subr.mxu0 0.0
  %572 = vmatpush1.xpose.msra.mxu0 0.0
  %573 = vmatprep.mubr.f32.mxu0 0.0
  %574 = vmatmul.mubr.f32.gmra.mrb[0].mxu0 %v501
  %v575 = vpop.f32.mrb[0].mxu0
  %v576 = vadd.f32 0.0, %v575
  %v577 = vpop.f32.mrb[0].mxu0
  %578 = vmatprep.mubr.f32.mxu0 0.0
  %579 = vmatmul.mubr.f32.gmra.mrb[0].mxu0 %v503
  %v580 = vpop.f32.mrb[0].mxu0
  %v581 = vadd.f32 0.0, %v580
  %v582 = vpop.f32.mrb[0].mxu0
  %583 = vdwg.mxu0
  %584 = vrot.lane.b32.xlu0 %v303, 96
  %v585 = vpop.permute.xlu0 %584
  %586 = vrot.lane.b32.xlu0 %v305, 96
  %v587 = vpop.permute.xlu0 %586
  %v588 = vsel %vm326, %v303, 0
  %v590 = vsel %vm326, %v305, 0
  %v592 = vsel %vm326, %v585, 0
  %v594 = vsel %vm326, %v587, 0
  %596 = vmatprep.subr.mxu0 0.0
  %597 = vmatpush1.xpose.msra.mxu0 %v592
  %598 = vmatprep.subr.mxu0 0.0
  %599 = vmatpush1.xpose.msra.mxu0 %v594
  %600 = vmatprep.subr.mxu0 0.0
  %601 = vmatpush1.xpose.msra.mxu0 0.0
  %602 = vmatprep.subr.mxu0 0.0
  %603 = vmatpush1.xpose.msra.mxu0 0.0
  %604 = vmatprep.subr.mxu0 0.0
  %605 = vmatpush1.xpose.msra.mxu0 0.0
  %606 = vmatprep.subr.mxu0 0.0
  %607 = vmatpush1.xpose.msra.mxu0 0.0
  %608 = vmatprep.subr.mxu0 0.0
  %609 = vmatpush1.xpose.msra.mxu0 0.0
  %610 = vmatprep.subr.mxu0 0.0
  %611 = vmatpush1.xpose.msra.mxu0 0.0
  %612 = vmatprep.subr.mxu0 0.0
  %613 = vmatpush1.xpose.msra.mxu0 0.0
  %614 = vmatprep.subr.mxu0 0.0
  %615 = vmatpush1.xpose.msra.mxu0 0.0
  %616 = vmatprep.subr.mxu0 0.0
  %617 = vmatpush1.xpose.msra.mxu0 0.0
  %618 = vmatprep.subr.mxu0 0.0
  %619 = vmatpush1.xpose.msra.mxu0 0.0
  %620 = vmatprep.subr.mxu0 0.0
  %621 = vmatpush1.xpose.msra.mxu0 0.0
  %622 = vmatprep.subr.mxu0 0.0
  %623 = vmatpush1.xpose.msra.mxu0 0.0
  %624 = vmatprep.subr.mxu0 0.0
  %625 = vmatpush1.xpose.msra.mxu0 0.0
  %626 = vmatprep.subr.mxu0 0.0
  %627 = vmatpush1.xpose.msra.mxu0 0.0
  %628 = vmatprep.subr.mxu0 0.0
  %629 = vmatpush1.xpose.msra.mxu0 0.0
  %630 = vmatprep.subr.mxu0 0.0
  %631 = vmatpush1.xpose.msra.mxu0 0.0
  %632 = vmatprep.subr.mxu0 0.0
  %633 = vmatpush1.xpose.msra.mxu0 0.0
  %634 = vmatprep.subr.mxu0 0.0
  %635 = vmatpush1.xpose.msra.mxu0 0.0
  %636 = vmatprep.subr.mxu0 0.0
  %637 = vmatpush1.xpose.msra.mxu0 0.0
  %638 = vmatprep.subr.mxu0 0.0
  %639 = vmatpush1.xpose.msra.mxu0 0.0
  %640 = vmatprep.subr.mxu0 0.0
  %641 = vmatpush1.xpose.msra.mxu0 0.0
  %642 = vmatprep.subr.mxu0 0.0
  %643 = vmatpush1.xpose.msra.mxu0 0.0
  %644 = vmatprep.subr.mxu0 0.0
  %645 = vmatpush1.xpose.msra.mxu0 0.0
  %646 = vmatprep.subr.mxu0 0.0
  %647 = vmatpush1.xpose.msra.mxu0 0.0
  %648 = vmatprep.subr.mxu0 0.0
  %649 = vmatpush1.xpose.msra.mxu0 0.0
  %650 = vmatprep.subr.mxu0 0.0
  %651 = vmatpush1.xpose.msra.mxu0 0.0
  %652 = vmatprep.subr.mxu0 0.0
  %653 = vmatpush1.xpose.msra.mxu0 0.0
  %654 = vmatprep.subr.mxu0 0.0
  %655 = vmatpush1.xpose.msra.mxu0 0.0
  %656 = vmatprep.subr.mxu0 0.0
  %657 = vmatpush1.xpose.msra.mxu0 0.0
  %658 = vmatprep.subr.mxu0 0.0
  %659 = vmatpush1.xpose.msra.mxu0 0.0
  %660 = vmatprep.mubr.f32.mxu0 0.0
  %661 = vmatmul.mubr.f32.gmra.mrb[0].mxu0 %v588
  %v662 = vpop.f32.mrb[0].mxu0
  %v663 = vadd.f32 0.0, %v662
  %v664 = vpop.f32.mrb[0].mxu0
  %665 = vmatprep.mubr.f32.mxu0 0.0
  %666 = vmatmul.mubr.f32.gmra.mrb[0].mxu0 %v590
  %v667 = vpop.f32.mrb[0].mxu0
  %v668 = vadd.f32 0.0, %v667
  %v669 = vpop.f32.mrb[0].mxu0
  %670 = vdwg.mxu0
  %671 = vrot.lane.b32.xlu0 %v307, 96
  %v672 = vpop.permute.xlu0 %671
  %673 = vrot.lane.b32.xlu0 %v309, 96
  %v674 = vpop.permute.xlu0 %673
  %v675 = vsel %vm326, %v307, 0
  %v677 = vsel %vm326, %v309, 0
  %v679 = vsel %vm326, %v672, 0
  %v681 = vsel %vm326, %v674, 0
  %683 = vmatprep.subr.mxu0 0.0
  %684 = vmatpush1.xpose.msra.mxu0 %v679
  %685 = vmatprep.subr.mxu0 0.0
  %686 = vmatpush1.xpose.msra.mxu0 %v681
  %687 = vmatprep.subr.mxu0 0.0
  %688 = vmatpush1.xpose.msra.mxu0 0.0
  %689 = vmatprep.subr.mxu0 0.0
  %690 = vmatpush1.xpose.msra.mxu0 0.0
  %691 = vmatprep.subr.mxu0 0.0
  %692 = vmatpush1.xpose.msra.mxu0 0.0
  %693 = vmatprep.subr.mxu0 0.0
  %694 = vmatpush1.xpose.msra.mxu0 0.0
  %695 = vmatprep.subr.mxu0 0.0
  %696 = vmatpush1.xpose.msra.mxu0 0.0
  %697 = vmatprep.subr.mxu0 0.0
  %698 = vmatpush1.xpose.msra.mxu0 0.0
  %699 = vmatprep.subr.mxu0 0.0
  %700 = vmatpush1.xpose.msra.mxu0 0.0
  %701 = vmatprep.subr.mxu0 0.0
  %702 = vmatpush1.xpose.msra.mxu0 0.0
  %703 = vmatprep.subr.mxu0 0.0
  %704 = vmatpush1.xpose.msra.mxu0 0.0
  %705 = vmatprep.subr.mxu0 0.0
  %706 = vmatpush1.xpose.msra.mxu0 0.0
  %707 = vmatprep.subr.mxu0 0.0
  %708 = vmatpush1.xpose.msra.mxu0 0.0
  %709 = vmatprep.subr.mxu0 0.0
  %710 = vmatpush1.xpose.msra.mxu0 0.0
  %711 = vmatprep.subr.mxu0 0.0
  %712 = vmatpush1.xpose.msra.mxu0 0.0
  %713 = vmatprep.subr.mxu0 0.0
  %714 = vmatpush1.xpose.msra.mxu0 0.0
  %715 = vmatprep.subr.mxu0 0.0
  %716 = vmatpush1.xpose.msra.mxu0 0.0
  %717 = vmatprep.subr.mxu0 0.0
  %718 = vmatpush1.xpose.msra.mxu0 0.0
  %719 = vmatprep.subr.mxu0 0.0
  %720 = vmatpush1.xpose.msra.mxu0 0.0
  %721 = vmatprep.subr.mxu0 0.0
  %722 = vmatpush1.xpose.msra.mxu0 0.0
  %723 = vmatprep.subr.mxu0 0.0
  %724 = vmatpush1.xpose.msra.mxu0 0.0
  %725 = vmatprep.subr.mxu0 0.0
  %726 = vmatpush1.xpose.msra.mxu0 0.0
  %727 = vmatprep.subr.mxu0 0.0
  %728 = vmatpush1.xpose.msra.mxu0 0.0
  %729 = vmatprep.subr.mxu0 0.0
  %730 = vmatpush1.xpose.msra.mxu0 0.0
  %731 = vmatprep.subr.mxu0 0.0
  %732 = vmatpush1.xpose.msra.mxu0 0.0
  %733 = vmatprep.subr.mxu0 0.0
  %734 = vmatpush1.xpose.msra.mxu0 0.0
  %735 = vmatprep.subr.mxu0 0.0
  %736 = vmatpush1.xpose.msra.mxu0 0.0
  %737 = vmatprep.subr.mxu0 0.0
  %738 = vmatpush1.xpose.msra.mxu0 0.0
  %739 = vmatprep.subr.mxu0 0.0
  %740 = vmatpush1.xpose.msra.mxu0 0.0
  %741 = vmatprep.subr.mxu0 0.0
  %742 = vmatpush1.xpose.msra.mxu0 0.0
  %743 = vmatprep.subr.mxu0 0.0
  %744 = vmatpush1.xpose.msra.mxu0 0.0
  %745 = vmatprep.subr.mxu0 0.0
  %746 = vmatpush1.xpose.msra.mxu0 0.0
  %747 = vmatprep.mubr.f32.mxu0 0.0
  %748 = vmatmul.mubr.f32.gmra.mrb[0].mxu0 %v675
  %v749 = vpop.f32.mrb[0].mxu0
  %v750 = vadd.f32 0.0, %v749
  %v751 = vpop.f32.mrb[0].mxu0
  %752 = vmatprep.mubr.f32.mxu0 0.0
  %753 = vmatmul.mubr.f32.gmra.mrb[0].mxu0 %v677
  %v754 = vpop.f32.mrb[0].mxu0
  %v755 = vadd.f32 0.0, %v754
  %v756 = vpop.f32.mrb[0].mxu0
  %757 = vdwg.mxu0
  %758 = vrot.lane.b32.xlu0 %v311, 96
  %v759 = vpop.permute.xlu0 %758
  %760 = vrot.lane.b32.xlu0 %v313, 96
  %v761 = vpop.permute.xlu0 %760
  %v762 = vsel %vm326, %v311, 0
  %v764 = vsel %vm326, %v313, 0
  %v766 = vsel %vm326, %v759, 0
  %v768 = vsel %vm326, %v761, 0
  %770 = vmatprep.subr.mxu0 0.0
  %771 = vmatpush1.xpose.msra.mxu0 %v766
  %772 = vmatprep.subr.mxu0 0.0
  %773 = vmatpush1.xpose.msra.mxu0 %v768
  %774 = vmatprep.subr.mxu0 0.0
  %775 = vmatpush1.xpose.msra.mxu0 0.0
  %776 = vmatprep.subr.mxu0 0.0
  %777 = vmatpush1.xpose.msra.mxu0 0.0
  %778 = vmatprep.subr.mxu0 0.0
  %779 = vmatpush1.xpose.msra.mxu0 0.0
  %780 = vmatprep.subr.mxu0 0.0
  %781 = vmatpush1.xpose.msra.mxu0 0.0
  %782 = vmatprep.subr.mxu0 0.0
  %783 = vmatpush1.xpose.msra.mxu0 0.0
  %784 = vmatprep.subr.mxu0 0.0
  %785 = vmatpush1.xpose.msra.mxu0 0.0
  %786 = vmatprep.subr.mxu0 0.0
  %787 = vmatpush1.xpose.msra.mxu0 0.0
  %788 = vmatprep.subr.mxu0 0.0
  %789 = vmatpush1.xpose.msra.mxu0 0.0
  %790 = vmatprep.subr.mxu0 0.0
  %791 = vmatpush1.xpose.msra.mxu0 0.0
  %792 = vmatprep.subr.mxu0 0.0
  %793 = vmatpush1.xpose.msra.mxu0 0.0
  %794 = vmatprep.subr.mxu0 0.0
  %795 = vmatpush1.xpose.msra.mxu0 0.0
  %796 = vmatprep.subr.mxu0 0.0
  %797 = vmatpush1.xpose.msra.mxu0 0.0
  %798 = vmatprep.subr.mxu0 0.0
  %799 = vmatpush1.xpose.msra.mxu0 0.0
  %800 = vmatprep.subr.mxu0 0.0
  %801 = vmatpush1.xpose.msra.mxu0 0.0
  %802 = vmatprep.subr.mxu0 0.0
  %803 = vmatpush1.xpose.msra.mxu0 0.0
  %804 = vmatprep.subr.mxu0 0.0
  %805 = vmatpush1.xpose.msra.mxu0 0.0
  %806 = vmatprep.subr.mxu0 0.0
  %807 = vmatpush1.xpose.msra.mxu0 0.0
  %808 = vmatprep.subr.mxu0 0.0
  %809 = vmatpush1.xpose.msra.mxu0 0.0
  %810 = vmatprep.subr.mxu0 0.0
  %811 = vmatpush1.xpose.msra.mxu0 0.0
  %812 = vmatprep.subr.mxu0 0.0
  %813 = vmatpush1.xpose.msra.mxu0 0.0
  %814 = vmatprep.subr.mxu0 0.0
  %815 = vmatpush1.xpose.msra.mxu0 0.0
  %816 = vmatprep.subr.mxu0 0.0
  %817 = vmatpush1.xpose.msra.mxu0 0.0
  %818 = vmatprep.subr.mxu0 0.0
  %819 = vmatpush1.xpose.msra.mxu0 0.0
  %820 = vmatprep.subr.mxu0 0.0
  %821 = vmatpush1.xpose.msra.mxu0 0.0
  %822 = vmatprep.subr.mxu0 0.0
  %823 = vmatpush1.xpose.msra.mxu0 0.0
  %824 = vmatprep.subr.mxu0 0.0
  %825 = vmatpush1.xpose.msra.mxu0 0.0
  %826 = vmatprep.subr.mxu0 0.0
  %827 = vmatpush1.xpose.msra.mxu0 0.0
  %828 = vmatprep.subr.mxu0 0.0
  %829 = vmatpush1.xpose.msra.mxu0 0.0
  %830 = vmatprep.subr.mxu0 0.0
  %831 = vmatpush1.xpose.msra.mxu0 0.0
  %832 = vmatprep.subr.mxu0 0.0
  %833 = vmatpush1.xpose.msra.mxu0 0.0
  %834 = vmatprep.mubr.f32.mxu0 0.0
  %835 = vmatmul.mubr.f32.gmra.mrb[0].mxu0 %v762
  %v836 = vpop.f32.mrb[0].mxu0
  %v837 = vadd.f32 0.0, %v836
  %v838 = vpop.f32.mrb[0].mxu0
  %839 = vmatprep.mubr.f32.mxu0 0.0
  %840 = vmatmul.mubr.f32.gmra.mrb[0].mxu0 %v764
  %v841 = vpop.f32.mrb[0].mxu0
  %v842 = vadd.f32 0.0, %v841
  %v843 = vpop.f32.mrb[0].mxu0
  %844 = vdwg.mxu0
  %845 = vrot.lane.b32.xlu0 %v315, 96
  %v846 = vpop.permute.xlu0 %845
  %847 = vrot.lane.b32.xlu0 %v317, 96
  %v848 = vpop.permute.xlu0 %847
  %v849 = vsel %vm326, %v315, 0
  %v851 = vsel %vm326, %v317, 0
  %v853 = vsel %vm326, %v846, 0
  %v855 = vsel %vm326, %v848, 0
  %857 = vmatprep.subr.mxu0 0.0
  %858 = vmatpush1.xpose.msra.mxu0 %v853
  %859 = vmatprep.subr.mxu0 0.0
  %860 = vmatpush1.xpose.msra.mxu0 %v855
  %861 = vmatprep.subr.mxu0 0.0
  %862 = vmatpush1.xpose.msra.mxu0 0.0
  %863 = vmatprep.subr.mxu0 0.0
  %864 = vmatpush1.xpose.msra.mxu0 0.0
  %865 = vmatprep.subr.mxu0 0.0
  %866 = vmatpush1.xpose.msra.mxu0 0.0
  %867 = vmatprep.subr.mxu0 0.0
  %868 = vmatpush1.xpose.msra.mxu0 0.0
  %869 = vmatprep.subr.mxu0 0.0
  %870 = vmatpush1.xpose.msra.mxu0 0.0
  %871 = vmatprep.subr.mxu0 0.0
  %872 = vmatpush1.xpose.msra.mxu0 0.0
  %873 = vmatprep.subr.mxu0 0.0
  %874 = vmatpush1.xpose.msra.mxu0 0.0
  %875 = vmatprep.subr.mxu0 0.0
  %876 = vmatpush1.xpose.msra.mxu0 0.0
  %877 = vmatprep.subr.mxu0 0.0
  %878 = vmatpush1.xpose.msra.mxu0 0.0
  %879 = vmatprep.subr.mxu0 0.0
  %880 = vmatpush1.xpose.msra.mxu0 0.0
  %881 = vmatprep.subr.mxu0 0.0
  %882 = vmatpush1.xpose.msra.mxu0 0.0
  %883 = vmatprep.subr.mxu0 0.0
  %884 = vmatpush1.xpose.msra.mxu0 0.0
  %885 = vmatprep.subr.mxu0 0.0
  %886 = vmatpush1.xpose.msra.mxu0 0.0
  %887 = vmatprep.subr.mxu0 0.0
  %888 = vmatpush1.xpose.msra.mxu0 0.0
  %889 = vmatprep.subr.mxu0 0.0
  %890 = vmatpush1.xpose.msra.mxu0 0.0
  %891 = vmatprep.subr.mxu0 0.0
  %892 = vmatpush1.xpose.msra.mxu0 0.0
  %893 = vmatprep.subr.mxu0 0.0
  %894 = vmatpush1.xpose.msra.mxu0 0.0
  %895 = vmatprep.subr.mxu0 0.0
  %896 = vmatpush1.xpose.msra.mxu0 0.0
  %897 = vmatprep.subr.mxu0 0.0
  %898 = vmatpush1.xpose.msra.mxu0 0.0
  %899 = vmatprep.subr.mxu0 0.0
  %900 = vmatpush1.xpose.msra.mxu0 0.0
  %901 = vmatprep.subr.mxu0 0.0
  %902 = vmatpush1.xpose.msra.mxu0 0.0
  %903 = vmatprep.subr.mxu0 0.0
  %904 = vmatpush1.xpose.msra.mxu0 0.0
  %905 = vmatprep.subr.mxu0 0.0
  %906 = vmatpush1.xpose.msra.mxu0 0.0
  %907 = vmatprep.subr.mxu0 0.0
  %908 = vmatpush1.xpose.msra.mxu0 0.0
  %909 = vmatprep.subr.mxu0 0.0
  %910 = vmatpush1.xpose.msra.mxu0 0.0
  %911 = vmatprep.subr.mxu0 0.0
  %912 = vmatpush1.xpose.msra.mxu0 0.0
  %913 = vmatprep.subr.mxu0 0.0
  %914 = vmatpush1.xpose.msra.mxu0 0.0
  %915 = vmatprep.subr.mxu0 0.0
  %916 = vmatpush1.xpose.msra.mxu0 0.0
  %917 = vmatprep.subr.mxu0 0.0
  %918 = vmatpush1.xpose.msra.mxu0 0.0
  %919 = vmatprep.subr.mxu0 0.0
  %920 = vmatpush1.xpose.msra.mxu0 0.0
  %921 = vmatprep.mubr.f32.mxu0 0.0
  %922 = vmatmul.mubr.f32.gmra.mrb[0].mxu0 %v849
  %v923 = vpop.f32.mrb[0].mxu0
  %v924 = vadd.f32 0.0, %v923
  %v925 = vpop.f32.mrb[0].mxu0
  %926 = vmatprep.mubr.f32.mxu0 0.0
  %927 = vmatmul.mubr.f32.gmra.mrb[0].mxu0 %v851
  %v928 = vpop.f32.mrb[0].mxu0
  %v929 = vadd.f32 0.0, %v928
  %v930 = vpop.f32.mrb[0].mxu0
  %931 = vdwg.mxu0
  %932 = vrot.lane.b32.xlu0 %v319, 96
  %v933 = vpop.permute.xlu0 %932
  %934 = vrot.lane.b32.xlu0 %v321, 96
  %v935 = vpop.permute.xlu0 %934
  %v936 = vsel %vm326, %v319, 0
  %v938 = vsel %vm326, %v321, 0
  %v940 = vsel %vm326, %v933, 0
  %v942 = vsel %vm326, %v935, 0
  %944 = vmatprep.subr.mxu0 0.0
  %945 = vmatpush1.xpose.msra.mxu0 %v940
  %946 = vmatprep.subr.mxu0 0.0
  %947 = vmatpush1.xpose.msra.mxu0 %v942
  %948 = vmatprep.subr.mxu0 0.0
  %949 = vmatpush1.xpose.msra.mxu0 0.0
  %950 = vmatprep.subr.mxu0 0.0
  %951 = vmatpush1.xpose.msra.mxu0 0.0
  %952 = vmatprep.subr.mxu0 0.0
  %953 = vmatpush1.xpose.msra.mxu0 0.0
  %954 = vmatprep.subr.mxu0 0.0
  %955 = vmatpush1.xpose.msra.mxu0 0.0
  %956 = vmatprep.subr.mxu0 0.0
  %957 = vmatpush1.xpose.msra.mxu0 0.0
  %958 = vmatprep.subr.mxu0 0.0
  %959 = vmatpush1.xpose.msra.mxu0 0.0
  %960 = vmatprep.subr.mxu0 0.0
  %961 = vmatpush1.xpose.msra.mxu0 0.0
  %962 = vmatprep.subr.mxu0 0.0
  %963 = vmatpush1.xpose.msra.mxu0 0.0
  %964 = vmatprep.subr.mxu0 0.0
  %965 = vmatpush1.xpose.msra.mxu0 0.0
  %966 = vmatprep.subr.mxu0 0.0
  %967 = vmatpush1.xpose.msra.mxu0 0.0
  %968 = vmatprep.subr.mxu0 0.0
  %969 = vmatpush1.xpose.msra.mxu0 0.0
  %970 = vmatprep.subr.mxu0 0.0
  %971 = vmatpush1.xpose.msra.mxu0 0.0
  %972 = vmatprep.subr.mxu0 0.0
  %973 = vmatpush1.xpose.msra.mxu0 0.0
  %974 = vmatprep.subr.mxu0 0.0
  %975 = vmatpush1.xpose.msra.mxu0 0.0
  %976 = vmatprep.subr.mxu0 0.0
  %977 = vmatpush1.xpose.msra.mxu0 0.0
  %978 = vmatprep.subr.mxu0 0.0
  %979 = vmatpush1.xpose.msra.mxu0 0.0
  %980 = vmatprep.subr.mxu0 0.0
  %981 = vmatpush1.xpose.msra.mxu0 0.0
  %982 = vmatprep.subr.mxu0 0.0
  %983 = vmatpush1.xpose.msra.mxu0 0.0
  %984 = vmatprep.subr.mxu0 0.0
  %985 = vmatpush1.xpose.msra.mxu0 0.0
  %986 = vmatprep.subr.mxu0 0.0
  %987 = vmatpush1.xpose.msra.mxu0 0.0
  %988 = vmatprep.subr.mxu0 0.0
  %989 = vmatpush1.xpose.msra.mxu0 0.0
  %990 = vmatprep.subr.mxu0 0.0
  %991 = vmatpush1.xpose.msra.mxu0 0.0
  %992 = vmatprep.subr.mxu0 0.0
  %993 = vmatpush1.xpose.msra.mxu0 0.0
  %994 = vmatprep.subr.mxu0 0.0
  %995 = vmatpush1.xpose.msra.mxu0 0.0
  %996 = vmatprep.subr.mxu0 0.0
  %997 = vmatpush1.xpose.msra.mxu0 0.0
  %998 = vmatprep.subr.mxu0 0.0
  %999 = vmatpush1.xpose.msra.mxu0 0.0
  %1000 = vmatprep.subr.mxu0 0.0
  %1001 = vmatpush1.xpose.msra.mxu0 0.0
  %1002 = vmatprep.subr.mxu0 0.0
  %1003 = vmatpush1.xpose.msra.mxu0 0.0
  %1004 = vmatprep.subr.mxu0 0.0
  %1005 = vmatpush1.xpose.msra.mxu0 0.0
  %1006 = vmatprep.subr.mxu0 0.0
  %1007 = vmatpush1.xpose.msra.mxu0 0.0
  %1008 = vmatprep.mubr.f32.mxu0 0.0
  %1009 = vmatmul.mubr.f32.gmra.mrb[0].mxu0 %v936
  %v1010 = vpop.f32.mrb[0].mxu0
  %v1011 = vadd.f32 0.0, %v1010
  %v1012 = vpop.f32.mrb[0].mxu0
  %1013 = vmatprep.mubr.f32.mxu0 0.0
  %1014 = vmatmul.mubr.f32.gmra.mrb[0].mxu0 %v938
  %v1015 = vpop.f32.mrb[0].mxu0
  %v1016 = vadd.f32 0.0, %v1015
  %v1017 = vpop.f32.mrb[0].mxu0
  %1018 = vdwg.mxu0
  %v1019 = vmul.f32 %v402, 0.5
  %v1020 = vmul.f32 %v407, 0.5
  %v1021 = vmul.f32 %v489, 0.5
  %v1022 = vmul.f32 %v494, 0.5
  %v1023 = vmul.f32 %v576, 0.5
  %v1024 = vmul.f32 %v581, 0.5
  %v1025 = vmul.f32 %v663, 0.5
  %v1026 = vmul.f32 %v668, 0.5
  %v1027 = vmul.f32 %v750, 0.5
  %v1028 = vmul.f32 %v755, 0.5
  %v1029 = vmul.f32 %v837, 0.5
  %v1030 = vmul.f32 %v842, 0.5
  %v1031 = vmul.f32 %v924, 0.5
  %v1032 = vmul.f32 %v929, 0.5
  %v1033 = vmul.f32 %v1011, 0.5
  %v1034 = vmul.f32 %v1016, 0.5
  %v1035 = vadd.f32 %v1019, %v32
  %v1036 = vadd.f32 %v1020, %v32
  %v1037 = vadd.f32 %v1021, %v32
  %v1038 = vadd.f32 %v1022, %v32
  %v1039 = vadd.f32 %v1023, %v32
  %v1040 = vadd.f32 %v1024, %v32
  %v1041 = vadd.f32 %v1025, %v32
  %v1042 = vadd.f32 %v1026, %v32
  %v1043 = vadd.f32 %v1027, %v32
  %v1044 = vadd.f32 %v1028, %v32
  %v1045 = vadd.f32 %v1029, %v32
  %v1046 = vadd.f32 %v1030, %v32
  %v1047 = vadd.f32 %v1031, %v32
  %v1048 = vadd.f32 %v1032, %v32
  %v1049 = vadd.f32 %v1033, %v32
  %v1050 = vadd.f32 %v1034, %v32
  %v1051 = vsel %vm37, %v1035, -inf
  %1052 = vmax.xlane.f32.xlu0 %v1051
  %v1053 = vpop.xlane.xlu0 %1052
  %v1054 = vsel %vm37, %v1036, -inf
  %1055 = vmax.xlane.f32.xlu0 %v1054
  %v1056 = vpop.xlane.xlu0 %1055
  %v1057 = vsel %vm37, %v1037, -inf
  %1058 = vmax.xlane.f32.xlu0 %v1057
  %v1059 = vpop.xlane.xlu0 %1058
  %v1060 = vsel %vm37, %v1038, -inf
  %1061 = vmax.xlane.f32.xlu0 %v1060
  %v1062 = vpop.xlane.xlu0 %1061
  %v1063 = vsel %vm37, %v1039, -inf
  %1064 = vmax.xlane.f32.xlu0 %v1063
  %v1065 = vpop.xlane.xlu0 %1064
  %v1066 = vsel %vm37, %v1040, -inf
  %1067 = vmax.xlane.f32.xlu0 %v1066
  %v1068 = vpop.xlane.xlu0 %1067
  %v1069 = vsel %vm37, %v1041, -inf
  %1070 = vmax.xlane.f32.xlu0 %v1069
  %v1071 = vpop.xlane.xlu0 %1070
  %v1072 = vsel %vm37, %v1042, -inf
  %1073 = vmax.xlane.f32.xlu0 %v1072
  %v1074 = vpop.xlane.xlu0 %1073
  %v1075 = vsel %vm37, %v1043, -inf
  %1076 = vmax.xlane.f32.xlu0 %v1075
  %v1077 = vpop.xlane.xlu0 %1076
  %v1078 = vsel %vm37, %v1044, -inf
  %1079 = vmax.xlane.f32.xlu0 %v1078
  %v1080 = vpop.xlane.xlu0 %1079
  %v1081 = vsel %vm37, %v1045, -inf
  %1082 = vmax.xlane.f32.xlu0 %v1081
  %v1083 = vpop.xlane.xlu0 %1082
  %v1084 = vsel %vm37, %v1046, -inf
  %1085 = vmax.xlane.f32.xlu0 %v1084
  %v1086 = vpop.xlane.xlu0 %1085
  %v1087 = vsel %vm37, %v1047, -inf
  %1088 = vmax.xlane.f32.xlu0 %v1087
  %v1089 = vpop.xlane.xlu0 %1088
  %v1090 = vsel %vm37, %v1048, -inf
  %1091 = vmax.xlane.f32.xlu0 %v1090
  %v1092 = vpop.xlane.xlu0 %1091
  %v1093 = vsel %vm37, %v1049, -inf
  %1094 = vmax.xlane.f32.xlu0 %v1093
  %v1095 = vpop.xlane.xlu0 %1094
  %v1096 = vsel %vm37, %v1050, -inf
  %1097 = vmax.xlane.f32.xlu0 %v1096
  %v1098 = vpop.xlane.xlu0 %1097
  %v1099 = vsub.f32 %v1035, %v1053
  %v1100 = vsub.f32 %v1036, %v1056
  %v1101 = vsub.f32 %v1037, %v1059
  %v1102 = vsub.f32 %v1038, %v1062
  %v1103 = vsub.f32 %v1039, %v1065
  %v1104 = vsub.f32 %v1040, %v1068
  %v1105 = vsub.f32 %v1041, %v1071
  %v1106 = vsub.f32 %v1042, %v1074
  %v1107 = vsub.f32 %v1043, %v1077
  %v1108 = vsub.f32 %v1044, %v1080
  %v1109 = vsub.f32 %v1045, %v1083
  %v1110 = vsub.f32 %v1046, %v1086
  %v1111 = vsub.f32 %v1047, %v1089
  %v1112 = vsub.f32 %v1048, %v1092
  %v1113 = vsub.f32 %v1049, %v1095
  %v1114 = vsub.f32 %v1050, %v1098
  %v1115 = vmul.f32 %v1099, 1.442695
  %v1116 = vpow.pop %v1115
  %v1117 = vmul.f32 %v1100, 1.442695
  %v1118 = vpow.pop %v1117
  %v1119 = vmul.f32 %v1101, 1.442695
  %v1120 = vpow.pop %v1119
  %v1121 = vmul.f32 %v1102, 1.442695
  %v1122 = vpow.pop %v1121
  %v1123 = vmul.f32 %v1103, 1.442695
  %v1124 = vpow.pop %v1123
  %v1125 = vmul.f32 %v1104, 1.442695
  %v1126 = vpow.pop %v1125
  %v1127 = vmul.f32 %v1105, 1.442695
  %v1128 = vpow.pop %v1127
  %v1129 = vmul.f32 %v1106, 1.442695
  %v1130 = vpow.pop %v1129
  %v1131 = vmul.f32 %v1107, 1.442695
  %v1132 = vpow.pop %v1131
  %v1133 = vmul.f32 %v1108, 1.442695
  %v1134 = vpow.pop %v1133
  %v1135 = vmul.f32 %v1109, 1.442695
  %v1136 = vpow.pop %v1135
  %v1137 = vmul.f32 %v1110, 1.442695
  %v1138 = vpow.pop %v1137
  %v1139 = vmul.f32 %v1111, 1.442695
  %v1140 = vpow.pop %v1139
  %v1141 = vmul.f32 %v1112, 1.442695
  %v1142 = vpow.pop %v1141
  %v1143 = vmul.f32 %v1113, 1.442695
  %v1144 = vpow.pop %v1143
  %v1145 = vmul.f32 %v1114, 1.442695
  %v1146 = vpow.pop %v1145
  %v1147 = vsel %vm37, %v1116, 0.0
  %1148 = vadd.xlane.f32.xlu0 %v1147
  %v1149 = vpop.xlane.xlu0 %1148
  %v1150 = vsel %vm37, %v1118, 0.0
  %1151 = vadd.xlane.f32.xlu0 %v1150
  %v1152 = vpop.xlane.xlu0 %1151
  %v1153 = vsel %vm37, %v1120, 0.0
  %1154 = vadd.xlane.f32.xlu0 %v1153
  %v1155 = vpop.xlane.xlu0 %1154
  %v1156 = vsel %vm37, %v1122, 0.0
  %1157 = vadd.xlane.f32.xlu0 %v1156
  %v1158 = vpop.xlane.xlu0 %1157
  %v1159 = vsel %vm37, %v1124, 0.0
  %1160 = vadd.xlane.f32.xlu0 %v1159
  %v1161 = vpop.xlane.xlu0 %1160
  %v1162 = vsel %vm37, %v1126, 0.0
  %1163 = vadd.xlane.f32.xlu0 %v1162
  %v1164 = vpop.xlane.xlu0 %1163
  %v1165 = vsel %vm37, %v1128, 0.0
  %1166 = vadd.xlane.f32.xlu0 %v1165
  %v1167 = vpop.xlane.xlu0 %1166
  %v1168 = vsel %vm37, %v1130, 0.0
  %1169 = vadd.xlane.f32.xlu0 %v1168
  %v1170 = vpop.xlane.xlu0 %1169
  %v1171 = vsel %vm37, %v1132, 0.0
  %1172 = vadd.xlane.f32.xlu0 %v1171
  %v1173 = vpop.xlane.xlu0 %1172
  %v1174 = vsel %vm37, %v1134, 0.0
  %1175 = vadd.xlane.f32.xlu0 %v1174
  %v1176 = vpop.xlane.xlu0 %1175
  %v1177 = vsel %vm37, %v1136, 0.0
  %1178 = vadd.xlane.f32.xlu0 %v1177
  %v1179 = vpop.xlane.xlu0 %1178
  %v1180 = vsel %vm37, %v1138, 0.0
  %1181 = vadd.xlane.f32.xlu0 %v1180
  %v1182 = vpop.xlane.xlu0 %1181
  %v1183 = vsel %vm37, %v1140, 0.0
  %1184 = vadd.xlane.f32.xlu0 %v1183
  %v1185 = vpop.xlane.xlu0 %1184
  %v1186 = vsel %vm37, %v1142, 0.0
  %1187 = vadd.xlane.f32.xlu0 %v1186
  %v1188 = vpop.xlane.xlu0 %1187
  %v1189 = vsel %vm37, %v1144, 0.0
  %1190 = vadd.xlane.f32.xlu0 %v1189
  %v1191 = vpop.xlane.xlu0 %1190
  %v1192 = vsel %vm37, %v1146, 0.0
  %1193 = vadd.xlane.f32.xlu0 %v1192
  %v1194 = vpop.xlane.xlu0 %1193
  %v1195 = vrcp.pop %v1149
  %v1196 = vrcp.pop %v1152
  %v1197 = vrcp.pop %v1155
  %v1198 = vrcp.pop %v1158
  %v1199 = vrcp.pop %v1161
  %v1200 = vrcp.pop %v1164
  %v1201 = vrcp.pop %v1167
  %v1202 = vrcp.pop %v1170
  %v1203 = vrcp.pop %v1173
  %v1204 = vrcp.pop %v1176
  %v1205 = vrcp.pop %v1179
  %v1206 = vrcp.pop %v1182
  %v1207 = vrcp.pop %v1185
  %v1208 = vrcp.pop %v1188
  %v1209 = vrcp.pop %v1191
  %v1210 = vrcp.pop %v1194
  %v1211 = vmul.f32 %v1116, %v1195
  %v1212 = vmul.f32 %v1118, %v1196
  %v1213 = vmul.f32 %v1120, %v1197
  %v1214 = vmul.f32 %v1122, %v1198
  %v1215 = vmul.f32 %v1124, %v1199
  %v1216 = vmul.f32 %v1126, %v1200
  %v1217 = vmul.f32 %v1128, %v1201
  %v1218 = vmul.f32 %v1130, %v1202
  %v1219 = vmul.f32 %v1132, %v1203
  %v1220 = vmul.f32 %v1134, %v1204
  %v1221 = vmul.f32 %v1136, %v1205
  %v1222 = vmul.f32 %v1138, %v1206
  %v1223 = vmul.f32 %v1140, %v1207
  %v1224 = vmul.f32 %v1142, %v1208
  %v1225 = vmul.f32 %v1144, %v1209
  %v1226 = vmul.f32 %v1146, %v1210
  %1227 = vrot.lane.b32.xlu0 %v284, 64
  %v1228 = vpop.permute.xlu0 %1227
  %1229 = vrot.lane.b32.xlu0 %v289, 64
  %v1230 = vpop.permute.xlu0 %1229
  %v1234 = vsel %vm37, %v1211, 0
  %v1237 = vsel %vm37, %v1212, 0
  %1239 = vmatprep.subr.mxu0 0.0
  %1240 = vmatpush1.msra.mxu0 %v1228
  %1241 = vmatprep.subr.mxu0 0.0
  %1242 = vmatpush1.msra.mxu0 %v1230
  %1243 = vmatprep.subr.mxu0 0.0
  %1244 = vmatpush1.msra.mxu0 0.0
  %1245 = vmatprep.subr.mxu0 0.0
  %1246 = vmatpush1.msra.mxu0 0.0
  %1247 = vmatprep.subr.mxu0 0.0
  %1248 = vmatpush1.msra.mxu0 0.0
  %1249 = vmatprep.subr.mxu0 0.0
  %1250 = vmatpush1.msra.mxu0 0.0
  %1251 = vmatprep.subr.mxu0 0.0
  %1252 = vmatpush1.msra.mxu0 0.0
  %1253 = vmatprep.subr.mxu0 0.0
  %1254 = vmatpush1.msra.mxu0 0.0
  %1255 = vmatprep.subr.mxu0 0.0
  %1256 = vmatpush1.msra.mxu0 0.0
  %1257 = vmatprep.subr.mxu0 0.0
  %1258 = vmatpush1.msra.mxu0 0.0
  %1259 = vmatprep.subr.mxu0 0.0
  %1260 = vmatpush1.msra.mxu0 0.0
  %1261 = vmatprep.subr.mxu0 0.0
  %1262 = vmatpush1.msra.mxu0 0.0
  %1263 = vmatprep.subr.mxu0 0.0
  %1264 = vmatpush1.msra.mxu0 0.0
  %1265 = vmatprep.subr.mxu0 0.0
  %1266 = vmatpush1.msra.mxu0 0.0
  %1267 = vmatprep.subr.mxu0 0.0
  %1268 = vmatpush1.msra.mxu0 0.0
  %1269 = vmatprep.subr.mxu0 0.0
  %1270 = vmatpush1.msra.mxu0 0.0
  %1271 = vmatprep.subr.mxu0 0.0
  %1272 = vmatpush1.msra.mxu0 0.0
  %1273 = vmatprep.subr.mxu0 0.0
  %1274 = vmatpush1.msra.mxu0 0.0
  %1275 = vmatprep.subr.mxu0 0.0
  %1276 = vmatpush1.msra.mxu0 0.0
  %1277 = vmatprep.subr.mxu0 0.0
  %1278 = vmatpush1.msra.mxu0 0.0
  %1279 = vmatprep.subr.mxu0 0.0
  %1280 = vmatpush1.msra.mxu0 0.0
  %1281 = vmatprep.subr.mxu0 0.0
  %1282 = vmatpush1.msra.mxu0 0.0
  %1283 = vmatprep.subr.mxu0 0.0
  %1284 = vmatpush1.msra.mxu0 0.0
  %1285 = vmatprep.subr.mxu0 0.0
  %1286 = vmatpush1.msra.mxu0 0.0
  %1287 = vmatprep.subr.mxu0 0.0
  %1288 = vmatpush1.msra.mxu0 0.0
  %1289 = vmatprep.subr.mxu0 0.0
  %1290 = vmatpush1.msra.mxu0 0.0
  %1291 = vmatprep.subr.mxu0 0.0
  %1292 = vmatpush1.msra.mxu0 0.0
  %1293 = vmatprep.subr.mxu0 0.0
  %1294 = vmatpush1.msra.mxu0 0.0
  %1295 = vmatprep.subr.mxu0 0.0
  %1296 = vmatpush1.msra.mxu0 0.0
  %1297 = vmatprep.subr.mxu0 0.0
  %1298 = vmatpush1.msra.mxu0 0.0
  %1299 = vmatprep.subr.mxu0 0.0
  %1300 = vmatpush1.msra.mxu0 0.0
  %1301 = vmatprep.subr.mxu0 0.0
  %1302 = vmatpush1.msra.mxu0 0.0
  %1303 = vmatprep.mubr.f32.mxu0 0.0
  %1304 = vmatmul.mubr.f32.gmra.mrb[0].mxu0 %v1234
  %v1305 = vpop.f32.mrb[0].mxu0
  %v1306 = vadd.f32 0.0, %v1305
  %v1307 = vpop.f32.mrb[0].mxu0
  %1308 = vmatprep.mubr.f32.mxu0 0.0
  %1309 = vmatmul.mubr.f32.gmra.mrb[0].mxu0 %v1237
  %v1310 = vpop.f32.mrb[0].mxu0
  %v1311 = vadd.f32 0.0, %v1310
  %v1312 = vpop.f32.mrb[0].mxu0
  %1313 = vdwg.mxu0
  %1314 = vrot.lane.b32.xlu0 %v295, 64
  %v1315 = vpop.permute.xlu0 %1314
  %1316 = vrot.lane.b32.xlu0 %v297, 64
  %v1317 = vpop.permute.xlu0 %1316
  %v1321 = vsel %vm37, %v1213, 0
  %v1324 = vsel %vm37, %v1214, 0
  %1326 = vmatprep.subr.mxu0 0.0
  %1327 = vmatpush1.msra.mxu0 %v1315
  %1328 = vmatprep.subr.mxu0 0.0
  %1329 = vmatpush1.msra.mxu0 %v1317
  %1330 = vmatprep.subr.mxu0 0.0
  %1331 = vmatpush1.msra.mxu0 0.0
  %1332 = vmatprep.subr.mxu0 0.0
  %1333 = vmatpush1.msra.mxu0 0.0
  %1334 = vmatprep.subr.mxu0 0.0
  %1335 = vmatpush1.msra.mxu0 0.0
  %1336 = vmatprep.subr.mxu0 0.0
  %1337 = vmatpush1.msra.mxu0 0.0
  %1338 = vmatprep.subr.mxu0 0.0
  %1339 = vmatpush1.msra.mxu0 0.0
  %1340 = vmatprep.subr.mxu0 0.0
  %1341 = vmatpush1.msra.mxu0 0.0
  %1342 = vmatprep.subr.mxu0 0.0
  %1343 = vmatpush1.msra.mxu0 0.0
  %1344 = vmatprep.subr.mxu0 0.0
  %1345 = vmatpush1.msra.mxu0 0.0
  %1346 = vmatprep.subr.mxu0 0.0
  %1347 = vmatpush1.msra.mxu0 0.0
  %1348 = vmatprep.subr.mxu0 0.0
  %1349 = vmatpush1.msra.mxu0 0.0
  %1350 = vmatprep.subr.mxu0 0.0
  %1351 = vmatpush1.msra.mxu0 0.0
  %1352 = vmatprep.subr.mxu0 0.0
  %1353 = vmatpush1.msra.mxu0 0.0
  %1354 = vmatprep.subr.mxu0 0.0
  %1355 = vmatpush1.msra.mxu0 0.0
  %1356 = vmatprep.subr.mxu0 0.0
  %1357 = vmatpush1.msra.mxu0 0.0
  %1358 = vmatprep.subr.mxu0 0.0
  %1359 = vmatpush1.msra.mxu0 0.0
  %1360 = vmatprep.subr.mxu0 0.0
  %1361 = vmatpush1.msra.mxu0 0.0
  %1362 = vmatprep.subr.mxu0 0.0
  %1363 = vmatpush1.msra.mxu0 0.0
  %1364 = vmatprep.subr.mxu0 0.0
  %1365 = vmatpush1.msra.mxu0 0.0
  %1366 = vmatprep.subr.mxu0 0.0
  %1367 = vmatpush1.msra.mxu0 0.0
  %1368 = vmatprep.subr.mxu0 0.0
  %1369 = vmatpush1.msra.mxu0 0.0
  %1370 = vmatprep.subr.mxu0 0.0
  %1371 = vmatpush1.msra.mxu0 0.0
  %1372 = vmatprep.subr.mxu0 0.0
  %1373 = vmatpush1.msra.mxu0 0.0
  %1374 = vmatprep.subr.mxu0 0.0
  %1375 = vmatpush1.msra.mxu0 0.0
  %1376 = vmatprep.subr.mxu0 0.0
  %1377 = vmatpush1.msra.mxu0 0.0
  %1378 = vmatprep.subr.mxu0 0.0
  %1379 = vmatpush1.msra.mxu0 0.0
  %1380 = vmatprep.subr.mxu0 0.0
  %1381 = vmatpush1.msra.mxu0 0.0
  %1382 = vmatprep.subr.mxu0 0.0
  %1383 = vmatpush1.msra.mxu0 0.0
  %1384 = vmatprep.subr.mxu0 0.0
  %1385 = vmatpush1.msra.mxu0 0.0
  %1386 = vmatprep.subr.mxu0 0.0
  %1387 = vmatpush1.msra.mxu0 0.0
  %1388 = vmatprep.subr.mxu0 0.0
  %1389 = vmatpush1.msra.mxu0 0.0
  %1390 = vmatprep.mubr.f32.mxu0 0.0
  %1391 = vmatmul.mubr.f32.gmra.mrb[0].mxu0 %v1321
  %v1392 = vpop.f32.mrb[0].mxu0
  %v1393 = vadd.f32 0.0, %v1392
  %v1394 = vpop.f32.mrb[0].mxu0
  %1395 = vmatprep.mubr.f32.mxu0 0.0
  %1396 = vmatmul.mubr.f32.gmra.mrb[0].mxu0 %v1324
  %v1397 = vpop.f32.mrb[0].mxu0
  %v1398 = vadd.f32 0.0, %v1397
  %v1399 = vpop.f32.mrb[0].mxu0
  %1400 = vdwg.mxu0
  %1401 = vrot.lane.b32.xlu0 %v299, 64
  %v1402 = vpop.permute.xlu0 %1401
  %1403 = vrot.lane.b32.xlu0 %v301, 64
  %v1404 = vpop.permute.xlu0 %1403
  %v1408 = vsel %vm37, %v1215, 0
  %v1411 = vsel %vm37, %v1216, 0
  %1413 = vmatprep.subr.mxu0 0.0
  %1414 = vmatpush1.msra.mxu0 %v1402
  %1415 = vmatprep.subr.mxu0 0.0
  %1416 = vmatpush1.msra.mxu0 %v1404
  %1417 = vmatprep.subr.mxu0 0.0
  %1418 = vmatpush1.msra.mxu0 0.0
  %1419 = vmatprep.subr.mxu0 0.0
  %1420 = vmatpush1.msra.mxu0 0.0
  %1421 = vmatprep.subr.mxu0 0.0
  %1422 = vmatpush1.msra.mxu0 0.0
  %1423 = vmatprep.subr.mxu0 0.0
  %1424 = vmatpush1.msra.mxu0 0.0
  %1425 = vmatprep.subr.mxu0 0.0
  %1426 = vmatpush1.msra.mxu0 0.0
  %1427 = vmatprep.subr.mxu0 0.0
  %1428 = vmatpush1.msra.mxu0 0.0
  %1429 = vmatprep.subr.mxu0 0.0
  %1430 = vmatpush1.msra.mxu0 0.0
  %1431 = vmatprep.subr.mxu0 0.0
  %1432 = vmatpush1.msra.mxu0 0.0
  %1433 = vmatprep.subr.mxu0 0.0
  %1434 = vmatpush1.msra.mxu0 0.0
  %1435 = vmatprep.subr.mxu0 0.0
  %1436 = vmatpush1.msra.mxu0 0.0
  %1437 = vmatprep.subr.mxu0 0.0
  %1438 = vmatpush1.msra.mxu0 0.0
  %1439 = vmatprep.subr.mxu0 0.0
  %1440 = vmatpush1.msra.mxu0 0.0
  %1441 = vmatprep.subr.mxu0 0.0
  %1442 = vmatpush1.msra.mxu0 0.0
  %1443 = vmatprep.subr.mxu0 0.0
  %1444 = vmatpush1.msra.mxu0 0.0
  %1445 = vmatprep.subr.mxu0 0.0
  %1446 = vmatpush1.msra.mxu0 0.0
  %1447 = vmatprep.subr.mxu0 0.0
  %1448 = vmatpush1.msra.mxu0 0.0
  %1449 = vmatprep.subr.mxu0 0.0
  %1450 = vmatpush1.msra.mxu0 0.0
  %1451 = vmatprep.subr.mxu0 0.0
  %1452 = vmatpush1.msra.mxu0 0.0
  %1453 = vmatprep.subr.mxu0 0.0
  %1454 = vmatpush1.msra.mxu0 0.0
  %1455 = vmatprep.subr.mxu0 0.0
  %1456 = vmatpush1.msra.mxu0 0.0
  %1457 = vmatprep.subr.mxu0 0.0
  %1458 = vmatpush1.msra.mxu0 0.0
  %1459 = vmatprep.subr.mxu0 0.0
  %1460 = vmatpush1.msra.mxu0 0.0
  %1461 = vmatprep.subr.mxu0 0.0
  %1462 = vmatpush1.msra.mxu0 0.0
  %1463 = vmatprep.subr.mxu0 0.0
  %1464 = vmatpush1.msra.mxu0 0.0
  %1465 = vmatprep.subr.mxu0 0.0
  %1466 = vmatpush1.msra.mxu0 0.0
  %1467 = vmatprep.subr.mxu0 0.0
  %1468 = vmatpush1.msra.mxu0 0.0
  %1469 = vmatprep.subr.mxu0 0.0
  %1470 = vmatpush1.msra.mxu0 0.0
  %1471 = vmatprep.subr.mxu0 0.0
  %1472 = vmatpush1.msra.mxu0 0.0
  %1473 = vmatprep.subr.mxu0 0.0
  %1474 = vmatpush1.msra.mxu0 0.0
  %1475 = vmatprep.subr.mxu0 0.0
  %1476 = vmatpush1.msra.mxu0 0.0
  %1477 = vmatprep.mubr.f32.mxu0 0.0
  %1478 = vmatmul.mubr.f32.gmra.mrb[0].mxu0 %v1408
  %v1479 = vpop.f32.mrb[0].mxu0
  %v1480 = vadd.f32 0.0, %v1479
  %v1481 = vpop.f32.mrb[0].mxu0
  %1482 = vmatprep.mubr.f32.mxu0 0.0
  %1483 = vmatmul.mubr.f32.gmra.mrb[0].mxu0 %v1411
  %v1484 = vpop.f32.mrb[0].mxu0
  %v1485 = vadd.f32 0.0, %v1484
  %v1486 = vpop.f32.mrb[0].mxu0
  %1487 = vdwg.mxu0
  %1488 = vrot.lane.b32.xlu0 %v303, 64
  %v1489 = vpop.permute.xlu0 %1488
  %1490 = vrot.lane.b32.xlu0 %v305, 64
  %v1491 = vpop.permute.xlu0 %1490
  %v1495 = vsel %vm37, %v1217, 0
  %v1498 = vsel %vm37, %v1218, 0
  %1500 = vmatprep.subr.mxu0 0.0
  %1501 = vmatpush1.msra.mxu0 %v1489
  %1502 = vmatprep.subr.mxu0 0.0
  %1503 = vmatpush1.msra.mxu0 %v1491
  %1504 = vmatprep.subr.mxu0 0.0
  %1505 = vmatpush1.msra.mxu0 0.0
  %1506 = vmatprep.subr.mxu0 0.0
  %1507 = vmatpush1.msra.mxu0 0.0
  %1508 = vmatprep.subr.mxu0 0.0
  %1509 = vmatpush1.msra.mxu0 0.0
  %1510 = vmatprep.subr.mxu0 0.0
  %1511 = vmatpush1.msra.mxu0 0.0
  %1512 = vmatprep.subr.mxu0 0.0
  %1513 = vmatpush1.msra.mxu0 0.0
  %1514 = vmatprep.subr.mxu0 0.0
  %1515 = vmatpush1.msra.mxu0 0.0
  %1516 = vmatprep.subr.mxu0 0.0
  %1517 = vmatpush1.msra.mxu0 0.0
  %1518 = vmatprep.subr.mxu0 0.0
  %1519 = vmatpush1.msra.mxu0 0.0
  %1520 = vmatprep.subr.mxu0 0.0
  %1521 = vmatpush1.msra.mxu0 0.0
  %1522 = vmatprep.subr.mxu0 0.0
  %1523 = vmatpush1.msra.mxu0 0.0
  %1524 = vmatprep.subr.mxu0 0.0
  %1525 = vmatpush1.msra.mxu0 0.0
  %1526 = vmatprep.subr.mxu0 0.0
  %1527 = vmatpush1.msra.mxu0 0.0
  %1528 = vmatprep.subr.mxu0 0.0
  %1529 = vmatpush1.msra.mxu0 0.0
  %1530 = vmatprep.subr.mxu0 0.0
  %1531 = vmatpush1.msra.mxu0 0.0
  %1532 = vmatprep.subr.mxu0 0.0
  %1533 = vmatpush1.msra.mxu0 0.0
  %1534 = vmatprep.subr.mxu0 0.0
  %1535 = vmatpush1.msra.mxu0 0.0
  %1536 = vmatprep.subr.mxu0 0.0
  %1537 = vmatpush1.msra.mxu0 0.0
  %1538 = vmatprep.subr.mxu0 0.0
  %1539 = vmatpush1.msra.mxu0 0.0
  %1540 = vmatprep.subr.mxu0 0.0
  %1541 = vmatpush1.msra.mxu0 0.0
  %1542 = vmatprep.subr.mxu0 0.0
  %1543 = vmatpush1.msra.mxu0 0.0
  %1544 = vmatprep.subr.mxu0 0.0
  %1545 = vmatpush1.msra.mxu0 0.0
  %1546 = vmatprep.subr.mxu0 0.0
  %1547 = vmatpush1.msra.mxu0 0.0
  %1548 = vmatprep.subr.mxu0 0.0
  %1549 = vmatpush1.msra.mxu0 0.0
  %1550 = vmatprep.subr.mxu0 0.0
  %1551 = vmatpush1.msra.mxu0 0.0
  %1552 = vmatprep.subr.mxu0 0.0
  %1553 = vmatpush1.msra.mxu0 0.0
  %1554 = vmatprep.subr.mxu0 0.0
  %1555 = vmatpush1.msra.mxu0 0.0
  %1556 = vmatprep.subr.mxu0 0.0
  %1557 = vmatpush1.msra.mxu0 0.0
  %1558 = vmatprep.subr.mxu0 0.0
  %1559 = vmatpush1.msra.mxu0 0.0
  %1560 = vmatprep.subr.mxu0 0.0
  %1561 = vmatpush1.msra.mxu0 0.0
  %1562 = vmatprep.subr.mxu0 0.0
  %1563 = vmatpush1.msra.mxu0 0.0
  %1564 = vmatprep.mubr.f32.mxu0 0.0
  %1565 = vmatmul.mubr.f32.gmra.mrb[0].mxu0 %v1495
  %v1566 = vpop.f32.mrb[0].mxu0
  %v1567 = vadd.f32 0.0, %v1566
  %v1568 = vpop.f32.mrb[0].mxu0
  %1569 = vmatprep.mubr.f32.mxu0 0.0
  %1570 = vmatmul.mubr.f32.gmra.mrb[0].mxu0 %v1498
  %v1571 = vpop.f32.mrb[0].mxu0
  %v1572 = vadd.f32 0.0, %v1571
  %v1573 = vpop.f32.mrb[0].mxu0
  %1574 = vdwg.mxu0
  %1575 = vrot.lane.b32.xlu0 %v307, 64
  %v1576 = vpop.permute.xlu0 %1575
  %1577 = vrot.lane.b32.xlu0 %v309, 64
  %v1578 = vpop.permute.xlu0 %1577
  %v1582 = vsel %vm37, %v1219, 0
  %v1585 = vsel %vm37, %v1220, 0
  %1587 = vmatprep.subr.mxu0 0.0
  %1588 = vmatpush1.msra.mxu0 %v1576
  %1589 = vmatprep.subr.mxu0 0.0
  %1590 = vmatpush1.msra.mxu0 %v1578
  %1591 = vmatprep.subr.mxu0 0.0
  %1592 = vmatpush1.msra.mxu0 0.0
  %1593 = vmatprep.subr.mxu0 0.0
  %1594 = vmatpush1.msra.mxu0 0.0
  %1595 = vmatprep.subr.mxu0 0.0
  %1596 = vmatpush1.msra.mxu0 0.0
  %1597 = vmatprep.subr.mxu0 0.0
  %1598 = vmatpush1.msra.mxu0 0.0
  %1599 = vmatprep.subr.mxu0 0.0
  %1600 = vmatpush1.msra.mxu0 0.0
  %1601 = vmatprep.subr.mxu0 0.0
  %1602 = vmatpush1.msra.mxu0 0.0
  %1603 = vmatprep.subr.mxu0 0.0
  %1604 = vmatpush1.msra.mxu0 0.0
  %1605 = vmatprep.subr.mxu0 0.0
  %1606 = vmatpush1.msra.mxu0 0.0
  %1607 = vmatprep.subr.mxu0 0.0
  %1608 = vmatpush1.msra.mxu0 0.0
  %1609 = vmatprep.subr.mxu0 0.0
  %1610 = vmatpush1.msra.mxu0 0.0
  %1611 = vmatprep.subr.mxu0 0.0
  %1612 = vmatpush1.msra.mxu0 0.0
  %1613 = vmatprep.subr.mxu0 0.0
  %1614 = vmatpush1.msra.mxu0 0.0
  %1615 = vmatprep.subr.mxu0 0.0
  %1616 = vmatpush1.msra.mxu0 0.0
  %1617 = vmatprep.subr.mxu0 0.0
  %1618 = vmatpush1.msra.mxu0 0.0
  %1619 = vmatprep.subr.mxu0 0.0
  %1620 = vmatpush1.msra.mxu0 0.0
  %1621 = vmatprep.subr.mxu0 0.0
  %1622 = vmatpush1.msra.mxu0 0.0
  %1623 = vmatprep.subr.mxu0 0.0
  %1624 = vmatpush1.msra.mxu0 0.0
  %1625 = vmatprep.subr.mxu0 0.0
  %1626 = vmatpush1.msra.mxu0 0.0
  %1627 = vmatprep.subr.mxu0 0.0
  %1628 = vmatpush1.msra.mxu0 0.0
  %1629 = vmatprep.subr.mxu0 0.0
  %1630 = vmatpush1.msra.mxu0 0.0
  %1631 = vmatprep.subr.mxu0 0.0
  %1632 = vmatpush1.msra.mxu0 0.0
  %1633 = vmatprep.subr.mxu0 0.0
  %1634 = vmatpush1.msra.mxu0 0.0
  %1635 = vmatprep.subr.mxu0 0.0
  %1636 = vmatpush1.msra.mxu0 0.0
  %1637 = vmatprep.subr.mxu0 0.0
  %1638 = vmatpush1.msra.mxu0 0.0
  %1639 = vmatprep.subr.mxu0 0.0
  %1640 = vmatpush1.msra.mxu0 0.0
  %1641 = vmatprep.subr.mxu0 0.0
  %1642 = vmatpush1.msra.mxu0 0.0
  %1643 = vmatprep.subr.mxu0 0.0
  %1644 = vmatpush1.msra.mxu0 0.0
  %1645 = vmatprep.subr.mxu0 0.0
  %1646 = vmatpush1.msra.mxu0 0.0
  %1647 = vmatprep.subr.mxu0 0.0
  %1648 = vmatpush1.msra.mxu0 0.0
  %1649 = vmatprep.subr.mxu0 0.0
  %1650 = vmatpush1.msra.mxu0 0.0
  %1651 = vmatprep.mubr.f32.mxu0 0.0
  %1652 = vmatmul.mubr.f32.gmra.mrb[0].mxu0 %v1582
  %v1653 = vpop.f32.mrb[0].mxu0
  %v1654 = vadd.f32 0.0, %v1653
  %v1655 = vpop.f32.mrb[0].mxu0
  %1656 = vmatprep.mubr.f32.mxu0 0.0
  %1657 = vmatmul.mubr.f32.gmra.mrb[0].mxu0 %v1585
  %v1658 = vpop.f32.mrb[0].mxu0
  %v1659 = vadd.f32 0.0, %v1658
  %v1660 = vpop.f32.mrb[0].mxu0
  %1661 = vdwg.mxu0
  %1662 = vrot.lane.b32.xlu0 %v311, 64
  %v1663 = vpop.permute.xlu0 %1662
  %1664 = vrot.lane.b32.xlu0 %v313, 64
  %v1665 = vpop.permute.xlu0 %1664
  %v1669 = vsel %vm37, %v1221, 0
  %v1672 = vsel %vm37, %v1222, 0
  %1674 = vmatprep.subr.mxu0 0.0
  %1675 = vmatpush1.msra.mxu0 %v1663
  %1676 = vmatprep.subr.mxu0 0.0
  %1677 = vmatpush1.msra.mxu0 %v1665
  %1678 = vmatprep.subr.mxu0 0.0
  %1679 = vmatpush1.msra.mxu0 0.0
  %1680 = vmatprep.subr.mxu0 0.0
  %1681 = vmatpush1.msra.mxu0 0.0
  %1682 = vmatprep.subr.mxu0 0.0
  %1683 = vmatpush1.msra.mxu0 0.0
  %1684 = vmatprep.subr.mxu0 0.0
  %1685 = vmatpush1.msra.mxu0 0.0
  %1686 = vmatprep.subr.mxu0 0.0
  %1687 = vmatpush1.msra.mxu0 0.0
  %1688 = vmatprep.subr.mxu0 0.0
  %1689 = vmatpush1.msra.mxu0 0.0
  %1690 = vmatprep.subr.mxu0 0.0
  %1691 = vmatpush1.msra.mxu0 0.0
  %1692 = vmatprep.subr.mxu0 0.0
  %1693 = vmatpush1.msra.mxu0 0.0
  %1694 = vmatprep.subr.mxu0 0.0
  %1695 = vmatpush1.msra.mxu0 0.0
  %1696 = vmatprep.subr.mxu0 0.0
  %1697 = vmatpush1.msra.mxu0 0.0
  %1698 = vmatprep.subr.mxu0 0.0
  %1699 = vmatpush1.msra.mxu0 0.0
  %1700 = vmatprep.subr.mxu0 0.0
  %1701 = vmatpush1.msra.mxu0 0.0
  %1702 = vmatprep.subr.mxu0 0.0
  %1703 = vmatpush1.msra.mxu0 0.0
  %1704 = vmatprep.subr.mxu0 0.0
  %1705 = vmatpush1.msra.mxu0 0.0
  %1706 = vmatprep.subr.mxu0 0.0
  %1707 = vmatpush1.msra.mxu0 0.0
  %1708 = vmatprep.subr.mxu0 0.0
  %1709 = vmatpush1.msra.mxu0 0.0
  %1710 = vmatprep.subr.mxu0 0.0
  %1711 = vmatpush1.msra.mxu0 0.0
  %1712 = vmatprep.subr.mxu0 0.0
  %1713 = vmatpush1.msra.mxu0 0.0
  %1714 = vmatprep.subr.mxu0 0.0
  %1715 = vmatpush1.msra.mxu0 0.0
  %1716 = vmatprep.subr.mxu0 0.0
  %1717 = vmatpush1.msra.mxu0 0.0
  %1718 = vmatprep.subr.mxu0 0.0
  %1719 = vmatpush1.msra.mxu0 0.0
  %1720 = vmatprep.subr.mxu0 0.0
  %1721 = vmatpush1.msra.mxu0 0.0
  %1722 = vmatprep.subr.mxu0 0.0
  %1723 = vmatpush1.msra.mxu0 0.0
  %1724 = vmatprep.subr.mxu0 0.0
  %1725 = vmatpush1.msra.mxu0 0.0
  %1726 = vmatprep.subr.mxu0 0.0
  %1727 = vmatpush1.msra.mxu0 0.0
  %1728 = vmatprep.subr.mxu0 0.0
  %1729 = vmatpush1.msra.mxu0 0.0
  %1730 = vmatprep.subr.mxu0 0.0
  %1731 = vmatpush1.msra.mxu0 0.0
  %1732 = vmatprep.subr.mxu0 0.0
  %1733 = vmatpush1.msra.mxu0 0.0
  %1734 = vmatprep.subr.mxu0 0.0
  %1735 = vmatpush1.msra.mxu0 0.0
  %1736 = vmatprep.subr.mxu0 0.0
  %1737 = vmatpush1.msra.mxu0 0.0
  %1738 = vmatprep.mubr.f32.mxu0 0.0
  %1739 = vmatmul.mubr.f32.gmra.mrb[0].mxu0 %v1669
  %v1740 = vpop.f32.mrb[0].mxu0
  %v1741 = vadd.f32 0.0, %v1740
  %v1742 = vpop.f32.mrb[0].mxu0
  %1743 = vmatprep.mubr.f32.mxu0 0.0
  %1744 = vmatmul.mubr.f32.gmra.mrb[0].mxu0 %v1672
  %v1745 = vpop.f32.mrb[0].mxu0
  %v1746 = vadd.f32 0.0, %v1745
  %v1747 = vpop.f32.mrb[0].mxu0
  %1748 = vdwg.mxu0
  %1749 = vrot.lane.b32.xlu0 %v315, 64
  %v1750 = vpop.permute.xlu0 %1749
  %1751 = vrot.lane.b32.xlu0 %v317, 64
  %v1752 = vpop.permute.xlu0 %1751
  %v1756 = vsel %vm37, %v1223, 0
  %v1759 = vsel %vm37, %v1224, 0
  %1761 = vmatprep.subr.mxu0 0.0
  %1762 = vmatpush1.msra.mxu0 %v1750
  %1763 = vmatprep.subr.mxu0 0.0
  %1764 = vmatpush1.msra.mxu0 %v1752
  %1765 = vmatprep.subr.mxu0 0.0
  %1766 = vmatpush1.msra.mxu0 0.0
  %1767 = vmatprep.subr.mxu0 0.0
  %1768 = vmatpush1.msra.mxu0 0.0
  %1769 = vmatprep.subr.mxu0 0.0
  %1770 = vmatpush1.msra.mxu0 0.0
  %1771 = vmatprep.subr.mxu0 0.0
  %1772 = vmatpush1.msra.mxu0 0.0
  %1773 = vmatprep.subr.mxu0 0.0
  %1774 = vmatpush1.msra.mxu0 0.0
  %1775 = vmatprep.subr.mxu0 0.0
  %1776 = vmatpush1.msra.mxu0 0.0
  %1777 = vmatprep.subr.mxu0 0.0
  %1778 = vmatpush1.msra.mxu0 0.0
  %1779 = vmatprep.subr.mxu0 0.0
  %1780 = vmatpush1.msra.mxu0 0.0
  %1781 = vmatprep.subr.mxu0 0.0
  %1782 = vmatpush1.msra.mxu0 0.0
  %1783 = vmatprep.subr.mxu0 0.0
  %1784 = vmatpush1.msra.mxu0 0.0
  %1785 = vmatprep.subr.mxu0 0.0
  %1786 = vmatpush1.msra.mxu0 0.0
  %1787 = vmatprep.subr.mxu0 0.0
  %1788 = vmatpush1.msra.mxu0 0.0
  %1789 = vmatprep.subr.mxu0 0.0
  %1790 = vmatpush1.msra.mxu0 0.0
  %1791 = vmatprep.subr.mxu0 0.0
  %1792 = vmatpush1.msra.mxu0 0.0
  %1793 = vmatprep.subr.mxu0 0.0
  %1794 = vmatpush1.msra.mxu0 0.0
  %1795 = vmatprep.subr.mxu0 0.0
  %1796 = vmatpush1.msra.mxu0 0.0
  %1797 = vmatprep.subr.mxu0 0.0
  %1798 = vmatpush1.msra.mxu0 0.0
  %1799 = vmatprep.subr.mxu0 0.0
  %1800 = vmatpush1.msra.mxu0 0.0
  %1801 = vmatprep.subr.mxu0 0.0
  %1802 = vmatpush1.msra.mxu0 0.0
  %1803 = vmatprep.subr.mxu0 0.0
  %1804 = vmatpush1.msra.mxu0 0.0
  %1805 = vmatprep.subr.mxu0 0.0
  %1806 = vmatpush1.msra.mxu0 0.0
  %1807 = vmatprep.subr.mxu0 0.0
  %1808 = vmatpush1.msra.mxu0 0.0
  %1809 = vmatprep.subr.mxu0 0.0
  %1810 = vmatpush1.msra.mxu0 0.0
  %1811 = vmatprep.subr.mxu0 0.0
  %1812 = vmatpush1.msra.mxu0 0.0
  %1813 = vmatprep.subr.mxu0 0.0
  %1814 = vmatpush1.msra.mxu0 0.0
  %1815 = vmatprep.subr.mxu0 0.0
  %1816 = vmatpush1.msra.mxu0 0.0
  %1817 = vmatprep.subr.mxu0 0.0
  %1818 = vmatpush1.msra.mxu0 0.0
  %1819 = vmatprep.subr.mxu0 0.0
  %1820 = vmatpush1.msra.mxu0 0.0
  %1821 = vmatprep.subr.mxu0 0.0
  %1822 = vmatpush1.msra.mxu0 0.0
  %1823 = vmatprep.subr.mxu0 0.0
  %1824 = vmatpush1.msra.mxu0 0.0
  %1825 = vmatprep.mubr.f32.mxu0 0.0
  %1826 = vmatmul.mubr.f32.gmra.mrb[0].mxu0 %v1756
  %v1827 = vpop.f32.mrb[0].mxu0
  %v1828 = vadd.f32 0.0, %v1827
  %v1829 = vpop.f32.mrb[0].mxu0
  %1830 = vmatprep.mubr.f32.mxu0 0.0
  %1831 = vmatmul.mubr.f32.gmra.mrb[0].mxu0 %v1759
  %v1832 = vpop.f32.mrb[0].mxu0
  %v1833 = vadd.f32 0.0, %v1832
  %v1834 = vpop.f32.mrb[0].mxu0
  %1835 = vdwg.mxu0
  %1836 = vrot.lane.b32.xlu0 %v319, 64
  %v1837 = vpop.permute.xlu0 %1836
  %1838 = vrot.lane.b32.xlu0 %v321, 64
  %v1839 = vpop.permute.xlu0 %1838
  %v1843 = vsel %vm37, %v1225, 0
  %v1846 = vsel %vm37, %v1226, 0
  %1848 = vmatprep.subr.mxu0 0.0
  %1849 = vmatpush1.msra.mxu0 %v1837
  %1850 = vmatprep.subr.mxu0 0.0
  %1851 = vmatpush1.msra.mxu0 %v1839
  %1852 = vmatprep.subr.mxu0 0.0
  %1853 = vmatpush1.msra.mxu0 0.0
  %1854 = vmatprep.subr.mxu0 0.0
  %1855 = vmatpush1.msra.mxu0 0.0
  %1856 = vmatprep.subr.mxu0 0.0
  %1857 = vmatpush1.msra.mxu0 0.0
  %1858 = vmatprep.subr.mxu0 0.0
  %1859 = vmatpush1.msra.mxu0 0.0
  %1860 = vmatprep.subr.mxu0 0.0
  %1861 = vmatpush1.msra.mxu0 0.0
  %1862 = vmatprep.subr.mxu0 0.0
  %1863 = vmatpush1.msra.mxu0 0.0
  %1864 = vmatprep.subr.mxu0 0.0
  %1865 = vmatpush1.msra.mxu0 0.0
  %1866 = vmatprep.subr.mxu0 0.0
  %1867 = vmatpush1.msra.mxu0 0.0
  %1868 = vmatprep.subr.mxu0 0.0
  %1869 = vmatpush1.msra.mxu0 0.0
  %1870 = vmatprep.subr.mxu0 0.0
  %1871 = vmatpush1.msra.mxu0 0.0
  %1872 = vmatprep.subr.mxu0 0.0
  %1873 = vmatpush1.msra.mxu0 0.0
  %1874 = vmatprep.subr.mxu0 0.0
  %1875 = vmatpush1.msra.mxu0 0.0
  %1876 = vmatprep.subr.mxu0 0.0
  %1877 = vmatpush1.msra.mxu0 0.0
  %1878 = vmatprep.subr.mxu0 0.0
  %1879 = vmatpush1.msra.mxu0 0.0
  %1880 = vmatprep.subr.mxu0 0.0
  %1881 = vmatpush1.msra.mxu0 0.0
  %1882 = vmatprep.subr.mxu0 0.0
  %1883 = vmatpush1.msra.mxu0 0.0
  %1884 = vmatprep.subr.mxu0 0.0
  %1885 = vmatpush1.msra.mxu0 0.0
  %1886 = vmatprep.subr.mxu0 0.0
  %1887 = vmatpush1.msra.mxu0 0.0
  %1888 = vmatprep.subr.mxu0 0.0
  %1889 = vmatpush1.msra.mxu0 0.0
  %1890 = vmatprep.subr.mxu0 0.0
  %1891 = vmatpush1.msra.mxu0 0.0
  %1892 = vmatprep.subr.mxu0 0.0
  %1893 = vmatpush1.msra.mxu0 0.0
  %1894 = vmatprep.subr.mxu0 0.0
  %1895 = vmatpush1.msra.mxu0 0.0
  %1896 = vmatprep.subr.mxu0 0.0
  %1897 = vmatpush1.msra.mxu0 0.0
  %1898 = vmatprep.subr.mxu0 0.0
  %1899 = vmatpush1.msra.mxu0 0.0
  %1900 = vmatprep.subr.mxu0 0.0
  %1901 = vmatpush1.msra.mxu0 0.0
  %1902 = vmatprep.subr.mxu0 0.0
  %1903 = vmatpush1.msra.mxu0 0.0
  %1904 = vmatprep.subr.mxu0 0.0
  %1905 = vmatpush1.msra.mxu0 0.0
  %1906 = vmatprep.subr.mxu0 0.0
  %1907 = vmatpush1.msra.mxu0 0.0
  %1908 = vmatprep.subr.mxu0 0.0
  %1909 = vmatpush1.msra.mxu0 0.0
  %1910 = vmatprep.subr.mxu0 0.0
  %1911 = vmatpush1.msra.mxu0 0.0
  %1912 = vmatprep.mubr.f32.mxu0 0.0
  %1913 = vmatmul.mubr.f32.gmra.mrb[0].mxu0 %v1843
  %v1914 = vpop.f32.mrb[0].mxu0
  %v1915 = vadd.f32 0.0, %v1914
  %v1916 = vpop.f32.mrb[0].mxu0
  %1917 = vmatprep.mubr.f32.mxu0 0.0
  %1918 = vmatmul.mubr.f32.gmra.mrb[0].mxu0 %v1846
  %v1919 = vpop.f32.mrb[0].mxu0
  %v1920 = vadd.f32 0.0, %v1919
  %v1921 = vpop.f32.mrb[0].mxu0
  %1922 = vdwg.mxu0
  %1925 = vrot.lane.b32.xlu0 %v1393, 4
  %v1926 = vpop.permute.xlu0 %1925
  %1927 = vrot.lane.b32.xlu0 %v1398, 4
  %v1928 = vpop.permute.xlu0 %1927
  %1933 = vrot.lane.b32.xlu0 %v1480, 8
  %v1934 = vpop.permute.xlu0 %1933
  %1935 = vrot.lane.b32.xlu0 %v1485, 8
  %v1936 = vpop.permute.xlu0 %1935
  %1941 = vrot.lane.b32.xlu0 %v1567, 12
  %v1942 = vpop.permute.xlu0 %1941
  %1943 = vrot.lane.b32.xlu0 %v1572, 12
  %v1944 = vpop.permute.xlu0 %1943
  %1949 = vrot.lane.b32.xlu0 %v1654, 16
  %v1950 = vpop.permute.xlu0 %1949
  %1951 = vrot.lane.b32.xlu0 %v1659, 16
  %v1952 = vpop.permute.xlu0 %1951
  %1957 = vrot.lane.b32.xlu0 %v1741, 20
  %v1958 = vpop.permute.xlu0 %1957
  %1959 = vrot.lane.b32.xlu0 %v1746, 20
  %v1960 = vpop.permute.xlu0 %1959
  %1965 = vrot.lane.b32.xlu0 %v1828, 24
  %v1966 = vpop.permute.xlu0 %1965
  %1967 = vrot.lane.b32.xlu0 %v1833, 24
  %v1968 = vpop.permute.xlu0 %1967
  %1973 = vrot.lane.b32.xlu0 %v1915, 28
  %v1974 = vpop.permute.xlu0 %1973
  %1975 = vrot.lane.b32.xlu0 %v1920, 28
  %v1976 = vpop.permute.xlu0 %1975
  %v1979 = vsel %vm326, %v1306, %v1926
  %v1980 = vsel %vm326, %v1311, %v1928
  %vm1981 = vcmask 64512
  %v1982 = vsel %vm1981, %v1979, %v1934
  %v1983 = vsel %vm1981, %v1980, %v1936
  %vm1984 = vcmask 97280
  %v1985 = vsel %vm1984, %v1982, %v1942
  %v1986 = vsel %vm1984, %v1983, %v1944
  %v1987 = vsel %vm37, %v1985, %v1950
  %v1988 = vsel %vm37, %v1986, %v1952
  %vm1989 = vcmask 162816
  %v1990 = vsel %vm1989, %v1987, %v1958
  %v1991 = vsel %vm1989, %v1988, %v1960
  %vm1992 = vcmask 195584
  %v1993 = vsel %vm1992, %v1990, %v1966
  %v1994 = vsel %vm1992, %v1991, %v1968
  %vm1995 = vcmask 228352
  %v1996 = vsel %vm1995, %v1993, %v1974
  %v1997 = vsel %vm1995, %v1994, %v1976
  %2002 = vrot.lane.b32.xlu0 %v119, 32
  %v2003 = vpop.permute.xlu0 %2002
  %2004 = vrot.lane.b32.xlu0 %v120, 32
  %v2005 = vpop.permute.xlu0 %2004
  %2006 = vrot.lane.b32.xlu0 %v121, 32
  %v2007 = vpop.permute.xlu0 %2006
  %2008 = vrot.lane.b32.xlu0 %v122, 32
  %v2009 = vpop.permute.xlu0 %2008
  %v2015 = vsel %vm210, %v1996, 0
  %v2018 = vsel %vm210, %v1997, 0
  %2020 = vmatprep.subr.mxu0 0.0
  %2021 = vmatpush1.msra.mxu0 %v2003
  %2022 = vmatprep.subr.mxu0 0.0
  %2023 = vmatpush1.msra.mxu0 %v2005
  %2024 = vmatprep.subr.mxu0 0.0
  %2025 = vmatpush1.msra.mxu0 %v2007
  %2026 = vmatprep.subr.mxu0 0.0
  %2027 = vmatpush1.msra.mxu0 %v2009
  %2028 = vmatprep.subr.mxu0 0.0
  %2029 = vmatpush1.msra.mxu0 0.0
  %2030 = vmatprep.subr.mxu0 0.0
  %2031 = vmatpush1.msra.mxu0 0.0
  %2032 = vmatprep.subr.mxu0 0.0
  %2033 = vmatpush1.msra.mxu0 0.0
  %2034 = vmatprep.subr.mxu0 0.0
  %2035 = vmatpush1.msra.mxu0 0.0
  %2036 = vmatprep.subr.mxu0 0.0
  %2037 = vmatpush1.msra.mxu0 0.0
  %2038 = vmatprep.subr.mxu0 0.0
  %2039 = vmatpush1.msra.mxu0 0.0
  %2040 = vmatprep.subr.mxu0 0.0
  %2041 = vmatpush1.msra.mxu0 0.0
  %2042 = vmatprep.subr.mxu0 0.0
  %2043 = vmatpush1.msra.mxu0 0.0
  %2044 = vmatprep.subr.mxu0 0.0
  %2045 = vmatpush1.msra.mxu0 0.0
  %2046 = vmatprep.subr.mxu0 0.0
  %2047 = vmatpush1.msra.mxu0 0.0
  %2048 = vmatprep.subr.mxu0 0.0
  %2049 = vmatpush1.msra.mxu0 0.0
  %2050 = vmatprep.subr.mxu0 0.0
  %2051 = vmatpush1.msra.mxu0 0.0
  %2052 = vmatprep.subr.mxu0 0.0
  %2053 = vmatpush1.msra.mxu0 0.0
  %2054 = vmatprep.subr.mxu0 0.0
  %2055 = vmatpush1.msra.mxu0 0.0
  %2056 = vmatprep.subr.mxu0 0.0
  %2057 = vmatpush1.msra.mxu0 0.0
  %2058 = vmatprep.subr.mxu0 0.0
  %2059 = vmatpush1.msra.mxu0 0.0
  %2060 = vmatprep.subr.mxu0 0.0
  %2061 = vmatpush1.msra.mxu0 0.0
  %2062 = vmatprep.subr.mxu0 0.0
  %2063 = vmatpush1.msra.mxu0 0.0
  %2064 = vmatprep.subr.mxu0 0.0
  %2065 = vmatpush1.msra.mxu0 0.0
  %2066 = vmatprep.subr.mxu0 0.0
  %2067 = vmatpush1.msra.mxu0 0.0
  %2068 = vmatprep.subr.mxu0 0.0
  %2069 = vmatpush1.msra.mxu0 0.0
  %2070 = vmatprep.subr.mxu0 0.0
  %2071 = vmatpush1.msra.mxu0 0.0
  %2072 = vmatprep.subr.mxu0 0.0
  %2073 = vmatpush1.msra.mxu0 0.0
  %2074 = vmatprep.subr.mxu0 0.0
  %2075 = vmatpush1.msra.mxu0 0.0
  %2076 = vmatprep.subr.mxu0 0.0
  %2077 = vmatpush1.msra.mxu0 0.0
  %2078 = vmatprep.subr.mxu0 0.0
  %2079 = vmatpush1.msra.mxu0 0.0
  %2080 = vmatprep.subr.mxu0 0.0
  %2081 = vmatpush1.msra.mxu0 0.0
  %2082 = vmatprep.subr.mxu0 0.0
  %2083 = vmatpush1.msra.mxu0 0.0
  %2084 = vmatprep.mubr.f32.mxu0 0.0
  %2085 = vmatmul.mubr.f32.gmra.mrb[0].mxu0 %v2015
  %v2086 = vpop.f32.mrb[0].mxu0
  %v2087 = vadd.f32 0.0, %v2086
  %v2088 = vpop.f32.mrb[0].mxu0
  %2089 = vmatprep.mubr.f32.mxu0 0.0
  %2090 = vmatmul.mubr.f32.gmra.mrb[0].mxu0 %v2018
  %v2091 = vpop.f32.mrb[0].mxu0
  %v2092 = vadd.f32 0.0, %v2091
  %v2093 = vpop.f32.mrb[0].mxu0
  %2094 = vdwg.mxu0
  %v2095 = vadd.f32 %v111, %v2087
  %v2096 = vadd.f32 %v116, %v2092
  %v2097 = vmul.f32 %v2095, %v27
  %v2098 = vmul.f32 %v2096, %v28
  %v2099 = vsel %vm210, %v2097, 0.0
  %v2100 = vsel %vm210, %v2098, 0.0
  %v2101 = vadd.f32 %v2099, %v2100
  %v2102 = vrot.slane %v2101, 4
  %v2103 = vadd.f32 %v2101, %v2102
  %v2104 = vrot.slane %v2103, 2
  %v2105 = vadd.f32 %v2103, %v2104
  %v2106 = vrot.slane %v2105, 1
  %v2107 = vadd.f32 %v2105, %v2106
  %v2108 = vmul.f32 %v2107, 0.07692308
  %v2109 = vsub.f32 %v2097, %v2108
  %v2110 = vsub.f32 %v2098, %v2108
  %v2111 = vmul.f32 %v2109, %v27
  %v2112 = vmul.f32 %v2110, %v28
  %v2113 = vmul.f32 %v2111, %v2111
  %v2114 = vmul.f32 %v2112, %v2112
  %v2115 = vsel %vm210, %v2113, 0.0
  %v2116 = vsel %vm210, %v2114, 0.0
  %v2117 = vadd.f32 %v2115, %v2116
  %v2118 = vrot.slane %v2117, 4
  %v2119 = vadd.f32 %v2117, %v2118
  %v2120 = vrot.slane %v2119, 2
  %v2121 = vadd.f32 %v2119, %v2120
  %v2122 = vrot.slane %v2121, 1
  %v2123 = vadd.f32 %v2121, %v2122
  %v2124 = vmul.f32 %v2123, 0.07692308
  %v2125 = vadd.f32 %v2124, 1e-05
  %v2126 = vrsqrt.pop %v2125
  %v2127 = vmul.f32 %v2126, %v141
  %v2128 = vmul.f32 %v2108, %v2127
  %v2129 = vsub.f32 %v142, %v2128
  %v2130 = vmul.f32 %v2097, %v2127
  %v2131 = vmul.f32 %v2098, %v2127
  %v2132 = vadd.f32 %v2130, %v2129
  %v2133 = vadd.f32 %v2131, %v2129
  %v2134 = vmul.f32 %v2132, %v27
  %v2135 = vmul.f32 %v2133, %v28
  %v2137 = vlaneseq
  %v2138 = vshrl.u32 %v2137, 7
  %v2139 = vsub.s32 0, %v2138
  %v2140 = vrot.slane %v140, %v2139
  %v2141 = vlaneseq
  %v2142 = vshrl.u32 %v2141, 7
  %v2143 = vsub.s32 1, %v2142
  %v2144 = vrot.slane %v140, %v2143
  %v2145 = vlaneseq
  %v2146 = vshrl.u32 %v2145, 7
  %v2147 = vsub.s32 2, %v2146
  %v2148 = vrot.slane %v140, %v2147
  %v2149 = vlaneseq
  %v2150 = vshrl.u32 %v2149, 7
  %v2151 = vsub.s32 3, %v2150
  %v2152 = vrot.slane %v140, %v2151
  %v2158 = vsel %vm210, %v2134, 0
  %v2161 = vsel %vm210, %v2135, 0
  %2163 = vmatprep.subr.mxu0 %v124
  %2164 = vmatpush1.msra.mxu0 %v123
  %2165 = vmatprep.subr.mxu0 %v128
  %2166 = vmatpush1.msra.mxu0 %v127
  %2167 = vmatprep.subr.mxu0 %v132
  %2168 = vmatpush1.msra.mxu0 %v131
  %2169 = vmatprep.subr.mxu0 %v136
  %2170 = vmatpush1.msra.mxu0 %v135
  %2171 = vmatprep.subr.mxu0 0.0
  %2172 = vmatpush1.msra.mxu0 0.0
  %2173 = vmatprep.subr.mxu0 0.0
  %2174 = vmatpush1.msra.mxu0 0.0
  %2175 = vmatprep.subr.mxu0 0.0
  %2176 = vmatpush1.msra.mxu0 0.0
  %2177 = vmatprep.subr.mxu0 0.0
  %2178 = vmatpush1.msra.mxu0 0.0
  %2179 = vmatprep.subr.mxu0 0.0
  %2180 = vmatpush1.msra.mxu0 0.0
  %2181 = vmatprep.subr.mxu0 0.0
  %2182 = vmatpush1.msra.mxu0 0.0
  %2183 = vmatprep.subr.mxu0 0.0
  %2184 = vmatpush1.msra.mxu0 0.0
  %2185 = vmatprep.subr.mxu0 0.0
  %2186 = vmatpush1.msra.mxu0 0.0
  %2187 = vmatprep.subr.mxu0 0.0
  %2188 = vmatpush1.msra.mxu0 0.0
  %2189 = vmatprep.subr.mxu0 0.0
  %2190 = vmatpush1.msra.mxu0 0.0
  %2191 = vmatprep.subr.mxu0 0.0
  %2192 = vmatpush1.msra.mxu0 0.0
  %2193 = vmatprep.subr.mxu0 0.0
  %2194 = vmatpush1.msra.mxu0 0.0
  %2195 = vmatprep.subr.mxu0 0.0
  %2196 = vmatpush1.msra.mxu0 0.0
  %2197 = vmatprep.subr.mxu0 0.0
  %2198 = vmatpush1.msra.mxu0 0.0
  %2199 = vmatprep.subr.mxu0 0.0
  %2200 = vmatpush1.msra.mxu0 0.0
  %2201 = vmatprep.subr.mxu0 0.0
  %2202 = vmatpush1.msra.mxu0 0.0
  %2203 = vmatprep.subr.mxu0 0.0
  %2204 = vmatpush1.msra.mxu0 0.0
  %2205 = vmatprep.subr.mxu0 0.0
  %2206 = vmatpush1.msra.mxu0 0.0
  %2207 = vmatprep.subr.mxu0 0.0
  %2208 = vmatpush1.msra.mxu0 0.0
  %2209 = vmatprep.subr.mxu0 0.0
  %2210 = vmatpush1.msra.mxu0 0.0
  %2211 = vmatprep.subr.mxu0 0.0
  %2212 = vmatpush1.msra.mxu0 0.0
  %2213 = vmatprep.subr.mxu0 0.0
  %2214 = vmatpush1.msra.mxu0 0.0
  %2215 = vmatprep.subr.mxu0 0.0
  %2216 = vmatpush1.msra.mxu0 0.0
  %2217 = vmatprep.subr.mxu0 0.0
  %2218 = vmatpush1.msra.mxu0 0.0
  %2219 = vmatprep.subr.mxu0 0.0
  %2220 = vmatpush1.msra.mxu0 0.0
  %2221 = vmatprep.subr.mxu0 0.0
  %2222 = vmatpush1.msra.mxu0 0.0
  %2223 = vmatprep.subr.mxu0 0.0
  %2224 = vmatpush1.msra.mxu0 0.0
  %2225 = vmatprep.subr.mxu0 0.0
  %2226 = vmatpush1.msra.mxu0 0.0
  %2227 = vmatprep.mubr.f32.mxu0 0.0
  %2228 = vmatmul.mubr.f32.gmra.mrb[0].mxu0 %v2158
  %v2229 = vpop.f32.mrb[0].mxu0
  %v2230 = vadd.f32 %v2140, %v2229
  %v2231 = vpop.f32.mrb[0].mxu0
  %v2232 = vadd.f32 %v2144, %v2231
  %2233 = vmatprep.mubr.f32.mxu0 0.0
  %2234 = vmatmul.mubr.f32.gmra.mrb[0].mxu0 %v2161
  %v2235 = vpop.f32.mrb[0].mxu0
  %v2236 = vadd.f32 %v2140, %v2235
  %v2237 = vpop.f32.mrb[0].mxu0
  %v2238 = vadd.f32 %v2144, %v2237
  %2239 = vdwg.mxu0
  %2240 = vmatprep.subr.mxu0 %v126
  %2241 = vmatpush1.msra.mxu0 %v125
  %2242 = vmatprep.subr.mxu0 %v130
  %2243 = vmatpush1.msra.mxu0 %v129
  %2244 = vmatprep.subr.mxu0 %v134
  %2245 = vmatpush1.msra.mxu0 %v133
  %2246 = vmatprep.subr.mxu0 %v138
  %2247 = vmatpush1.msra.mxu0 %v137
  %2248 = vmatprep.subr.mxu0 0.0
  %2249 = vmatpush1.msra.mxu0 0.0
  %2250 = vmatprep.subr.mxu0 0.0
  %2251 = vmatpush1.msra.mxu0 0.0
  %2252 = vmatprep.subr.mxu0 0.0
  %2253 = vmatpush1.msra.mxu0 0.0
  %2254 = vmatprep.subr.mxu0 0.0
  %2255 = vmatpush1.msra.mxu0 0.0
  %2256 = vmatprep.subr.mxu0 0.0
  %2257 = vmatpush1.msra.mxu0 0.0
  %2258 = vmatprep.subr.mxu0 0.0
  %2259 = vmatpush1.msra.mxu0 0.0
  %2260 = vmatprep.subr.mxu0 0.0
  %2261 = vmatpush1.msra.mxu0 0.0
  %2262 = vmatprep.subr.mxu0 0.0
  %2263 = vmatpush1.msra.mxu0 0.0
  %2264 = vmatprep.subr.mxu0 0.0
  %2265 = vmatpush1.msra.mxu0 0.0
  %2266 = vmatprep.subr.mxu0 0.0
  %2267 = vmatpush1.msra.mxu0 0.0
  %2268 = vmatprep.subr.mxu0 0.0
  %2269 = vmatpush1.msra.mxu0 0.0
  %2270 = vmatprep.subr.mxu0 0.0
  %2271 = vmatpush1.msra.mxu0 0.0
  %2272 = vmatprep.subr.mxu0 0.0
  %2273 = vmatpush1.msra.mxu0 0.0
  %2274 = vmatprep.subr.mxu0 0.0
  %2275 = vmatpush1.msra.mxu0 0.0
  %2276 = vmatprep.subr.mxu0 0.0
  %2277 = vmatpush1.msra.mxu0 0.0
  %2278 = vmatprep.subr.mxu0 0.0
  %2279 = vmatpush1.msra.mxu0 0.0
  %2280 = vmatprep.subr.mxu0 0.0
  %2281 = vmatpush1.msra.mxu0 0.0
  %2282 = vmatprep.subr.mxu0 0.0
  %2283 = vmatpush1.msra.mxu0 0.0
  %2284 = vmatprep.subr.mxu0 0.0
  %2285 = vmatpush1.msra.mxu0 0.0
  %2286 = vmatprep.subr.mxu0 0.0
  %2287 = vmatpush1.msra.mxu0 0.0
  %2288 = vmatprep.subr.mxu0 0.0
  %2289 = vmatpush1.msra.mxu0 0.0
  %2290 = vmatprep.subr.mxu0 0.0
  %2291 = vmatpush1.msra.mxu0 0.0
  %2292 = vmatprep.subr.mxu0 0.0
  %2293 = vmatpush1.msra.mxu0 0.0
  %2294 = vmatprep.subr.mxu0 0.0
  %2295 = vmatpush1.msra.mxu0 0.0
  %2296 = vmatprep.subr.mxu0 0.0
  %2297 = vmatpush1.msra.mxu0 0.0
  %2298 = vmatprep.subr.mxu0 0.0
  %2299 = vmatpush1.msra.mxu0 0.0
  %2300 = vmatprep.subr.mxu0 0.0
  %2301 = vmatpush1.msra.mxu0 0.0
  %2302 = vmatprep.subr.mxu0 0.0
  %2303 = vmatpush1.msra.mxu0 0.0
  %2304 = vmatprep.mubr.f32.mxu0 0.0
  %2305 = vmatmul.mubr.f32.gmra.mrb[0].mxu0 %v2158
  %v2306 = vpop.f32.mrb[0].mxu0
  %v2307 = vadd.f32 %v2148, %v2306
  %v2308 = vpop.f32.mrb[0].mxu0
  %v2309 = vadd.f32 %v2152, %v2308
  %2310 = vmatprep.mubr.f32.mxu0 0.0
  %2311 = vmatmul.mubr.f32.gmra.mrb[0].mxu0 %v2161
  %v2312 = vpop.f32.mrb[0].mxu0
  %v2313 = vadd.f32 %v2148, %v2312
  %v2314 = vpop.f32.mrb[0].mxu0
  %v2315 = vadd.f32 %v2152, %v2314
  %2316 = vdwg.mxu0
  %v2317 = vmax.f32 %v2230, 0.0
  %v2318 = vmax.f32 %v2232, 0.0
  %v2319 = vmax.f32 %v2307, 0.0
  %v2320 = vmax.f32 %v2309, 0.0
  %v2321 = vmax.f32 %v2236, 0.0
  %v2322 = vmax.f32 %v2238, 0.0
  %v2323 = vmax.f32 %v2313, 0.0
  %v2324 = vmax.f32 %v2315, 0.0
  %2325 = vmatprep.subr.mxu0 0.0
  %2326 = vmatpush1.msra.mxu0 %v146
  %2327 = vmatprep.subr.mxu0 0.0
  %2328 = vmatpush1.msra.mxu0 %v147
  %2329 = vmatprep.subr.mxu0 0.0
  %2330 = vmatpush1.msra.mxu0 %v148
  %2331 = vmatprep.subr.mxu0 0.0
  %2332 = vmatpush1.msra.mxu0 %v149
  %2333 = vmatprep.subr.mxu0 0.0
  %2334 = vmatpush1.msra.mxu0 %v150
  %2335 = vmatprep.subr.mxu0 0.0
  %2336 = vmatpush1.msra.mxu0 %v151
  %2337 = vmatprep.subr.mxu0 0.0
  %2338 = vmatpush1.msra.mxu0 %v152
  %2339 = vmatprep.subr.mxu0 0.0
  %2340 = vmatpush1.msra.mxu0 %v153
  %2341 = vmatprep.subr.mxu0 0.0
  %2342 = vmatpush1.msra.mxu0 %v154
  %2343 = vmatprep.subr.mxu0 0.0
  %2344 = vmatpush1.msra.mxu0 %v155
  %2345 = vmatprep.subr.mxu0 0.0
  %2346 = vmatpush1.msra.mxu0 %v156
  %2347 = vmatprep.subr.mxu0 0.0
  %2348 = vmatpush1.msra.mxu0 %v157
  %2349 = vmatprep.subr.mxu0 0.0
  %2350 = vmatpush1.msra.mxu0 %v158
  %2351 = vmatprep.subr.mxu0 0.0
  %2352 = vmatpush1.msra.mxu0 %v159
  %2353 = vmatprep.subr.mxu0 0.0
  %2354 = vmatpush1.msra.mxu0 %v160
  %2355 = vmatprep.subr.mxu0 0.0
  %2356 = vmatpush1.msra.mxu0 %v161
  %2357 = vmatprep.subr.mxu0 0.0
  %2358 = vmatpush1.msra.mxu0 %v162
  %2359 = vmatprep.subr.mxu0 0.0
  %2360 = vmatpush1.msra.mxu0 %v163
  %2361 = vmatprep.subr.mxu0 0.0
  %2362 = vmatpush1.msra.mxu0 %v164
  %2363 = vmatprep.subr.mxu0 0.0
  %2364 = vmatpush1.msra.mxu0 %v165
  %2365 = vmatprep.subr.mxu0 0.0
  %2366 = vmatpush1.msra.mxu0 %v166
  %2367 = vmatprep.subr.mxu0 0.0
  %2368 = vmatpush1.msra.mxu0 %v167
  %2369 = vmatprep.subr.mxu0 0.0
  %2370 = vmatpush1.msra.mxu0 %v168
  %2371 = vmatprep.subr.mxu0 0.0
  %2372 = vmatpush1.msra.mxu0 %v169
  %2373 = vmatprep.subr.mxu0 0.0
  %2374 = vmatpush1.msra.mxu0 %v170
  %2375 = vmatprep.subr.mxu0 0.0
  %2376 = vmatpush1.msra.mxu0 %v171
  %2377 = vmatprep.subr.mxu0 0.0
  %2378 = vmatpush1.msra.mxu0 %v172
  %2379 = vmatprep.subr.mxu0 0.0
  %2380 = vmatpush1.msra.mxu0 %v173
  %2381 = vmatprep.subr.mxu0 0.0
  %2382 = vmatpush1.msra.mxu0 %v174
  %2383 = vmatprep.subr.mxu0 0.0
  %2384 = vmatpush1.msra.mxu0 %v175
  %2385 = vmatprep.subr.mxu0 0.0
  %2386 = vmatpush1.msra.mxu0 %v176
  %2387 = vmatprep.subr.mxu0 0.0
  %2388 = vmatpush1.msra.mxu0 %v177
  %2389 = vmatprep.mubr.f32.mxu0 %v2318
  %2390 = vmatmul.mubr.f32.gmra.mrb[0].mxu0 %v2317
  %v2391 = vpop.f32.mrb[0].mxu0
  %v2392 = vadd.f32 %v145, %v2391
  %v2393 = vpop.f32.mrb[0].mxu0
  %2394 = vmatprep.mubr.f32.mxu0 %v2322
  %2395 = vmatmul.mubr.f32.gmra.mrb[0].mxu0 %v2321
  %v2396 = vpop.f32.mrb[0].mxu0
  %v2397 = vadd.f32 %v145, %v2396
  %v2398 = vpop.f32.mrb[0].mxu0
  %2399 = vdwg.mxu0
  %2400 = vmatprep.subr.mxu0 0.0
  %2401 = vmatpush1.msra.mxu0 %v178
  %2402 = vmatprep.subr.mxu0 0.0
  %2403 = vmatpush1.msra.mxu0 %v179
  %2404 = vmatprep.subr.mxu0 0.0
  %2405 = vmatpush1.msra.mxu0 %v180
  %2406 = vmatprep.subr.mxu0 0.0
  %2407 = vmatpush1.msra.mxu0 %v181
  %2408 = vmatprep.subr.mxu0 0.0
  %2409 = vmatpush1.msra.mxu0 %v182
  %2410 = vmatprep.subr.mxu0 0.0
  %2411 = vmatpush1.msra.mxu0 %v183
  %2412 = vmatprep.subr.mxu0 0.0
  %2413 = vmatpush1.msra.mxu0 %v184
  %2414 = vmatprep.subr.mxu0 0.0
  %2415 = vmatpush1.msra.mxu0 %v185
  %2416 = vmatprep.subr.mxu0 0.0
  %2417 = vmatpush1.msra.mxu0 %v186
  %2418 = vmatprep.subr.mxu0 0.0
  %2419 = vmatpush1.msra.mxu0 %v187
  %2420 = vmatprep.subr.mxu0 0.0
  %2421 = vmatpush1.msra.mxu0 %v188
  %2422 = vmatprep.subr.mxu0 0.0
  %2423 = vmatpush1.msra.mxu0 %v189
  %2424 = vmatprep.subr.mxu0 0.0
  %2425 = vmatpush1.msra.mxu0 %v190
  %2426 = vmatprep.subr.mxu0 0.0
  %2427 = vmatpush1.msra.mxu0 %v191
  %2428 = vmatprep.subr.mxu0 0.0
  %2429 = vmatpush1.msra.mxu0 %v192
  %2430 = vmatprep.subr.mxu0 0.0
  %2431 = vmatpush1.msra.mxu0 %v193
  %2432 = vmatprep.subr.mxu0 0.0
  %2433 = vmatpush1.msra.mxu0 %v194
  %2434 = vmatprep.subr.mxu0 0.0
  %2435 = vmatpush1.msra.mxu0 %v195
  %2436 = vmatprep.subr.mxu0 0.0
  %2437 = vmatpush1.msra.mxu0 %v196
  %2438 = vmatprep.subr.mxu0 0.0
  %2439 = vmatpush1.msra.mxu0 %v197
  %2440 = vmatprep.subr.mxu0 0.0
  %2441 = vmatpush1.msra.mxu0 %v198
  %2442 = vmatprep.subr.mxu0 0.0
  %2443 = vmatpush1.msra.mxu0 %v199
  %2444 = vmatprep.subr.mxu0 0.0
  %2445 = vmatpush1.msra.mxu0 %v200
  %2446 = vmatprep.subr.mxu0 0.0
  %2447 = vmatpush1.msra.mxu0 %v201
  %2448 = vmatprep.subr.mxu0 0.0
  %2449 = vmatpush1.msra.mxu0 %v202
  %2450 = vmatprep.subr.mxu0 0.0
  %2451 = vmatpush1.msra.mxu0 %v203
  %2452 = vmatprep.subr.mxu0 0.0
  %2453 = vmatpush1.msra.mxu0 %v204
  %2454 = vmatprep.subr.mxu0 0.0
  %2455 = vmatpush1.msra.mxu0 %v205
  %2456 = vmatprep.subr.mxu0 0.0
  %2457 = vmatpush1.msra.mxu0 %v206
  %2458 = vmatprep.subr.mxu0 0.0
  %2459 = vmatpush1.msra.mxu0 %v207
  %2460 = vmatprep.subr.mxu0 0.0
  %2461 = vmatpush1.msra.mxu0 %v208
  %2462 = vmatprep.subr.mxu0 0.0
  %2463 = vmatpush1.msra.mxu0 %v209
  %2464 = vmatprep.mubr.f32.mxu0 %v2320
  %2465 = vmatmul.mubr.f32.gmra.mrb[0].mxu0 %v2319
  %v2466 = vpop.f32.mrb[0].mxu0
  %v2467 = vadd.f32 %v2392, %v2466
  %v2468 = vpop.f32.mrb[0].mxu0
  %2469 = vmatprep.mubr.f32.mxu0 %v2324
  %2470 = vmatmul.mubr.f32.gmra.mrb[0].mxu0 %v2323
  %v2471 = vpop.f32.mrb[0].mxu0
  %v2472 = vadd.f32 %v2397, %v2471
  %v2473 = vpop.f32.mrb[0].mxu0
  %2474 = vdwg.mxu0
  %v2475 = vadd.f32 %v2134, %v2467
  %v2476 = vadd.f32 %v2135, %v2472
  %v2477 = vmul.f32 %v2475, %v27
  %v2478 = vmul.f32 %v2476, %v28
  %v2479 = vsel %vm210, %v2477, 0.0
  %v2480 = vsel %vm210, %v2478, 0.0
  %v2481 = vadd.f32 %v2479, %v2480
  %v2482 = vrot.slane %v2481, 4
  %v2483 = vadd.f32 %v2481, %v2482
  %v2484 = vrot.slane %v2483, 2
  %v2485 = vadd.f32 %v2483, %v2484
  %v2486 = vrot.slane %v2485, 1
  %v2487 = vadd.f32 %v2485, %v2486
  %v2488 = vmul.f32 %v2487, 0.07692308
  %v2489 = vsub.f32 %v2477, %v2488
  %v2490 = vsub.f32 %v2478, %v2488
  %v2491 = vmul.f32 %v2489, %v27
  %v2492 = vmul.f32 %v2490, %v28
  %v2493 = vmul.f32 %v2491, %v2491
  %v2494 = vmul.f32 %v2492, %v2492
  %v2495 = vsel %vm210, %v2493, 0.0
  %v2496 = vsel %vm210, %v2494, 0.0
  %v2497 = vadd.f32 %v2495, %v2496
  %v2498 = vrot.slane %v2497, 4
  %v2499 = vadd.f32 %v2497, %v2498
  %v2500 = vrot.slane %v2499, 2
  %v2501 = vadd.f32 %v2499, %v2500
  %v2502 = vrot.slane %v2501, 1
  %v2503 = vadd.f32 %v2501, %v2502
  %v2504 = vmul.f32 %v2503, 0.07692308
  %v2505 = vadd.f32 %v2504, 1e-05
  %v2506 = vrsqrt.pop %v2505
  %v2507 = vmul.f32 %v2506, %v143
  %v2508 = vmul.f32 %v2488, %v2507
  %v2509 = vsub.f32 %v144, %v2508
  %v2510 = vmul.f32 %v2477, %v2507
  %v2511 = vmul.f32 %v2478, %v2507
  %v2512 = vadd.f32 %v2510, %v2509
  %v2513 = vadd.f32 %v2511, %v2509
  %v2514 = vmul.f32 %v2512, %v27
  %v2515 = vmul.f32 %v2513, %v28
  %s2516 = scalar_lea.vmem %s2, 32
  %v2517 = vld [vmem:[%s2516] sm:$0xff]
  %v2518 = vld [vmem:[%s2516 + $0x8] sm:$0xff]
  %v2519 = vld [vmem:[%s2516 + $0x10] sm:$0xff]
  %v2520 = vld [vmem:[%s2516 + $0x18] sm:$0xff]
  %s2521 = scalar_lea.vmem %s3, 160
  %v2522 = vld [vmem:[%s2521] sm:$0xff]
  %v2523 = vld [vmem:[%s2521 + $0x8] sm:$0xff]
  %v2524 = vld [vmem:[%s2521 + $0x10] sm:$0xff]
  %v2525 = vld [vmem:[%s2521 + $0x18] sm:$0xff]
  %v2526 = vld [vmem:[%s2521 + $0x20] sm:$0xff]
  %v2527 = vld [vmem:[%s2521 + $0x28] sm:$0xff]
  %v2528 = vld [vmem:[%s2521 + $0x30] sm:$0xff]
  %v2529 = vld [vmem:[%s2521 + $0x38] sm:$0xff]
  %v2530 = vld [vmem:[%s2521 + $0x40] sm:$0xff]
  %v2531 = vld [vmem:[%s2521 + $0x48] sm:$0xff]
  %v2532 = vld [vmem:[%s2521 + $0x50] sm:$0xff]
  %v2533 = vld [vmem:[%s2521 + $0x58] sm:$0xff]
  %v2534 = vld [vmem:[%s2521 + $0x60] sm:$0xff]
  %v2535 = vld [vmem:[%s2521 + $0x68] sm:$0xff]
  %v2536 = vld [vmem:[%s2521 + $0x70] sm:$0xff]
  %v2537 = vld [vmem:[%s2521 + $0x78] sm:$0xff]
  %s2538 = scalar_lea.vmem %s2521, 128
  %v2539 = vld [vmem:[%s2538] ss:$8 sm:$0xf]
  %v2540 = vld [vmem:[%s2521 + $0x81] ss:$0 sm:$0xff]
  %v2541 = vld [vmem:[%s2521 + $0x82] ss:$0 sm:$0xff]
  %v2542 = vld [vmem:[%s2521 + $0x83] ss:$0 sm:$0xff]
  %v2543 = vld [vmem:[%s2521 + $0x84] ss:$0 sm:$0xff]
  %v2544 = vld [vmem:[%s2521 + $0x85] ss:$0 sm:$0xff]
  %s2545 = scalar_lea.vmem %s4, 512
  %v2546 = vld [vmem:[%s2545] sm:$0xff]
  %v2547 = vld [vmem:[%s2545 + $0x8] sm:$0xff]
  %v2548 = vld [vmem:[%s2545 + $0x10] sm:$0xff]
  %v2549 = vld [vmem:[%s2545 + $0x18] sm:$0xff]
  %v2550 = vld [vmem:[%s2545 + $0x20] sm:$0xff]
  %v2551 = vld [vmem:[%s2545 + $0x28] sm:$0xff]
  %v2552 = vld [vmem:[%s2545 + $0x30] sm:$0xff]
  %v2553 = vld [vmem:[%s2545 + $0x38] sm:$0xff]
  %v2554 = vld [vmem:[%s2545 + $0x40] sm:$0xff]
  %v2555 = vld [vmem:[%s2545 + $0x48] sm:$0xff]
  %v2556 = vld [vmem:[%s2545 + $0x50] sm:$0xff]
  %v2557 = vld [vmem:[%s2545 + $0x58] sm:$0xff]
  %v2558 = vld [vmem:[%s2545 + $0x60] sm:$0xff]
  %v2559 = vld [vmem:[%s2545 + $0x68] sm:$0xff]
  %v2560 = vld [vmem:[%s2545 + $0x70] sm:$0xff]
  %v2561 = vld [vmem:[%s2545 + $0x78] sm:$0xff]
  %v2562 = vld [vmem:[%s2545 + $0x80] sm:$0xff]
  %v2563 = vld [vmem:[%s2545 + $0x88] sm:$0xff]
  %v2564 = vld [vmem:[%s2545 + $0x90] sm:$0xff]
  %v2565 = vld [vmem:[%s2545 + $0x98] sm:$0xff]
  %v2566 = vld [vmem:[%s2545 + $0xa0] sm:$0xff]
  %v2567 = vld [vmem:[%s2545 + $0xa8] sm:$0xff]
  %v2568 = vld [vmem:[%s2545 + $0xb0] sm:$0xff]
  %v2569 = vld [vmem:[%s2545 + $0xb8] sm:$0xff]
  %v2570 = vld [vmem:[%s2545 + $0xc0] sm:$0xff]
  %v2571 = vld [vmem:[%s2545 + $0xc8] sm:$0xff]
  %v2572 = vld [vmem:[%s2545 + $0xd0] sm:$0xff]
  %v2573 = vld [vmem:[%s2545 + $0xd8] sm:$0xff]
  %v2574 = vld [vmem:[%s2545 + $0xe0] sm:$0xff]
  %v2575 = vld [vmem:[%s2545 + $0xe8] sm:$0xff]
  %v2576 = vld [vmem:[%s2545 + $0xf0] sm:$0xff]
  %v2577 = vld [vmem:[%s2545 + $0xf8] sm:$0xff]
  %v2578 = vld [vmem:[%s2545 + $0x100] sm:$0xff]
  %v2579 = vld [vmem:[%s2545 + $0x108] sm:$0xff]
  %v2580 = vld [vmem:[%s2545 + $0x110] sm:$0xff]
  %v2581 = vld [vmem:[%s2545 + $0x118] sm:$0xff]
  %v2582 = vld [vmem:[%s2545 + $0x120] sm:$0xff]
  %v2583 = vld [vmem:[%s2545 + $0x128] sm:$0xff]
  %v2584 = vld [vmem:[%s2545 + $0x130] sm:$0xff]
  %v2585 = vld [vmem:[%s2545 + $0x138] sm:$0xff]
  %v2586 = vld [vmem:[%s2545 + $0x140] sm:$0xff]
  %v2587 = vld [vmem:[%s2545 + $0x148] sm:$0xff]
  %v2588 = vld [vmem:[%s2545 + $0x150] sm:$0xff]
  %v2589 = vld [vmem:[%s2545 + $0x158] sm:$0xff]
  %v2590 = vld [vmem:[%s2545 + $0x160] sm:$0xff]
  %v2591 = vld [vmem:[%s2545 + $0x168] sm:$0xff]
  %v2592 = vld [vmem:[%s2545 + $0x170] sm:$0xff]
  %v2593 = vld [vmem:[%s2545 + $0x178] sm:$0xff]
  %v2594 = vld [vmem:[%s2545 + $0x180] sm:$0xff]
  %v2595 = vld [vmem:[%s2545 + $0x188] sm:$0xff]
  %v2596 = vld [vmem:[%s2545 + $0x190] sm:$0xff]
  %v2597 = vld [vmem:[%s2545 + $0x198] sm:$0xff]
  %v2598 = vld [vmem:[%s2545 + $0x1a0] sm:$0xff]
  %v2599 = vld [vmem:[%s2545 + $0x1a8] sm:$0xff]
  %v2600 = vld [vmem:[%s2545 + $0x1b0] sm:$0xff]
  %v2601 = vld [vmem:[%s2545 + $0x1b8] sm:$0xff]
  %v2602 = vld [vmem:[%s2545 + $0x1c0] sm:$0xff]
  %v2603 = vld [vmem:[%s2545 + $0x1c8] sm:$0xff]
  %v2604 = vld [vmem:[%s2545 + $0x1d0] sm:$0xff]
  %v2605 = vld [vmem:[%s2545 + $0x1d8] sm:$0xff]
  %v2606 = vld [vmem:[%s2545 + $0x1e0] sm:$0xff]
  %v2607 = vld [vmem:[%s2545 + $0x1e8] sm:$0xff]
  %v2608 = vld [vmem:[%s2545 + $0x1f0] sm:$0xff]
  %v2609 = vld [vmem:[%s2545 + $0x1f8] sm:$0xff]
  %v2611 = vsel %vm210, %v2514, 0
  %v2614 = vsel %vm210, %v2515, 0
  %2616 = vmatprep.subr.mxu0 0.0
  %2617 = vmatpush1.msra.mxu0 %v2517
  %2618 = vmatprep.subr.mxu0 0.0
  %2619 = vmatpush1.msra.mxu0 %v2518
  %2620 = vmatprep.subr.mxu0 0.0
  %2621 = vmatpush1.msra.mxu0 %v2519
  %2622 = vmatprep.subr.mxu0 0.0
  %2623 = vmatpush1.msra.mxu0 %v2520
  %2624 = vmatprep.subr.mxu0 0.0
  %2625 = vmatpush1.msra.mxu0 0.0
  %2626 = vmatprep.subr.mxu0 0.0
  %2627 = vmatpush1.msra.mxu0 0.0
  %2628 = vmatprep.subr.mxu0 0.0
  %2629 = vmatpush1.msra.mxu0 0.0
  %2630 = vmatprep.subr.mxu0 0.0
  %2631 = vmatpush1.msra.mxu0 0.0
  %2632 = vmatprep.subr.mxu0 0.0
  %2633 = vmatpush1.msra.mxu0 0.0
  %2634 = vmatprep.subr.mxu0 0.0
  %2635 = vmatpush1.msra.mxu0 0.0
  %2636 = vmatprep.subr.mxu0 0.0
  %2637 = vmatpush1.msra.mxu0 0.0
  %2638 = vmatprep.subr.mxu0 0.0
  %2639 = vmatpush1.msra.mxu0 0.0
  %2640 = vmatprep.subr.mxu0 0.0
  %2641 = vmatpush1.msra.mxu0 0.0
  %2642 = vmatprep.subr.mxu0 0.0
  %2643 = vmatpush1.msra.mxu0 0.0
  %2644 = vmatprep.subr.mxu0 0.0
  %2645 = vmatpush1.msra.mxu0 0.0
  %2646 = vmatprep.subr.mxu0 0.0
  %2647 = vmatpush1.msra.mxu0 0.0
  %2648 = vmatprep.subr.mxu0 0.0
  %2649 = vmatpush1.msra.mxu0 0.0
  %2650 = vmatprep.subr.mxu0 0.0
  %2651 = vmatpush1.msra.mxu0 0.0
  %2652 = vmatprep.subr.mxu0 0.0
  %2653 = vmatpush1.msra.mxu0 0.0
  %2654 = vmatprep.subr.mxu0 0.0
  %2655 = vmatpush1.msra.mxu0 0.0
  %2656 = vmatprep.subr.mxu0 0.0
  %2657 = vmatpush1.msra.mxu0 0.0
  %2658 = vmatprep.subr.mxu0 0.0
  %2659 = vmatpush1.msra.mxu0 0.0
  %2660 = vmatprep.subr.mxu0 0.0
  %2661 = vmatpush1.msra.mxu0 0.0
  %2662 = vmatprep.subr.mxu0 0.0
  %2663 = vmatpush1.msra.mxu0 0.0
  %2664 = vmatprep.subr.mxu0 0.0
  %2665 = vmatpush1.msra.mxu0 0.0
  %2666 = vmatprep.subr.mxu0 0.0
  %2667 = vmatpush1.msra.mxu0 0.0
  %2668 = vmatprep.subr.mxu0 0.0
  %2669 = vmatpush1.msra.mxu0 0.0
  %2670 = vmatprep.subr.mxu0 0.0
  %2671 = vmatpush1.msra.mxu0 0.0
  %2672 = vmatprep.subr.mxu0 0.0
  %2673 = vmatpush1.msra.mxu0 0.0
  %2674 = vmatprep.subr.mxu0 0.0
  %2675 = vmatpush1.msra.mxu0 0.0
  %2676 = vmatprep.subr.mxu0 0.0
  %2677 = vmatpush1.msra.mxu0 0.0
  %2678 = vmatprep.subr.mxu0 0.0
  %2679 = vmatpush1.msra.mxu0 0.0
  %2680 = vmatprep.mubr.f32.mxu0 0.0
  %2681 = vmatmul.mubr.f32.gmra.mrb[0].mxu0 %v2611
  %v2682 = vpop.f32.mrb[0].mxu0
  %v2683 = vadd.f32 0.0, %v2682
  %v2684 = vpop.f32.mrb[0].mxu0
  %2685 = vmatprep.mubr.f32.mxu0 0.0
  %2686 = vmatmul.mubr.f32.gmra.mrb[0].mxu0 %v2614
  %v2687 = vpop.f32.mrb[0].mxu0
  %v2688 = vadd.f32 0.0, %v2687
  %v2689 = vpop.f32.mrb[0].mxu0
  %2690 = vdwg.mxu0
  %2693 = vrot.lane.b32.xlu0 %v2683, 124
  %v2694 = vpop.permute.xlu0 %2693
  %2695 = vrot.lane.b32.xlu0 %v2688, 124
  %v2696 = vpop.permute.xlu0 %2695
  %2697 = vrot.lane.b32.xlu0 %v2683, 120
  %v2698 = vpop.permute.xlu0 %2697
  %2699 = vrot.lane.b32.xlu0 %v2688, 120
  %v2700 = vpop.permute.xlu0 %2699
  %2701 = vrot.lane.b32.xlu0 %v2683, 116
  %v2702 = vpop.permute.xlu0 %2701
  %2703 = vrot.lane.b32.xlu0 %v2688, 116
  %v2704 = vpop.permute.xlu0 %2703
  %2705 = vrot.lane.b32.xlu0 %v2683, 112
  %v2706 = vpop.permute.xlu0 %2705
  %2707 = vrot.lane.b32.xlu0 %v2688, 112
  %v2708 = vpop.permute.xlu0 %2707
  %2709 = vrot.lane.b32.xlu0 %v2683, 108
  %v2710 = vpop.permute.xlu0 %2709
  %2711 = vrot.lane.b32.xlu0 %v2688, 108
  %v2712 = vpop.permute.xlu0 %2711
  %2713 = vrot.lane.b32.xlu0 %v2683, 104
  %v2714 = vpop.permute.xlu0 %2713
  %2715 = vrot.lane.b32.xlu0 %v2688, 104
  %v2716 = vpop.permute.xlu0 %2715
  %2717 = vrot.lane.b32.xlu0 %v2683, 100
  %v2718 = vpop.permute.xlu0 %2717
  %2719 = vrot.lane.b32.xlu0 %v2688, 100
  %v2720 = vpop.permute.xlu0 %2719
  %2721 = vrot.lane.b32.xlu0 %v2683, 96
  %v2722 = vpop.permute.xlu0 %2721
  %2723 = vrot.lane.b32.xlu0 %v2688, 96
  %v2724 = vpop.permute.xlu0 %2723
  %v2725 = vsel %vm326, %v2683, 0
  %v2727 = vsel %vm326, %v2688, 0
  %v2729 = vsel %vm326, %v2722, 0
  %v2731 = vsel %vm326, %v2724, 0
  %2733 = vmatprep.subr.mxu0 0.0
  %2734 = vmatpush1.xpose.msra.mxu0 %v2729
  %2735 = vmatprep.subr.mxu0 0.0
  %2736 = vmatpush1.xpose.msra.mxu0 %v2731
  %2737 = vmatprep.subr.mxu0 0.0
  %2738 = vmatpush1.xpose.msra.mxu0 0.0
  %2739 = vmatprep.subr.mxu0 0.0
  %2740 = vmatpush1.xpose.msra.mxu0 0.0
  %2741 = vmatprep.subr.mxu0 0.0
  %2742 = vmatpush1.xpose.msra.mxu0 0.0
  %2743 = vmatprep.subr.mxu0 0.0
  %2744 = vmatpush1.xpose.msra.mxu0 0.0
  %2745 = vmatprep.subr.mxu0 0.0
  %2746 = vmatpush1.xpose.msra.mxu0 0.0
  %2747 = vmatprep.subr.mxu0 0.0
  %2748 = vmatpush1.xpose.msra.mxu0 0.0
  %2749 = vmatprep.subr.mxu0 0.0
  %2750 = vmatpush1.xpose.msra.mxu0 0.0
  %2751 = vmatprep.subr.mxu0 0.0
  %2752 = vmatpush1.xpose.msra.mxu0 0.0
  %2753 = vmatprep.subr.mxu0 0.0
  %2754 = vmatpush1.xpose.msra.mxu0 0.0
  %2755 = vmatprep.subr.mxu0 0.0
  %2756 = vmatpush1.xpose.msra.mxu0 0.0
  %2757 = vmatprep.subr.mxu0 0.0
  %2758 = vmatpush1.xpose.msra.mxu0 0.0
  %2759 = vmatprep.subr.mxu0 0.0
  %2760 = vmatpush1.xpose.msra.mxu0 0.0
  %2761 = vmatprep.subr.mxu0 0.0
  %2762 = vmatpush1.xpose.msra.mxu0 0.0
  %2763 = vmatprep.subr.mxu0 0.0
  %2764 = vmatpush1.xpose.msra.mxu0 0.0
  %2765 = vmatprep.subr.mxu0 0.0
  %2766 = vmatpush1.xpose.msra.mxu0 0.0
  %2767 = vmatprep.subr.mxu0 0.0
  %2768 = vmatpush1.xpose.msra.mxu0 0.0
  %2769 = vmatprep.subr.mxu0 0.0
  %2770 = vmatpush1.xpose.msra.mxu0 0.0
  %2771 = vmatprep.subr.mxu0 0.0
  %2772 = vmatpush1.xpose.msra.mxu0 0.0
  %2773 = vmatprep.subr.mxu0 0.0
  %2774 = vmatpush1.xpose.msra.mxu0 0.0
  %2775 = vmatprep.subr.mxu0 0.0
  %2776 = vmatpush1.xpose.msra.mxu0 0.0
  %2777 = vmatprep.subr.mxu0 0.0
  %2778 = vmatpush1.xpose.msra.mxu0 0.0
  %2779 = vmatprep.subr.mxu0 0.0
  %2780 = vmatpush1.xpose.msra.mxu0 0.0
  %2781 = vmatprep.subr.mxu0 0.0
  %2782 = vmatpush1.xpose.msra.mxu0 0.0
  %2783 = vmatprep.subr.mxu0 0.0
  %2784 = vmatpush1.xpose.msra.mxu0 0.0
  %2785 = vmatprep.subr.mxu0 0.0
  %2786 = vmatpush1.xpose.msra.mxu0 0.0
  %2787 = vmatprep.subr.mxu0 0.0
  %2788 = vmatpush1.xpose.msra.mxu0 0.0
  %2789 = vmatprep.subr.mxu0 0.0
  %2790 = vmatpush1.xpose.msra.mxu0 0.0
  %2791 = vmatprep.subr.mxu0 0.0
  %2792 = vmatpush1.xpose.msra.mxu0 0.0
  %2793 = vmatprep.subr.mxu0 0.0
  %2794 = vmatpush1.xpose.msra.mxu0 0.0
  %2795 = vmatprep.subr.mxu0 0.0
  %2796 = vmatpush1.xpose.msra.mxu0 0.0
  %2797 = vmatprep.mubr.f32.mxu0 0.0
  %2798 = vmatmul.mubr.f32.gmra.mrb[0].mxu0 %v2725
  %v2799 = vpop.f32.mrb[0].mxu0
  %v2800 = vadd.f32 0.0, %v2799
  %v2801 = vpop.f32.mrb[0].mxu0
  %2802 = vmatprep.mubr.f32.mxu0 0.0
  %2803 = vmatmul.mubr.f32.gmra.mrb[0].mxu0 %v2727
  %v2804 = vpop.f32.mrb[0].mxu0
  %v2805 = vadd.f32 0.0, %v2804
  %v2806 = vpop.f32.mrb[0].mxu0
  %2807 = vdwg.mxu0
  %2808 = vrot.lane.b32.xlu0 %v2694, 96
  %v2809 = vpop.permute.xlu0 %2808
  %2810 = vrot.lane.b32.xlu0 %v2696, 96
  %v2811 = vpop.permute.xlu0 %2810
  %v2812 = vsel %vm326, %v2694, 0
  %v2814 = vsel %vm326, %v2696, 0
  %v2816 = vsel %vm326, %v2809, 0
  %v2818 = vsel %vm326, %v2811, 0
  %2820 = vmatprep.subr.mxu0 0.0
  %2821 = vmatpush1.xpose.msra.mxu0 %v2816
  %2822 = vmatprep.subr.mxu0 0.0
  %2823 = vmatpush1.xpose.msra.mxu0 %v2818
  %2824 = vmatprep.subr.mxu0 0.0
  %2825 = vmatpush1.xpose.msra.mxu0 0.0
  %2826 = vmatprep.subr.mxu0 0.0
  %2827 = vmatpush1.xpose.msra.mxu0 0.0
  %2828 = vmatprep.subr.mxu0 0.0
  %2829 = vmatpush1.xpose.msra.mxu0 0.0
  %2830 = vmatprep.subr.mxu0 0.0
  %2831 = vmatpush1.xpose.msra.mxu0 0.0
  %2832 = vmatprep.subr.mxu0 0.0
  %2833 = vmatpush1.xpose.msra.mxu0 0.0
  %2834 = vmatprep.subr.mxu0 0.0
  %2835 = vmatpush1.xpose.msra.mxu0 0.0
  %2836 = vmatprep.subr.mxu0 0.0
  %2837 = vmatpush1.xpose.msra.mxu0 0.0
  %2838 = vmatprep.subr.mxu0 0.0
  %2839 = vmatpush1.xpose.msra.mxu0 0.0
  %2840 = vmatprep.subr.mxu0 0.0
  %2841 = vmatpush1.xpose.msra.mxu0 0.0
  %2842 = vmatprep.subr.mxu0 0.0
  %2843 = vmatpush1.xpose.msra.mxu0 0.0
  %2844 = vmatprep.subr.mxu0 0.0
  %2845 = vmatpush1.xpose.msra.mxu0 0.0
  %2846 = vmatprep.subr.mxu0 0.0
  %2847 = vmatpush1.xpose.msra.mxu0 0.0
  %2848 = vmatprep.subr.mxu0 0.0
  %2849 = vmatpush1.xpose.msra.mxu0 0.0
  %2850 = vmatprep.subr.mxu0 0.0
  %2851 = vmatpush1.xpose.msra.mxu0 0.0
  %2852 = vmatprep.subr.mxu0 0.0
  %2853 = vmatpush1.xpose.msra.mxu0 0.0
  %2854 = vmatprep.subr.mxu0 0.0
  %2855 = vmatpush1.xpose.msra.mxu0 0.0
  %2856 = vmatprep.subr.mxu0 0.0
  %2857 = vmatpush1.xpose.msra.mxu0 0.0
  %2858 = vmatprep.subr.mxu0 0.0
  %2859 = vmatpush1.xpose.msra.mxu0 0.0
  %2860 = vmatprep.subr.mxu0 0.0
  %2861 = vmatpush1.xpose.msra.mxu0 0.0
  %2862 = vmatprep.subr.mxu0 0.0
  %2863 = vmatpush1.xpose.msra.mxu0 0.0
  %2864 = vmatprep.subr.mxu0 0.0
  %2865 = vmatpush1.xpose.msra.mxu0 0.0
  %2866 = vmatprep.subr.mxu0 0.0
  %2867 = vmatpush1.xpose.msra.mxu0 0.0
  %2868 = vmatprep.subr.mxu0 0.0
  %2869 = vmatpush1.xpose.msra.mxu0 0.0
  %2870 = vmatprep.subr.mxu0 0.0
  %2871 = vmatpush1.xpose.msra.mxu0 0.0
  %2872 = vmatprep.subr.mxu0 0.0
  %2873 = vmatpush1.xpose.msra.mxu0 0.0
  %2874 = vmatprep.subr.mxu0 0.0
  %2875 = vmatpush1.xpose.msra.mxu0 0.0
  %2876 = vmatprep.subr.mxu0 0.0
  %2877 = vmatpush1.xpose.msra.mxu0 0.0
  %2878 = vmatprep.subr.mxu0 0.0
  %2879 = vmatpush1.xpose.msra.mxu0 0.0
  %2880 = vmatprep.subr.mxu0 0.0
  %2881 = vmatpush1.xpose.msra.mxu0 0.0
  %2882 = vmatprep.subr.mxu0 0.0
  %2883 = vmatpush1.xpose.msra.mxu0 0.0
  %2884 = vmatprep.mubr.f32.mxu0 0.0
  %2885 = vmatmul.mubr.f32.gmra.mrb[0].mxu0 %v2812
  %v2886 = vpop.f32.mrb[0].mxu0
  %v2887 = vadd.f32 0.0, %v2886
  %v2888 = vpop.f32.mrb[0].mxu0
  %2889 = vmatprep.mubr.f32.mxu0 0.0
  %2890 = vmatmul.mubr.f32.gmra.mrb[0].mxu0 %v2814
  %v2891 = vpop.f32.mrb[0].mxu0
  %v2892 = vadd.f32 0.0, %v2891
  %v2893 = vpop.f32.mrb[0].mxu0
  %2894 = vdwg.mxu0
  %2895 = vrot.lane.b32.xlu0 %v2698, 96
  %v2896 = vpop.permute.xlu0 %2895
  %2897 = vrot.lane.b32.xlu0 %v2700, 96
  %v2898 = vpop.permute.xlu0 %2897
  %v2899 = vsel %vm326, %v2698, 0
  %v2901 = vsel %vm326, %v2700, 0
  %v2903 = vsel %vm326, %v2896, 0
  %v2905 = vsel %vm326, %v2898, 0
  %2907 = vmatprep.subr.mxu0 0.0
  %2908 = vmatpush1.xpose.msra.mxu0 %v2903
  %2909 = vmatprep.subr.mxu0 0.0
  %2910 = vmatpush1.xpose.msra.mxu0 %v2905
  %2911 = vmatprep.subr.mxu0 0.0
  %2912 = vmatpush1.xpose.msra.mxu0 0.0
  %2913 = vmatprep.subr.mxu0 0.0
  %2914 = vmatpush1.xpose.msra.mxu0 0.0
  %2915 = vmatprep.subr.mxu0 0.0
  %2916 = vmatpush1.xpose.msra.mxu0 0.0
  %2917 = vmatprep.subr.mxu0 0.0
  %2918 = vmatpush1.xpose.msra.mxu0 0.0
  %2919 = vmatprep.subr.mxu0 0.0
  %2920 = vmatpush1.xpose.msra.mxu0 0.0
  %2921 = vmatprep.subr.mxu0 0.0
  %2922 = vmatpush1.xpose.msra.mxu0 0.0
  %2923 = vmatprep.subr.mxu0 0.0
  %2924 = vmatpush1.xpose.msra.mxu0 0.0
  %2925 = vmatprep.subr.mxu0 0.0
  %2926 = vmatpush1.xpose.msra.mxu0 0.0
  %2927 = vmatprep.subr.mxu0 0.0
  %2928 = vmatpush1.xpose.msra.mxu0 0.0
  %2929 = vmatprep.subr.mxu0 0.0
  %2930 = vmatpush1.xpose.msra.mxu0 0.0
  %2931 = vmatprep.subr.mxu0 0.0
  %2932 = vmatpush1.xpose.msra.mxu0 0.0
  %2933 = vmatprep.subr.mxu0 0.0
  %2934 = vmatpush1.xpose.msra.mxu0 0.0
  %2935 = vmatprep.subr.mxu0 0.0
  %2936 = vmatpush1.xpose.msra.mxu0 0.0
  %2937 = vmatprep.subr.mxu0 0.0
  %2938 = vmatpush1.xpose.msra.mxu0 0.0
  %2939 = vmatprep.subr.mxu0 0.0
  %2940 = vmatpush1.xpose.msra.mxu0 0.0
  %2941 = vmatprep.subr.mxu0 0.0
  %2942 = vmatpush1.xpose.msra.mxu0 0.0
  %2943 = vmatprep.subr.mxu0 0.0
  %2944 = vmatpush1.xpose.msra.mxu0 0.0
  %2945 = vmatprep.subr.mxu0 0.0
  %2946 = vmatpush1.xpose.msra.mxu0 0.0
  %2947 = vmatprep.subr.mxu0 0.0
  %2948 = vmatpush1.xpose.msra.mxu0 0.0
  %2949 = vmatprep.subr.mxu0 0.0
  %2950 = vmatpush1.xpose.msra.mxu0 0.0
  %2951 = vmatprep.subr.mxu0 0.0
  %2952 = vmatpush1.xpose.msra.mxu0 0.0
  %2953 = vmatprep.subr.mxu0 0.0
  %2954 = vmatpush1.xpose.msra.mxu0 0.0
  %2955 = vmatprep.subr.mxu0 0.0
  %2956 = vmatpush1.xpose.msra.mxu0 0.0
  %2957 = vmatprep.subr.mxu0 0.0
  %2958 = vmatpush1.xpose.msra.mxu0 0.0
  %2959 = vmatprep.subr.mxu0 0.0
  %2960 = vmatpush1.xpose.msra.mxu0 0.0
  %2961 = vmatprep.subr.mxu0 0.0
  %2962 = vmatpush1.xpose.msra.mxu0 0.0
  %2963 = vmatprep.subr.mxu0 0.0
  %2964 = vmatpush1.xpose.msra.mxu0 0.0
  %2965 = vmatprep.subr.mxu0 0.0
  %2966 = vmatpush1.xpose.msra.mxu0 0.0
  %2967 = vmatprep.subr.mxu0 0.0
  %2968 = vmatpush1.xpose.msra.mxu0 0.0
  %2969 = vmatprep.subr.mxu0 0.0
  %2970 = vmatpush1.xpose.msra.mxu0 0.0
  %2971 = vmatprep.mubr.f32.mxu0 0.0
  %2972 = vmatmul.mubr.f32.gmra.mrb[0].mxu0 %v2899
  %v2973 = vpop.f32.mrb[0].mxu0
  %v2974 = vadd.f32 0.0, %v2973
  %v2975 = vpop.f32.mrb[0].mxu0
  %2976 = vmatprep.mubr.f32.mxu0 0.0
  %2977 = vmatmul.mubr.f32.gmra.mrb[0].mxu0 %v2901
  %v2978 = vpop.f32.mrb[0].mxu0
  %v2979 = vadd.f32 0.0, %v2978
  %v2980 = vpop.f32.mrb[0].mxu0
  %2981 = vdwg.mxu0
  %2982 = vrot.lane.b32.xlu0 %v2702, 96
  %v2983 = vpop.permute.xlu0 %2982
  %2984 = vrot.lane.b32.xlu0 %v2704, 96
  %v2985 = vpop.permute.xlu0 %2984
  %v2986 = vsel %vm326, %v2702, 0
  %v2988 = vsel %vm326, %v2704, 0
  %v2990 = vsel %vm326, %v2983, 0
  %v2992 = vsel %vm326, %v2985, 0
  %2994 = vmatprep.subr.mxu0 0.0
  %2995 = vmatpush1.xpose.msra.mxu0 %v2990
  %2996 = vmatprep.subr.mxu0 0.0
  %2997 = vmatpush1.xpose.msra.mxu0 %v2992
  %2998 = vmatprep.subr.mxu0 0.0
  %2999 = vmatpush1.xpose.msra.mxu0 0.0
  %3000 = vmatprep.subr.mxu0 0.0
  %3001 = vmatpush1.xpose.msra.mxu0 0.0
  %3002 = vmatprep.subr.mxu0 0.0
  %3003 = vmatpush1.xpose.msra.mxu0 0.0
  %3004 = vmatprep.subr.mxu0 0.0
  %3005 = vmatpush1.xpose.msra.mxu0 0.0
  %3006 = vmatprep.subr.mxu0 0.0
  %3007 = vmatpush1.xpose.msra.mxu0 0.0
  %3008 = vmatprep.subr.mxu0 0.0
  %3009 = vmatpush1.xpose.msra.mxu0 0.0
  %3010 = vmatprep.subr.mxu0 0.0
  %3011 = vmatpush1.xpose.msra.mxu0 0.0
  %3012 = vmatprep.subr.mxu0 0.0
  %3013 = vmatpush1.xpose.msra.mxu0 0.0
  %3014 = vmatprep.subr.mxu0 0.0
  %3015 = vmatpush1.xpose.msra.mxu0 0.0
  %3016 = vmatprep.subr.mxu0 0.0
  %3017 = vmatpush1.xpose.msra.mxu0 0.0
  %3018 = vmatprep.subr.mxu0 0.0
  %3019 = vmatpush1.xpose.msra.mxu0 0.0
  %3020 = vmatprep.subr.mxu0 0.0
  %3021 = vmatpush1.xpose.msra.mxu0 0.0
  %3022 = vmatprep.subr.mxu0 0.0
  %3023 = vmatpush1.xpose.msra.mxu0 0.0
  %3024 = vmatprep.subr.mxu0 0.0
  %3025 = vmatpush1.xpose.msra.mxu0 0.0
  %3026 = vmatprep.subr.mxu0 0.0
  %3027 = vmatpush1.xpose.msra.mxu0 0.0
  %3028 = vmatprep.subr.mxu0 0.0
  %3029 = vmatpush1.xpose.msra.mxu0 0.0
  %3030 = vmatprep.subr.mxu0 0.0
  %3031 = vmatpush1.xpose.msra.mxu0 0.0
  %3032 = vmatprep.subr.mxu0 0.0
  %3033 = vmatpush1.xpose.msra.mxu0 0.0
  %3034 = vmatprep.subr.mxu0 0.0
  %3035 = vmatpush1.xpose.msra.mxu0 0.0
  %3036 = vmatprep.subr.mxu0 0.0
  %3037 = vmatpush1.xpose.msra.mxu0 0.0
  %3038 = vmatprep.subr.mxu0 0.0
  %3039 = vmatpush1.xpose.msra.mxu0 0.0
  %3040 = vmatprep.subr.mxu0 0.0
  %3041 = vmatpush1.xpose.msra.mxu0 0.0
  %3042 = vmatprep.subr.mxu0 0.0
  %3043 = vmatpush1.xpose.msra.mxu0 0.0
  %3044 = vmatprep.subr.mxu0 0.0
  %3045 = vmatpush1.xpose.msra.mxu0 0.0
  %3046 = vmatprep.subr.mxu0 0.0
  %3047 = vmatpush1.xpose.msra.mxu0 0.0
  %3048 = vmatprep.subr.mxu0 0.0
  %3049 = vmatpush1.xpose.msra.mxu0 0.0
  %3050 = vmatprep.subr.mxu0 0.0
  %3051 = vmatpush1.xpose.msra.mxu0 0.0
  %3052 = vmatprep.subr.mxu0 0.0
  %3053 = vmatpush1.xpose.msra.mxu0 0.0
  %3054 = vmatprep.subr.mxu0 0.0
  %3055 = vmatpush1.xpose.msra.mxu0 0.0
  %3056 = vmatprep.subr.mxu0 0.0
  %3057 = vmatpush1.xpose.msra.mxu0 0.0
  %3058 = vmatprep.mubr.f32.mxu0 0.0
  %3059 = vmatmul.mubr.f32.gmra.mrb[0].mxu0 %v2986
  %v3060 = vpop.f32.mrb[0].mxu0
  %v3061 = vadd.f32 0.0, %v3060
  %v3062 = vpop.f32.mrb[0].mxu0
  %3063 = vmatprep.mubr.f32.mxu0 0.0
  %3064 = vmatmul.mubr.f32.gmra.mrb[0].mxu0 %v2988
  %v3065 = vpop.f32.mrb[0].mxu0
  %v3066 = vadd.f32 0.0, %v3065
  %v3067 = vpop.f32.mrb[0].mxu0
  %3068 = vdwg.mxu0
  %3069 = vrot.lane.b32.xlu0 %v2706, 96
  %v3070 = vpop.permute.xlu0 %3069
  %3071 = vrot.lane.b32.xlu0 %v2708, 96
  %v3072 = vpop.permute.xlu0 %3071
  %v3073 = vsel %vm326, %v2706, 0
  %v3075 = vsel %vm326, %v2708, 0
  %v3077 = vsel %vm326, %v3070, 0
  %v3079 = vsel %vm326, %v3072, 0
  %3081 = vmatprep.subr.mxu0 0.0
  %3082 = vmatpush1.xpose.msra.mxu0 %v3077
  %3083 = vmatprep.subr.mxu0 0.0
  %3084 = vmatpush1.xpose.msra.mxu0 %v3079
  %3085 = vmatprep.subr.mxu0 0.0
  %3086 = vmatpush1.xpose.msra.mxu0 0.0
  %3087 = vmatprep.subr.mxu0 0.0
  %3088 = vmatpush1.xpose.msra.mxu0 0.0
  %3089 = vmatprep.subr.mxu0 0.0
  %3090 = vmatpush1.xpose.msra.mxu0 0.0
  %3091 = vmatprep.subr.mxu0 0.0
  %3092 = vmatpush1.xpose.msra.mxu0 0.0
  %3093 = vmatprep.subr.mxu0 0.0
  %3094 = vmatpush1.xpose.msra.mxu0 0.0
  %3095 = vmatprep.subr.mxu0 0.0
  %3096 = vmatpush1.xpose.msra.mxu0 0.0
  %3097 = vmatprep.subr.mxu0 0.0
  %3098 = vmatpush1.xpose.msra.mxu0 0.0
  %3099 = vmatprep.subr.mxu0 0.0
  %3100 = vmatpush1.xpose.msra.mxu0 0.0
  %3101 = vmatprep.subr.mxu0 0.0
  %3102 = vmatpush1.xpose.msra.mxu0 0.0
  %3103 = vmatprep.subr.mxu0 0.0
  %3104 = vmatpush1.xpose.msra.mxu0 0.0
  %3105 = vmatprep.subr.mxu0 0.0
  %3106 = vmatpush1.xpose.msra.mxu0 0.0
  %3107 = vmatprep.subr.mxu0 0.0
  %3108 = vmatpush1.xpose.msra.mxu0 0.0
  %3109 = vmatprep.subr.mxu0 0.0
  %3110 = vmatpush1.xpose.msra.mxu0 0.0
  %3111 = vmatprep.subr.mxu0 0.0
  %3112 = vmatpush1.xpose.msra.mxu0 0.0
  %3113 = vmatprep.subr.mxu0 0.0
  %3114 = vmatpush1.xpose.msra.mxu0 0.0
  %3115 = vmatprep.subr.mxu0 0.0
  %3116 = vmatpush1.xpose.msra.mxu0 0.0
  %3117 = vmatprep.subr.mxu0 0.0
  %3118 = vmatpush1.xpose.msra.mxu0 0.0
  %3119 = vmatprep.subr.mxu0 0.0
  %3120 = vmatpush1.xpose.msra.mxu0 0.0
  %3121 = vmatprep.subr.mxu0 0.0
  %3122 = vmatpush1.xpose.msra.mxu0 0.0
  %3123 = vmatprep.subr.mxu0 0.0
  %3124 = vmatpush1.xpose.msra.mxu0 0.0
  %3125 = vmatprep.subr.mxu0 0.0
  %3126 = vmatpush1.xpose.msra.mxu0 0.0
  %3127 = vmatprep.subr.mxu0 0.0
  %3128 = vmatpush1.xpose.msra.mxu0 0.0
  %3129 = vmatprep.subr.mxu0 0.0
  %3130 = vmatpush1.xpose.msra.mxu0 0.0
  %3131 = vmatprep.subr.mxu0 0.0
  %3132 = vmatpush1.xpose.msra.mxu0 0.0
  %3133 = vmatprep.subr.mxu0 0.0
  %3134 = vmatpush1.xpose.msra.mxu0 0.0
  %3135 = vmatprep.subr.mxu0 0.0
  %3136 = vmatpush1.xpose.msra.mxu0 0.0
  %3137 = vmatprep.subr.mxu0 0.0
  %3138 = vmatpush1.xpose.msra.mxu0 0.0
  %3139 = vmatprep.subr.mxu0 0.0
  %3140 = vmatpush1.xpose.msra.mxu0 0.0
  %3141 = vmatprep.subr.mxu0 0.0
  %3142 = vmatpush1.xpose.msra.mxu0 0.0
  %3143 = vmatprep.subr.mxu0 0.0
  %3144 = vmatpush1.xpose.msra.mxu0 0.0
  %3145 = vmatprep.mubr.f32.mxu0 0.0
  %3146 = vmatmul.mubr.f32.gmra.mrb[0].mxu0 %v3073
  %v3147 = vpop.f32.mrb[0].mxu0
  %v3148 = vadd.f32 0.0, %v3147
  %v3149 = vpop.f32.mrb[0].mxu0
  %3150 = vmatprep.mubr.f32.mxu0 0.0
  %3151 = vmatmul.mubr.f32.gmra.mrb[0].mxu0 %v3075
  %v3152 = vpop.f32.mrb[0].mxu0
  %v3153 = vadd.f32 0.0, %v3152
  %v3154 = vpop.f32.mrb[0].mxu0
  %3155 = vdwg.mxu0
  %3156 = vrot.lane.b32.xlu0 %v2710, 96
  %v3157 = vpop.permute.xlu0 %3156
  %3158 = vrot.lane.b32.xlu0 %v2712, 96
  %v3159 = vpop.permute.xlu0 %3158
  %v3160 = vsel %vm326, %v2710, 0
  %v3162 = vsel %vm326, %v2712, 0
  %v3164 = vsel %vm326, %v3157, 0
  %v3166 = vsel %vm326, %v3159, 0
  %3168 = vmatprep.subr.mxu0 0.0
  %3169 = vmatpush1.xpose.msra.mxu0 %v3164
  %3170 = vmatprep.subr.mxu0 0.0
  %3171 = vmatpush1.xpose.msra.mxu0 %v3166
  %3172 = vmatprep.subr.mxu0 0.0
  %3173 = vmatpush1.xpose.msra.mxu0 0.0
  %3174 = vmatprep.subr.mxu0 0.0
  %3175 = vmatpush1.xpose.msra.mxu0 0.0
  %3176 = vmatprep.subr.mxu0 0.0
  %3177 = vmatpush1.xpose.msra.mxu0 0.0
  %3178 = vmatprep.subr.mxu0 0.0
  %3179 = vmatpush1.xpose.msra.mxu0 0.0
  %3180 = vmatprep.subr.mxu0 0.0
  %3181 = vmatpush1.xpose.msra.mxu0 0.0
  %3182 = vmatprep.subr.mxu0 0.0
  %3183 = vmatpush1.xpose.msra.mxu0 0.0
  %3184 = vmatprep.subr.mxu0 0.0
  %3185 = vmatpush1.xpose.msra.mxu0 0.0
  %3186 = vmatprep.subr.mxu0 0.0
  %3187 = vmatpush1.xpose.msra.mxu0 0.0
  %3188 = vmatprep.subr.mxu0 0.0
  %3189 = vmatpush1.xpose.msra.mxu0 0.0
  %3190 = vmatprep.subr.mxu0 0.0
  %3191 = vmatpush1.xpose.msra.mxu0 0.0
  %3192 = vmatprep.subr.mxu0 0.0
  %3193 = vmatpush1.xpose.msra.mxu0 0.0
  %3194 = vmatprep.subr.mxu0 0.0
  %3195 = vmatpush1.xpose.msra.mxu0 0.0
  %3196 = vmatprep.subr.mxu0 0.0
  %3197 = vmatpush1.xpose.msra.mxu0 0.0
  %3198 = vmatprep.subr.mxu0 0.0
  %3199 = vmatpush1.xpose.msra.mxu0 0.0
  %3200 = vmatprep.subr.mxu0 0.0
  %3201 = vmatpush1.xpose.msra.mxu0 0.0
  %3202 = vmatprep.subr.mxu0 0.0
  %3203 = vmatpush1.xpose.msra.mxu0 0.0
  %3204 = vmatprep.subr.mxu0 0.0
  %3205 = vmatpush1.xpose.msra.mxu0 0.0
  %3206 = vmatprep.subr.mxu0 0.0
  %3207 = vmatpush1.xpose.msra.mxu0 0.0
  %3208 = vmatprep.subr.mxu0 0.0
  %3209 = vmatpush1.xpose.msra.mxu0 0.0
  %3210 = vmatprep.subr.mxu0 0.0
  %3211 = vmatpush1.xpose.msra.mxu0 0.0
  %3212 = vmatprep.subr.mxu0 0.0
  %3213 = vmatpush1.xpose.msra.mxu0 0.0
  %3214 = vmatprep.subr.mxu0 0.0
  %3215 = vmatpush1.xpose.msra.mxu0 0.0
  %3216 = vmatprep.subr.mxu0 0.0
  %3217 = vmatpush1.xpose.msra.mxu0 0.0
  %3218 = vmatprep.subr.mxu0 0.0
  %3219 = vmatpush1.xpose.msra.mxu0 0.0
  %3220 = vmatprep.subr.mxu0 0.0
  %3221 = vmatpush1.xpose.msra.mxu0 0.0
  %3222 = vmatprep.subr.mxu0 0.0
  %3223 = vmatpush1.xpose.msra.mxu0 0.0
  %3224 = vmatprep.subr.mxu0 0.0
  %3225 = vmatpush1.xpose.msra.mxu0 0.0
  %3226 = vmatprep.subr.mxu0 0.0
  %3227 = vmatpush1.xpose.msra.mxu0 0.0
  %3228 = vmatprep.subr.mxu0 0.0
  %3229 = vmatpush1.xpose.msra.mxu0 0.0
  %3230 = vmatprep.subr.mxu0 0.0
  %3231 = vmatpush1.xpose.msra.mxu0 0.0
  %3232 = vmatprep.mubr.f32.mxu0 0.0
  %3233 = vmatmul.mubr.f32.gmra.mrb[0].mxu0 %v3160
  %v3234 = vpop.f32.mrb[0].mxu0
  %v3235 = vadd.f32 0.0, %v3234
  %v3236 = vpop.f32.mrb[0].mxu0
  %3237 = vmatprep.mubr.f32.mxu0 0.0
  %3238 = vmatmul.mubr.f32.gmra.mrb[0].mxu0 %v3162
  %v3239 = vpop.f32.mrb[0].mxu0
  %v3240 = vadd.f32 0.0, %v3239
  %v3241 = vpop.f32.mrb[0].mxu0
  %3242 = vdwg.mxu0
  %3243 = vrot.lane.b32.xlu0 %v2714, 96
  %v3244 = vpop.permute.xlu0 %3243
  %3245 = vrot.lane.b32.xlu0 %v2716, 96
  %v3246 = vpop.permute.xlu0 %3245
  %v3247 = vsel %vm326, %v2714, 0
  %v3249 = vsel %vm326, %v2716, 0
  %v3251 = vsel %vm326, %v3244, 0
  %v3253 = vsel %vm326, %v3246, 0
  %3255 = vmatprep.subr.mxu0 0.0
  %3256 = vmatpush1.xpose.msra.mxu0 %v3251
  %3257 = vmatprep.subr.mxu0 0.0
  %3258 = vmatpush1.xpose.msra.mxu0 %v3253
  %3259 = vmatprep.subr.mxu0 0.0
  %3260 = vmatpush1.xpose.msra.mxu0 0.0
  %3261 = vmatprep.subr.mxu0 0.0
  %3262 = vmatpush1.xpose.msra.mxu0 0.0
  %3263 = vmatprep.subr.mxu0 0.0
  %3264 = vmatpush1.xpose.msra.mxu0 0.0
  %3265 = vmatprep.subr.mxu0 0.0
  %3266 = vmatpush1.xpose.msra.mxu0 0.0
  %3267 = vmatprep.subr.mxu0 0.0
  %3268 = vmatpush1.xpose.msra.mxu0 0.0
  %3269 = vmatprep.subr.mxu0 0.0
  %3270 = vmatpush1.xpose.msra.mxu0 0.0
  %3271 = vmatprep.subr.mxu0 0.0
  %3272 = vmatpush1.xpose.msra.mxu0 0.0
  %3273 = vmatprep.subr.mxu0 0.0
  %3274 = vmatpush1.xpose.msra.mxu0 0.0
  %3275 = vmatprep.subr.mxu0 0.0
  %3276 = vmatpush1.xpose.msra.mxu0 0.0
  %3277 = vmatprep.subr.mxu0 0.0
  %3278 = vmatpush1.xpose.msra.mxu0 0.0
  %3279 = vmatprep.subr.mxu0 0.0
  %3280 = vmatpush1.xpose.msra.mxu0 0.0
  %3281 = vmatprep.subr.mxu0 0.0
  %3282 = vmatpush1.xpose.msra.mxu0 0.0
  %3283 = vmatprep.subr.mxu0 0.0
  %3284 = vmatpush1.xpose.msra.mxu0 0.0
  %3285 = vmatprep.subr.mxu0 0.0
  %3286 = vmatpush1.xpose.msra.mxu0 0.0
  %3287 = vmatprep.subr.mxu0 0.0
  %3288 = vmatpush1.xpose.msra.mxu0 0.0
  %3289 = vmatprep.subr.mxu0 0.0
  %3290 = vmatpush1.xpose.msra.mxu0 0.0
  %3291 = vmatprep.subr.mxu0 0.0
  %3292 = vmatpush1.xpose.msra.mxu0 0.0
  %3293 = vmatprep.subr.mxu0 0.0
  %3294 = vmatpush1.xpose.msra.mxu0 0.0
  %3295 = vmatprep.subr.mxu0 0.0
  %3296 = vmatpush1.xpose.msra.mxu0 0.0
  %3297 = vmatprep.subr.mxu0 0.0
  %3298 = vmatpush1.xpose.msra.mxu0 0.0
  %3299 = vmatprep.subr.mxu0 0.0
  %3300 = vmatpush1.xpose.msra.mxu0 0.0
  %3301 = vmatprep.subr.mxu0 0.0
  %3302 = vmatpush1.xpose.msra.mxu0 0.0
  %3303 = vmatprep.subr.mxu0 0.0
  %3304 = vmatpush1.xpose.msra.mxu0 0.0
  %3305 = vmatprep.subr.mxu0 0.0
  %3306 = vmatpush1.xpose.msra.mxu0 0.0
  %3307 = vmatprep.subr.mxu0 0.0
  %3308 = vmatpush1.xpose.msra.mxu0 0.0
  %3309 = vmatprep.subr.mxu0 0.0
  %3310 = vmatpush1.xpose.msra.mxu0 0.0
  %3311 = vmatprep.subr.mxu0 0.0
  %3312 = vmatpush1.xpose.msra.mxu0 0.0
  %3313 = vmatprep.subr.mxu0 0.0
  %3314 = vmatpush1.xpose.msra.mxu0 0.0
  %3315 = vmatprep.subr.mxu0 0.0
  %3316 = vmatpush1.xpose.msra.mxu0 0.0
  %3317 = vmatprep.subr.mxu0 0.0
  %3318 = vmatpush1.xpose.msra.mxu0 0.0
  %3319 = vmatprep.mubr.f32.mxu0 0.0
  %3320 = vmatmul.mubr.f32.gmra.mrb[0].mxu0 %v3247
  %v3321 = vpop.f32.mrb[0].mxu0
  %v3322 = vadd.f32 0.0, %v3321
  %v3323 = vpop.f32.mrb[0].mxu0
  %3324 = vmatprep.mubr.f32.mxu0 0.0
  %3325 = vmatmul.mubr.f32.gmra.mrb[0].mxu0 %v3249
  %v3326 = vpop.f32.mrb[0].mxu0
  %v3327 = vadd.f32 0.0, %v3326
  %v3328 = vpop.f32.mrb[0].mxu0
  %3329 = vdwg.mxu0
  %3330 = vrot.lane.b32.xlu0 %v2718, 96
  %v3331 = vpop.permute.xlu0 %3330
  %3332 = vrot.lane.b32.xlu0 %v2720, 96
  %v3333 = vpop.permute.xlu0 %3332
  %v3334 = vsel %vm326, %v2718, 0
  %v3336 = vsel %vm326, %v2720, 0
  %v3338 = vsel %vm326, %v3331, 0
  %v3340 = vsel %vm326, %v3333, 0
  %3342 = vmatprep.subr.mxu0 0.0
  %3343 = vmatpush1.xpose.msra.mxu0 %v3338
  %3344 = vmatprep.subr.mxu0 0.0
  %3345 = vmatpush1.xpose.msra.mxu0 %v3340
  %3346 = vmatprep.subr.mxu0 0.0
  %3347 = vmatpush1.xpose.msra.mxu0 0.0
  %3348 = vmatprep.subr.mxu0 0.0
  %3349 = vmatpush1.xpose.msra.mxu0 0.0
  %3350 = vmatprep.subr.mxu0 0.0
  %3351 = vmatpush1.xpose.msra.mxu0 0.0
  %3352 = vmatprep.subr.mxu0 0.0
  %3353 = vmatpush1.xpose.msra.mxu0 0.0
  %3354 = vmatprep.subr.mxu0 0.0
  %3355 = vmatpush1.xpose.msra.mxu0 0.0
  %3356 = vmatprep.subr.mxu0 0.0
  %3357 = vmatpush1.xpose.msra.mxu0 0.0
  %3358 = vmatprep.subr.mxu0 0.0
  %3359 = vmatpush1.xpose.msra.mxu0 0.0
  %3360 = vmatprep.subr.mxu0 0.0
  %3361 = vmatpush1.xpose.msra.mxu0 0.0
  %3362 = vmatprep.subr.mxu0 0.0
  %3363 = vmatpush1.xpose.msra.mxu0 0.0
  %3364 = vmatprep.subr.mxu0 0.0
  %3365 = vmatpush1.xpose.msra.mxu0 0.0
  %3366 = vmatprep.subr.mxu0 0.0
  %3367 = vmatpush1.xpose.msra.mxu0 0.0
  %3368 = vmatprep.subr.mxu0 0.0
  %3369 = vmatpush1.xpose.msra.mxu0 0.0
  %3370 = vmatprep.subr.mxu0 0.0
  %3371 = vmatpush1.xpose.msra.mxu0 0.0
  %3372 = vmatprep.subr.mxu0 0.0
  %3373 = vmatpush1.xpose.msra.mxu0 0.0
  %3374 = vmatprep.subr.mxu0 0.0
  %3375 = vmatpush1.xpose.msra.mxu0 0.0
  %3376 = vmatprep.subr.mxu0 0.0
  %3377 = vmatpush1.xpose.msra.mxu0 0.0
  %3378 = vmatprep.subr.mxu0 0.0
  %3379 = vmatpush1.xpose.msra.mxu0 0.0
  %3380 = vmatprep.subr.mxu0 0.0
  %3381 = vmatpush1.xpose.msra.mxu0 0.0
  %3382 = vmatprep.subr.mxu0 0.0
  %3383 = vmatpush1.xpose.msra.mxu0 0.0
  %3384 = vmatprep.subr.mxu0 0.0
  %3385 = vmatpush1.xpose.msra.mxu0 0.0
  %3386 = vmatprep.subr.mxu0 0.0
  %3387 = vmatpush1.xpose.msra.mxu0 0.0
  %3388 = vmatprep.subr.mxu0 0.0
  %3389 = vmatpush1.xpose.msra.mxu0 0.0
  %3390 = vmatprep.subr.mxu0 0.0
  %3391 = vmatpush1.xpose.msra.mxu0 0.0
  %3392 = vmatprep.subr.mxu0 0.0
  %3393 = vmatpush1.xpose.msra.mxu0 0.0
  %3394 = vmatprep.subr.mxu0 0.0
  %3395 = vmatpush1.xpose.msra.mxu0 0.0
  %3396 = vmatprep.subr.mxu0 0.0
  %3397 = vmatpush1.xpose.msra.mxu0 0.0
  %3398 = vmatprep.subr.mxu0 0.0
  %3399 = vmatpush1.xpose.msra.mxu0 0.0
  %3400 = vmatprep.subr.mxu0 0.0
  %3401 = vmatpush1.xpose.msra.mxu0 0.0
  %3402 = vmatprep.subr.mxu0 0.0
  %3403 = vmatpush1.xpose.msra.mxu0 0.0
  %3404 = vmatprep.subr.mxu0 0.0
  %3405 = vmatpush1.xpose.msra.mxu0 0.0
  %3406 = vmatprep.mubr.f32.mxu0 0.0
  %3407 = vmatmul.mubr.f32.gmra.mrb[0].mxu0 %v3334
  %v3408 = vpop.f32.mrb[0].mxu0
  %v3409 = vadd.f32 0.0, %v3408
  %v3410 = vpop.f32.mrb[0].mxu0
  %3411 = vmatprep.mubr.f32.mxu0 0.0
  %3412 = vmatmul.mubr.f32.gmra.mrb[0].mxu0 %v3336
  %v3413 = vpop.f32.mrb[0].mxu0
  %v3414 = vadd.f32 0.0, %v3413
  %v3415 = vpop.f32.mrb[0].mxu0
  %3416 = vdwg.mxu0
  %v3417 = vmul.f32 %v2800, 0.5
  %v3418 = vmul.f32 %v2805, 0.5
  %v3419 = vmul.f32 %v2887, 0.5
  %v3420 = vmul.f32 %v2892, 0.5
  %v3421 = vmul.f32 %v2974, 0.5
  %v3422 = vmul.f32 %v2979, 0.5
  %v3423 = vmul.f32 %v3061, 0.5
  %v3424 = vmul.f32 %v3066, 0.5
  %v3425 = vmul.f32 %v3148, 0.5
  %v3426 = vmul.f32 %v3153, 0.5
  %v3427 = vmul.f32 %v3235, 0.5
  %v3428 = vmul.f32 %v3240, 0.5
  %v3429 = vmul.f32 %v3322, 0.5
  %v3430 = vmul.f32 %v3327, 0.5
  %v3431 = vmul.f32 %v3409, 0.5
  %v3432 = vmul.f32 %v3414, 0.5
  %v3433 = vadd.f32 %v3417, %v32
  %v3434 = vadd.f32 %v3418, %v32
  %v3435 = vadd.f32 %v3419, %v32
  %v3436 = vadd.f32 %v3420, %v32
  %v3437 = vadd.f32 %v3421, %v32
  %v3438 = vadd.f32 %v3422, %v32
  %v3439 = vadd.f32 %v3423, %v32
  %v3440 = vadd.f32 %v3424, %v32
  %v3441 = vadd.f32 %v3425, %v32
  %v3442 = vadd.f32 %v3426, %v32
  %v3443 = vadd.f32 %v3427, %v32
  %v3444 = vadd.f32 %v3428, %v32
  %v3445 = vadd.f32 %v3429, %v32
  %v3446 = vadd.f32 %v3430, %v32
  %v3447 = vadd.f32 %v3431, %v32
  %v3448 = vadd.f32 %v3432, %v32
  %v3449 = vsel %vm37, %v3433, -inf
  %3450 = vmax.xlane.f32.xlu0 %v3449
  %v3451 = vpop.xlane.xlu0 %3450
  %v3452 = vsel %vm37, %v3434, -inf
  %3453 = vmax.xlane.f32.xlu0 %v3452
  %v3454 = vpop.xlane.xlu0 %3453
  %v3455 = vsel %vm37, %v3435, -inf
  %3456 = vmax.xlane.f32.xlu0 %v3455
  %v3457 = vpop.xlane.xlu0 %3456
  %v3458 = vsel %vm37, %v3436, -inf
  %3459 = vmax.xlane.f32.xlu0 %v3458
  %v3460 = vpop.xlane.xlu0 %3459
  %v3461 = vsel %vm37, %v3437, -inf
  %3462 = vmax.xlane.f32.xlu0 %v3461
  %v3463 = vpop.xlane.xlu0 %3462
  %v3464 = vsel %vm37, %v3438, -inf
  %3465 = vmax.xlane.f32.xlu0 %v3464
  %v3466 = vpop.xlane.xlu0 %3465
  %v3467 = vsel %vm37, %v3439, -inf
  %3468 = vmax.xlane.f32.xlu0 %v3467
  %v3469 = vpop.xlane.xlu0 %3468
  %v3470 = vsel %vm37, %v3440, -inf
  %3471 = vmax.xlane.f32.xlu0 %v3470
  %v3472 = vpop.xlane.xlu0 %3471
  %v3473 = vsel %vm37, %v3441, -inf
  %3474 = vmax.xlane.f32.xlu0 %v3473
  %v3475 = vpop.xlane.xlu0 %3474
  %v3476 = vsel %vm37, %v3442, -inf
  %3477 = vmax.xlane.f32.xlu0 %v3476
  %v3478 = vpop.xlane.xlu0 %3477
  %v3479 = vsel %vm37, %v3443, -inf
  %3480 = vmax.xlane.f32.xlu0 %v3479
  %v3481 = vpop.xlane.xlu0 %3480
  %v3482 = vsel %vm37, %v3444, -inf
  %3483 = vmax.xlane.f32.xlu0 %v3482
  %v3484 = vpop.xlane.xlu0 %3483
  %v3485 = vsel %vm37, %v3445, -inf
  %3486 = vmax.xlane.f32.xlu0 %v3485
  %v3487 = vpop.xlane.xlu0 %3486
  %v3488 = vsel %vm37, %v3446, -inf
  %3489 = vmax.xlane.f32.xlu0 %v3488
  %v3490 = vpop.xlane.xlu0 %3489
  %v3491 = vsel %vm37, %v3447, -inf
  %3492 = vmax.xlane.f32.xlu0 %v3491
  %v3493 = vpop.xlane.xlu0 %3492
  %v3494 = vsel %vm37, %v3448, -inf
  %3495 = vmax.xlane.f32.xlu0 %v3494
  %v3496 = vpop.xlane.xlu0 %3495
  %v3497 = vsub.f32 %v3433, %v3451
  %v3498 = vsub.f32 %v3434, %v3454
  %v3499 = vsub.f32 %v3435, %v3457
  %v3500 = vsub.f32 %v3436, %v3460
  %v3501 = vsub.f32 %v3437, %v3463
  %v3502 = vsub.f32 %v3438, %v3466
  %v3503 = vsub.f32 %v3439, %v3469
  %v3504 = vsub.f32 %v3440, %v3472
  %v3505 = vsub.f32 %v3441, %v3475
  %v3506 = vsub.f32 %v3442, %v3478
  %v3507 = vsub.f32 %v3443, %v3481
  %v3508 = vsub.f32 %v3444, %v3484
  %v3509 = vsub.f32 %v3445, %v3487
  %v3510 = vsub.f32 %v3446, %v3490
  %v3511 = vsub.f32 %v3447, %v3493
  %v3512 = vsub.f32 %v3448, %v3496
  %v3513 = vmul.f32 %v3497, 1.442695
  %v3514 = vpow.pop %v3513
  %v3515 = vmul.f32 %v3498, 1.442695
  %v3516 = vpow.pop %v3515
  %v3517 = vmul.f32 %v3499, 1.442695
  %v3518 = vpow.pop %v3517
  %v3519 = vmul.f32 %v3500, 1.442695
  %v3520 = vpow.pop %v3519
  %v3521 = vmul.f32 %v3501, 1.442695
  %v3522 = vpow.pop %v3521
  %v3523 = vmul.f32 %v3502, 1.442695
  %v3524 = vpow.pop %v3523
  %v3525 = vmul.f32 %v3503, 1.442695
  %v3526 = vpow.pop %v3525
  %v3527 = vmul.f32 %v3504, 1.442695
  %v3528 = vpow.pop %v3527
  %v3529 = vmul.f32 %v3505, 1.442695
  %v3530 = vpow.pop %v3529
  %v3531 = vmul.f32 %v3506, 1.442695
  %v3532 = vpow.pop %v3531
  %v3533 = vmul.f32 %v3507, 1.442695
  %v3534 = vpow.pop %v3533
  %v3535 = vmul.f32 %v3508, 1.442695
  %v3536 = vpow.pop %v3535
  %v3537 = vmul.f32 %v3509, 1.442695
  %v3538 = vpow.pop %v3537
  %v3539 = vmul.f32 %v3510, 1.442695
  %v3540 = vpow.pop %v3539
  %v3541 = vmul.f32 %v3511, 1.442695
  %v3542 = vpow.pop %v3541
  %v3543 = vmul.f32 %v3512, 1.442695
  %v3544 = vpow.pop %v3543
  %v3545 = vsel %vm37, %v3514, 0.0
  %3546 = vadd.xlane.f32.xlu0 %v3545
  %v3547 = vpop.xlane.xlu0 %3546
  %v3548 = vsel %vm37, %v3516, 0.0
  %3549 = vadd.xlane.f32.xlu0 %v3548
  %v3550 = vpop.xlane.xlu0 %3549
  %v3551 = vsel %vm37, %v3518, 0.0
  %3552 = vadd.xlane.f32.xlu0 %v3551
  %v3553 = vpop.xlane.xlu0 %3552
  %v3554 = vsel %vm37, %v3520, 0.0
  %3555 = vadd.xlane.f32.xlu0 %v3554
  %v3556 = vpop.xlane.xlu0 %3555
  %v3557 = vsel %vm37, %v3522, 0.0
  %3558 = vadd.xlane.f32.xlu0 %v3557
  %v3559 = vpop.xlane.xlu0 %3558
  %v3560 = vsel %vm37, %v3524, 0.0
  %3561 = vadd.xlane.f32.xlu0 %v3560
  %v3562 = vpop.xlane.xlu0 %3561
  %v3563 = vsel %vm37, %v3526, 0.0
  %3564 = vadd.xlane.f32.xlu0 %v3563
  %v3565 = vpop.xlane.xlu0 %3564
  %v3566 = vsel %vm37, %v3528, 0.0
  %3567 = vadd.xlane.f32.xlu0 %v3566
  %v3568 = vpop.xlane.xlu0 %3567
  %v3569 = vsel %vm37, %v3530, 0.0
  %3570 = vadd.xlane.f32.xlu0 %v3569
  %v3571 = vpop.xlane.xlu0 %3570
  %v3572 = vsel %vm37, %v3532, 0.0
  %3573 = vadd.xlane.f32.xlu0 %v3572
  %v3574 = vpop.xlane.xlu0 %3573
  %v3575 = vsel %vm37, %v3534, 0.0
  %3576 = vadd.xlane.f32.xlu0 %v3575
  %v3577 = vpop.xlane.xlu0 %3576
  %v3578 = vsel %vm37, %v3536, 0.0
  %3579 = vadd.xlane.f32.xlu0 %v3578
  %v3580 = vpop.xlane.xlu0 %3579
  %v3581 = vsel %vm37, %v3538, 0.0
  %3582 = vadd.xlane.f32.xlu0 %v3581
  %v3583 = vpop.xlane.xlu0 %3582
  %v3584 = vsel %vm37, %v3540, 0.0
  %3585 = vadd.xlane.f32.xlu0 %v3584
  %v3586 = vpop.xlane.xlu0 %3585
  %v3587 = vsel %vm37, %v3542, 0.0
  %3588 = vadd.xlane.f32.xlu0 %v3587
  %v3589 = vpop.xlane.xlu0 %3588
  %v3590 = vsel %vm37, %v3544, 0.0
  %3591 = vadd.xlane.f32.xlu0 %v3590
  %v3592 = vpop.xlane.xlu0 %3591
  %v3593 = vrcp.pop %v3547
  %v3594 = vrcp.pop %v3550
  %v3595 = vrcp.pop %v3553
  %v3596 = vrcp.pop %v3556
  %v3597 = vrcp.pop %v3559
  %v3598 = vrcp.pop %v3562
  %v3599 = vrcp.pop %v3565
  %v3600 = vrcp.pop %v3568
  %v3601 = vrcp.pop %v3571
  %v3602 = vrcp.pop %v3574
  %v3603 = vrcp.pop %v3577
  %v3604 = vrcp.pop %v3580
  %v3605 = vrcp.pop %v3583
  %v3606 = vrcp.pop %v3586
  %v3607 = vrcp.pop %v3589
  %v3608 = vrcp.pop %v3592
  %v3609 = vmul.f32 %v3514, %v3593
  %v3610 = vmul.f32 %v3516, %v3594
  %v3611 = vmul.f32 %v3518, %v3595
  %v3612 = vmul.f32 %v3520, %v3596
  %v3613 = vmul.f32 %v3522, %v3597
  %v3614 = vmul.f32 %v3524, %v3598
  %v3615 = vmul.f32 %v3526, %v3599
  %v3616 = vmul.f32 %v3528, %v3600
  %v3617 = vmul.f32 %v3530, %v3601
  %v3618 = vmul.f32 %v3532, %v3602
  %v3619 = vmul.f32 %v3534, %v3603
  %v3620 = vmul.f32 %v3536, %v3604
  %v3621 = vmul.f32 %v3538, %v3605
  %v3622 = vmul.f32 %v3540, %v3606
  %v3623 = vmul.f32 %v3542, %v3607
  %v3624 = vmul.f32 %v3544, %v3608
  %3625 = vrot.lane.b32.xlu0 %v2683, 64
  %v3626 = vpop.permute.xlu0 %3625
  %3627 = vrot.lane.b32.xlu0 %v2688, 64
  %v3628 = vpop.permute.xlu0 %3627
  %v3632 = vsel %vm37, %v3609, 0
  %v3635 = vsel %vm37, %v3610, 0
  %3637 = vmatprep.subr.mxu0 0.0
  %3638 = vmatpush1.msra.mxu0 %v3626
  %3639 = vmatprep.subr.mxu0 0.0
  %3640 = vmatpush1.msra.mxu0 %v3628
  %3641 = vmatprep.subr.mxu0 0.0
  %3642 = vmatpush1.msra.mxu0 0.0
  %3643 = vmatprep.subr.mxu0 0.0
  %3644 = vmatpush1.msra.mxu0 0.0
  %3645 = vmatprep.subr.mxu0 0.0
  %3646 = vmatpush1.msra.mxu0 0.0
  %3647 = vmatprep.subr.mxu0 0.0
  %3648 = vmatpush1.msra.mxu0 0.0
  %3649 = vmatprep.subr.mxu0 0.0
  %3650 = vmatpush1.msra.mxu0 0.0
  %3651 = vmatprep.subr.mxu0 0.0
  %3652 = vmatpush1.msra.mxu0 0.0
  %3653 = vmatprep.subr.mxu0 0.0
  %3654 = vmatpush1.msra.mxu0 0.0
  %3655 = vmatprep.subr.mxu0 0.0
  %3656 = vmatpush1.msra.mxu0 0.0
  %3657 = vmatprep.subr.mxu0 0.0
  %3658 = vmatpush1.msra.mxu0 0.0
  %3659 = vmatprep.subr.mxu0 0.0
  %3660 = vmatpush1.msra.mxu0 0.0
  %3661 = vmatprep.subr.mxu0 0.0
  %3662 = vmatpush1.msra.mxu0 0.0
  %3663 = vmatprep.subr.mxu0 0.0
  %3664 = vmatpush1.msra.mxu0 0.0
  %3665 = vmatprep.subr.mxu0 0.0
  %3666 = vmatpush1.msra.mxu0 0.0
  %3667 = vmatprep.subr.mxu0 0.0
  %3668 = vmatpush1.msra.mxu0 0.0
  %3669 = vmatprep.subr.mxu0 0.0
  %3670 = vmatpush1.msra.mxu0 0.0
  %3671 = vmatprep.subr.mxu0 0.0
  %3672 = vmatpush1.msra.mxu0 0.0
  %3673 = vmatprep.subr.mxu0 0.0
  %3674 = vmatpush1.msra.mxu0 0.0
  %3675 = vmatprep.subr.mxu0 0.0
  %3676 = vmatpush1.msra.mxu0 0.0
  %3677 = vmatprep.subr.mxu0 0.0
  %3678 = vmatpush1.msra.mxu0 0.0
  %3679 = vmatprep.subr.mxu0 0.0
  %3680 = vmatpush1.msra.mxu0 0.0
  %3681 = vmatprep.subr.mxu0 0.0
  %3682 = vmatpush1.msra.mxu0 0.0
  %3683 = vmatprep.subr.mxu0 0.0
  %3684 = vmatpush1.msra.mxu0 0.0
  %3685 = vmatprep.subr.mxu0 0.0
  %3686 = vmatpush1.msra.mxu0 0.0
  %3687 = vmatprep.subr.mxu0 0.0
  %3688 = vmatpush1.msra.mxu0 0.0
  %3689 = vmatprep.subr.mxu0 0.0
  %3690 = vmatpush1.msra.mxu0 0.0
  %3691 = vmatprep.subr.mxu0 0.0
  %3692 = vmatpush1.msra.mxu0 0.0
  %3693 = vmatprep.subr.mxu0 0.0
  %3694 = vmatpush1.msra.mxu0 0.0
  %3695 = vmatprep.subr.mxu0 0.0
  %3696 = vmatpush1.msra.mxu0 0.0
  %3697 = vmatprep.subr.mxu0 0.0
  %3698 = vmatpush1.msra.mxu0 0.0
  %3699 = vmatprep.subr.mxu0 0.0
  %3700 = vmatpush1.msra.mxu0 0.0
  %3701 = vmatprep.mubr.f32.mxu0 0.0
  %3702 = vmatmul.mubr.f32.gmra.mrb[0].mxu0 %v3632
  %v3703 = vpop.f32.mrb[0].mxu0
  %v3704 = vadd.f32 0.0, %v3703
  %v3705 = vpop.f32.mrb[0].mxu0
  %3706 = vmatprep.mubr.f32.mxu0 0.0
  %3707 = vmatmul.mubr.f32.gmra.mrb[0].mxu0 %v3635
  %v3708 = vpop.f32.mrb[0].mxu0
  %v3709 = vadd.f32 0.0, %v3708
  %v3710 = vpop.f32.mrb[0].mxu0
  %3711 = vdwg.mxu0
  %3712 = vrot.lane.b32.xlu0 %v2694, 64
  %v3713 = vpop.permute.xlu0 %3712
  %3714 = vrot.lane.b32.xlu0 %v2696, 64
  %v3715 = vpop.permute.xlu0 %3714
  %v3719 = vsel %vm37, %v3611, 0
  %v3722 = vsel %vm37, %v3612, 0
  %3724 = vmatprep.subr.mxu0 0.0
  %3725 = vmatpush1.msra.mxu0 %v3713
  %3726 = vmatprep.subr.mxu0 0.0
  %3727 = vmatpush1.msra.mxu0 %v3715
  %3728 = vmatprep.subr.mxu0 0.0
  %3729 = vmatpush1.msra.mxu0 0.0
  %3730 = vmatprep.subr.mxu0 0.0
  %3731 = vmatpush1.msra.mxu0 0.0
  %3732 = vmatprep.subr.mxu0 0.0
  %3733 = vmatpush1.msra.mxu0 0.0
  %3734 = vmatprep.subr.mxu0 0.0
  %3735 = vmatpush1.msra.mxu0 0.0
  %3736 = vmatprep.subr.mxu0 0.0
  %3737 = vmatpush1.msra.mxu0 0.0
  %3738 = vmatprep.subr.mxu0 0.0
  %3739 = vmatpush1.msra.mxu0 0.0
  %3740 = vmatprep.subr.mxu0 0.0
  %3741 = vmatpush1.msra.mxu0 0.0
  %3742 = vmatprep.subr.mxu0 0.0
  %3743 = vmatpush1.msra.mxu0 0.0
  %3744 = vmatprep.subr.mxu0 0.0
  %3745 = vmatpush1.msra.mxu0 0.0
  %3746 = vmatprep.subr.mxu0 0.0
  %3747 = vmatpush1.msra.mxu0 0.0
  %3748 = vmatprep.subr.mxu0 0.0
  %3749 = vmatpush1.msra.mxu0 0.0
  %3750 = vmatprep.subr.mxu0 0.0
  %3751 = vmatpush1.msra.mxu0 0.0
  %3752 = vmatprep.subr.mxu0 0.0
  %3753 = vmatpush1.msra.mxu0 0.0
  %3754 = vmatprep.subr.mxu0 0.0
  %3755 = vmatpush1.msra.mxu0 0.0
  %3756 = vmatprep.subr.mxu0 0.0
  %3757 = vmatpush1.msra.mxu0 0.0
  %3758 = vmatprep.subr.mxu0 0.0
  %3759 = vmatpush1.msra.mxu0 0.0
  %3760 = vmatprep.subr.mxu0 0.0
  %3761 = vmatpush1.msra.mxu0 0.0
  %3762 = vmatprep.subr.mxu0 0.0
  %3763 = vmatpush1.msra.mxu0 0.0
  %3764 = vmatprep.subr.mxu0 0.0
  %3765 = vmatpush1.msra.mxu0 0.0
  %3766 = vmatprep.subr.mxu0 0.0
  %3767 = vmatpush1.msra.mxu0 0.0
  %3768 = vmatprep.subr.mxu0 0.0
  %3769 = vmatpush1.msra.mxu0 0.0
  %3770 = vmatprep.subr.mxu0 0.0
  %3771 = vmatpush1.msra.mxu0 0.0
  %3772 = vmatprep.subr.mxu0 0.0
  %3773 = vmatpush1.msra.mxu0 0.0
  %3774 = vmatprep.subr.mxu0 0.0
  %3775 = vmatpush1.msra.mxu0 0.0
  %3776 = vmatprep.subr.mxu0 0.0
  %3777 = vmatpush1.msra.mxu0 0.0
  %3778 = vmatprep.subr.mxu0 0.0
  %3779 = vmatpush1.msra.mxu0 0.0
  %3780 = vmatprep.subr.mxu0 0.0
  %3781 = vmatpush1.msra.mxu0 0.0
  %3782 = vmatprep.subr.mxu0 0.0
  %3783 = vmatpush1.msra.mxu0 0.0
  %3784 = vmatprep.subr.mxu0 0.0
  %3785 = vmatpush1.msra.mxu0 0.0
  %3786 = vmatprep.subr.mxu0 0.0
  %3787 = vmatpush1.msra.mxu0 0.0
  %3788 = vmatprep.mubr.f32.mxu0 0.0
  %3789 = vmatmul.mubr.f32.gmra.mrb[0].mxu0 %v3719
  %v3790 = vpop.f32.mrb[0].mxu0
  %v3791 = vadd.f32 0.0, %v3790
  %v3792 = vpop.f32.mrb[0].mxu0
  %3793 = vmatprep.mubr.f32.mxu0 0.0
  %3794 = vmatmul.mubr.f32.gmra.mrb[0].mxu0 %v3722
  %v3795 = vpop.f32.mrb[0].mxu0
  %v3796 = vadd.f32 0.0, %v3795
  %v3797 = vpop.f32.mrb[0].mxu0
  %3798 = vdwg.mxu0
  %3799 = vrot.lane.b32.xlu0 %v2698, 64
  %v3800 = vpop.permute.xlu0 %3799
  %3801 = vrot.lane.b32.xlu0 %v2700, 64
  %v3802 = vpop.permute.xlu0 %3801
  %v3806 = vsel %vm37, %v3613, 0
  %v3809 = vsel %vm37, %v3614, 0
  %3811 = vmatprep.subr.mxu0 0.0
  %3812 = vmatpush1.msra.mxu0 %v3800
  %3813 = vmatprep.subr.mxu0 0.0
  %3814 = vmatpush1.msra.mxu0 %v3802
  %3815 = vmatprep.subr.mxu0 0.0
  %3816 = vmatpush1.msra.mxu0 0.0
  %3817 = vmatprep.subr.mxu0 0.0
  %3818 = vmatpush1.msra.mxu0 0.0
  %3819 = vmatprep.subr.mxu0 0.0
  %3820 = vmatpush1.msra.mxu0 0.0
  %3821 = vmatprep.subr.mxu0 0.0
  %3822 = vmatpush1.msra.mxu0 0.0
  %3823 = vmatprep.subr.mxu0 0.0
  %3824 = vmatpush1.msra.mxu0 0.0
  %3825 = vmatprep.subr.mxu0 0.0
  %3826 = vmatpush1.msra.mxu0 0.0
  %3827 = vmatprep.subr.mxu0 0.0
  %3828 = vmatpush1.msra.mxu0 0.0
  %3829 = vmatprep.subr.mxu0 0.0
  %3830 = vmatpush1.msra.mxu0 0.0
  %3831 = vmatprep.subr.mxu0 0.0
  %3832 = vmatpush1.msra.mxu0 0.0
  %3833 = vmatprep.subr.mxu0 0.0
  %3834 = vmatpush1.msra.mxu0 0.0
  %3835 = vmatprep.subr.mxu0 0.0
  %3836 = vmatpush1.msra.mxu0 0.0
  %3837 = vmatprep.subr.mxu0 0.0
  %3838 = vmatpush1.msra.mxu0 0.0
  %3839 = vmatprep.subr.mxu0 0.0
  %3840 = vmatpush1.msra.mxu0 0.0
  %3841 = vmatprep.subr.mxu0 0.0
  %3842 = vmatpush1.msra.mxu0 0.0
  %3843 = vmatprep.subr.mxu0 0.0
  %3844 = vmatpush1.msra.mxu0 0.0
  %3845 = vmatprep.subr.mxu0 0.0
  %3846 = vmatpush1.msra.mxu0 0.0
  %3847 = vmatprep.subr.mxu0 0.0
  %3848 = vmatpush1.msra.mxu0 0.0
  %3849 = vmatprep.subr.mxu0 0.0
  %3850 = vmatpush1.msra.mxu0 0.0
  %3851 = vmatprep.subr.mxu0 0.0
  %3852 = vmatpush1.msra.mxu0 0.0
  %3853 = vmatprep.subr.mxu0 0.0
  %3854 = vmatpush1.msra.mxu0 0.0
  %3855 = vmatprep.subr.mxu0 0.0
  %3856 = vmatpush1.msra.mxu0 0.0
  %3857 = vmatprep.subr.mxu0 0.0
  %3858 = vmatpush1.msra.mxu0 0.0
  %3859 = vmatprep.subr.mxu0 0.0
  %3860 = vmatpush1.msra.mxu0 0.0
  %3861 = vmatprep.subr.mxu0 0.0
  %3862 = vmatpush1.msra.mxu0 0.0
  %3863 = vmatprep.subr.mxu0 0.0
  %3864 = vmatpush1.msra.mxu0 0.0
  %3865 = vmatprep.subr.mxu0 0.0
  %3866 = vmatpush1.msra.mxu0 0.0
  %3867 = vmatprep.subr.mxu0 0.0
  %3868 = vmatpush1.msra.mxu0 0.0
  %3869 = vmatprep.subr.mxu0 0.0
  %3870 = vmatpush1.msra.mxu0 0.0
  %3871 = vmatprep.subr.mxu0 0.0
  %3872 = vmatpush1.msra.mxu0 0.0
  %3873 = vmatprep.subr.mxu0 0.0
  %3874 = vmatpush1.msra.mxu0 0.0
  %3875 = vmatprep.mubr.f32.mxu0 0.0
  %3876 = vmatmul.mubr.f32.gmra.mrb[0].mxu0 %v3806
  %v3877 = vpop.f32.mrb[0].mxu0
  %v3878 = vadd.f32 0.0, %v3877
  %v3879 = vpop.f32.mrb[0].mxu0
  %3880 = vmatprep.mubr.f32.mxu0 0.0
  %3881 = vmatmul.mubr.f32.gmra.mrb[0].mxu0 %v3809
  %v3882 = vpop.f32.mrb[0].mxu0
  %v3883 = vadd.f32 0.0, %v3882
  %v3884 = vpop.f32.mrb[0].mxu0
  %3885 = vdwg.mxu0
  %3886 = vrot.lane.b32.xlu0 %v2702, 64
  %v3887 = vpop.permute.xlu0 %3886
  %3888 = vrot.lane.b32.xlu0 %v2704, 64
  %v3889 = vpop.permute.xlu0 %3888
  %v3893 = vsel %vm37, %v3615, 0
  %v3896 = vsel %vm37, %v3616, 0
  %3898 = vmatprep.subr.mxu0 0.0
  %3899 = vmatpush1.msra.mxu0 %v3887
  %3900 = vmatprep.subr.mxu0 0.0
  %3901 = vmatpush1.msra.mxu0 %v3889
  %3902 = vmatprep.subr.mxu0 0.0
  %3903 = vmatpush1.msra.mxu0 0.0
  %3904 = vmatprep.subr.mxu0 0.0
  %3905 = vmatpush1.msra.mxu0 0.0
  %3906 = vmatprep.subr.mxu0 0.0
  %3907 = vmatpush1.msra.mxu0 0.0
  %3908 = vmatprep.subr.mxu0 0.0
  %3909 = vmatpush1.msra.mxu0 0.0
  %3910 = vmatprep.subr.mxu0 0.0
  %3911 = vmatpush1.msra.mxu0 0.0
  %3912 = vmatprep.subr.mxu0 0.0
  %3913 = vmatpush1.msra.mxu0 0.0
  %3914 = vmatprep.subr.mxu0 0.0
  %3915 = vmatpush1.msra.mxu0 0.0
  %3916 = vmatprep.subr.mxu0 0.0
  %3917 = vmatpush1.msra.mxu0 0.0
  %3918 = vmatprep.subr.mxu0 0.0
  %3919 = vmatpush1.msra.mxu0 0.0
  %3920 = vmatprep.subr.mxu0 0.0
  %3921 = vmatpush1.msra.mxu0 0.0
  %3922 = vmatprep.subr.mxu0 0.0
  %3923 = vmatpush1.msra.mxu0 0.0
  %3924 = vmatprep.subr.mxu0 0.0
  %3925 = vmatpush1.msra.mxu0 0.0
  %3926 = vmatprep.subr.mxu0 0.0
  %3927 = vmatpush1.msra.mxu0 0.0
  %3928 = vmatprep.subr.mxu0 0.0
  %3929 = vmatpush1.msra.mxu0 0.0
  %3930 = vmatprep.subr.mxu0 0.0
  %3931 = vmatpush1.msra.mxu0 0.0
  %3932 = vmatprep.subr.mxu0 0.0
  %3933 = vmatpush1.msra.mxu0 0.0
  %3934 = vmatprep.subr.mxu0 0.0
  %3935 = vmatpush1.msra.mxu0 0.0
  %3936 = vmatprep.subr.mxu0 0.0
  %3937 = vmatpush1.msra.mxu0 0.0
  %3938 = vmatprep.subr.mxu0 0.0
  %3939 = vmatpush1.msra.mxu0 0.0
  %3940 = vmatprep.subr.mxu0 0.0
  %3941 = vmatpush1.msra.mxu0 0.0
  %3942 = vmatprep.subr.mxu0 0.0
  %3943 = vmatpush1.msra.mxu0 0.0
  %3944 = vmatprep.subr.mxu0 0.0
  %3945 = vmatpush1.msra.mxu0 0.0
  %3946 = vmatprep.subr.mxu0 0.0
  %3947 = vmatpush1.msra.mxu0 0.0
  %3948 = vmatprep.subr.mxu0 0.0
  %3949 = vmatpush1.msra.mxu0 0.0
  %3950 = vmatprep.subr.mxu0 0.0
  %3951 = vmatpush1.msra.mxu0 0.0
  %3952 = vmatprep.subr.mxu0 0.0
  %3953 = vmatpush1.msra.mxu0 0.0
  %3954 = vmatprep.subr.mxu0 0.0
  %3955 = vmatpush1.msra.mxu0 0.0
  %3956 = vmatprep.subr.mxu0 0.0
  %3957 = vmatpush1.msra.mxu0 0.0
  %3958 = vmatprep.subr.mxu0 0.0
  %3959 = vmatpush1.msra.mxu0 0.0
  %3960 = vmatprep.subr.mxu0 0.0
  %3961 = vmatpush1.msra.mxu0 0.0
  %3962 = vmatprep.mubr.f32.mxu0 0.0
  %3963 = vmatmul.mubr.f32.gmra.mrb[0].mxu0 %v3893
  %v3964 = vpop.f32.mrb[0].mxu0
  %v3965 = vadd.f32 0.0, %v3964
  %v3966 = vpop.f32.mrb[0].mxu0
  %3967 = vmatprep.mubr.f32.mxu0 0.0
  %3968 = vmatmul.mubr.f32.gmra.mrb[0].mxu0 %v3896
  %v3969 = vpop.f32.mrb[0].mxu0
  %v3970 = vadd.f32 0.0, %v3969
  %v3971 = vpop.f32.mrb[0].mxu0
  %3972 = vdwg.mxu0
  %3973 = vrot.lane.b32.xlu0 %v2706, 64
  %v3974 = vpop.permute.xlu0 %3973
  %3975 = vrot.lane.b32.xlu0 %v2708, 64
  %v3976 = vpop.permute.xlu0 %3975
  %v3980 = vsel %vm37, %v3617, 0
  %v3983 = vsel %vm37, %v3618, 0
  %3985 = vmatprep.subr.mxu0 0.0
  %3986 = vmatpush1.msra.mxu0 %v3974
  %3987 = vmatprep.subr.mxu0 0.0
  %3988 = vmatpush1.msra.mxu0 %v3976
  %3989 = vmatprep.subr.mxu0 0.0
  %3990 = vmatpush1.msra.mxu0 0.0
  %3991 = vmatprep.subr.mxu0 0.0
  %3992 = vmatpush1.msra.mxu0 0.0
  %3993 = vmatprep.subr.mxu0 0.0
  %3994 = vmatpush1.msra.mxu0 0.0
  %3995 = vmatprep.subr.mxu0 0.0
  %3996 = vmatpush1.msra.mxu0 0.0
  %3997 = vmatprep.subr.mxu0 0.0
  %3998 = vmatpush1.msra.mxu0 0.0
  %3999 = vmatprep.subr.mxu0 0.0
  %4000 = vmatpush1.msra.mxu0 0.0
  %4001 = vmatprep.subr.mxu0 0.0
  %4002 = vmatpush1.msra.mxu0 0.0
  %4003 = vmatprep.subr.mxu0 0.0
  %4004 = vmatpush1.msra.mxu0 0.0
  %4005 = vmatprep.subr.mxu0 0.0
  %4006 = vmatpush1.msra.mxu0 0.0
  %4007 = vmatprep.subr.mxu0 0.0
  %4008 = vmatpush1.msra.mxu0 0.0
  %4009 = vmatprep.subr.mxu0 0.0
  %4010 = vmatpush1.msra.mxu0 0.0
  %4011 = vmatprep.subr.mxu0 0.0
  %4012 = vmatpush1.msra.mxu0 0.0
  %4013 = vmatprep.subr.mxu0 0.0
  %4014 = vmatpush1.msra.mxu0 0.0
  %4015 = vmatprep.subr.mxu0 0.0
  %4016 = vmatpush1.msra.mxu0 0.0
  %4017 = vmatprep.subr.mxu0 0.0
  %4018 = vmatpush1.msra.mxu0 0.0
  %4019 = vmatprep.subr.mxu0 0.0
  %4020 = vmatpush1.msra.mxu0 0.0
  %4021 = vmatprep.subr.mxu0 0.0
  %4022 = vmatpush1.msra.mxu0 0.0
  %4023 = vmatprep.subr.mxu0 0.0
  %4024 = vmatpush1.msra.mxu0 0.0
  %4025 = vmatprep.subr.mxu0 0.0
  %4026 = vmatpush1.msra.mxu0 0.0
  %4027 = vmatprep.subr.mxu0 0.0
  %4028 = vmatpush1.msra.mxu0 0.0
  %4029 = vmatprep.subr.mxu0 0.0
  %4030 = vmatpush1.msra.mxu0 0.0
  %4031 = vmatprep.subr.mxu0 0.0
  %4032 = vmatpush1.msra.mxu0 0.0
  %4033 = vmatprep.subr.mxu0 0.0
  %4034 = vmatpush1.msra.mxu0 0.0
  %4035 = vmatprep.subr.mxu0 0.0
  %4036 = vmatpush1.msra.mxu0 0.0
  %4037 = vmatprep.subr.mxu0 0.0
  %4038 = vmatpush1.msra.mxu0 0.0
  %4039 = vmatprep.subr.mxu0 0.0
  %4040 = vmatpush1.msra.mxu0 0.0
  %4041 = vmatprep.subr.mxu0 0.0
  %4042 = vmatpush1.msra.mxu0 0.0
  %4043 = vmatprep.subr.mxu0 0.0
  %4044 = vmatpush1.msra.mxu0 0.0
  %4045 = vmatprep.subr.mxu0 0.0
  %4046 = vmatpush1.msra.mxu0 0.0
  %4047 = vmatprep.subr.mxu0 0.0
  %4048 = vmatpush1.msra.mxu0 0.0
  %4049 = vmatprep.mubr.f32.mxu0 0.0
  %4050 = vmatmul.mubr.f32.gmra.mrb[0].mxu0 %v3980
  %v4051 = vpop.f32.mrb[0].mxu0
  %v4052 = vadd.f32 0.0, %v4051
  %v4053 = vpop.f32.mrb[0].mxu0
  %4054 = vmatprep.mubr.f32.mxu0 0.0
  %4055 = vmatmul.mubr.f32.gmra.mrb[0].mxu0 %v3983
  %v4056 = vpop.f32.mrb[0].mxu0
  %v4057 = vadd.f32 0.0, %v4056
  %v4058 = vpop.f32.mrb[0].mxu0
  %4059 = vdwg.mxu0
  %4060 = vrot.lane.b32.xlu0 %v2710, 64
  %v4061 = vpop.permute.xlu0 %4060
  %4062 = vrot.lane.b32.xlu0 %v2712, 64
  %v4063 = vpop.permute.xlu0 %4062
  %v4067 = vsel %vm37, %v3619, 0
  %v4070 = vsel %vm37, %v3620, 0
  %4072 = vmatprep.subr.mxu0 0.0
  %4073 = vmatpush1.msra.mxu0 %v4061
  %4074 = vmatprep.subr.mxu0 0.0
  %4075 = vmatpush1.msra.mxu0 %v4063
  %4076 = vmatprep.subr.mxu0 0.0
  %4077 = vmatpush1.msra.mxu0 0.0
  %4078 = vmatprep.subr.mxu0 0.0
  %4079 = vmatpush1.msra.mxu0 0.0
  %4080 = vmatprep.subr.mxu0 0.0
  %4081 = vmatpush1.msra.mxu0 0.0
  %4082 = vmatprep.subr.mxu0 0.0
  %4083 = vmatpush1.msra.mxu0 0.0
  %4084 = vmatprep.subr.mxu0 0.0
  %4085 = vmatpush1.msra.mxu0 0.0
  %4086 = vmatprep.subr.mxu0 0.0
  %4087 = vmatpush1.msra.mxu0 0.0
  %4088 = vmatprep.subr.mxu0 0.0
  %4089 = vmatpush1.msra.mxu0 0.0
  %4090 = vmatprep.subr.mxu0 0.0
  %4091 = vmatpush1.msra.mxu0 0.0
  %4092 = vmatprep.subr.mxu0 0.0
  %4093 = vmatpush1.msra.mxu0 0.0
  %4094 = vmatprep.subr.mxu0 0.0
  %4095 = vmatpush1.msra.mxu0 0.0
  %4096 = vmatprep.subr.mxu0 0.0
  %4097 = vmatpush1.msra.mxu0 0.0
  %4098 = vmatprep.subr.mxu0 0.0
  %4099 = vmatpush1.msra.mxu0 0.0
  %4100 = vmatprep.subr.mxu0 0.0
  %4101 = vmatpush1.msra.mxu0 0.0
  %4102 = vmatprep.subr.mxu0 0.0
  %4103 = vmatpush1.msra.mxu0 0.0
  %4104 = vmatprep.subr.mxu0 0.0
  %4105 = vmatpush1.msra.mxu0 0.0
  %4106 = vmatprep.subr.mxu0 0.0
  %4107 = vmatpush1.msra.mxu0 0.0
  %4108 = vmatprep.subr.mxu0 0.0
  %4109 = vmatpush1.msra.mxu0 0.0
  %4110 = vmatprep.subr.mxu0 0.0
  %4111 = vmatpush1.msra.mxu0 0.0
  %4112 = vmatprep.subr.mxu0 0.0
  %4113 = vmatpush1.msra.mxu0 0.0
  %4114 = vmatprep.subr.mxu0 0.0
  %4115 = vmatpush1.msra.mxu0 0.0
  %4116 = vmatprep.subr.mxu0 0.0
  %4117 = vmatpush1.msra.mxu0 0.0
  %4118 = vmatprep.subr.mxu0 0.0
  %4119 = vmatpush1.msra.mxu0 0.0
  %4120 = vmatprep.subr.mxu0 0.0
  %4121 = vmatpush1.msra.mxu0 0.0
  %4122 = vmatprep.subr.mxu0 0.0
  %4123 = vmatpush1.msra.mxu0 0.0
  %4124 = vmatprep.subr.mxu0 0.0
  %4125 = vmatpush1.msra.mxu0 0.0
  %4126 = vmatprep.subr.mxu0 0.0
  %4127 = vmatpush1.msra.mxu0 0.0
  %4128 = vmatprep.subr.mxu0 0.0
  %4129 = vmatpush1.msra.mxu0 0.0
  %4130 = vmatprep.subr.mxu0 0.0
  %4131 = vmatpush1.msra.mxu0 0.0
  %4132 = vmatprep.subr.mxu0 0.0
  %4133 = vmatpush1.msra.mxu0 0.0
  %4134 = vmatprep.subr.mxu0 0.0
  %4135 = vmatpush1.msra.mxu0 0.0
  %4136 = vmatprep.mubr.f32.mxu0 0.0
  %4137 = vmatmul.mubr.f32.gmra.mrb[0].mxu0 %v4067
  %v4138 = vpop.f32.mrb[0].mxu0
  %v4139 = vadd.f32 0.0, %v4138
  %v4140 = vpop.f32.mrb[0].mxu0
  %4141 = vmatprep.mubr.f32.mxu0 0.0
  %4142 = vmatmul.mubr.f32.gmra.mrb[0].mxu0 %v4070
  %v4143 = vpop.f32.mrb[0].mxu0
  %v4144 = vadd.f32 0.0, %v4143
  %v4145 = vpop.f32.mrb[0].mxu0
  %4146 = vdwg.mxu0
  %4147 = vrot.lane.b32.xlu0 %v2714, 64
  %v4148 = vpop.permute.xlu0 %4147
  %4149 = vrot.lane.b32.xlu0 %v2716, 64
  %v4150 = vpop.permute.xlu0 %4149
  %v4154 = vsel %vm37, %v3621, 0
  %v4157 = vsel %vm37, %v3622, 0
  %4159 = vmatprep.subr.mxu0 0.0
  %4160 = vmatpush1.msra.mxu0 %v4148
  %4161 = vmatprep.subr.mxu0 0.0
  %4162 = vmatpush1.msra.mxu0 %v4150
  %4163 = vmatprep.subr.mxu0 0.0
  %4164 = vmatpush1.msra.mxu0 0.0
  %4165 = vmatprep.subr.mxu0 0.0
  %4166 = vmatpush1.msra.mxu0 0.0
  %4167 = vmatprep.subr.mxu0 0.0
  %4168 = vmatpush1.msra.mxu0 0.0
  %4169 = vmatprep.subr.mxu0 0.0
  %4170 = vmatpush1.msra.mxu0 0.0
  %4171 = vmatprep.subr.mxu0 0.0
  %4172 = vmatpush1.msra.mxu0 0.0
  %4173 = vmatprep.subr.mxu0 0.0
  %4174 = vmatpush1.msra.mxu0 0.0
  %4175 = vmatprep.subr.mxu0 0.0
  %4176 = vmatpush1.msra.mxu0 0.0
  %4177 = vmatprep.subr.mxu0 0.0
  %4178 = vmatpush1.msra.mxu0 0.0
  %4179 = vmatprep.subr.mxu0 0.0
  %4180 = vmatpush1.msra.mxu0 0.0
  %4181 = vmatprep.subr.mxu0 0.0
  %4182 = vmatpush1.msra.mxu0 0.0
  %4183 = vmatprep.subr.mxu0 0.0
  %4184 = vmatpush1.msra.mxu0 0.0
  %4185 = vmatprep.subr.mxu0 0.0
  %4186 = vmatpush1.msra.mxu0 0.0
  %4187 = vmatprep.subr.mxu0 0.0
  %4188 = vmatpush1.msra.mxu0 0.0
  %4189 = vmatprep.subr.mxu0 0.0
  %4190 = vmatpush1.msra.mxu0 0.0
  %4191 = vmatprep.subr.mxu0 0.0
  %4192 = vmatpush1.msra.mxu0 0.0
  %4193 = vmatprep.subr.mxu0 0.0
  %4194 = vmatpush1.msra.mxu0 0.0
  %4195 = vmatprep.subr.mxu0 0.0
  %4196 = vmatpush1.msra.mxu0 0.0
  %4197 = vmatprep.subr.mxu0 0.0
  %4198 = vmatpush1.msra.mxu0 0.0
  %4199 = vmatprep.subr.mxu0 0.0
  %4200 = vmatpush1.msra.mxu0 0.0
  %4201 = vmatprep.subr.mxu0 0.0
  %4202 = vmatpush1.msra.mxu0 0.0
  %4203 = vmatprep.subr.mxu0 0.0
  %4204 = vmatpush1.msra.mxu0 0.0
  %4205 = vmatprep.subr.mxu0 0.0
  %4206 = vmatpush1.msra.mxu0 0.0
  %4207 = vmatprep.subr.mxu0 0.0
  %4208 = vmatpush1.msra.mxu0 0.0
  %4209 = vmatprep.subr.mxu0 0.0
  %4210 = vmatpush1.msra.mxu0 0.0
  %4211 = vmatprep.subr.mxu0 0.0
  %4212 = vmatpush1.msra.mxu0 0.0
  %4213 = vmatprep.subr.mxu0 0.0
  %4214 = vmatpush1.msra.mxu0 0.0
  %4215 = vmatprep.subr.mxu0 0.0
  %4216 = vmatpush1.msra.mxu0 0.0
  %4217 = vmatprep.subr.mxu0 0.0
  %4218 = vmatpush1.msra.mxu0 0.0
  %4219 = vmatprep.subr.mxu0 0.0
  %4220 = vmatpush1.msra.mxu0 0.0
  %4221 = vmatprep.subr.mxu0 0.0
  %4222 = vmatpush1.msra.mxu0 0.0
  %4223 = vmatprep.mubr.f32.mxu0 0.0
  %4224 = vmatmul.mubr.f32.gmra.mrb[0].mxu0 %v4154
  %v4225 = vpop.f32.mrb[0].mxu0
  %v4226 = vadd.f32 0.0, %v4225
  %v4227 = vpop.f32.mrb[0].mxu0
  %4228 = vmatprep.mubr.f32.mxu0 0.0
  %4229 = vmatmul.mubr.f32.gmra.mrb[0].mxu0 %v4157
  %v4230 = vpop.f32.mrb[0].mxu0
  %v4231 = vadd.f32 0.0, %v4230
  %v4232 = vpop.f32.mrb[0].mxu0
  %4233 = vdwg.mxu0
  %4234 = vrot.lane.b32.xlu0 %v2718, 64
  %v4235 = vpop.permute.xlu0 %4234
  %4236 = vrot.lane.b32.xlu0 %v2720, 64
  %v4237 = vpop.permute.xlu0 %4236
  %v4241 = vsel %vm37, %v3623, 0
  %v4244 = vsel %vm37, %v3624, 0
  %4246 = vmatprep.subr.mxu0 0.0
  %4247 = vmatpush1.msra.mxu0 %v4235
  %4248 = vmatprep.subr.mxu0 0.0
  %4249 = vmatpush1.msra.mxu0 %v4237
  %4250 = vmatprep.subr.mxu0 0.0
  %4251 = vmatpush1.msra.mxu0 0.0
  %4252 = vmatprep.subr.mxu0 0.0
  %4253 = vmatpush1.msra.mxu0 0.0
  %4254 = vmatprep.subr.mxu0 0.0
  %4255 = vmatpush1.msra.mxu0 0.0
  %4256 = vmatprep.subr.mxu0 0.0
  %4257 = vmatpush1.msra.mxu0 0.0
  %4258 = vmatprep.subr.mxu0 0.0
  %4259 = vmatpush1.msra.mxu0 0.0
  %4260 = vmatprep.subr.mxu0 0.0
  %4261 = vmatpush1.msra.mxu0 0.0
  %4262 = vmatprep.subr.mxu0 0.0
  %4263 = vmatpush1.msra.mxu0 0.0
  %4264 = vmatprep.subr.mxu0 0.0
  %4265 = vmatpush1.msra.mxu0 0.0
  %4266 = vmatprep.subr.mxu0 0.0
  %4267 = vmatpush1.msra.mxu0 0.0
  %4268 = vmatprep.subr.mxu0 0.0
  %4269 = vmatpush1.msra.mxu0 0.0
  %4270 = vmatprep.subr.mxu0 0.0
  %4271 = vmatpush1.msra.mxu0 0.0
  %4272 = vmatprep.subr.mxu0 0.0
  %4273 = vmatpush1.msra.mxu0 0.0
  %4274 = vmatprep.subr.mxu0 0.0
  %4275 = vmatpush1.msra.mxu0 0.0
  %4276 = vmatprep.subr.mxu0 0.0
  %4277 = vmatpush1.msra.mxu0 0.0
  %4278 = vmatprep.subr.mxu0 0.0
  %4279 = vmatpush1.msra.mxu0 0.0
  %4280 = vmatprep.subr.mxu0 0.0
  %4281 = vmatpush1.msra.mxu0 0.0
  %4282 = vmatprep.subr.mxu0 0.0
  %4283 = vmatpush1.msra.mxu0 0.0
  %4284 = vmatprep.subr.mxu0 0.0
  %4285 = vmatpush1.msra.mxu0 0.0
  %4286 = vmatprep.subr.mxu0 0.0
  %4287 = vmatpush1.msra.mxu0 0.0
  %4288 = vmatprep.subr.mxu0 0.0
  %4289 = vmatpush1.msra.mxu0 0.0
  %4290 = vmatprep.subr.mxu0 0.0
  %4291 = vmatpush1.msra.mxu0 0.0
  %4292 = vmatprep.subr.mxu0 0.0
  %4293 = vmatpush1.msra.mxu0 0.0
  %4294 = vmatprep.subr.mxu0 0.0
  %4295 = vmatpush1.msra.mxu0 0.0
  %4296 = vmatprep.subr.mxu0 0.0
  %4297 = vmatpush1.msra.mxu0 0.0
  %4298 = vmatprep.subr.mxu0 0.0
  %4299 = vmatpush1.msra.mxu0 0.0
  %4300 = vmatprep.subr.mxu0 0.0
  %4301 = vmatpush1.msra.mxu0 0.0
  %4302 = vmatprep.subr.mxu0 0.0
  %4303 = vmatpush1.msra.mxu0 0.0
  %4304 = vmatprep.subr.mxu0 0.0
  %4305 = vmatpush1.msra.mxu0 0.0
  %4306 = vmatprep.subr.mxu0 0.0
  %4307 = vmatpush1.msra.mxu0 0.0
  %4308 = vmatprep.subr.mxu0 0.0
  %4309 = vmatpush1.msra.mxu0 0.0
  %4310 = vmatprep.mubr.f32.mxu0 0.0
  %4311 = vmatmul.mubr.f32.gmra.mrb[0].mxu0 %v4241
  %v4312 = vpop.f32.mrb[0].mxu0
  %v4313 = vadd.f32 0.0, %v4312
  %v4314 = vpop.f32.mrb[0].mxu0
  %4315 = vmatprep.mubr.f32.mxu0 0.0
  %4316 = vmatmul.mubr.f32.gmra.mrb[0].mxu0 %v4244
  %v4317 = vpop.f32.mrb[0].mxu0
  %v4318 = vadd.f32 0.0, %v4317
  %v4319 = vpop.f32.mrb[0].mxu0
  %4320 = vdwg.mxu0
  %4323 = vrot.lane.b32.xlu0 %v3791, 4
  %v4324 = vpop.permute.xlu0 %4323
  %4325 = vrot.lane.b32.xlu0 %v3796, 4
  %v4326 = vpop.permute.xlu0 %4325
  %4331 = vrot.lane.b32.xlu0 %v3878, 8
  %v4332 = vpop.permute.xlu0 %4331
  %4333 = vrot.lane.b32.xlu0 %v3883, 8
  %v4334 = vpop.permute.xlu0 %4333
  %4339 = vrot.lane.b32.xlu0 %v3965, 12
  %v4340 = vpop.permute.xlu0 %4339
  %4341 = vrot.lane.b32.xlu0 %v3970, 12
  %v4342 = vpop.permute.xlu0 %4341
  %4347 = vrot.lane.b32.xlu0 %v4052, 16
  %v4348 = vpop.permute.xlu0 %4347
  %4349 = vrot.lane.b32.xlu0 %v4057, 16
  %v4350 = vpop.permute.xlu0 %4349
  %4355 = vrot.lane.b32.xlu0 %v4139, 20
  %v4356 = vpop.permute.xlu0 %4355
  %4357 = vrot.lane.b32.xlu0 %v4144, 20
  %v4358 = vpop.permute.xlu0 %4357
  %4363 = vrot.lane.b32.xlu0 %v4226, 24
  %v4364 = vpop.permute.xlu0 %4363
  %4365 = vrot.lane.b32.xlu0 %v4231, 24
  %v4366 = vpop.permute.xlu0 %4365
  %4371 = vrot.lane.b32.xlu0 %v4313, 28
  %v4372 = vpop.permute.xlu0 %4371
  %4373 = vrot.lane.b32.xlu0 %v4318, 28
  %v4374 = vpop.permute.xlu0 %4373
  %v4377 = vsel %vm326, %v3704, %v4324
  %v4378 = vsel %vm326, %v3709, %v4326
  %v4379 = vsel %vm1981, %v4377, %v4332
  %v4380 = vsel %vm1981, %v4378, %v4334
  %v4381 = vsel %vm1984, %v4379, %v4340
  %v4382 = vsel %vm1984, %v4380, %v4342
  %v4383 = vsel %vm37, %v4381, %v4348
  %v4384 = vsel %vm37, %v4382, %v4350
  %v4385 = vsel %vm1989, %v4383, %v4356
  %v4386 = vsel %vm1989, %v4384, %v4358
  %v4387 = vsel %vm1992, %v4385, %v4364
  %v4388 = vsel %vm1992, %v4386, %v4366
  %v4389 = vsel %vm1995, %v4387, %v4372
  %v4390 = vsel %vm1995, %v4388, %v4374
  %4395 = vrot.lane.b32.xlu0 %v2517, 32
  %v4396 = vpop.permute.xlu0 %4395
  %4397 = vrot.lane.b32.xlu0 %v2518, 32
  %v4398 = vpop.permute.xlu0 %4397
  %4399 = vrot.lane.b32.xlu0 %v2519, 32
  %v4400 = vpop.permute.xlu0 %4399
  %4401 = vrot.lane.b32.xlu0 %v2520, 32
  %v4402 = vpop.permute.xlu0 %4401
  %v4408 = vsel %vm210, %v4389, 0
  %v4411 = vsel %vm210, %v4390, 0
  %4413 = vmatprep.subr.mxu0 0.0
  %4414 = vmatpush1.msra.mxu0 %v4396
  %4415 = vmatprep.subr.mxu0 0.0
  %4416 = vmatpush1.msra.mxu0 %v4398
  %4417 = vmatprep.subr.mxu0 0.0
  %4418 = vmatpush1.msra.mxu0 %v4400
  %4419 = vmatprep.subr.mxu0 0.0
  %4420 = vmatpush1.msra.mxu0 %v4402
  %4421 = vmatprep.subr.mxu0 0.0
  %4422 = vmatpush1.msra.mxu0 0.0
  %4423 = vmatprep.subr.mxu0 0.0
  %4424 = vmatpush1.msra.mxu0 0.0
  %4425 = vmatprep.subr.mxu0 0.0
  %4426 = vmatpush1.msra.mxu0 0.0
  %4427 = vmatprep.subr.mxu0 0.0
  %4428 = vmatpush1.msra.mxu0 0.0
  %4429 = vmatprep.subr.mxu0 0.0
  %4430 = vmatpush1.msra.mxu0 0.0
  %4431 = vmatprep.subr.mxu0 0.0
  %4432 = vmatpush1.msra.mxu0 0.0
  %4433 = vmatprep.subr.mxu0 0.0
  %4434 = vmatpush1.msra.mxu0 0.0
  %4435 = vmatprep.subr.mxu0 0.0
  %4436 = vmatpush1.msra.mxu0 0.0
  %4437 = vmatprep.subr.mxu0 0.0
  %4438 = vmatpush1.msra.mxu0 0.0
  %4439 = vmatprep.subr.mxu0 0.0
  %4440 = vmatpush1.msra.mxu0 0.0
  %4441 = vmatprep.subr.mxu0 0.0
  %4442 = vmatpush1.msra.mxu0 0.0
  %4443 = vmatprep.subr.mxu0 0.0
  %4444 = vmatpush1.msra.mxu0 0.0
  %4445 = vmatprep.subr.mxu0 0.0
  %4446 = vmatpush1.msra.mxu0 0.0
  %4447 = vmatprep.subr.mxu0 0.0
  %4448 = vmatpush1.msra.mxu0 0.0
  %4449 = vmatprep.subr.mxu0 0.0
  %4450 = vmatpush1.msra.mxu0 0.0
  %4451 = vmatprep.subr.mxu0 0.0
  %4452 = vmatpush1.msra.mxu0 0.0
  %4453 = vmatprep.subr.mxu0 0.0
  %4454 = vmatpush1.msra.mxu0 0.0
  %4455 = vmatprep.subr.mxu0 0.0
  %4456 = vmatpush1.msra.mxu0 0.0
  %4457 = vmatprep.subr.mxu0 0.0
  %4458 = vmatpush1.msra.mxu0 0.0
  %4459 = vmatprep.subr.mxu0 0.0
  %4460 = vmatpush1.msra.mxu0 0.0
  %4461 = vmatprep.subr.mxu0 0.0
  %4462 = vmatpush1.msra.mxu0 0.0
  %4463 = vmatprep.subr.mxu0 0.0
  %4464 = vmatpush1.msra.mxu0 0.0
  %4465 = vmatprep.subr.mxu0 0.0
  %4466 = vmatpush1.msra.mxu0 0.0
  %4467 = vmatprep.subr.mxu0 0.0
  %4468 = vmatpush1.msra.mxu0 0.0
  %4469 = vmatprep.subr.mxu0 0.0
  %4470 = vmatpush1.msra.mxu0 0.0
  %4471 = vmatprep.subr.mxu0 0.0
  %4472 = vmatpush1.msra.mxu0 0.0
  %4473 = vmatprep.subr.mxu0 0.0
  %4474 = vmatpush1.msra.mxu0 0.0
  %4475 = vmatprep.subr.mxu0 0.0
  %4476 = vmatpush1.msra.mxu0 0.0
  %4477 = vmatprep.mubr.f32.mxu0 0.0
  %4478 = vmatmul.mubr.f32.gmra.mrb[0].mxu0 %v4408
  %v4479 = vpop.f32.mrb[0].mxu0
  %v4480 = vadd.f32 0.0, %v4479
  %v4481 = vpop.f32.mrb[0].mxu0
  %4482 = vmatprep.mubr.f32.mxu0 0.0
  %4483 = vmatmul.mubr.f32.gmra.mrb[0].mxu0 %v4411
  %v4484 = vpop.f32.mrb[0].mxu0
  %v4485 = vadd.f32 0.0, %v4484
  %v4486 = vpop.f32.mrb[0].mxu0
  %4487 = vdwg.mxu0
  %v4488 = vadd.f32 %v2514, %v4480
  %v4489 = vadd.f32 %v2515, %v4485
  %v4490 = vmul.f32 %v4488, %v27
  %v4491 = vmul.f32 %v4489, %v28
  %v4492 = vsel %vm210, %v4490, 0.0
  %v4493 = vsel %vm210, %v4491, 0.0
  %v4494 = vadd.f32 %v4492, %v4493
  %v4495 = vrot.slane %v4494, 4
  %v4496 = vadd.f32 %v4494, %v4495
  %v4497 = vrot.slane %v4496, 2
  %v4498 = vadd.f32 %v4496, %v4497
  %v4499 = vrot.slane %v4498, 1
  %v4500 = vadd.f32 %v4498, %v4499
  %v4501 = vmul.f32 %v4500, 0.07692308
  %v4502 = vsub.f32 %v4490, %v4501
  %v4503 = vsub.f32 %v4491, %v4501
  %v4504 = vmul.f32 %v4502, %v27
  %v4505 = vmul.f32 %v4503, %v28
  %v4506 = vmul.f32 %v4504, %v4504
  %v4507 = vmul.f32 %v4505, %v4505
  %v4508 = vsel %vm210, %v4506, 0.0
  %v4509 = vsel %vm210, %v4507, 0.0
  %v4510 = vadd.f32 %v4508, %v4509
  %v4511 = vrot.slane %v4510, 4
  %v4512 = vadd.f32 %v4510, %v4511
  %v4513 = vrot.slane %v4512, 2
  %v4514 = vadd.f32 %v4512, %v4513
  %v4515 = vrot.slane %v4514, 1
  %v4516 = vadd.f32 %v4514, %v4515
  %v4517 = vmul.f32 %v4516, 0.07692308
  %v4518 = vadd.f32 %v4517, 1e-05
  %v4519 = vrsqrt.pop %v4518
  %v4520 = vmul.f32 %v4519, %v2540
  %v4521 = vmul.f32 %v4501, %v4520
  %v4522 = vsub.f32 %v2541, %v4521
  %v4523 = vmul.f32 %v4490, %v4520
  %v4524 = vmul.f32 %v4491, %v4520
  %v4525 = vadd.f32 %v4523, %v4522
  %v4526 = vadd.f32 %v4524, %v4522
  %v4527 = vmul.f32 %v4525, %v27
  %v4528 = vmul.f32 %v4526, %v28
  %v4530 = vlaneseq
  %v4531 = vshrl.u32 %v4530, 7
  %v4532 = vsub.s32 0, %v4531
  %v4533 = vrot.slane %v2539, %v4532
  %v4534 = vlaneseq
  %v4535 = vshrl.u32 %v4534, 7
  %v4536 = vsub.s32 1, %v4535
  %v4537 = vrot.slane %v2539, %v4536
  %v4538 = vlaneseq
  %v4539 = vshrl.u32 %v4538, 7
  %v4540 = vsub.s32 2, %v4539
  %v4541 = vrot.slane %v2539, %v4540
  %v4542 = vlaneseq
  %v4543 = vshrl.u32 %v4542, 7
  %v4544 = vsub.s32 3, %v4543
  %v4545 = vrot.slane %v2539, %v4544
  %v4551 = vsel %vm210, %v4527, 0
  %v4554 = vsel %vm210, %v4528, 0
  %4556 = vmatprep.subr.mxu0 %v2523
  %4557 = vmatpush1.msra.mxu0 %v2522
  %4558 = vmatprep.subr.mxu0 %v2527
  %4559 = vmatpush1.msra.mxu0 %v2526
  %4560 = vmatprep.subr.mxu0 %v2531
  %4561 = vmatpush1.msra.mxu0 %v2530
  %4562 = vmatprep.subr.mxu0 %v2535
  %4563 = vmatpush1.msra.mxu0 %v2534
  %4564 = vmatprep.subr.mxu0 0.0
  %4565 = vmatpush1.msra.mxu0 0.0
  %4566 = vmatprep.subr.mxu0 0.0
  %4567 = vmatpush1.msra.mxu0 0.0
  %4568 = vmatprep.subr.mxu0 0.0
  %4569 = vmatpush1.msra.mxu0 0.0
  %4570 = vmatprep.subr.mxu0 0.0
  %4571 = vmatpush1.msra.mxu0 0.0
  %4572 = vmatprep.subr.mxu0 0.0
  %4573 = vmatpush1.msra.mxu0 0.0
  %4574 = vmatprep.subr.mxu0 0.0
  %4575 = vmatpush1.msra.mxu0 0.0
  %4576 = vmatprep.subr.mxu0 0.0
  %4577 = vmatpush1.msra.mxu0 0.0
  %4578 = vmatprep.subr.mxu0 0.0
  %4579 = vmatpush1.msra.mxu0 0.0
  %4580 = vmatprep.subr.mxu0 0.0
  %4581 = vmatpush1.msra.mxu0 0.0
  %4582 = vmatprep.subr.mxu0 0.0
  %4583 = vmatpush1.msra.mxu0 0.0
  %4584 = vmatprep.subr.mxu0 0.0
  %4585 = vmatpush1.msra.mxu0 0.0
  %4586 = vmatprep.subr.mxu0 0.0
  %4587 = vmatpush1.msra.mxu0 0.0
  %4588 = vmatprep.subr.mxu0 0.0
  %4589 = vmatpush1.msra.mxu0 0.0
  %4590 = vmatprep.subr.mxu0 0.0
  %4591 = vmatpush1.msra.mxu0 0.0
  %4592 = vmatprep.subr.mxu0 0.0
  %4593 = vmatpush1.msra.mxu0 0.0
  %4594 = vmatprep.subr.mxu0 0.0
  %4595 = vmatpush1.msra.mxu0 0.0
  %4596 = vmatprep.subr.mxu0 0.0
  %4597 = vmatpush1.msra.mxu0 0.0
  %4598 = vmatprep.subr.mxu0 0.0
  %4599 = vmatpush1.msra.mxu0 0.0
  %4600 = vmatprep.subr.mxu0 0.0
  %4601 = vmatpush1.msra.mxu0 0.0
  %4602 = vmatprep.subr.mxu0 0.0
  %4603 = vmatpush1.msra.mxu0 0.0
  %4604 = vmatprep.subr.mxu0 0.0
  %4605 = vmatpush1.msra.mxu0 0.0
  %4606 = vmatprep.subr.mxu0 0.0
  %4607 = vmatpush1.msra.mxu0 0.0
  %4608 = vmatprep.subr.mxu0 0.0
  %4609 = vmatpush1.msra.mxu0 0.0
  %4610 = vmatprep.subr.mxu0 0.0
  %4611 = vmatpush1.msra.mxu0 0.0
  %4612 = vmatprep.subr.mxu0 0.0
  %4613 = vmatpush1.msra.mxu0 0.0
  %4614 = vmatprep.subr.mxu0 0.0
  %4615 = vmatpush1.msra.mxu0 0.0
  %4616 = vmatprep.subr.mxu0 0.0
  %4617 = vmatpush1.msra.mxu0 0.0
  %4618 = vmatprep.subr.mxu0 0.0
  %4619 = vmatpush1.msra.mxu0 0.0
  %4620 = vmatprep.mubr.f32.mxu0 0.0
  %4621 = vmatmul.mubr.f32.gmra.mrb[0].mxu0 %v4551
  %v4622 = vpop.f32.mrb[0].mxu0
  %v4623 = vadd.f32 %v4533, %v4622
  %v4624 = vpop.f32.mrb[0].mxu0
  %v4625 = vadd.f32 %v4537, %v4624
  %4626 = vmatprep.mubr.f32.mxu0 0.0
  %4627 = vmatmul.mubr.f32.gmra.mrb[0].mxu0 %v4554
  %v4628 = vpop.f32.mrb[0].mxu0
  %v4629 = vadd.f32 %v4533, %v4628
  %v4630 = vpop.f32.mrb[0].mxu0
  %v4631 = vadd.f32 %v4537, %v4630
  %4632 = vdwg.mxu0
  %4633 = vmatprep.subr.mxu0 %v2525
  %4634 = vmatpush1.msra.mxu0 %v2524
  %4635 = vmatprep.subr.mxu0 %v2529
  %4636 = vmatpush1.msra.mxu0 %v2528
  %4637 = vmatprep.subr.mxu0 %v2533
  %4638 = vmatpush1.msra.mxu0 %v2532
  %4639 = vmatprep.subr.mxu0 %v2537
  %4640 = vmatpush1.msra.mxu0 %v2536
  %4641 = vmatprep.subr.mxu0 0.0
  %4642 = vmatpush1.msra.mxu0 0.0
  %4643 = vmatprep.subr.mxu0 0.0
  %4644 = vmatpush1.msra.mxu0 0.0
  %4645 = vmatprep.subr.mxu0 0.0
  %4646 = vmatpush1.msra.mxu0 0.0
  %4647 = vmatprep.subr.mxu0 0.0
  %4648 = vmatpush1.msra.mxu0 0.0
  %4649 = vmatprep.subr.mxu0 0.0
  %4650 = vmatpush1.msra.mxu0 0.0
  %4651 = vmatprep.subr.mxu0 0.0
  %4652 = vmatpush1.msra.mxu0 0.0
  %4653 = vmatprep.subr.mxu0 0.0
  %4654 = vmatpush1.msra.mxu0 0.0
  %4655 = vmatprep.subr.mxu0 0.0
  %4656 = vmatpush1.msra.mxu0 0.0
  %4657 = vmatprep.subr.mxu0 0.0
  %4658 = vmatpush1.msra.mxu0 0.0
  %4659 = vmatprep.subr.mxu0 0.0
  %4660 = vmatpush1.msra.mxu0 0.0
  %4661 = vmatprep.subr.mxu0 0.0
  %4662 = vmatpush1.msra.mxu0 0.0
  %4663 = vmatprep.subr.mxu0 0.0
  %4664 = vmatpush1.msra.mxu0 0.0
  %4665 = vmatprep.subr.mxu0 0.0
  %4666 = vmatpush1.msra.mxu0 0.0
  %4667 = vmatprep.subr.mxu0 0.0
  %4668 = vmatpush1.msra.mxu0 0.0
  %4669 = vmatprep.subr.mxu0 0.0
  %4670 = vmatpush1.msra.mxu0 0.0
  %4671 = vmatprep.subr.mxu0 0.0
  %4672 = vmatpush1.msra.mxu0 0.0
  %4673 = vmatprep.subr.mxu0 0.0
  %4674 = vmatpush1.msra.mxu0 0.0
  %4675 = vmatprep.subr.mxu0 0.0
  %4676 = vmatpush1.msra.mxu0 0.0
  %4677 = vmatprep.subr.mxu0 0.0
  %4678 = vmatpush1.msra.mxu0 0.0
  %4679 = vmatprep.subr.mxu0 0.0
  %4680 = vmatpush1.msra.mxu0 0.0
  %4681 = vmatprep.subr.mxu0 0.0
  %4682 = vmatpush1.msra.mxu0 0.0
  %4683 = vmatprep.subr.mxu0 0.0
  %4684 = vmatpush1.msra.mxu0 0.0
  %4685 = vmatprep.subr.mxu0 0.0
  %4686 = vmatpush1.msra.mxu0 0.0
  %4687 = vmatprep.subr.mxu0 0.0
  %4688 = vmatpush1.msra.mxu0 0.0
  %4689 = vmatprep.subr.mxu0 0.0
  %4690 = vmatpush1.msra.mxu0 0.0
  %4691 = vmatprep.subr.mxu0 0.0
  %4692 = vmatpush1.msra.mxu0 0.0
  %4693 = vmatprep.subr.mxu0 0.0
  %4694 = vmatpush1.msra.mxu0 0.0
  %4695 = vmatprep.subr.mxu0 0.0
  %4696 = vmatpush1.msra.mxu0 0.0
  %4697 = vmatprep.mubr.f32.mxu0 0.0
  %4698 = vmatmul.mubr.f32.gmra.mrb[0].mxu0 %v4551
  %v4699 = vpop.f32.mrb[0].mxu0
  %v4700 = vadd.f32 %v4541, %v4699
  %v4701 = vpop.f32.mrb[0].mxu0
  %v4702 = vadd.f32 %v4545, %v4701
  %4703 = vmatprep.mubr.f32.mxu0 0.0
  %4704 = vmatmul.mubr.f32.gmra.mrb[0].mxu0 %v4554
  %v4705 = vpop.f32.mrb[0].mxu0
  %v4706 = vadd.f32 %v4541, %v4705
  %v4707 = vpop.f32.mrb[0].mxu0
  %v4708 = vadd.f32 %v4545, %v4707
  %4709 = vdwg.mxu0
  %v4710 = vmax.f32 %v4623, 0.0
  %v4711 = vmax.f32 %v4625, 0.0
  %v4712 = vmax.f32 %v4700, 0.0
  %v4713 = vmax.f32 %v4702, 0.0
  %v4714 = vmax.f32 %v4629, 0.0
  %v4715 = vmax.f32 %v4631, 0.0
  %v4716 = vmax.f32 %v4706, 0.0
  %v4717 = vmax.f32 %v4708, 0.0
  %4718 = vmatprep.subr.mxu0 0.0
  %4719 = vmatpush1.msra.mxu0 %v2546
  %4720 = vmatprep.subr.mxu0 0.0
  %4721 = vmatpush1.msra.mxu0 %v2547
  %4722 = vmatprep.subr.mxu0 0.0
  %4723 = vmatpush1.msra.mxu0 %v2548
  %4724 = vmatprep.subr.mxu0 0.0
  %4725 = vmatpush1.msra.mxu0 %v2549
  %4726 = vmatprep.subr.mxu0 0.0
  %4727 = vmatpush1.msra.mxu0 %v2550
  %4728 = vmatprep.subr.mxu0 0.0
  %4729 = vmatpush1.msra.mxu0 %v2551
  %4730 = vmatprep.subr.mxu0 0.0
  %4731 = vmatpush1.msra.mxu0 %v2552
  %4732 = vmatprep.subr.mxu0 0.0
  %4733 = vmatpush1.msra.mxu0 %v2553
  %4734 = vmatprep.subr.mxu0 0.0
  %4735 = vmatpush1.msra.mxu0 %v2554
  %4736 = vmatprep.subr.mxu0 0.0
  %4737 = vmatpush1.msra.mxu0 %v2555
  %4738 = vmatprep.subr.mxu0 0.0
  %4739 = vmatpush1.msra.mxu0 %v2556
  %4740 = vmatprep.subr.mxu0 0.0
  %4741 = vmatpush1.msra.mxu0 %v2557
  %4742 = vmatprep.subr.mxu0 0.0
  %4743 = vmatpush1.msra.mxu0 %v2558
  %4744 = vmatprep.subr.mxu0 0.0
  %4745 = vmatpush1.msra.mxu0 %v2559
  %4746 = vmatprep.subr.mxu0 0.0
  %4747 = vmatpush1.msra.mxu0 %v2560
  %4748 = vmatprep.subr.mxu0 0.0
  %4749 = vmatpush1.msra.mxu0 %v2561
  %4750 = vmatprep.subr.mxu0 0.0
  %4751 = vmatpush1.msra.mxu0 %v2562
  %4752 = vmatprep.subr.mxu0 0.0
  %4753 = vmatpush1.msra.mxu0 %v2563
  %4754 = vmatprep.subr.mxu0 0.0
  %4755 = vmatpush1.msra.mxu0 %v2564
  %4756 = vmatprep.subr.mxu0 0.0
  %4757 = vmatpush1.msra.mxu0 %v2565
  %4758 = vmatprep.subr.mxu0 0.0
  %4759 = vmatpush1.msra.mxu0 %v2566
  %4760 = vmatprep.subr.mxu0 0.0
  %4761 = vmatpush1.msra.mxu0 %v2567
  %4762 = vmatprep.subr.mxu0 0.0
  %4763 = vmatpush1.msra.mxu0 %v2568
  %4764 = vmatprep.subr.mxu0 0.0
  %4765 = vmatpush1.msra.mxu0 %v2569
  %4766 = vmatprep.subr.mxu0 0.0
  %4767 = vmatpush1.msra.mxu0 %v2570
  %4768 = vmatprep.subr.mxu0 0.0
  %4769 = vmatpush1.msra.mxu0 %v2571
  %4770 = vmatprep.subr.mxu0 0.0
  %4771 = vmatpush1.msra.mxu0 %v2572
  %4772 = vmatprep.subr.mxu0 0.0
  %4773 = vmatpush1.msra.mxu0 %v2573
  %4774 = vmatprep.subr.mxu0 0.0
  %4775 = vmatpush1.msra.mxu0 %v2574
  %4776 = vmatprep.subr.mxu0 0.0
  %4777 = vmatpush1.msra.mxu0 %v2575
  %4778 = vmatprep.subr.mxu0 0.0
  %4779 = vmatpush1.msra.mxu0 %v2576
  %4780 = vmatprep.subr.mxu0 0.0
  %4781 = vmatpush1.msra.mxu0 %v2577
  %4782 = vmatprep.mubr.f32.mxu0 %v4711
  %4783 = vmatmul.mubr.f32.gmra.mrb[0].mxu0 %v4710
  %v4784 = vpop.f32.mrb[0].mxu0
  %v4785 = vadd.f32 %v2544, %v4784
  %v4786 = vpop.f32.mrb[0].mxu0
  %4787 = vmatprep.mubr.f32.mxu0 %v4715
  %4788 = vmatmul.mubr.f32.gmra.mrb[0].mxu0 %v4714
  %v4789 = vpop.f32.mrb[0].mxu0
  %v4790 = vadd.f32 %v2544, %v4789
  %v4791 = vpop.f32.mrb[0].mxu0
  %4792 = vdwg.mxu0
  %4793 = vmatprep.subr.mxu0 0.0
  %4794 = vmatpush1.msra.mxu0 %v2578
  %4795 = vmatprep.subr.mxu0 0.0
  %4796 = vmatpush1.msra.mxu0 %v2579
  %4797 = vmatprep.subr.mxu0 0.0
  %4798 = vmatpush1.msra.mxu0 %v2580
  %4799 = vmatprep.subr.mxu0 0.0
  %4800 = vmatpush1.msra.mxu0 %v2581
  %4801 = vmatprep.subr.mxu0 0.0
  %4802 = vmatpush1.msra.mxu0 %v2582
  %4803 = vmatprep.subr.mxu0 0.0
  %4804 = vmatpush1.msra.mxu0 %v2583
  %4805 = vmatprep.subr.mxu0 0.0
  %4806 = vmatpush1.msra.mxu0 %v2584
  %4807 = vmatprep.subr.mxu0 0.0
  %4808 = vmatpush1.msra.mxu0 %v2585
  %4809 = vmatprep.subr.mxu0 0.0
  %4810 = vmatpush1.msra.mxu0 %v2586
  %4811 = vmatprep.subr.mxu0 0.0
  %4812 = vmatpush1.msra.mxu0 %v2587
  %4813 = vmatprep.subr.mxu0 0.0
  %4814 = vmatpush1.msra.mxu0 %v2588
  %4815 = vmatprep.subr.mxu0 0.0
  %4816 = vmatpush1.msra.mxu0 %v2589
  %4817 = vmatprep.subr.mxu0 0.0
  %4818 = vmatpush1.msra.mxu0 %v2590
  %4819 = vmatprep.subr.mxu0 0.0
  %4820 = vmatpush1.msra.mxu0 %v2591
  %4821 = vmatprep.subr.mxu0 0.0
  %4822 = vmatpush1.msra.mxu0 %v2592
  %4823 = vmatprep.subr.mxu0 0.0
  %4824 = vmatpush1.msra.mxu0 %v2593
  %4825 = vmatprep.subr.mxu0 0.0
  %4826 = vmatpush1.msra.mxu0 %v2594
  %4827 = vmatprep.subr.mxu0 0.0
  %4828 = vmatpush1.msra.mxu0 %v2595
  %4829 = vmatprep.subr.mxu0 0.0
  %4830 = vmatpush1.msra.mxu0 %v2596
  %4831 = vmatprep.subr.mxu0 0.0
  %4832 = vmatpush1.msra.mxu0 %v2597
  %4833 = vmatprep.subr.mxu0 0.0
  %4834 = vmatpush1.msra.mxu0 %v2598
  %4835 = vmatprep.subr.mxu0 0.0
  %4836 = vmatpush1.msra.mxu0 %v2599
  %4837 = vmatprep.subr.mxu0 0.0
  %4838 = vmatpush1.msra.mxu0 %v2600
  %4839 = vmatprep.subr.mxu0 0.0
  %4840 = vmatpush1.msra.mxu0 %v2601
  %4841 = vmatprep.subr.mxu0 0.0
  %4842 = vmatpush1.msra.mxu0 %v2602
  %4843 = vmatprep.subr.mxu0 0.0
  %4844 = vmatpush1.msra.mxu0 %v2603
  %4845 = vmatprep.subr.mxu0 0.0
  %4846 = vmatpush1.msra.mxu0 %v2604
  %4847 = vmatprep.subr.mxu0 0.0
  %4848 = vmatpush1.msra.mxu0 %v2605
  %4849 = vmatprep.subr.mxu0 0.0
  %4850 = vmatpush1.msra.mxu0 %v2606
  %4851 = vmatprep.subr.mxu0 0.0
  %4852 = vmatpush1.msra.mxu0 %v2607
  %4853 = vmatprep.subr.mxu0 0.0
  %4854 = vmatpush1.msra.mxu0 %v2608
  %4855 = vmatprep.subr.mxu0 0.0
  %4856 = vmatpush1.msra.mxu0 %v2609
  %4857 = vmatprep.mubr.f32.mxu0 %v4713
  %4858 = vmatmul.mubr.f32.gmra.mrb[0].mxu0 %v4712
  %v4859 = vpop.f32.mrb[0].mxu0
  %v4860 = vadd.f32 %v4785, %v4859
  %v4861 = vpop.f32.mrb[0].mxu0
  %4862 = vmatprep.mubr.f32.mxu0 %v4717
  %4863 = vmatmul.mubr.f32.gmra.mrb[0].mxu0 %v4716
  %v4864 = vpop.f32.mrb[0].mxu0
  %v4865 = vadd.f32 %v4790, %v4864
  %v4866 = vpop.f32.mrb[0].mxu0
  %4867 = vdwg.mxu0
  %v4868 = vadd.f32 %v4527, %v4860
  %v4869 = vadd.f32 %v4528, %v4865
  %v4870 = vmul.f32 %v4868, %v27
  %v4871 = vmul.f32 %v4869, %v28
  %v4872 = vsel %vm210, %v4870, 0.0
  %v4873 = vsel %vm210, %v4871, 0.0
  %v4874 = vadd.f32 %v4872, %v4873
  %v4875 = vrot.slane %v4874, 4
  %v4876 = vadd.f32 %v4874, %v4875
  %v4877 = vrot.slane %v4876, 2
  %v4878 = vadd.f32 %v4876, %v4877
  %v4879 = vrot.slane %v4878, 1
  %v4880 = vadd.f32 %v4878, %v4879
  %v4881 = vmul.f32 %v4880, 0.07692308
  %v4882 = vsub.f32 %v4870, %v4881
  %v4883 = vsub.f32 %v4871, %v4881
  %v4884 = vmul.f32 %v4882, %v27
  %v4885 = vmul.f32 %v4883, %v28
  %v4886 = vmul.f32 %v4884, %v4884
  %v4887 = vmul.f32 %v4885, %v4885
  %v4888 = vsel %vm210, %v4886, 0.0
  %v4889 = vsel %vm210, %v4887, 0.0
  %v4890 = vadd.f32 %v4888, %v4889
  %v4891 = vrot.slane %v4890, 4
  %v4892 = vadd.f32 %v4890, %v4891
  %v4893 = vrot.slane %v4892, 2
  %v4894 = vadd.f32 %v4892, %v4893
  %v4895 = vrot.slane %v4894, 1
  %v4896 = vadd.f32 %v4894, %v4895
  %v4897 = vmul.f32 %v4896, 0.07692308
  %v4898 = vadd.f32 %v4897, 1e-05
  %v4899 = vrsqrt.pop %v4898
  %v4900 = vmul.f32 %v4899, %v2542
  %v4901 = vmul.f32 %v4881, %v4900
  %v4902 = vsub.f32 %v2543, %v4901
  %v4903 = vmul.f32 %v4870, %v4900
  %v4904 = vmul.f32 %v4871, %v4900
  %v4905 = vadd.f32 %v4903, %v4902
  %v4906 = vadd.f32 %v4904, %v4902
  %v4907 = vmul.f32 %v4905, %v27
  %v4908 = vmul.f32 %v4906, %v28
  %s4909 = scalar_lea.vmem %s2, 64
  %v4910 = vld [vmem:[%s4909] sm:$0xff]
  %v4911 = vld [vmem:[%s4909 + $0x8] sm:$0xff]
  %v4912 = vld [vmem:[%s4909 + $0x10] sm:$0xff]
  %v4913 = vld [vmem:[%s4909 + $0x18] sm:$0xff]
  %s4914 = scalar_lea.vmem %s3, 320
  %v4915 = vld [vmem:[%s4914] sm:$0xff]
  %v4916 = vld [vmem:[%s4914 + $0x8] sm:$0xff]
  %v4917 = vld [vmem:[%s4914 + $0x10] sm:$0xff]
  %v4918 = vld [vmem:[%s4914 + $0x18] sm:$0xff]
  %v4919 = vld [vmem:[%s4914 + $0x20] sm:$0xff]
  %v4920 = vld [vmem:[%s4914 + $0x28] sm:$0xff]
  %v4921 = vld [vmem:[%s4914 + $0x30] sm:$0xff]
  %v4922 = vld [vmem:[%s4914 + $0x38] sm:$0xff]
  %v4923 = vld [vmem:[%s4914 + $0x40] sm:$0xff]
  %v4924 = vld [vmem:[%s4914 + $0x48] sm:$0xff]
  %v4925 = vld [vmem:[%s4914 + $0x50] sm:$0xff]
  %v4926 = vld [vmem:[%s4914 + $0x58] sm:$0xff]
  %v4927 = vld [vmem:[%s4914 + $0x60] sm:$0xff]
  %v4928 = vld [vmem:[%s4914 + $0x68] sm:$0xff]
  %v4929 = vld [vmem:[%s4914 + $0x70] sm:$0xff]
  %v4930 = vld [vmem:[%s4914 + $0x78] sm:$0xff]
  %s4931 = scalar_lea.vmem %s4914, 128
  %v4932 = vld [vmem:[%s4931] ss:$8 sm:$0xf]
  %v4933 = vld [vmem:[%s4914 + $0x81] ss:$0 sm:$0xff]
  %v4934 = vld [vmem:[%s4914 + $0x82] ss:$0 sm:$0xff]
  %v4935 = vld [vmem:[%s4914 + $0x83] ss:$0 sm:$0xff]
  %v4936 = vld [vmem:[%s4914 + $0x84] ss:$0 sm:$0xff]
  %v4937 = vld [vmem:[%s4914 + $0x85] ss:$0 sm:$0xff]
  %s4938 = scalar_lea.vmem %s4, 1024
  %v4939 = vld [vmem:[%s4938] sm:$0xff]
  %v4940 = vld [vmem:[%s4938 + $0x8] sm:$0xff]
  %v4941 = vld [vmem:[%s4938 + $0x10] sm:$0xff]
  %v4942 = vld [vmem:[%s4938 + $0x18] sm:$0xff]
  %v4943 = vld [vmem:[%s4938 + $0x20] sm:$0xff]
  %v4944 = vld [vmem:[%s4938 + $0x28] sm:$0xff]
  %v4945 = vld [vmem:[%s4938 + $0x30] sm:$0xff]
  %v4946 = vld [vmem:[%s4938 + $0x38] sm:$0xff]
  %v4947 = vld [vmem:[%s4938 + $0x40] sm:$0xff]
  %v4948 = vld [vmem:[%s4938 + $0x48] sm:$0xff]
  %v4949 = vld [vmem:[%s4938 + $0x50] sm:$0xff]
  %v4950 = vld [vmem:[%s4938 + $0x58] sm:$0xff]
  %v4951 = vld [vmem:[%s4938 + $0x60] sm:$0xff]
  %v4952 = vld [vmem:[%s4938 + $0x68] sm:$0xff]
  %v4953 = vld [vmem:[%s4938 + $0x70] sm:$0xff]
  %v4954 = vld [vmem:[%s4938 + $0x78] sm:$0xff]
  %v4955 = vld [vmem:[%s4938 + $0x80] sm:$0xff]
  %v4956 = vld [vmem:[%s4938 + $0x88] sm:$0xff]
  %v4957 = vld [vmem:[%s4938 + $0x90] sm:$0xff]
  %v4958 = vld [vmem:[%s4938 + $0x98] sm:$0xff]
  %v4959 = vld [vmem:[%s4938 + $0xa0] sm:$0xff]
  %v4960 = vld [vmem:[%s4938 + $0xa8] sm:$0xff]
  %v4961 = vld [vmem:[%s4938 + $0xb0] sm:$0xff]
  %v4962 = vld [vmem:[%s4938 + $0xb8] sm:$0xff]
  %v4963 = vld [vmem:[%s4938 + $0xc0] sm:$0xff]
  %v4964 = vld [vmem:[%s4938 + $0xc8] sm:$0xff]
  %v4965 = vld [vmem:[%s4938 + $0xd0] sm:$0xff]
  %v4966 = vld [vmem:[%s4938 + $0xd8] sm:$0xff]
  %v4967 = vld [vmem:[%s4938 + $0xe0] sm:$0xff]
  %v4968 = vld [vmem:[%s4938 + $0xe8] sm:$0xff]
  %v4969 = vld [vmem:[%s4938 + $0xf0] sm:$0xff]
  %v4970 = vld [vmem:[%s4938 + $0xf8] sm:$0xff]
  %v4971 = vld [vmem:[%s4938 + $0x100] sm:$0xff]
  %v4972 = vld [vmem:[%s4938 + $0x108] sm:$0xff]
  %v4973 = vld [vmem:[%s4938 + $0x110] sm:$0xff]
  %v4974 = vld [vmem:[%s4938 + $0x118] sm:$0xff]
  %v4975 = vld [vmem:[%s4938 + $0x120] sm:$0xff]
  %v4976 = vld [vmem:[%s4938 + $0x128] sm:$0xff]
  %v4977 = vld [vmem:[%s4938 + $0x130] sm:$0xff]
  %v4978 = vld [vmem:[%s4938 + $0x138] sm:$0xff]
  %v4979 = vld [vmem:[%s4938 + $0x140] sm:$0xff]
  %v4980 = vld [vmem:[%s4938 + $0x148] sm:$0xff]
  %v4981 = vld [vmem:[%s4938 + $0x150] sm:$0xff]
  %v4982 = vld [vmem:[%s4938 + $0x158] sm:$0xff]
  %v4983 = vld [vmem:[%s4938 + $0x160] sm:$0xff]
  %v4984 = vld [vmem:[%s4938 + $0x168] sm:$0xff]
  %v4985 = vld [vmem:[%s4938 + $0x170] sm:$0xff]
  %v4986 = vld [vmem:[%s4938 + $0x178] sm:$0xff]
  %v4987 = vld [vmem:[%s4938 + $0x180] sm:$0xff]
  %v4988 = vld [vmem:[%s4938 + $0x188] sm:$0xff]
  %v4989 = vld [vmem:[%s4938 + $0x190] sm:$0xff]
  %v4990 = vld [vmem:[%s4938 + $0x198] sm:$0xff]
  %v4991 = vld [vmem:[%s4938 + $0x1a0] sm:$0xff]
  %v4992 = vld [vmem:[%s4938 + $0x1a8] sm:$0xff]
  %v4993 = vld [vmem:[%s4938 + $0x1b0] sm:$0xff]
  %v4994 = vld [vmem:[%s4938 + $0x1b8] sm:$0xff]
  %v4995 = vld [vmem:[%s4938 + $0x1c0] sm:$0xff]
  %v4996 = vld [vmem:[%s4938 + $0x1c8] sm:$0xff]
  %v4997 = vld [vmem:[%s4938 + $0x1d0] sm:$0xff]
  %v4998 = vld [vmem:[%s4938 + $0x1d8] sm:$0xff]
  %v4999 = vld [vmem:[%s4938 + $0x1e0] sm:$0xff]
  %v5000 = vld [vmem:[%s4938 + $0x1e8] sm:$0xff]
  %v5001 = vld [vmem:[%s4938 + $0x1f0] sm:$0xff]
  %v5002 = vld [vmem:[%s4938 + $0x1f8] sm:$0xff]
  %v5004 = vsel %vm210, %v4907, 0
  %v5007 = vsel %vm210, %v4908, 0
  %5009 = vmatprep.subr.mxu0 0.0
  %5010 = vmatpush1.msra.mxu0 %v4910
  %5011 = vmatprep.subr.mxu0 0.0
  %5012 = vmatpush1.msra.mxu0 %v4911
  %5013 = vmatprep.subr.mxu0 0.0
  %5014 = vmatpush1.msra.mxu0 %v4912
  %5015 = vmatprep.subr.mxu0 0.0
  %5016 = vmatpush1.msra.mxu0 %v4913
  %5017 = vmatprep.subr.mxu0 0.0
  %5018 = vmatpush1.msra.mxu0 0.0
  %5019 = vmatprep.subr.mxu0 0.0
  %5020 = vmatpush1.msra.mxu0 0.0
  %5021 = vmatprep.subr.mxu0 0.0
  %5022 = vmatpush1.msra.mxu0 0.0
  %5023 = vmatprep.subr.mxu0 0.0
  %5024 = vmatpush1.msra.mxu0 0.0
  %5025 = vmatprep.subr.mxu0 0.0
  %5026 = vmatpush1.msra.mxu0 0.0
  %5027 = vmatprep.subr.mxu0 0.0
  %5028 = vmatpush1.msra.mxu0 0.0
  %5029 = vmatprep.subr.mxu0 0.0
  %5030 = vmatpush1.msra.mxu0 0.0
  %5031 = vmatprep.subr.mxu0 0.0
  %5032 = vmatpush1.msra.mxu0 0.0
  %5033 = vmatprep.subr.mxu0 0.0
  %5034 = vmatpush1.msra.mxu0 0.0
  %5035 = vmatprep.subr.mxu0 0.0
  %5036 = vmatpush1.msra.mxu0 0.0
  %5037 = vmatprep.subr.mxu0 0.0
  %5038 = vmatpush1.msra.mxu0 0.0
  %5039 = vmatprep.subr.mxu0 0.0
  %5040 = vmatpush1.msra.mxu0 0.0
  %5041 = vmatprep.subr.mxu0 0.0
  %5042 = vmatpush1.msra.mxu0 0.0
  %5043 = vmatprep.subr.mxu0 0.0
  %5044 = vmatpush1.msra.mxu0 0.0
  %5045 = vmatprep.subr.mxu0 0.0
  %5046 = vmatpush1.msra.mxu0 0.0
  %5047 = vmatprep.subr.mxu0 0.0
  %5048 = vmatpush1.msra.mxu0 0.0
  %5049 = vmatprep.subr.mxu0 0.0
  %5050 = vmatpush1.msra.mxu0 0.0
  %5051 = vmatprep.subr.mxu0 0.0
  %5052 = vmatpush1.msra.mxu0 0.0
  %5053 = vmatprep.subr.mxu0 0.0
  %5054 = vmatpush1.msra.mxu0 0.0
  %5055 = vmatprep.subr.mxu0 0.0
  %5056 = vmatpush1.msra.mxu0 0.0
  %5057 = vmatprep.subr.mxu0 0.0
  %5058 = vmatpush1.msra.mxu0 0.0
  %5059 = vmatprep.subr.mxu0 0.0
  %5060 = vmatpush1.msra.mxu0 0.0
  %5061 = vmatprep.subr.mxu0 0.0
  %5062 = vmatpush1.msra.mxu0 0.0
  %5063 = vmatprep.subr.mxu0 0.0
  %5064 = vmatpush1.msra.mxu0 0.0
  %5065 = vmatprep.subr.mxu0 0.0
  %5066 = vmatpush1.msra.mxu0 0.0
  %5067 = vmatprep.subr.mxu0 0.0
  %5068 = vmatpush1.msra.mxu0 0.0
  %5069 = vmatprep.subr.mxu0 0.0
  %5070 = vmatpush1.msra.mxu0 0.0
  %5071 = vmatprep.subr.mxu0 0.0
  %5072 = vmatpush1.msra.mxu0 0.0
  %5073 = vmatprep.mubr.f32.mxu0 0.0
  %5074 = vmatmul.mubr.f32.gmra.mrb[0].mxu0 %v5004
  %v5075 = vpop.f32.mrb[0].mxu0
  %v5076 = vadd.f32 0.0, %v5075
  %v5077 = vpop.f32.mrb[0].mxu0
  %5078 = vmatprep.mubr.f32.mxu0 0.0
  %5079 = vmatmul.mubr.f32.gmra.mrb[0].mxu0 %v5007
  %v5080 = vpop.f32.mrb[0].mxu0
  %v5081 = vadd.f32 0.0, %v5080
  %v5082 = vpop.f32.mrb[0].mxu0
  %5083 = vdwg.mxu0
  %5086 = vrot.lane.b32.xlu0 %v5076, 124
  %v5087 = vpop.permute.xlu0 %5086
  %5088 = vrot.lane.b32.xlu0 %v5081, 124
  %v5089 = vpop.permute.xlu0 %5088
  %5090 = vrot.lane.b32.xlu0 %v5076, 120
  %v5091 = vpop.permute.xlu0 %5090
  %5092 = vrot.lane.b32.xlu0 %v5081, 120
  %v5093 = vpop.permute.xlu0 %5092
  %5094 = vrot.lane.b32.xlu0 %v5076, 116
  %v5095 = vpop.permute.xlu0 %5094
  %5096 = vrot.lane.b32.xlu0 %v5081, 116
  %v5097 = vpop.permute.xlu0 %5096
  %5098 = vrot.lane.b32.xlu0 %v5076, 112
  %v5099 = vpop.permute.xlu0 %5098
  %5100 = vrot.lane.b32.xlu0 %v5081, 112
  %v5101 = vpop.permute.xlu0 %5100
  %5102 = vrot.lane.b32.xlu0 %v5076, 108
  %v5103 = vpop.permute.xlu0 %5102
  %5104 = vrot.lane.b32.xlu0 %v5081, 108
  %v5105 = vpop.permute.xlu0 %5104
  %5106 = vrot.lane.b32.xlu0 %v5076, 104
  %v5107 = vpop.permute.xlu0 %5106
  %5108 = vrot.lane.b32.xlu0 %v5081, 104
  %v5109 = vpop.permute.xlu0 %5108
  %5110 = vrot.lane.b32.xlu0 %v5076, 100
  %v5111 = vpop.permute.xlu0 %5110
  %5112 = vrot.lane.b32.xlu0 %v5081, 100
  %v5113 = vpop.permute.xlu0 %5112
  %5114 = vrot.lane.b32.xlu0 %v5076, 96
  %v5115 = vpop.permute.xlu0 %5114
  %5116 = vrot.lane.b32.xlu0 %v5081, 96
  %v5117 = vpop.permute.xlu0 %5116
  %v5118 = vsel %vm326, %v5076, 0
  %v5120 = vsel %vm326, %v5081, 0
  %v5122 = vsel %vm326, %v5115, 0
  %v5124 = vsel %vm326, %v5117, 0
  %5126 = vmatprep.subr.mxu0 0.0
  %5127 = vmatpush1.xpose.msra.mxu0 %v5122
  %5128 = vmatprep.subr.mxu0 0.0
  %5129 = vmatpush1.xpose.msra.mxu0 %v5124
  %5130 = vmatprep.subr.mxu0 0.0
  %5131 = vmatpush1.xpose.msra.mxu0 0.0
  %5132 = vmatprep.subr.mxu0 0.0
  %5133 = vmatpush1.xpose.msra.mxu0 0.0
  %5134 = vmatprep.subr.mxu0 0.0
  %5135 = vmatpush1.xpose.msra.mxu0 0.0
  %5136 = vmatprep.subr.mxu0 0.0
  %5137 = vmatpush1.xpose.msra.mxu0 0.0
  %5138 = vmatprep.subr.mxu0 0.0
  %5139 = vmatpush1.xpose.msra.mxu0 0.0
  %5140 = vmatprep.subr.mxu0 0.0
  %5141 = vmatpush1.xpose.msra.mxu0 0.0
  %5142 = vmatprep.subr.mxu0 0.0
  %5143 = vmatpush1.xpose.msra.mxu0 0.0
  %5144 = vmatprep.subr.mxu0 0.0
  %5145 = vmatpush1.xpose.msra.mxu0 0.0
  %5146 = vmatprep.subr.mxu0 0.0
  %5147 = vmatpush1.xpose.msra.mxu0 0.0
  %5148 = vmatprep.subr.mxu0 0.0
  %5149 = vmatpush1.xpose.msra.mxu0 0.0
  %5150 = vmatprep.subr.mxu0 0.0
  %5151 = vmatpush1.xpose.msra.mxu0 0.0
  %5152 = vmatprep.subr.mxu0 0.0
  %5153 = vmatpush1.xpose.msra.mxu0 0.0
  %5154 = vmatprep.subr.mxu0 0.0
  %5155 = vmatpush1.xpose.msra.mxu0 0.0
  %5156 = vmatprep.subr.mxu0 0.0
  %5157 = vmatpush1.xpose.msra.mxu0 0.0
  %5158 = vmatprep.subr.mxu0 0.0
  %5159 = vmatpush1.xpose.msra.mxu0 0.0
  %5160 = vmatprep.subr.mxu0 0.0
  %5161 = vmatpush1.xpose.msra.mxu0 0.0
  %5162 = vmatprep.subr.mxu0 0.0
  %5163 = vmatpush1.xpose.msra.mxu0 0.0
  %5164 = vmatprep.subr.mxu0 0.0
  %5165 = vmatpush1.xpose.msra.mxu0 0.0
  %5166 = vmatprep.subr.mxu0 0.0
  %5167 = vmatpush1.xpose.msra.mxu0 0.0
  %5168 = vmatprep.subr.mxu0 0.0
  %5169 = vmatpush1.xpose.msra.mxu0 0.0
  %5170 = vmatprep.subr.mxu0 0.0
  %5171 = vmatpush1.xpose.msra.mxu0 0.0
  %5172 = vmatprep.subr.mxu0 0.0
  %5173 = vmatpush1.xpose.msra.mxu0 0.0
  %5174 = vmatprep.subr.mxu0 0.0
  %5175 = vmatpush1.xpose.msra.mxu0 0.0
  %5176 = vmatprep.subr.mxu0 0.0
  %5177 = vmatpush1.xpose.msra.mxu0 0.0
  %5178 = vmatprep.subr.mxu0 0.0
  %5179 = vmatpush1.xpose.msra.mxu0 0.0
  %5180 = vmatprep.subr.mxu0 0.0
  %5181 = vmatpush1.xpose.msra.mxu0 0.0
  %5182 = vmatprep.subr.mxu0 0.0
  %5183 = vmatpush1.xpose.msra.mxu0 0.0
  %5184 = vmatprep.subr.mxu0 0.0
  %5185 = vmatpush1.xpose.msra.mxu0 0.0
  %5186 = vmatprep.subr.mxu0 0.0
  %5187 = vmatpush1.xpose.msra.mxu0 0.0
  %5188 = vmatprep.subr.mxu0 0.0
  %5189 = vmatpush1.xpose.msra.mxu0 0.0
  %5190 = vmatprep.mubr.f32.mxu0 0.0
  %5191 = vmatmul.mubr.f32.gmra.mrb[0].mxu0 %v5118
  %v5192 = vpop.f32.mrb[0].mxu0
  %v5193 = vadd.f32 0.0, %v5192
  %v5194 = vpop.f32.mrb[0].mxu0
  %5195 = vmatprep.mubr.f32.mxu0 0.0
  %5196 = vmatmul.mubr.f32.gmra.mrb[0].mxu0 %v5120
  %v5197 = vpop.f32.mrb[0].mxu0
  %v5198 = vadd.f32 0.0, %v5197
  %v5199 = vpop.f32.mrb[0].mxu0
  %5200 = vdwg.mxu0
  %5201 = vrot.lane.b32.xlu0 %v5087, 96
  %v5202 = vpop.permute.xlu0 %5201
  %5203 = vrot.lane.b32.xlu0 %v5089, 96
  %v5204 = vpop.permute.xlu0 %5203
  %v5205 = vsel %vm326, %v5087, 0
  %v5207 = vsel %vm326, %v5089, 0
  %v5209 = vsel %vm326, %v5202, 0
  %v5211 = vsel %vm326, %v5204, 0
  %5213 = vmatprep.subr.mxu0 0.0
  %5214 = vmatpush1.xpose.msra.mxu0 %v5209
  %5215 = vmatprep.subr.mxu0 0.0
  %5216 = vmatpush1.xpose.msra.mxu0 %v5211
  %5217 = vmatprep.subr.mxu0 0.0
  %5218 = vmatpush1.xpose.msra.mxu0 0.0
  %5219 = vmatprep.subr.mxu0 0.0
  %5220 = vmatpush1.xpose.msra.mxu0 0.0
  %5221 = vmatprep.subr.mxu0 0.0
  %5222 = vmatpush1.xpose.msra.mxu0 0.0
  %5223 = vmatprep.subr.mxu0 0.0
  %5224 = vmatpush1.xpose.msra.mxu0 0.0
  %5225 = vmatprep.subr.mxu0 0.0
  %5226 = vmatpush1.xpose.msra.mxu0 0.0
  %5227 = vmatprep.subr.mxu0 0.0
  %5228 = vmatpush1.xpose.msra.mxu0 0.0
  %5229 = vmatprep.subr.mxu0 0.0
  %5230 = vmatpush1.xpose.msra.mxu0 0.0
  %5231 = vmatprep.subr.mxu0 0.0
  %5232 = vmatpush1.xpose.msra.mxu0 0.0
  %5233 = vmatprep.subr.mxu0 0.0
  %5234 = vmatpush1.xpose.msra.mxu0 0.0
  %5235 = vmatprep.subr.mxu0 0.0
  %5236 = vmatpush1.xpose.msra.mxu0 0.0
  %5237 = vmatprep.subr.mxu0 0.0
  %5238 = vmatpush1.xpose.msra.mxu0 0.0
  %5239 = vmatprep.subr.mxu0 0.0
  %5240 = vmatpush1.xpose.msra.mxu0 0.0
  %5241 = vmatprep.subr.mxu0 0.0
  %5242 = vmatpush1.xpose.msra.mxu0 0.0
  %5243 = vmatprep.subr.mxu0 0.0
  %5244 = vmatpush1.xpose.msra.mxu0 0.0
  %5245 = vmatprep.subr.mxu0 0.0
  %5246 = vmatpush1.xpose.msra.mxu0 0.0
  %5247 = vmatprep.subr.mxu0 0.0
  %5248 = vmatpush1.xpose.msra.mxu0 0.0
  %5249 = vmatprep.subr.mxu0 0.0
  %5250 = vmatpush1.xpose.msra.mxu0 0.0
  %5251 = vmatprep.subr.mxu0 0.0
  %5252 = vmatpush1.xpose.msra.mxu0 0.0
  %5253 = vmatprep.subr.mxu0 0.0
  %5254 = vmatpush1.xpose.msra.mxu0 0.0
  %5255 = vmatprep.subr.mxu0 0.0
  %5256 = vmatpush1.xpose.msra.mxu0 0.0
  %5257 = vmatprep.subr.mxu0 0.0
  %5258 = vmatpush1.xpose.msra.mxu0 0.0
  %5259 = vmatprep.subr.mxu0 0.0
  %5260 = vmatpush1.xpose.msra.mxu0 0.0
  %5261 = vmatprep.subr.mxu0 0.0
  %5262 = vmatpush1.xpose.msra.mxu0 0.0
  %5263 = vmatprep.subr.mxu0 0.0
  %5264 = vmatpush1.xpose.msra.mxu0 0.0
  %5265 = vmatprep.subr.mxu0 0.0
  %5266 = vmatpush1.xpose.msra.mxu0 0.0
  %5267 = vmatprep.subr.mxu0 0.0
  %5268 = vmatpush1.xpose.msra.mxu0 0.0
  %5269 = vmatprep.subr.mxu0 0.0
  %5270 = vmatpush1.xpose.msra.mxu0 0.0
  %5271 = vmatprep.subr.mxu0 0.0
  %5272 = vmatpush1.xpose.msra.mxu0 0.0
  %5273 = vmatprep.subr.mxu0 0.0
  %5274 = vmatpush1.xpose.msra.mxu0 0.0
  %5275 = vmatprep.subr.mxu0 0.0
  %5276 = vmatpush1.xpose.msra.mxu0 0.0
  %5277 = vmatprep.mubr.f32.mxu0 0.0
  %5278 = vmatmul.mubr.f32.gmra.mrb[0].mxu0 %v5205
  %v5279 = vpop.f32.mrb[0].mxu0
  %v5280 = vadd.f32 0.0, %v5279
  %v5281 = vpop.f32.mrb[0].mxu0
  %5282 = vmatprep.mubr.f32.mxu0 0.0
  %5283 = vmatmul.mubr.f32.gmra.mrb[0].mxu0 %v5207
  %v5284 = vpop.f32.mrb[0].mxu0
  %v5285 = vadd.f32 0.0, %v5284
  %v5286 = vpop.f32.mrb[0].mxu0
  %5287 = vdwg.mxu0
  %5288 = vrot.lane.b32.xlu0 %v5091, 96
  %v5289 = vpop.permute.xlu0 %5288
  %5290 = vrot.lane.b32.xlu0 %v5093, 96
  %v5291 = vpop.permute.xlu0 %5290
  %v5292 = vsel %vm326, %v5091, 0
  %v5294 = vsel %vm326, %v5093, 0
  %v5296 = vsel %vm326, %v5289, 0
  %v5298 = vsel %vm326, %v5291, 0
  %5300 = vmatprep.subr.mxu0 0.0
  %5301 = vmatpush1.xpose.msra.mxu0 %v5296
  %5302 = vmatprep.subr.mxu0 0.0
  %5303 = vmatpush1.xpose.msra.mxu0 %v5298
  %5304 = vmatprep.subr.mxu0 0.0
  %5305 = vmatpush1.xpose.msra.mxu0 0.0
  %5306 = vmatprep.subr.mxu0 0.0
  %5307 = vmatpush1.xpose.msra.mxu0 0.0
  %5308 = vmatprep.subr.mxu0 0.0
  %5309 = vmatpush1.xpose.msra.mxu0 0.0
  %5310 = vmatprep.subr.mxu0 0.0
  %5311 = vmatpush1.xpose.msra.mxu0 0.0
  %5312 = vmatprep.subr.mxu0 0.0
  %5313 = vmatpush1.xpose.msra.mxu0 0.0
  %5314 = vmatprep.subr.mxu0 0.0
  %5315 = vmatpush1.xpose.msra.mxu0 0.0
  %5316 = vmatprep.subr.mxu0 0.0
  %5317 = vmatpush1.xpose.msra.mxu0 0.0
  %5318 = vmatprep.subr.mxu0 0.0
  %5319 = vmatpush1.xpose.msra.mxu0 0.0
  %5320 = vmatprep.subr.mxu0 0.0
  %5321 = vmatpush1.xpose.msra.mxu0 0.0
  %5322 = vmatprep.subr.mxu0 0.0
  %5323 = vmatpush1.xpose.msra.mxu0 0.0
  %5324 = vmatprep.subr.mxu0 0.0
  %5325 = vmatpush1.xpose.msra.mxu0 0.0
  %5326 = vmatprep.subr.mxu0 0.0
  %5327 = vmatpush1.xpose.msra.mxu0 0.0
  %5328 = vmatprep.subr.mxu0 0.0
  %5329 = vmatpush1.xpose.msra.mxu0 0.0
  %5330 = vmatprep.subr.mxu0 0.0
  %5331 = vmatpush1.xpose.msra.mxu0 0.0
  %5332 = vmatprep.subr.mxu0 0.0
  %5333 = vmatpush1.xpose.msra.mxu0 0.0
  %5334 = vmatprep.subr.mxu0 0.0
  %5335 = vmatpush1.xpose.msra.mxu0 0.0
  %5336 = vmatprep.subr.mxu0 0.0
  %5337 = vmatpush1.xpose.msra.mxu0 0.0
  %5338 = vmatprep.subr.mxu0 0.0
  %5339 = vmatpush1.xpose.msra.mxu0 0.0
  %5340 = vmatprep.subr.mxu0 0.0
  %5341 = vmatpush1.xpose.msra.mxu0 0.0
  %5342 = vmatprep.subr.mxu0 0.0
  %5343 = vmatpush1.xpose.msra.mxu0 0.0
  %5344 = vmatprep.subr.mxu0 0.0
  %5345 = vmatpush1.xpose.msra.mxu0 0.0
  %5346 = vmatprep.subr.mxu0 0.0
  %5347 = vmatpush1.xpose.msra.mxu0 0.0
  %5348 = vmatprep.subr.mxu0 0.0
  %5349 = vmatpush1.xpose.msra.mxu0 0.0
  %5350 = vmatprep.subr.mxu0 0.0
  %5351 = vmatpush1.xpose.msra.mxu0 0.0
  %5352 = vmatprep.subr.mxu0 0.0
  %5353 = vmatpush1.xpose.msra.mxu0 0.0
  %5354 = vmatprep.subr.mxu0 0.0
  %5355 = vmatpush1.xpose.msra.mxu0 0.0
  %5356 = vmatprep.subr.mxu0 0.0
  %5357 = vmatpush1.xpose.msra.mxu0 0.0
  %5358 = vmatprep.subr.mxu0 0.0
  %5359 = vmatpush1.xpose.msra.mxu0 0.0
  %5360 = vmatprep.subr.mxu0 0.0
  %5361 = vmatpush1.xpose.msra.mxu0 0.0
  %5362 = vmatprep.subr.mxu0 0.0
  %5363 = vmatpush1.xpose.msra.mxu0 0.0
  %5364 = vmatprep.mubr.f32.mxu0 0.0
  %5365 = vmatmul.mubr.f32.gmra.mrb[0].mxu0 %v5292
  %v5366 = vpop.f32.mrb[0].mxu0
  %v5367 = vadd.f32 0.0, %v5366
  %v5368 = vpop.f32.mrb[0].mxu0
  %5369 = vmatprep.mubr.f32.mxu0 0.0
  %5370 = vmatmul.mubr.f32.gmra.mrb[0].mxu0 %v5294
  %v5371 = vpop.f32.mrb[0].mxu0
  %v5372 = vadd.f32 0.0, %v5371
  %v5373 = vpop.f32.mrb[0].mxu0
  %5374 = vdwg.mxu0
  %5375 = vrot.lane.b32.xlu0 %v5095, 96
  %v5376 = vpop.permute.xlu0 %5375
  %5377 = vrot.lane.b32.xlu0 %v5097, 96
  %v5378 = vpop.permute.xlu0 %5377
  %v5379 = vsel %vm326, %v5095, 0
  %v5381 = vsel %vm326, %v5097, 0
  %v5383 = vsel %vm326, %v5376, 0
  %v5385 = vsel %vm326, %v5378, 0
  %5387 = vmatprep.subr.mxu0 0.0
  %5388 = vmatpush1.xpose.msra.mxu0 %v5383
  %5389 = vmatprep.subr.mxu0 0.0
  %5390 = vmatpush1.xpose.msra.mxu0 %v5385
  %5391 = vmatprep.subr.mxu0 0.0
  %5392 = vmatpush1.xpose.msra.mxu0 0.0
  %5393 = vmatprep.subr.mxu0 0.0
  %5394 = vmatpush1.xpose.msra.mxu0 0.0
  %5395 = vmatprep.subr.mxu0 0.0
  %5396 = vmatpush1.xpose.msra.mxu0 0.0
  %5397 = vmatprep.subr.mxu0 0.0
  %5398 = vmatpush1.xpose.msra.mxu0 0.0
  %5399 = vmatprep.subr.mxu0 0.0
  %5400 = vmatpush1.xpose.msra.mxu0 0.0
  %5401 = vmatprep.subr.mxu0 0.0
  %5402 = vmatpush1.xpose.msra.mxu0 0.0
  %5403 = vmatprep.subr.mxu0 0.0
  %5404 = vmatpush1.xpose.msra.mxu0 0.0
  %5405 = vmatprep.subr.mxu0 0.0
  %5406 = vmatpush1.xpose.msra.mxu0 0.0
  %5407 = vmatprep.subr.mxu0 0.0
  %5408 = vmatpush1.xpose.msra.mxu0 0.0
  %5409 = vmatprep.subr.mxu0 0.0
  %5410 = vmatpush1.xpose.msra.mxu0 0.0
  %5411 = vmatprep.subr.mxu0 0.0
  %5412 = vmatpush1.xpose.msra.mxu0 0.0
  %5413 = vmatprep.subr.mxu0 0.0
  %5414 = vmatpush1.xpose.msra.mxu0 0.0
  %5415 = vmatprep.subr.mxu0 0.0
  %5416 = vmatpush1.xpose.msra.mxu0 0.0
  %5417 = vmatprep.subr.mxu0 0.0
  %5418 = vmatpush1.xpose.msra.mxu0 0.0
  %5419 = vmatprep.subr.mxu0 0.0
  %5420 = vmatpush1.xpose.msra.mxu0 0.0
  %5421 = vmatprep.subr.mxu0 0.0
  %5422 = vmatpush1.xpose.msra.mxu0 0.0
  %5423 = vmatprep.subr.mxu0 0.0
  %5424 = vmatpush1.xpose.msra.mxu0 0.0
  %5425 = vmatprep.subr.mxu0 0.0
  %5426 = vmatpush1.xpose.msra.mxu0 0.0
  %5427 = vmatprep.subr.mxu0 0.0
  %5428 = vmatpush1.xpose.msra.mxu0 0.0
  %5429 = vmatprep.subr.mxu0 0.0
  %5430 = vmatpush1.xpose.msra.mxu0 0.0
  %5431 = vmatprep.subr.mxu0 0.0
  %5432 = vmatpush1.xpose.msra.mxu0 0.0
  %5433 = vmatprep.subr.mxu0 0.0
  %5434 = vmatpush1.xpose.msra.mxu0 0.0
  %5435 = vmatprep.subr.mxu0 0.0
  %5436 = vmatpush1.xpose.msra.mxu0 0.0
  %5437 = vmatprep.subr.mxu0 0.0
  %5438 = vmatpush1.xpose.msra.mxu0 0.0
  %5439 = vmatprep.subr.mxu0 0.0
  %5440 = vmatpush1.xpose.msra.mxu0 0.0
  %5441 = vmatprep.subr.mxu0 0.0
  %5442 = vmatpush1.xpose.msra.mxu0 0.0
  %5443 = vmatprep.subr.mxu0 0.0
  %5444 = vmatpush1.xpose.msra.mxu0 0.0
  %5445 = vmatprep.subr.mxu0 0.0
  %5446 = vmatpush1.xpose.msra.mxu0 0.0
  %5447 = vmatprep.subr.mxu0 0.0
  %5448 = vmatpush1.xpose.msra.mxu0 0.0
  %5449 = vmatprep.subr.mxu0 0.0
  %5450 = vmatpush1.xpose.msra.mxu0 0.0
  %5451 = vmatprep.mubr.f32.mxu0 0.0
  %5452 = vmatmul.mubr.f32.gmra.mrb[0].mxu0 %v5379
  %v5453 = vpop.f32.mrb[0].mxu0
  %v5454 = vadd.f32 0.0, %v5453
  %v5455 = vpop.f32.mrb[0].mxu0
  %5456 = vmatprep.mubr.f32.mxu0 0.0
  %5457 = vmatmul.mubr.f32.gmra.mrb[0].mxu0 %v5381
  %v5458 = vpop.f32.mrb[0].mxu0
  %v5459 = vadd.f32 0.0, %v5458
  %v5460 = vpop.f32.mrb[0].mxu0
  %5461 = vdwg.mxu0
  %5462 = vrot.lane.b32.xlu0 %v5099, 96
  %v5463 = vpop.permute.xlu0 %5462
  %5464 = vrot.lane.b32.xlu0 %v5101, 96
  %v5465 = vpop.permute.xlu0 %5464
  %v5466 = vsel %vm326, %v5099, 0
  %v5468 = vsel %vm326, %v5101, 0
  %v5470 = vsel %vm326, %v5463, 0
  %v5472 = vsel %vm326, %v5465, 0
  %5474 = vmatprep.subr.mxu0 0.0
  %5475 = vmatpush1.xpose.msra.mxu0 %v5470
  %5476 = vmatprep.subr.mxu0 0.0
  %5477 = vmatpush1.xpose.msra.mxu0 %v5472
  %5478 = vmatprep.subr.mxu0 0.0
  %5479 = vmatpush1.xpose.msra.mxu0 0.0
  %5480 = vmatprep.subr.mxu0 0.0
  %5481 = vmatpush1.xpose.msra.mxu0 0.0
  %5482 = vmatprep.subr.mxu0 0.0
  %5483 = vmatpush1.xpose.msra.mxu0 0.0
  %5484 = vmatprep.subr.mxu0 0.0
  %5485 = vmatpush1.xpose.msra.mxu0 0.0
  %5486 = vmatprep.subr.mxu0 0.0
  %5487 = vmatpush1.xpose.msra.mxu0 0.0
  %5488 = vmatprep.subr.mxu0 0.0
  %5489 = vmatpush1.xpose.msra.mxu0 0.0
  %5490 = vmatprep.subr.mxu0 0.0
  %5491 = vmatpush1.xpose.msra.mxu0 0.0
  %5492 = vmatprep.subr.mxu0 0.0
  %5493 = vmatpush1.xpose.msra.mxu0 0.0
  %5494 = vmatprep.subr.mxu0 0.0
  %5495 = vmatpush1.xpose.msra.mxu0 0.0
  %5496 = vmatprep.subr.mxu0 0.0
  %5497 = vmatpush1.xpose.msra.mxu0 0.0
  %5498 = vmatprep.subr.mxu0 0.0
  %5499 = vmatpush1.xpose.msra.mxu0 0.0
  %5500 = vmatprep.subr.mxu0 0.0
  %5501 = vmatpush1.xpose.msra.mxu0 0.0
  %5502 = vmatprep.subr.mxu0 0.0
  %5503 = vmatpush1.xpose.msra.mxu0 0.0
  %5504 = vmatprep.subr.mxu0 0.0
  %5505 = vmatpush1.xpose.msra.mxu0 0.0
  %5506 = vmatprep.subr.mxu0 0.0
  %5507 = vmatpush1.xpose.msra.mxu0 0.0
  %5508 = vmatprep.subr.mxu0 0.0
  %5509 = vmatpush1.xpose.msra.mxu0 0.0
  %5510 = vmatprep.subr.mxu0 0.0
  %5511 = vmatpush1.xpose.msra.mxu0 0.0
  %5512 = vmatprep.subr.mxu0 0.0
  %5513 = vmatpush1.xpose.msra.mxu0 0.0
  %5514 = vmatprep.subr.mxu0 0.0
  %5515 = vmatpush1.xpose.msra.mxu0 0.0
  %5516 = vmatprep.subr.mxu0 0.0
  %5517 = vmatpush1.xpose.msra.mxu0 0.0
  %5518 = vmatprep.subr.mxu0 0.0
  %5519 = vmatpush1.xpose.msra.mxu0 0.0
  %5520 = vmatprep.subr.mxu0 0.0
  %5521 = vmatpush1.xpose.msra.mxu0 0.0
  %5522 = vmatprep.subr.mxu0 0.0
  %5523 = vmatpush1.xpose.msra.mxu0 0.0
  %5524 = vmatprep.subr.mxu0 0.0
  %5525 = vmatpush1.xpose.msra.mxu0 0.0
  %5526 = vmatprep.subr.mxu0 0.0
  %5527 = vmatpush1.xpose.msra.mxu0 0.0
  %5528 = vmatprep.subr.mxu0 0.0
  %5529 = vmatpush1.xpose.msra.mxu0 0.0
  %5530 = vmatprep.subr.mxu0 0.0
  %5531 = vmatpush1.xpose.msra.mxu0 0.0
  %5532 = vmatprep.subr.mxu0 0.0
  %5533 = vmatpush1.xpose.msra.mxu0 0.0
  %5534 = vmatprep.subr.mxu0 0.0
  %5535 = vmatpush1.xpose.msra.mxu0 0.0
  %5536 = vmatprep.subr.mxu0 0.0
  %5537 = vmatpush1.xpose.msra.mxu0 0.0
  %5538 = vmatprep.mubr.f32.mxu0 0.0
  %5539 = vmatmul.mubr.f32.gmra.mrb[0].mxu0 %v5466
  %v5540 = vpop.f32.mrb[0].mxu0
  %v5541 = vadd.f32 0.0, %v5540
  %v5542 = vpop.f32.mrb[0].mxu0
  %5543 = vmatprep.mubr.f32.mxu0 0.0
  %5544 = vmatmul.mubr.f32.gmra.mrb[0].mxu0 %v5468
  %v5545 = vpop.f32.mrb[0].mxu0
  %v5546 = vadd.f32 0.0, %v5545
  %v5547 = vpop.f32.mrb[0].mxu0
  %5548 = vdwg.mxu0
  %5549 = vrot.lane.b32.xlu0 %v5103, 96
  %v5550 = vpop.permute.xlu0 %5549
  %5551 = vrot.lane.b32.xlu0 %v5105, 96
  %v5552 = vpop.permute.xlu0 %5551
  %v5553 = vsel %vm326, %v5103, 0
  %v5555 = vsel %vm326, %v5105, 0
  %v5557 = vsel %vm326, %v5550, 0
  %v5559 = vsel %vm326, %v5552, 0
  %5561 = vmatprep.subr.mxu0 0.0
  %5562 = vmatpush1.xpose.msra.mxu0 %v5557
  %5563 = vmatprep.subr.mxu0 0.0
  %5564 = vmatpush1.xpose.msra.mxu0 %v5559
  %5565 = vmatprep.subr.mxu0 0.0
  %5566 = vmatpush1.xpose.msra.mxu0 0.0
  %5567 = vmatprep.subr.mxu0 0.0
  %5568 = vmatpush1.xpose.msra.mxu0 0.0
  %5569 = vmatprep.subr.mxu0 0.0
  %5570 = vmatpush1.xpose.msra.mxu0 0.0
  %5571 = vmatprep.subr.mxu0 0.0
  %5572 = vmatpush1.xpose.msra.mxu0 0.0
  %5573 = vmatprep.subr.mxu0 0.0
  %5574 = vmatpush1.xpose.msra.mxu0 0.0
  %5575 = vmatprep.subr.mxu0 0.0
  %5576 = vmatpush1.xpose.msra.mxu0 0.0
  %5577 = vmatprep.subr.mxu0 0.0
  %5578 = vmatpush1.xpose.msra.mxu0 0.0
  %5579 = vmatprep.subr.mxu0 0.0
  %5580 = vmatpush1.xpose.msra.mxu0 0.0
  %5581 = vmatprep.subr.mxu0 0.0
  %5582 = vmatpush1.xpose.msra.mxu0 0.0
  %5583 = vmatprep.subr.mxu0 0.0
  %5584 = vmatpush1.xpose.msra.mxu0 0.0
  %5585 = vmatprep.subr.mxu0 0.0
  %5586 = vmatpush1.xpose.msra.mxu0 0.0
  %5587 = vmatprep.subr.mxu0 0.0
  %5588 = vmatpush1.xpose.msra.mxu0 0.0
  %5589 = vmatprep.subr.mxu0 0.0
  %5590 = vmatpush1.xpose.msra.mxu0 0.0
  %5591 = vmatprep.subr.mxu0 0.0
  %5592 = vmatpush1.xpose.msra.mxu0 0.0
  %5593 = vmatprep.subr.mxu0 0.0
  %5594 = vmatpush1.xpose.msra.mxu0 0.0
  %5595 = vmatprep.subr.mxu0 0.0
  %5596 = vmatpush1.xpose.msra.mxu0 0.0
  %5597 = vmatprep.subr.mxu0 0.0
  %5598 = vmatpush1.xpose.msra.mxu0 0.0
  %5599 = vmatprep.subr.mxu0 0.0
  %5600 = vmatpush1.xpose.msra.mxu0 0.0
  %5601 = vmatprep.subr.mxu0 0.0
  %5602 = vmatpush1.xpose.msra.mxu0 0.0
  %5603 = vmatprep.subr.mxu0 0.0
  %5604 = vmatpush1.xpose.msra.mxu0 0.0
  %5605 = vmatprep.subr.mxu0 0.0
  %5606 = vmatpush1.xpose.msra.mxu0 0.0
  %5607 = vmatprep.subr.mxu0 0.0
  %5608 = vmatpush1.xpose.msra.mxu0 0.0
  %5609 = vmatprep.subr.mxu0 0.0
  %5610 = vmatpush1.xpose.msra.mxu0 0.0
  %5611 = vmatprep.subr.mxu0 0.0
  %5612 = vmatpush1.xpose.msra.mxu0 0.0
  %5613 = vmatprep.subr.mxu0 0.0
  %5614 = vmatpush1.xpose.msra.mxu0 0.0
  %5615 = vmatprep.subr.mxu0 0.0
  %5616 = vmatpush1.xpose.msra.mxu0 0.0
  %5617 = vmatprep.subr.mxu0 0.0
  %5618 = vmatpush1.xpose.msra.mxu0 0.0
  %5619 = vmatprep.subr.mxu0 0.0
  %5620 = vmatpush1.xpose.msra.mxu0 0.0
  %5621 = vmatprep.subr.mxu0 0.0
  %5622 = vmatpush1.xpose.msra.mxu0 0.0
  %5623 = vmatprep.subr.mxu0 0.0
  %5624 = vmatpush1.xpose.msra.mxu0 0.0
  %5625 = vmatprep.mubr.f32.mxu0 0.0
  %5626 = vmatmul.mubr.f32.gmra.mrb[0].mxu0 %v5553
  %v5627 = vpop.f32.mrb[0].mxu0
  %v5628 = vadd.f32 0.0, %v5627
  %v5629 = vpop.f32.mrb[0].mxu0
  %5630 = vmatprep.mubr.f32.mxu0 0.0
  %5631 = vmatmul.mubr.f32.gmra.mrb[0].mxu0 %v5555
  %v5632 = vpop.f32.mrb[0].mxu0
  %v5633 = vadd.f32 0.0, %v5632
  %v5634 = vpop.f32.mrb[0].mxu0
  %5635 = vdwg.mxu0
  %5636 = vrot.lane.b32.xlu0 %v5107, 96
  %v5637 = vpop.permute.xlu0 %5636
  %5638 = vrot.lane.b32.xlu0 %v5109, 96
  %v5639 = vpop.permute.xlu0 %5638
  %v5640 = vsel %vm326, %v5107, 0
  %v5642 = vsel %vm326, %v5109, 0
  %v5644 = vsel %vm326, %v5637, 0
  %v5646 = vsel %vm326, %v5639, 0
  %5648 = vmatprep.subr.mxu0 0.0
  %5649 = vmatpush1.xpose.msra.mxu0 %v5644
  %5650 = vmatprep.subr.mxu0 0.0
  %5651 = vmatpush1.xpose.msra.mxu0 %v5646
  %5652 = vmatprep.subr.mxu0 0.0
  %5653 = vmatpush1.xpose.msra.mxu0 0.0
  %5654 = vmatprep.subr.mxu0 0.0
  %5655 = vmatpush1.xpose.msra.mxu0 0.0
  %5656 = vmatprep.subr.mxu0 0.0
  %5657 = vmatpush1.xpose.msra.mxu0 0.0
  %5658 = vmatprep.subr.mxu0 0.0
  %5659 = vmatpush1.xpose.msra.mxu0 0.0
  %5660 = vmatprep.subr.mxu0 0.0
  %5661 = vmatpush1.xpose.msra.mxu0 0.0
  %5662 = vmatprep.subr.mxu0 0.0
  %5663 = vmatpush1.xpose.msra.mxu0 0.0
  %5664 = vmatprep.subr.mxu0 0.0
  %5665 = vmatpush1.xpose.msra.mxu0 0.0
  %5666 = vmatprep.subr.mxu0 0.0
  %5667 = vmatpush1.xpose.msra.mxu0 0.0
  %5668 = vmatprep.subr.mxu0 0.0
  %5669 = vmatpush1.xpose.msra.mxu0 0.0
  %5670 = vmatprep.subr.mxu0 0.0
  %5671 = vmatpush1.xpose.msra.mxu0 0.0
  %5672 = vmatprep.subr.mxu0 0.0
  %5673 = vmatpush1.xpose.msra.mxu0 0.0
  %5674 = vmatprep.subr.mxu0 0.0
  %5675 = vmatpush1.xpose.msra.mxu0 0.0
  %5676 = vmatprep.subr.mxu0 0.0
  %5677 = vmatpush1.xpose.msra.mxu0 0.0
  %5678 = vmatprep.subr.mxu0 0.0
  %5679 = vmatpush1.xpose.msra.mxu0 0.0
  %5680 = vmatprep.subr.mxu0 0.0
  %5681 = vmatpush1.xpose.msra.mxu0 0.0
  %5682 = vmatprep.subr.mxu0 0.0
  %5683 = vmatpush1.xpose.msra.mxu0 0.0
  %5684 = vmatprep.subr.mxu0 0.0
  %5685 = vmatpush1.xpose.msra.mxu0 0.0
  %5686 = vmatprep.subr.mxu0 0.0
  %5687 = vmatpush1.xpose.msra.mxu0 0.0
  %5688 = vmatprep.subr.mxu0 0.0
  %5689 = vmatpush1.xpose.msra.mxu0 0.0
  %5690 = vmatprep.subr.mxu0 0.0
  %5691 = vmatpush1.xpose.msra.mxu0 0.0
  %5692 = vmatprep.subr.mxu0 0.0
  %5693 = vmatpush1.xpose.msra.mxu0 0.0
  %5694 = vmatprep.subr.mxu0 0.0
  %5695 = vmatpush1.xpose.msra.mxu0 0.0
  %5696 = vmatprep.subr.mxu0 0.0
  %5697 = vmatpush1.xpose.msra.mxu0 0.0
  %5698 = vmatprep.subr.mxu0 0.0
  %5699 = vmatpush1.xpose.msra.mxu0 0.0
  %5700 = vmatprep.subr.mxu0 0.0
  %5701 = vmatpush1.xpose.msra.mxu0 0.0
  %5702 = vmatprep.subr.mxu0 0.0
  %5703 = vmatpush1.xpose.msra.mxu0 0.0
  %5704 = vmatprep.subr.mxu0 0.0
  %5705 = vmatpush1.xpose.msra.mxu0 0.0
  %5706 = vmatprep.subr.mxu0 0.0
  %5707 = vmatpush1.xpose.msra.mxu0 0.0
  %5708 = vmatprep.subr.mxu0 0.0
  %5709 = vmatpush1.xpose.msra.mxu0 0.0
  %5710 = vmatprep.subr.mxu0 0.0
  %5711 = vmatpush1.xpose.msra.mxu0 0.0
  %5712 = vmatprep.mubr.f32.mxu0 0.0
  %5713 = vmatmul.mubr.f32.gmra.mrb[0].mxu0 %v5640
  %v5714 = vpop.f32.mrb[0].mxu0
  %v5715 = vadd.f32 0.0, %v5714
  %v5716 = vpop.f32.mrb[0].mxu0
  %5717 = vmatprep.mubr.f32.mxu0 0.0
  %5718 = vmatmul.mubr.f32.gmra.mrb[0].mxu0 %v5642
  %v5719 = vpop.f32.mrb[0].mxu0
  %v5720 = vadd.f32 0.0, %v5719
  %v5721 = vpop.f32.mrb[0].mxu0
  %5722 = vdwg.mxu0
  %5723 = vrot.lane.b32.xlu0 %v5111, 96
  %v5724 = vpop.permute.xlu0 %5723
  %5725 = vrot.lane.b32.xlu0 %v5113, 96
  %v5726 = vpop.permute.xlu0 %5725
  %v5727 = vsel %vm326, %v5111, 0
  %v5729 = vsel %vm326, %v5113, 0
  %v5731 = vsel %vm326, %v5724, 0
  %v5733 = vsel %vm326, %v5726, 0
  %5735 = vmatprep.subr.mxu0 0.0
  %5736 = vmatpush1.xpose.msra.mxu0 %v5731
  %5737 = vmatprep.subr.mxu0 0.0
  %5738 = vmatpush1.xpose.msra.mxu0 %v5733
  %5739 = vmatprep.subr.mxu0 0.0
  %5740 = vmatpush1.xpose.msra.mxu0 0.0
  %5741 = vmatprep.subr.mxu0 0.0
  %5742 = vmatpush1.xpose.msra.mxu0 0.0
  %5743 = vmatprep.subr.mxu0 0.0
  %5744 = vmatpush1.xpose.msra.mxu0 0.0
  %5745 = vmatprep.subr.mxu0 0.0
  %5746 = vmatpush1.xpose.msra.mxu0 0.0
  %5747 = vmatprep.subr.mxu0 0.0
  %5748 = vmatpush1.xpose.msra.mxu0 0.0
  %5749 = vmatprep.subr.mxu0 0.0
  %5750 = vmatpush1.xpose.msra.mxu0 0.0
  %5751 = vmatprep.subr.mxu0 0.0
  %5752 = vmatpush1.xpose.msra.mxu0 0.0
  %5753 = vmatprep.subr.mxu0 0.0
  %5754 = vmatpush1.xpose.msra.mxu0 0.0
  %5755 = vmatprep.subr.mxu0 0.0
  %5756 = vmatpush1.xpose.msra.mxu0 0.0
  %5757 = vmatprep.subr.mxu0 0.0
  %5758 = vmatpush1.xpose.msra.mxu0 0.0
  %5759 = vmatprep.subr.mxu0 0.0
  %5760 = vmatpush1.xpose.msra.mxu0 0.0
  %5761 = vmatprep.subr.mxu0 0.0
  %5762 = vmatpush1.xpose.msra.mxu0 0.0
  %5763 = vmatprep.subr.mxu0 0.0
  %5764 = vmatpush1.xpose.msra.mxu0 0.0
  %5765 = vmatprep.subr.mxu0 0.0
  %5766 = vmatpush1.xpose.msra.mxu0 0.0
  %5767 = vmatprep.subr.mxu0 0.0
  %5768 = vmatpush1.xpose.msra.mxu0 0.0
  %5769 = vmatprep.subr.mxu0 0.0
  %5770 = vmatpush1.xpose.msra.mxu0 0.0
  %5771 = vmatprep.subr.mxu0 0.0
  %5772 = vmatpush1.xpose.msra.mxu0 0.0
  %5773 = vmatprep.subr.mxu0 0.0
  %5774 = vmatpush1.xpose.msra.mxu0 0.0
  %5775 = vmatprep.subr.mxu0 0.0
  %5776 = vmatpush1.xpose.msra.mxu0 0.0
  %5777 = vmatprep.subr.mxu0 0.0
  %5778 = vmatpush1.xpose.msra.mxu0 0.0
  %5779 = vmatprep.subr.mxu0 0.0
  %5780 = vmatpush1.xpose.msra.mxu0 0.0
  %5781 = vmatprep.subr.mxu0 0.0
  %5782 = vmatpush1.xpose.msra.mxu0 0.0
  %5783 = vmatprep.subr.mxu0 0.0
  %5784 = vmatpush1.xpose.msra.mxu0 0.0
  %5785 = vmatprep.subr.mxu0 0.0
  %5786 = vmatpush1.xpose.msra.mxu0 0.0
  %5787 = vmatprep.subr.mxu0 0.0
  %5788 = vmatpush1.xpose.msra.mxu0 0.0
  %5789 = vmatprep.subr.mxu0 0.0
  %5790 = vmatpush1.xpose.msra.mxu0 0.0
  %5791 = vmatprep.subr.mxu0 0.0
  %5792 = vmatpush1.xpose.msra.mxu0 0.0
  %5793 = vmatprep.subr.mxu0 0.0
  %5794 = vmatpush1.xpose.msra.mxu0 0.0
  %5795 = vmatprep.subr.mxu0 0.0
  %5796 = vmatpush1.xpose.msra.mxu0 0.0
  %5797 = vmatprep.subr.mxu0 0.0
  %5798 = vmatpush1.xpose.msra.mxu0 0.0
  %5799 = vmatprep.mubr.f32.mxu0 0.0
  %5800 = vmatmul.mubr.f32.gmra.mrb[0].mxu0 %v5727
  %v5801 = vpop.f32.mrb[0].mxu0
  %v5802 = vadd.f32 0.0, %v5801
  %v5803 = vpop.f32.mrb[0].mxu0
  %5804 = vmatprep.mubr.f32.mxu0 0.0
  %5805 = vmatmul.mubr.f32.gmra.mrb[0].mxu0 %v5729
  %v5806 = vpop.f32.mrb[0].mxu0
  %v5807 = vadd.f32 0.0, %v5806
  %v5808 = vpop.f32.mrb[0].mxu0
  %5809 = vdwg.mxu0
  %v5810 = vmul.f32 %v5193, 0.5
  %v5811 = vmul.f32 %v5198, 0.5
  %v5812 = vmul.f32 %v5280, 0.5
  %v5813 = vmul.f32 %v5285, 0.5
  %v5814 = vmul.f32 %v5367, 0.5
  %v5815 = vmul.f32 %v5372, 0.5
  %v5816 = vmul.f32 %v5454, 0.5
  %v5817 = vmul.f32 %v5459, 0.5
  %v5818 = vmul.f32 %v5541, 0.5
  %v5819 = vmul.f32 %v5546, 0.5
  %v5820 = vmul.f32 %v5628, 0.5
  %v5821 = vmul.f32 %v5633, 0.5
  %v5822 = vmul.f32 %v5715, 0.5
  %v5823 = vmul.f32 %v5720, 0.5
  %v5824 = vmul.f32 %v5802, 0.5
  %v5825 = vmul.f32 %v5807, 0.5
  %v5826 = vadd.f32 %v5810, %v32
  %v5827 = vadd.f32 %v5811, %v32
  %v5828 = vadd.f32 %v5812, %v32
  %v5829 = vadd.f32 %v5813, %v32
  %v5830 = vadd.f32 %v5814, %v32
  %v5831 = vadd.f32 %v5815, %v32
  %v5832 = vadd.f32 %v5816, %v32
  %v5833 = vadd.f32 %v5817, %v32
  %v5834 = vadd.f32 %v5818, %v32
  %v5835 = vadd.f32 %v5819, %v32
  %v5836 = vadd.f32 %v5820, %v32
  %v5837 = vadd.f32 %v5821, %v32
  %v5838 = vadd.f32 %v5822, %v32
  %v5839 = vadd.f32 %v5823, %v32
  %v5840 = vadd.f32 %v5824, %v32
  %v5841 = vadd.f32 %v5825, %v32
  %v5842 = vsel %vm37, %v5826, -inf
  %5843 = vmax.xlane.f32.xlu0 %v5842
  %v5844 = vpop.xlane.xlu0 %5843
  %v5845 = vsel %vm37, %v5827, -inf
  %5846 = vmax.xlane.f32.xlu0 %v5845
  %v5847 = vpop.xlane.xlu0 %5846
  %v5848 = vsel %vm37, %v5828, -inf
  %5849 = vmax.xlane.f32.xlu0 %v5848
  %v5850 = vpop.xlane.xlu0 %5849
  %v5851 = vsel %vm37, %v5829, -inf
  %5852 = vmax.xlane.f32.xlu0 %v5851
  %v5853 = vpop.xlane.xlu0 %5852
  %v5854 = vsel %vm37, %v5830, -inf
  %5855 = vmax.xlane.f32.xlu0 %v5854
  %v5856 = vpop.xlane.xlu0 %5855
  %v5857 = vsel %vm37, %v5831, -inf
  %5858 = vmax.xlane.f32.xlu0 %v5857
  %v5859 = vpop.xlane.xlu0 %5858
  %v5860 = vsel %vm37, %v5832, -inf
  %5861 = vmax.xlane.f32.xlu0 %v5860
  %v5862 = vpop.xlane.xlu0 %5861
  %v5863 = vsel %vm37, %v5833, -inf
  %5864 = vmax.xlane.f32.xlu0 %v5863
  %v5865 = vpop.xlane.xlu0 %5864
  %v5866 = vsel %vm37, %v5834, -inf
  %5867 = vmax.xlane.f32.xlu0 %v5866
  %v5868 = vpop.xlane.xlu0 %5867
  %v5869 = vsel %vm37, %v5835, -inf
  %5870 = vmax.xlane.f32.xlu0 %v5869
  %v5871 = vpop.xlane.xlu0 %5870
  %v5872 = vsel %vm37, %v5836, -inf
  %5873 = vmax.xlane.f32.xlu0 %v5872
  %v5874 = vpop.xlane.xlu0 %5873
  %v5875 = vsel %vm37, %v5837, -inf
  %5876 = vmax.xlane.f32.xlu0 %v5875
  %v5877 = vpop.xlane.xlu0 %5876
  %v5878 = vsel %vm37, %v5838, -inf
  %5879 = vmax.xlane.f32.xlu0 %v5878
  %v5880 = vpop.xlane.xlu0 %5879
  %v5881 = vsel %vm37, %v5839, -inf
  %5882 = vmax.xlane.f32.xlu0 %v5881
  %v5883 = vpop.xlane.xlu0 %5882
  %v5884 = vsel %vm37, %v5840, -inf
  %5885 = vmax.xlane.f32.xlu0 %v5884
  %v5886 = vpop.xlane.xlu0 %5885
  %v5887 = vsel %vm37, %v5841, -inf
  %5888 = vmax.xlane.f32.xlu0 %v5887
  %v5889 = vpop.xlane.xlu0 %5888
  %v5890 = vsub.f32 %v5826, %v5844
  %v5891 = vsub.f32 %v5827, %v5847
  %v5892 = vsub.f32 %v5828, %v5850
  %v5893 = vsub.f32 %v5829, %v5853
  %v5894 = vsub.f32 %v5830, %v5856
  %v5895 = vsub.f32 %v5831, %v5859
  %v5896 = vsub.f32 %v5832, %v5862
  %v5897 = vsub.f32 %v5833, %v5865
  %v5898 = vsub.f32 %v5834, %v5868
  %v5899 = vsub.f32 %v5835, %v5871
  %v5900 = vsub.f32 %v5836, %v5874
  %v5901 = vsub.f32 %v5837, %v5877
  %v5902 = vsub.f32 %v5838, %v5880
  %v5903 = vsub.f32 %v5839, %v5883
  %v5904 = vsub.f32 %v5840, %v5886
  %v5905 = vsub.f32 %v5841, %v5889
  %v5906 = vmul.f32 %v5890, 1.442695
  %v5907 = vpow.pop %v5906
  %v5908 = vmul.f32 %v5891, 1.442695
  %v5909 = vpow.pop %v5908
  %v5910 = vmul.f32 %v5892, 1.442695
  %v5911 = vpow.pop %v5910
  %v5912 = vmul.f32 %v5893, 1.442695
  %v5913 = vpow.pop %v5912
  %v5914 = vmul.f32 %v5894, 1.442695
  %v5915 = vpow.pop %v5914
  %v5916 = vmul.f32 %v5895, 1.442695
  %v5917 = vpow.pop %v5916
  %v5918 = vmul.f32 %v5896, 1.442695
  %v5919 = vpow.pop %v5918
  %v5920 = vmul.f32 %v5897, 1.442695
  %v5921 = vpow.pop %v5920
  %v5922 = vmul.f32 %v5898, 1.442695
  %v5923 = vpow.pop %v5922
  %v5924 = vmul.f32 %v5899, 1.442695
  %v5925 = vpow.pop %v5924
  %v5926 = vmul.f32 %v5900, 1.442695
  %v5927 = vpow.pop %v5926
  %v5928 = vmul.f32 %v5901, 1.442695
  %v5929 = vpow.pop %v5928
  %v5930 = vmul.f32 %v5902, 1.442695
  %v5931 = vpow.pop %v5930
  %v5932 = vmul.f32 %v5903, 1.442695
  %v5933 = vpow.pop %v5932
  %v5934 = vmul.f32 %v5904, 1.442695
  %v5935 = vpow.pop %v5934
  %v5936 = vmul.f32 %v5905, 1.442695
  %v5937 = vpow.pop %v5936
  %v5938 = vsel %vm37, %v5907, 0.0
  %5939 = vadd.xlane.f32.xlu0 %v5938
  %v5940 = vpop.xlane.xlu0 %5939
  %v5941 = vsel %vm37, %v5909, 0.0
  %5942 = vadd.xlane.f32.xlu0 %v5941
  %v5943 = vpop.xlane.xlu0 %5942
  %v5944 = vsel %vm37, %v5911, 0.0
  %5945 = vadd.xlane.f32.xlu0 %v5944
  %v5946 = vpop.xlane.xlu0 %5945
  %v5947 = vsel %vm37, %v5913, 0.0
  %5948 = vadd.xlane.f32.xlu0 %v5947
  %v5949 = vpop.xlane.xlu0 %5948
  %v5950 = vsel %vm37, %v5915, 0.0
  %5951 = vadd.xlane.f32.xlu0 %v5950
  %v5952 = vpop.xlane.xlu0 %5951
  %v5953 = vsel %vm37, %v5917, 0.0
  %5954 = vadd.xlane.f32.xlu0 %v5953
  %v5955 = vpop.xlane.xlu0 %5954
  %v5956 = vsel %vm37, %v5919, 0.0
  %5957 = vadd.xlane.f32.xlu0 %v5956
  %v5958 = vpop.xlane.xlu0 %5957
  %v5959 = vsel %vm37, %v5921, 0.0
  %5960 = vadd.xlane.f32.xlu0 %v5959
  %v5961 = vpop.xlane.xlu0 %5960
  %v5962 = vsel %vm37, %v5923, 0.0
  %5963 = vadd.xlane.f32.xlu0 %v5962
  %v5964 = vpop.xlane.xlu0 %5963
  %v5965 = vsel %vm37, %v5925, 0.0
  %5966 = vadd.xlane.f32.xlu0 %v5965
  %v5967 = vpop.xlane.xlu0 %5966
  %v5968 = vsel %vm37, %v5927, 0.0
  %5969 = vadd.xlane.f32.xlu0 %v5968
  %v5970 = vpop.xlane.xlu0 %5969
  %v5971 = vsel %vm37, %v5929, 0.0
  %5972 = vadd.xlane.f32.xlu0 %v5971
  %v5973 = vpop.xlane.xlu0 %5972
  %v5974 = vsel %vm37, %v5931, 0.0
  %5975 = vadd.xlane.f32.xlu0 %v5974
  %v5976 = vpop.xlane.xlu0 %5975
  %v5977 = vsel %vm37, %v5933, 0.0
  %5978 = vadd.xlane.f32.xlu0 %v5977
  %v5979 = vpop.xlane.xlu0 %5978
  %v5980 = vsel %vm37, %v5935, 0.0
  %5981 = vadd.xlane.f32.xlu0 %v5980
  %v5982 = vpop.xlane.xlu0 %5981
  %v5983 = vsel %vm37, %v5937, 0.0
  %5984 = vadd.xlane.f32.xlu0 %v5983
  %v5985 = vpop.xlane.xlu0 %5984
  %v5986 = vrcp.pop %v5940
  %v5987 = vrcp.pop %v5943
  %v5988 = vrcp.pop %v5946
  %v5989 = vrcp.pop %v5949
  %v5990 = vrcp.pop %v5952
  %v5991 = vrcp.pop %v5955
  %v5992 = vrcp.pop %v5958
  %v5993 = vrcp.pop %v5961
  %v5994 = vrcp.pop %v5964
  %v5995 = vrcp.pop %v5967
  %v5996 = vrcp.pop %v5970
  %v5997 = vrcp.pop %v5973
  %v5998 = vrcp.pop %v5976
  %v5999 = vrcp.pop %v5979
  %v6000 = vrcp.pop %v5982
  %v6001 = vrcp.pop %v5985
  %v6002 = vmul.f32 %v5907, %v5986
  %v6003 = vmul.f32 %v5909, %v5987
  %v6004 = vmul.f32 %v5911, %v5988
  %v6005 = vmul.f32 %v5913, %v5989
  %v6006 = vmul.f32 %v5915, %v5990
  %v6007 = vmul.f32 %v5917, %v5991
  %v6008 = vmul.f32 %v5919, %v5992
  %v6009 = vmul.f32 %v5921, %v5993
  %v6010 = vmul.f32 %v5923, %v5994
  %v6011 = vmul.f32 %v5925, %v5995
  %v6012 = vmul.f32 %v5927, %v5996
  %v6013 = vmul.f32 %v5929, %v5997
  %v6014 = vmul.f32 %v5931, %v5998
  %v6015 = vmul.f32 %v5933, %v5999
  %v6016 = vmul.f32 %v5935, %v6000
  %v6017 = vmul.f32 %v5937, %v6001
  %6018 = vrot.lane.b32.xlu0 %v5076, 64
  %v6019 = vpop.permute.xlu0 %6018
  %6020 = vrot.lane.b32.xlu0 %v5081, 64
  %v6021 = vpop.permute.xlu0 %6020
  %v6025 = vsel %vm37, %v6002, 0
  %v6028 = vsel %vm37, %v6003, 0
  %6030 = vmatprep.subr.mxu0 0.0
  %6031 = vmatpush1.msra.mxu0 %v6019
  %6032 = vmatprep.subr.mxu0 0.0
  %6033 = vmatpush1.msra.mxu0 %v6021
  %6034 = vmatprep.subr.mxu0 0.0
  %6035 = vmatpush1.msra.mxu0 0.0
  %6036 = vmatprep.subr.mxu0 0.0
  %6037 = vmatpush1.msra.mxu0 0.0
  %6038 = vmatprep.subr.mxu0 0.0
  %6039 = vmatpush1.msra.mxu0 0.0
  %6040 = vmatprep.subr.mxu0 0.0
  %6041 = vmatpush1.msra.mxu0 0.0
  %6042 = vmatprep.subr.mxu0 0.0
  %6043 = vmatpush1.msra.mxu0 0.0
  %6044 = vmatprep.subr.mxu0 0.0
  %6045 = vmatpush1.msra.mxu0 0.0
  %6046 = vmatprep.subr.mxu0 0.0
  %6047 = vmatpush1.msra.mxu0 0.0
  %6048 = vmatprep.subr.mxu0 0.0
  %6049 = vmatpush1.msra.mxu0 0.0
  %6050 = vmatprep.subr.mxu0 0.0
  %6051 = vmatpush1.msra.mxu0 0.0
  %6052 = vmatprep.subr.mxu0 0.0
  %6053 = vmatpush1.msra.mxu0 0.0
  %6054 = vmatprep.subr.mxu0 0.0
  %6055 = vmatpush1.msra.mxu0 0.0
  %6056 = vmatprep.subr.mxu0 0.0
  %6057 = vmatpush1.msra.mxu0 0.0
  %6058 = vmatprep.subr.mxu0 0.0
  %6059 = vmatpush1.msra.mxu0 0.0
  %6060 = vmatprep.subr.mxu0 0.0
  %6061 = vmatpush1.msra.mxu0 0.0
  %6062 = vmatprep.subr.mxu0 0.0
  %6063 = vmatpush1.msra.mxu0 0.0
  %6064 = vmatprep.subr.mxu0 0.0
  %6065 = vmatpush1.msra.mxu0 0.0
  %6066 = vmatprep.subr.mxu0 0.0
  %6067 = vmatpush1.msra.mxu0 0.0
  %6068 = vmatprep.subr.mxu0 0.0
  %6069 = vmatpush1.msra.mxu0 0.0
  %6070 = vmatprep.subr.mxu0 0.0
  %6071 = vmatpush1.msra.mxu0 0.0
  %6072 = vmatprep.subr.mxu0 0.0
  %6073 = vmatpush1.msra.mxu0 0.0
  %6074 = vmatprep.subr.mxu0 0.0
  %6075 = vmatpush1.msra.mxu0 0.0
  %6076 = vmatprep.subr.mxu0 0.0
  %6077 = vmatpush1.msra.mxu0 0.0
  %6078 = vmatprep.subr.mxu0 0.0
  %6079 = vmatpush1.msra.mxu0 0.0
  %6080 = vmatprep.subr.mxu0 0.0
  %6081 = vmatpush1.msra.mxu0 0.0
  %6082 = vmatprep.subr.mxu0 0.0
  %6083 = vmatpush1.msra.mxu0 0.0
  %6084 = vmatprep.subr.mxu0 0.0
  %6085 = vmatpush1.msra.mxu0 0.0
  %6086 = vmatprep.subr.mxu0 0.0
  %6087 = vmatpush1.msra.mxu0 0.0
  %6088 = vmatprep.subr.mxu0 0.0
  %6089 = vmatpush1.msra.mxu0 0.0
  %6090 = vmatprep.subr.mxu0 0.0
  %6091 = vmatpush1.msra.mxu0 0.0
  %6092 = vmatprep.subr.mxu0 0.0
  %6093 = vmatpush1.msra.mxu0 0.0
  %6094 = vmatprep.mubr.f32.mxu0 0.0
  %6095 = vmatmul.mubr.f32.gmra.mrb[0].mxu0 %v6025
  %v6096 = vpop.f32.mrb[0].mxu0
  %v6097 = vadd.f32 0.0, %v6096
  %v6098 = vpop.f32.mrb[0].mxu0
  %6099 = vmatprep.mubr.f32.mxu0 0.0
  %6100 = vmatmul.mubr.f32.gmra.mrb[0].mxu0 %v6028
  %v6101 = vpop.f32.mrb[0].mxu0
  %v6102 = vadd.f32 0.0, %v6101
  %v6103 = vpop.f32.mrb[0].mxu0
  %6104 = vdwg.mxu0
  %6105 = vrot.lane.b32.xlu0 %v5087, 64
  %v6106 = vpop.permute.xlu0 %6105
  %6107 = vrot.lane.b32.xlu0 %v5089, 64
  %v6108 = vpop.permute.xlu0 %6107
  %v6112 = vsel %vm37, %v6004, 0
  %v6115 = vsel %vm37, %v6005, 0
  %6117 = vmatprep.subr.mxu0 0.0
  %6118 = vmatpush1.msra.mxu0 %v6106
  %6119 = vmatprep.subr.mxu0 0.0
  %6120 = vmatpush1.msra.mxu0 %v6108
  %6121 = vmatprep.subr.mxu0 0.0
  %6122 = vmatpush1.msra.mxu0 0.0
  %6123 = vmatprep.subr.mxu0 0.0
  %6124 = vmatpush1.msra.mxu0 0.0
  %6125 = vmatprep.subr.mxu0 0.0
  %6126 = vmatpush1.msra.mxu0 0.0
  %6127 = vmatprep.subr.mxu0 0.0
  %6128 = vmatpush1.msra.mxu0 0.0
  %6129 = vmatprep.subr.mxu0 0.0
  %6130 = vmatpush1.msra.mxu0 0.0
  %6131 = vmatprep.subr.mxu0 0.0
  %6132 = vmatpush1.msra.mxu0 0.0
  %6133 = vmatprep.subr.mxu0 0.0
  %6134 = vmatpush1.msra.mxu0 0.0
  %6135 = vmatprep.subr.mxu0 0.0
  %6136 = vmatpush1.msra.mxu0 0.0
  %6137 = vmatprep.subr.mxu0 0.0
  %6138 = vmatpush1.msra.mxu0 0.0
  %6139 = vmatprep.subr.mxu0 0.0
  %6140 = vmatpush1.msra.mxu0 0.0
  %6141 = vmatprep.subr.mxu0 0.0
  %6142 = vmatpush1.msra.mxu0 0.0
  %6143 = vmatprep.subr.mxu0 0.0
  %6144 = vmatpush1.msra.mxu0 0.0
  %6145 = vmatprep.subr.mxu0 0.0
  %6146 = vmatpush1.msra.mxu0 0.0
  %6147 = vmatprep.subr.mxu0 0.0
  %6148 = vmatpush1.msra.mxu0 0.0
  %6149 = vmatprep.subr.mxu0 0.0
  %6150 = vmatpush1.msra.mxu0 0.0
  %6151 = vmatprep.subr.mxu0 0.0
  %6152 = vmatpush1.msra.mxu0 0.0
  %6153 = vmatprep.subr.mxu0 0.0
  %6154 = vmatpush1.msra.mxu0 0.0
  %6155 = vmatprep.subr.mxu0 0.0
  %6156 = vmatpush1.msra.mxu0 0.0
  %6157 = vmatprep.subr.mxu0 0.0
  %6158 = vmatpush1.msra.mxu0 0.0
  %6159 = vmatprep.subr.mxu0 0.0
  %6160 = vmatpush1.msra.mxu0 0.0
  %6161 = vmatprep.subr.mxu0 0.0
  %6162 = vmatpush1.msra.mxu0 0.0
  %6163 = vmatprep.subr.mxu0 0.0
  %6164 = vmatpush1.msra.mxu0 0.0
  %6165 = vmatprep.subr.mxu0 0.0
  %6166 = vmatpush1.msra.mxu0 0.0
  %6167 = vmatprep.subr.mxu0 0.0
  %6168 = vmatpush1.msra.mxu0 0.0
  %6169 = vmatprep.subr.mxu0 0.0
  %6170 = vmatpush1.msra.mxu0 0.0
  %6171 = vmatprep.subr.mxu0 0.0
  %6172 = vmatpush1.msra.mxu0 0.0
  %6173 = vmatprep.subr.mxu0 0.0
  %6174 = vmatpush1.msra.mxu0 0.0
  %6175 = vmatprep.subr.mxu0 0.0
  %6176 = vmatpush1.msra.mxu0 0.0
  %6177 = vmatprep.subr.mxu0 0.0
  %6178 = vmatpush1.msra.mxu0 0.0
  %6179 = vmatprep.subr.mxu0 0.0
  %6180 = vmatpush1.msra.mxu0 0.0
  %6181 = vmatprep.mubr.f32.mxu0 0.0
  %6182 = vmatmul.mubr.f32.gmra.mrb[0].mxu0 %v6112
  %v6183 = vpop.f32.mrb[0].mxu0
  %v6184 = vadd.f32 0.0, %v6183
  %v6185 = vpop.f32.mrb[0].mxu0
  %6186 = vmatprep.mubr.f32.mxu0 0.0
  %6187 = vmatmul.mubr.f32.gmra.mrb[0].mxu0 %v6115
  %v6188 = vpop.f32.mrb[0].mxu0
  %v6189 = vadd.f32 0.0, %v6188
  %v6190 = vpop.f32.mrb[0].mxu0
  %6191 = vdwg.mxu0
  %6192 = vrot.lane.b32.xlu0 %v5091, 64
  %v6193 = vpop.permute.xlu0 %6192
  %6194 = vrot.lane.b32.xlu0 %v5093, 64
  %v6195 = vpop.permute.xlu0 %6194
  %v6199 = vsel %vm37, %v6006, 0
  %v6202 = vsel %vm37, %v6007, 0
  %6204 = vmatprep.subr.mxu0 0.0
  %6205 = vmatpush1.msra.mxu0 %v6193
  %6206 = vmatprep.subr.mxu0 0.0
  %6207 = vmatpush1.msra.mxu0 %v6195
  %6208 = vmatprep.subr.mxu0 0.0
  %6209 = vmatpush1.msra.mxu0 0.0
  %6210 = vmatprep.subr.mxu0 0.0
  %6211 = vmatpush1.msra.mxu0 0.0
  %6212 = vmatprep.subr.mxu0 0.0
  %6213 = vmatpush1.msra.mxu0 0.0
  %6214 = vmatprep.subr.mxu0 0.0
  %6215 = vmatpush1.msra.mxu0 0.0
  %6216 = vmatprep.subr.mxu0 0.0
  %6217 = vmatpush1.msra.mxu0 0.0
  %6218 = vmatprep.subr.mxu0 0.0
  %6219 = vmatpush1.msra.mxu0 0.0
  %6220 = vmatprep.subr.mxu0 0.0
  %6221 = vmatpush1.msra.mxu0 0.0
  %6222 = vmatprep.subr.mxu0 0.0
  %6223 = vmatpush1.msra.mxu0 0.0
  %6224 = vmatprep.subr.mxu0 0.0
  %6225 = vmatpush1.msra.mxu0 0.0
  %6226 = vmatprep.subr.mxu0 0.0
  %6227 = vmatpush1.msra.mxu0 0.0
  %6228 = vmatprep.subr.mxu0 0.0
  %6229 = vmatpush1.msra.mxu0 0.0
  %6230 = vmatprep.subr.mxu0 0.0
  %6231 = vmatpush1.msra.mxu0 0.0
  %6232 = vmatprep.subr.mxu0 0.0
  %6233 = vmatpush1.msra.mxu0 0.0
  %6234 = vmatprep.subr.mxu0 0.0
  %6235 = vmatpush1.msra.mxu0 0.0
  %6236 = vmatprep.subr.mxu0 0.0
  %6237 = vmatpush1.msra.mxu0 0.0
  %6238 = vmatprep.subr.mxu0 0.0
  %6239 = vmatpush1.msra.mxu0 0.0
  %6240 = vmatprep.subr.mxu0 0.0
  %6241 = vmatpush1.msra.mxu0 0.0
  %6242 = vmatprep.subr.mxu0 0.0
  %6243 = vmatpush1.msra.mxu0 0.0
  %6244 = vmatprep.subr.mxu0 0.0
  %6245 = vmatpush1.msra.mxu0 0.0
  %6246 = vmatprep.subr.mxu0 0.0
  %6247 = vmatpush1.msra.mxu0 0.0
  %6248 = vmatprep.subr.mxu0 0.0
  %6249 = vmatpush1.msra.mxu0 0.0
  %6250 = vmatprep.subr.mxu0 0.0
  %6251 = vmatpush1.msra.mxu0 0.0
  %6252 = vmatprep.subr.mxu0 0.0
  %6253 = vmatpush1.msra.mxu0 0.0
  %6254 = vmatprep.subr.mxu0 0.0
  %6255 = vmatpush1.msra.mxu0 0.0
  %6256 = vmatprep.subr.mxu0 0.0
  %6257 = vmatpush1.msra.mxu0 0.0
  %6258 = vmatprep.subr.mxu0 0.0
  %6259 = vmatpush1.msra.mxu0 0.0
  %6260 = vmatprep.subr.mxu0 0.0
  %6261 = vmatpush1.msra.mxu0 0.0
  %6262 = vmatprep.subr.mxu0 0.0
  %6263 = vmatpush1.msra.mxu0 0.0
  %6264 = vmatprep.subr.mxu0 0.0
  %6265 = vmatpush1.msra.mxu0 0.0
  %6266 = vmatprep.subr.mxu0 0.0
  %6267 = vmatpush1.msra.mxu0 0.0
  %6268 = vmatprep.mubr.f32.mxu0 0.0
  %6269 = vmatmul.mubr.f32.gmra.mrb[0].mxu0 %v6199
  %v6270 = vpop.f32.mrb[0].mxu0
  %v6271 = vadd.f32 0.0, %v6270
  %v6272 = vpop.f32.mrb[0].mxu0
  %6273 = vmatprep.mubr.f32.mxu0 0.0
  %6274 = vmatmul.mubr.f32.gmra.mrb[0].mxu0 %v6202
  %v6275 = vpop.f32.mrb[0].mxu0
  %v6276 = vadd.f32 0.0, %v6275
  %v6277 = vpop.f32.mrb[0].mxu0
  %6278 = vdwg.mxu0
  %6279 = vrot.lane.b32.xlu0 %v5095, 64
  %v6280 = vpop.permute.xlu0 %6279
  %6281 = vrot.lane.b32.xlu0 %v5097, 64
  %v6282 = vpop.permute.xlu0 %6281
  %v6286 = vsel %vm37, %v6008, 0
  %v6289 = vsel %vm37, %v6009, 0
  %6291 = vmatprep.subr.mxu0 0.0
  %6292 = vmatpush1.msra.mxu0 %v6280
  %6293 = vmatprep.subr.mxu0 0.0
  %6294 = vmatpush1.msra.mxu0 %v6282
  %6295 = vmatprep.subr.mxu0 0.0
  %6296 = vmatpush1.msra.mxu0 0.0
  %6297 = vmatprep.subr.mxu0 0.0
  %6298 = vmatpush1.msra.mxu0 0.0
  %6299 = vmatprep.subr.mxu0 0.0
  %6300 = vmatpush1.msra.mxu0 0.0
  %6301 = vmatprep.subr.mxu0 0.0
  %6302 = vmatpush1.msra.mxu0 0.0
  %6303 = vmatprep.subr.mxu0 0.0
  %6304 = vmatpush1.msra.mxu0 0.0
  %6305 = vmatprep.subr.mxu0 0.0
  %6306 = vmatpush1.msra.mxu0 0.0
  %6307 = vmatprep.subr.mxu0 0.0
  %6308 = vmatpush1.msra.mxu0 0.0
  %6309 = vmatprep.subr.mxu0 0.0
  %6310 = vmatpush1.msra.mxu0 0.0
  %6311 = vmatprep.subr.mxu0 0.0
  %6312 = vmatpush1.msra.mxu0 0.0
  %6313 = vmatprep.subr.mxu0 0.0
  %6314 = vmatpush1.msra.mxu0 0.0
  %6315 = vmatprep.subr.mxu0 0.0
  %6316 = vmatpush1.msra.mxu0 0.0
  %6317 = vmatprep.subr.mxu0 0.0
  %6318 = vmatpush1.msra.mxu0 0.0
  %6319 = vmatprep.subr.mxu0 0.0
  %6320 = vmatpush1.msra.mxu0 0.0
  %6321 = vmatprep.subr.mxu0 0.0
  %6322 = vmatpush1.msra.mxu0 0.0
  %6323 = vmatprep.subr.mxu0 0.0
  %6324 = vmatpush1.msra.mxu0 0.0
  %6325 = vmatprep.subr.mxu0 0.0
  %6326 = vmatpush1.msra.mxu0 0.0
  %6327 = vmatprep.subr.mxu0 0.0
  %6328 = vmatpush1.msra.mxu0 0.0
  %6329 = vmatprep.subr.mxu0 0.0
  %6330 = vmatpush1.msra.mxu0 0.0
  %6331 = vmatprep.subr.mxu0 0.0
  %6332 = vmatpush1.msra.mxu0 0.0
  %6333 = vmatprep.subr.mxu0 0.0
  %6334 = vmatpush1.msra.mxu0 0.0
  %6335 = vmatprep.subr.mxu0 0.0
  %6336 = vmatpush1.msra.mxu0 0.0
  %6337 = vmatprep.subr.mxu0 0.0
  %6338 = vmatpush1.msra.mxu0 0.0
  %6339 = vmatprep.subr.mxu0 0.0
  %6340 = vmatpush1.msra.mxu0 0.0
  %6341 = vmatprep.subr.mxu0 0.0
  %6342 = vmatpush1.msra.mxu0 0.0
  %6343 = vmatprep.subr.mxu0 0.0
  %6344 = vmatpush1.msra.mxu0 0.0
  %6345 = vmatprep.subr.mxu0 0.0
  %6346 = vmatpush1.msra.mxu0 0.0
  %6347 = vmatprep.subr.mxu0 0.0
  %6348 = vmatpush1.msra.mxu0 0.0
  %6349 = vmatprep.subr.mxu0 0.0
  %6350 = vmatpush1.msra.mxu0 0.0
  %6351 = vmatprep.subr.mxu0 0.0
  %6352 = vmatpush1.msra.mxu0 0.0
  %6353 = vmatprep.subr.mxu0 0.0
  %6354 = vmatpush1.msra.mxu0 0.0
  %6355 = vmatprep.mubr.f32.mxu0 0.0
  %6356 = vmatmul.mubr.f32.gmra.mrb[0].mxu0 %v6286
  %v6357 = vpop.f32.mrb[0].mxu0
  %v6358 = vadd.f32 0.0, %v6357
  %v6359 = vpop.f32.mrb[0].mxu0
  %6360 = vmatprep.mubr.f32.mxu0 0.0
  %6361 = vmatmul.mubr.f32.gmra.mrb[0].mxu0 %v6289
  %v6362 = vpop.f32.mrb[0].mxu0
  %v6363 = vadd.f32 0.0, %v6362
  %v6364 = vpop.f32.mrb[0].mxu0
  %6365 = vdwg.mxu0
  %6366 = vrot.lane.b32.xlu0 %v5099, 64
  %v6367 = vpop.permute.xlu0 %6366
  %6368 = vrot.lane.b32.xlu0 %v5101, 64
  %v6369 = vpop.permute.xlu0 %6368
  %v6373 = vsel %vm37, %v6010, 0
  %v6376 = vsel %vm37, %v6011, 0
  %6378 = vmatprep.subr.mxu0 0.0
  %6379 = vmatpush1.msra.mxu0 %v6367
  %6380 = vmatprep.subr.mxu0 0.0
  %6381 = vmatpush1.msra.mxu0 %v6369
  %6382 = vmatprep.subr.mxu0 0.0
  %6383 = vmatpush1.msra.mxu0 0.0
  %6384 = vmatprep.subr.mxu0 0.0
  %6385 = vmatpush1.msra.mxu0 0.0
  %6386 = vmatprep.subr.mxu0 0.0
  %6387 = vmatpush1.msra.mxu0 0.0
  %6388 = vmatprep.subr.mxu0 0.0
  %6389 = vmatpush1.msra.mxu0 0.0
  %6390 = vmatprep.subr.mxu0 0.0
  %6391 = vmatpush1.msra.mxu0 0.0
  %6392 = vmatprep.subr.mxu0 0.0
  %6393 = vmatpush1.msra.mxu0 0.0
  %6394 = vmatprep.subr.mxu0 0.0
  %6395 = vmatpush1.msra.mxu0 0.0
  %6396 = vmatprep.subr.mxu0 0.0
  %6397 = vmatpush1.msra.mxu0 0.0
  %6398 = vmatprep.subr.mxu0 0.0
  %6399 = vmatpush1.msra.mxu0 0.0
  %6400 = vmatprep.subr.mxu0 0.0
  %6401 = vmatpush1.msra.mxu0 0.0
  %6402 = vmatprep.subr.mxu0 0.0
  %6403 = vmatpush1.msra.mxu0 0.0
  %6404 = vmatprep.subr.mxu0 0.0
  %6405 = vmatpush1.msra.mxu0 0.0
  %6406 = vmatprep.subr.mxu0 0.0
  %6407 = vmatpush1.msra.mxu0 0.0
  %6408 = vmatprep.subr.mxu0 0.0
  %6409 = vmatpush1.msra.mxu0 0.0
  %6410 = vmatprep.subr.mxu0 0.0
  %6411 = vmatpush1.msra.mxu0 0.0
  %6412 = vmatprep.subr.mxu0 0.0
  %6413 = vmatpush1.msra.mxu0 0.0
  %6414 = vmatprep.subr.mxu0 0.0
  %6415 = vmatpush1.msra.mxu0 0.0
  %6416 = vmatprep.subr.mxu0 0.0
  %6417 = vmatpush1.msra.mxu0 0.0
  %6418 = vmatprep.subr.mxu0 0.0
  %6419 = vmatpush1.msra.mxu0 0.0
  %6420 = vmatprep.subr.mxu0 0.0
  %6421 = vmatpush1.msra.mxu0 0.0
  %6422 = vmatprep.subr.mxu0 0.0
  %6423 = vmatpush1.msra.mxu0 0.0
  %6424 = vmatprep.subr.mxu0 0.0
  %6425 = vmatpush1.msra.mxu0 0.0
  %6426 = vmatprep.subr.mxu0 0.0
  %6427 = vmatpush1.msra.mxu0 0.0
  %6428 = vmatprep.subr.mxu0 0.0
  %6429 = vmatpush1.msra.mxu0 0.0
  %6430 = vmatprep.subr.mxu0 0.0
  %6431 = vmatpush1.msra.mxu0 0.0
  %6432 = vmatprep.subr.mxu0 0.0
  %6433 = vmatpush1.msra.mxu0 0.0
  %6434 = vmatprep.subr.mxu0 0.0
  %6435 = vmatpush1.msra.mxu0 0.0
  %6436 = vmatprep.subr.mxu0 0.0
  %6437 = vmatpush1.msra.mxu0 0.0
  %6438 = vmatprep.subr.mxu0 0.0
  %6439 = vmatpush1.msra.mxu0 0.0
  %6440 = vmatprep.subr.mxu0 0.0
  %6441 = vmatpush1.msra.mxu0 0.0
  %6442 = vmatprep.mubr.f32.mxu0 0.0
  %6443 = vmatmul.mubr.f32.gmra.mrb[0].mxu0 %v6373
  %v6444 = vpop.f32.mrb[0].mxu0
  %v6445 = vadd.f32 0.0, %v6444
  %v6446 = vpop.f32.mrb[0].mxu0
  %6447 = vmatprep.mubr.f32.mxu0 0.0
  %6448 = vmatmul.mubr.f32.gmra.mrb[0].mxu0 %v6376
  %v6449 = vpop.f32.mrb[0].mxu0
  %v6450 = vadd.f32 0.0, %v6449
  %v6451 = vpop.f32.mrb[0].mxu0
  %6452 = vdwg.mxu0
  %6453 = vrot.lane.b32.xlu0 %v5103, 64
  %v6454 = vpop.permute.xlu0 %6453
  %6455 = vrot.lane.b32.xlu0 %v5105, 64
  %v6456 = vpop.permute.xlu0 %6455
  %v6460 = vsel %vm37, %v6012, 0
  %v6463 = vsel %vm37, %v6013, 0
  %6465 = vmatprep.subr.mxu0 0.0
  %6466 = vmatpush1.msra.mxu0 %v6454
  %6467 = vmatprep.subr.mxu0 0.0
  %6468 = vmatpush1.msra.mxu0 %v6456
  %6469 = vmatprep.subr.mxu0 0.0
  %6470 = vmatpush1.msra.mxu0 0.0
  %6471 = vmatprep.subr.mxu0 0.0
  %6472 = vmatpush1.msra.mxu0 0.0
  %6473 = vmatprep.subr.mxu0 0.0
  %6474 = vmatpush1.msra.mxu0 0.0
  %6475 = vmatprep.subr.mxu0 0.0
  %6476 = vmatpush1.msra.mxu0 0.0
  %6477 = vmatprep.subr.mxu0 0.0
  %6478 = vmatpush1.msra.mxu0 0.0
  %6479 = vmatprep.subr.mxu0 0.0
  %6480 = vmatpush1.msra.mxu0 0.0
  %6481 = vmatprep.subr.mxu0 0.0
  %6482 = vmatpush1.msra.mxu0 0.0
  %6483 = vmatprep.subr.mxu0 0.0
  %6484 = vmatpush1.msra.mxu0 0.0
  %6485 = vmatprep.subr.mxu0 0.0
  %6486 = vmatpush1.msra.mxu0 0.0
  %6487 = vmatprep.subr.mxu0 0.0
  %6488 = vmatpush1.msra.mxu0 0.0
  %6489 = vmatprep.subr.mxu0 0.0
  %6490 = vmatpush1.msra.mxu0 0.0
  %6491 = vmatprep.subr.mxu0 0.0
  %6492 = vmatpush1.msra.mxu0 0.0
  %6493 = vmatprep.subr.mxu0 0.0
  %6494 = vmatpush1.msra.mxu0 0.0
  %6495 = vmatprep.subr.mxu0 0.0
  %6496 = vmatpush1.msra.mxu0 0.0
  %6497 = vmatprep.subr.mxu0 0.0
  %6498 = vmatpush1.msra.mxu0 0.0
  %6499 = vmatprep.subr.mxu0 0.0
  %6500 = vmatpush1.msra.mxu0 0.0
  %6501 = vmatprep.subr.mxu0 0.0
  %6502 = vmatpush1.msra.mxu0 0.0
  %6503 = vmatprep.subr.mxu0 0.0
  %6504 = vmatpush1.msra.mxu0 0.0
  %6505 = vmatprep.subr.mxu0 0.0
  %6506 = vmatpush1.msra.mxu0 0.0
  %6507 = vmatprep.subr.mxu0 0.0
  %6508 = vmatpush1.msra.mxu0 0.0
  %6509 = vmatprep.subr.mxu0 0.0
  %6510 = vmatpush1.msra.mxu0 0.0
  %6511 = vmatprep.subr.mxu0 0.0
  %6512 = vmatpush1.msra.mxu0 0.0
  %6513 = vmatprep.subr.mxu0 0.0
  %6514 = vmatpush1.msra.mxu0 0.0
  %6515 = vmatprep.subr.mxu0 0.0
  %6516 = vmatpush1.msra.mxu0 0.0
  %6517 = vmatprep.subr.mxu0 0.0
  %6518 = vmatpush1.msra.mxu0 0.0
  %6519 = vmatprep.subr.mxu0 0.0
  %6520 = vmatpush1.msra.mxu0 0.0
  %6521 = vmatprep.subr.mxu0 0.0
  %6522 = vmatpush1.msra.mxu0 0.0
  %6523 = vmatprep.subr.mxu0 0.0
  %6524 = vmatpush1.msra.mxu0 0.0
  %6525 = vmatprep.subr.mxu0 0.0
  %6526 = vmatpush1.msra.mxu0 0.0
  %6527 = vmatprep.subr.mxu0 0.0
  %6528 = vmatpush1.msra.mxu0 0.0
  %6529 = vmatprep.mubr.f32.mxu0 0.0
  %6530 = vmatmul.mubr.f32.gmra.mrb[0].mxu0 %v6460
  %v6531 = vpop.f32.mrb[0].mxu0
  %v6532 = vadd.f32 0.0, %v6531
  %v6533 = vpop.f32.mrb[0].mxu0
  %6534 = vmatprep.mubr.f32.mxu0 0.0
  %6535 = vmatmul.mubr.f32.gmra.mrb[0].mxu0 %v6463
  %v6536 = vpop.f32.mrb[0].mxu0
  %v6537 = vadd.f32 0.0, %v6536
  %v6538 = vpop.f32.mrb[0].mxu0
  %6539 = vdwg.mxu0
  %6540 = vrot.lane.b32.xlu0 %v5107, 64
  %v6541 = vpop.permute.xlu0 %6540
  %6542 = vrot.lane.b32.xlu0 %v5109, 64
  %v6543 = vpop.permute.xlu0 %6542
  %v6547 = vsel %vm37, %v6014, 0
  %v6550 = vsel %vm37, %v6015, 0
  %6552 = vmatprep.subr.mxu0 0.0
  %6553 = vmatpush1.msra.mxu0 %v6541
  %6554 = vmatprep.subr.mxu0 0.0
  %6555 = vmatpush1.msra.mxu0 %v6543
  %6556 = vmatprep.subr.mxu0 0.0
  %6557 = vmatpush1.msra.mxu0 0.0
  %6558 = vmatprep.subr.mxu0 0.0
  %6559 = vmatpush1.msra.mxu0 0.0
  %6560 = vmatprep.subr.mxu0 0.0
  %6561 = vmatpush1.msra.mxu0 0.0
  %6562 = vmatprep.subr.mxu0 0.0
  %6563 = vmatpush1.msra.mxu0 0.0
  %6564 = vmatprep.subr.mxu0 0.0
  %6565 = vmatpush1.msra.mxu0 0.0
  %6566 = vmatprep.subr.mxu0 0.0
  %6567 = vmatpush1.msra.mxu0 0.0
  %6568 = vmatprep.subr.mxu0 0.0
  %6569 = vmatpush1.msra.mxu0 0.0
  %6570 = vmatprep.subr.mxu0 0.0
  %6571 = vmatpush1.msra.mxu0 0.0
  %6572 = vmatprep.subr.mxu0 0.0
  %6573 = vmatpush1.msra.mxu0 0.0
  %6574 = vmatprep.subr.mxu0 0.0
  %6575 = vmatpush1.msra.mxu0 0.0
  %6576 = vmatprep.subr.mxu0 0.0
  %6577 = vmatpush1.msra.mxu0 0.0
  %6578 = vmatprep.subr.mxu0 0.0
  %6579 = vmatpush1.msra.mxu0 0.0
  %6580 = vmatprep.subr.mxu0 0.0
  %6581 = vmatpush1.msra.mxu0 0.0
  %6582 = vmatprep.subr.mxu0 0.0
  %6583 = vmatpush1.msra.mxu0 0.0
  %6584 = vmatprep.subr.mxu0 0.0
  %6585 = vmatpush1.msra.mxu0 0.0
  %6586 = vmatprep.subr.mxu0 0.0
  %6587 = vmatpush1.msra.mxu0 0.0
  %6588 = vmatprep.subr.mxu0 0.0
  %6589 = vmatpush1.msra.mxu0 0.0
  %6590 = vmatprep.subr.mxu0 0.0
  %6591 = vmatpush1.msra.mxu0 0.0
  %6592 = vmatprep.subr.mxu0 0.0
  %6593 = vmatpush1.msra.mxu0 0.0
  %6594 = vmatprep.subr.mxu0 0.0
  %6595 = vmatpush1.msra.mxu0 0.0
  %6596 = vmatprep.subr.mxu0 0.0
  %6597 = vmatpush1.msra.mxu0 0.0
  %6598 = vmatprep.subr.mxu0 0.0
  %6599 = vmatpush1.msra.mxu0 0.0
  %6600 = vmatprep.subr.mxu0 0.0
  %6601 = vmatpush1.msra.mxu0 0.0
  %6602 = vmatprep.subr.mxu0 0.0
  %6603 = vmatpush1.msra.mxu0 0.0
  %6604 = vmatprep.subr.mxu0 0.0
  %6605 = vmatpush1.msra.mxu0 0.0
  %6606 = vmatprep.subr.mxu0 0.0
  %6607 = vmatpush1.msra.mxu0 0.0
  %6608 = vmatprep.subr.mxu0 0.0
  %6609 = vmatpush1.msra.mxu0 0.0
  %6610 = vmatprep.subr.mxu0 0.0
  %6611 = vmatpush1.msra.mxu0 0.0
  %6612 = vmatprep.subr.mxu0 0.0
  %6613 = vmatpush1.msra.mxu0 0.0
  %6614 = vmatprep.subr.mxu0 0.0
  %6615 = vmatpush1.msra.mxu0 0.0
  %6616 = vmatprep.mubr.f32.mxu0 0.0
  %6617 = vmatmul.mubr.f32.gmra.mrb[0].mxu0 %v6547
  %v6618 = vpop.f32.mrb[0].mxu0
  %v6619 = vadd.f32 0.0, %v6618
  %v6620 = vpop.f32.mrb[0].mxu0
  %6621 = vmatprep.mubr.f32.mxu0 0.0
  %6622 = vmatmul.mubr.f32.gmra.mrb[0].mxu0 %v6550
  %v6623 = vpop.f32.mrb[0].mxu0
  %v6624 = vadd.f32 0.0, %v6623
  %v6625 = vpop.f32.mrb[0].mxu0
  %6626 = vdwg.mxu0
  %6627 = vrot.lane.b32.xlu0 %v5111, 64
  %v6628 = vpop.permute.xlu0 %6627
  %6629 = vrot.lane.b32.xlu0 %v5113, 64
  %v6630 = vpop.permute.xlu0 %6629
  %v6634 = vsel %vm37, %v6016, 0
  %v6637 = vsel %vm37, %v6017, 0
  %6639 = vmatprep.subr.mxu0 0.0
  %6640 = vmatpush1.msra.mxu0 %v6628
  %6641 = vmatprep.subr.mxu0 0.0
  %6642 = vmatpush1.msra.mxu0 %v6630
  %6643 = vmatprep.subr.mxu0 0.0
  %6644 = vmatpush1.msra.mxu0 0.0
  %6645 = vmatprep.subr.mxu0 0.0
  %6646 = vmatpush1.msra.mxu0 0.0
  %6647 = vmatprep.subr.mxu0 0.0
  %6648 = vmatpush1.msra.mxu0 0.0
  %6649 = vmatprep.subr.mxu0 0.0
  %6650 = vmatpush1.msra.mxu0 0.0
  %6651 = vmatprep.subr.mxu0 0.0
  %6652 = vmatpush1.msra.mxu0 0.0
  %6653 = vmatprep.subr.mxu0 0.0
  %6654 = vmatpush1.msra.mxu0 0.0
  %6655 = vmatprep.subr.mxu0 0.0
  %6656 = vmatpush1.msra.mxu0 0.0
  %6657 = vmatprep.subr.mxu0 0.0
  %6658 = vmatpush1.msra.mxu0 0.0
  %6659 = vmatprep.subr.mxu0 0.0
  %6660 = vmatpush1.msra.mxu0 0.0
  %6661 = vmatprep.subr.mxu0 0.0
  %6662 = vmatpush1.msra.mxu0 0.0
  %6663 = vmatprep.subr.mxu0 0.0
  %6664 = vmatpush1.msra.mxu0 0.0
  %6665 = vmatprep.subr.mxu0 0.0
  %6666 = vmatpush1.msra.mxu0 0.0
  %6667 = vmatprep.subr.mxu0 0.0
  %6668 = vmatpush1.msra.mxu0 0.0
  %6669 = vmatprep.subr.mxu0 0.0
  %6670 = vmatpush1.msra.mxu0 0.0
  %6671 = vmatprep.subr.mxu0 0.0
  %6672 = vmatpush1.msra.mxu0 0.0
  %6673 = vmatprep.subr.mxu0 0.0
  %6674 = vmatpush1.msra.mxu0 0.0
  %6675 = vmatprep.subr.mxu0 0.0
  %6676 = vmatpush1.msra.mxu0 0.0
  %6677 = vmatprep.subr.mxu0 0.0
  %6678 = vmatpush1.msra.mxu0 0.0
  %6679 = vmatprep.subr.mxu0 0.0
  %6680 = vmatpush1.msra.mxu0 0.0
  %6681 = vmatprep.subr.mxu0 0.0
  %6682 = vmatpush1.msra.mxu0 0.0
  %6683 = vmatprep.subr.mxu0 0.0
  %6684 = vmatpush1.msra.mxu0 0.0
  %6685 = vmatprep.subr.mxu0 0.0
  %6686 = vmatpush1.msra.mxu0 0.0
  %6687 = vmatprep.subr.mxu0 0.0
  %6688 = vmatpush1.msra.mxu0 0.0
  %6689 = vmatprep.subr.mxu0 0.0
  %6690 = vmatpush1.msra.mxu0 0.0
  %6691 = vmatprep.subr.mxu0 0.0
  %6692 = vmatpush1.msra.mxu0 0.0
  %6693 = vmatprep.subr.mxu0 0.0
  %6694 = vmatpush1.msra.mxu0 0.0
  %6695 = vmatprep.subr.mxu0 0.0
  %6696 = vmatpush1.msra.mxu0 0.0
  %6697 = vmatprep.subr.mxu0 0.0
  %6698 = vmatpush1.msra.mxu0 0.0
  %6699 = vmatprep.subr.mxu0 0.0
  %6700 = vmatpush1.msra.mxu0 0.0
  %6701 = vmatprep.subr.mxu0 0.0
  %6702 = vmatpush1.msra.mxu0 0.0
  %6703 = vmatprep.mubr.f32.mxu0 0.0
  %6704 = vmatmul.mubr.f32.gmra.mrb[0].mxu0 %v6634
  %v6705 = vpop.f32.mrb[0].mxu0
  %v6706 = vadd.f32 0.0, %v6705
  %v6707 = vpop.f32.mrb[0].mxu0
  %6708 = vmatprep.mubr.f32.mxu0 0.0
  %6709 = vmatmul.mubr.f32.gmra.mrb[0].mxu0 %v6637
  %v6710 = vpop.f32.mrb[0].mxu0
  %v6711 = vadd.f32 0.0, %v6710
  %v6712 = vpop.f32.mrb[0].mxu0
  %6713 = vdwg.mxu0
  %6716 = vrot.lane.b32.xlu0 %v6184, 4
  %v6717 = vpop.permute.xlu0 %6716
  %6718 = vrot.lane.b32.xlu0 %v6189, 4
  %v6719 = vpop.permute.xlu0 %6718
  %6724 = vrot.lane.b32.xlu0 %v6271, 8
  %v6725 = vpop.permute.xlu0 %6724
  %6726 = vrot.lane.b32.xlu0 %v6276, 8
  %v6727 = vpop.permute.xlu0 %6726
  %6732 = vrot.lane.b32.xlu0 %v6358, 12
  %v6733 = vpop.permute.xlu0 %6732
  %6734 = vrot.lane.b32.xlu0 %v6363, 12
  %v6735 = vpop.permute.xlu0 %6734
  %6740 = vrot.lane.b32.xlu0 %v6445, 16
  %v6741 = vpop.permute.xlu0 %6740
  %6742 = vrot.lane.b32.xlu0 %v6450, 16
  %v6743 = vpop.permute.xlu0 %6742
  %6748 = vrot.lane.b32.xlu0 %v6532, 20
  %v6749 = vpop.permute.xlu0 %6748
  %6750 = vrot.lane.b32.xlu0 %v6537, 20
  %v6751 = vpop.permute.xlu0 %6750
  %6756 = vrot.lane.b32.xlu0 %v6619, 24
  %v6757 = vpop.permute.xlu0 %6756
  %6758 = vrot.lane.b32.xlu0 %v6624, 24
  %v6759 = vpop.permute.xlu0 %6758
  %6764 = vrot.lane.b32.xlu0 %v6706, 28
  %v6765 = vpop.permute.xlu0 %6764
  %6766 = vrot.lane.b32.xlu0 %v6711, 28
  %v6767 = vpop.permute.xlu0 %6766
  %v6770 = vsel %vm326, %v6097, %v6717
  %v6771 = vsel %vm326, %v6102, %v6719
  %v6772 = vsel %vm1981, %v6770, %v6725
  %v6773 = vsel %vm1981, %v6771, %v6727
  %v6774 = vsel %vm1984, %v6772, %v6733
  %v6775 = vsel %vm1984, %v6773, %v6735
  %v6776 = vsel %vm37, %v6774, %v6741
  %v6777 = vsel %vm37, %v6775, %v6743
  %v6778 = vsel %vm1989, %v6776, %v6749
  %v6779 = vsel %vm1989, %v6777, %v6751
  %v6780 = vsel %vm1992, %v6778, %v6757
  %v6781 = vsel %vm1992, %v6779, %v6759
  %v6782 = vsel %vm1995, %v6780, %v6765
  %v6783 = vsel %vm1995, %v6781, %v6767
  %6788 = vrot.lane.b32.xlu0 %v4910, 32
  %v6789 = vpop.permute.xlu0 %6788
  %6790 = vrot.lane.b32.xlu0 %v4911, 32
  %v6791 = vpop.permute.xlu0 %6790
  %6792 = vrot.lane.b32.xlu0 %v4912, 32
  %v6793 = vpop.permute.xlu0 %6792
  %6794 = vrot.lane.b32.xlu0 %v4913, 32
  %v6795 = vpop.permute.xlu0 %6794
  %v6801 = vsel %vm210, %v6782, 0
  %v6804 = vsel %vm210, %v6783, 0
  %6806 = vmatprep.subr.mxu0 0.0
  %6807 = vmatpush1.msra.mxu0 %v6789
  %6808 = vmatprep.subr.mxu0 0.0
  %6809 = vmatpush1.msra.mxu0 %v6791
  %6810 = vmatprep.subr.mxu0 0.0
  %6811 = vmatpush1.msra.mxu0 %v6793
  %6812 = vmatprep.subr.mxu0 0.0
  %6813 = vmatpush1.msra.mxu0 %v6795
  %6814 = vmatprep.subr.mxu0 0.0
  %6815 = vmatpush1.msra.mxu0 0.0
  %6816 = vmatprep.subr.mxu0 0.0
  %6817 = vmatpush1.msra.mxu0 0.0
  %6818 = vmatprep.subr.mxu0 0.0
  %6819 = vmatpush1.msra.mxu0 0.0
  %6820 = vmatprep.subr.mxu0 0.0
  %6821 = vmatpush1.msra.mxu0 0.0
  %6822 = vmatprep.subr.mxu0 0.0
  %6823 = vmatpush1.msra.mxu0 0.0
  %6824 = vmatprep.subr.mxu0 0.0
  %6825 = vmatpush1.msra.mxu0 0.0
  %6826 = vmatprep.subr.mxu0 0.0
  %6827 = vmatpush1.msra.mxu0 0.0
  %6828 = vmatprep.subr.mxu0 0.0
  %6829 = vmatpush1.msra.mxu0 0.0
  %6830 = vmatprep.subr.mxu0 0.0
  %6831 = vmatpush1.msra.mxu0 0.0
  %6832 = vmatprep.subr.mxu0 0.0
  %6833 = vmatpush1.msra.mxu0 0.0
  %6834 = vmatprep.subr.mxu0 0.0
  %6835 = vmatpush1.msra.mxu0 0.0
  %6836 = vmatprep.subr.mxu0 0.0
  %6837 = vmatpush1.msra.mxu0 0.0
  %6838 = vmatprep.subr.mxu0 0.0
  %6839 = vmatpush1.msra.mxu0 0.0
  %6840 = vmatprep.subr.mxu0 0.0
  %6841 = vmatpush1.msra.mxu0 0.0
  %6842 = vmatprep.subr.mxu0 0.0
  %6843 = vmatpush1.msra.mxu0 0.0
  %6844 = vmatprep.subr.mxu0 0.0
  %6845 = vmatpush1.msra.mxu0 0.0
  %6846 = vmatprep.subr.mxu0 0.0
  %6847 = vmatpush1.msra.mxu0 0.0
  %6848 = vmatprep.subr.mxu0 0.0
  %6849 = vmatpush1.msra.mxu0 0.0
  %6850 = vmatprep.subr.mxu0 0.0
  %6851 = vmatpush1.msra.mxu0 0.0
  %6852 = vmatprep.subr.mxu0 0.0
  %6853 = vmatpush1.msra.mxu0 0.0
  %6854 = vmatprep.subr.mxu0 0.0
  %6855 = vmatpush1.msra.mxu0 0.0
  %6856 = vmatprep.subr.mxu0 0.0
  %6857 = vmatpush1.msra.mxu0 0.0
  %6858 = vmatprep.subr.mxu0 0.0
  %6859 = vmatpush1.msra.mxu0 0.0
  %6860 = vmatprep.subr.mxu0 0.0
  %6861 = vmatpush1.msra.mxu0 0.0
  %6862 = vmatprep.subr.mxu0 0.0
  %6863 = vmatpush1.msra.mxu0 0.0
  %6864 = vmatprep.subr.mxu0 0.0
  %6865 = vmatpush1.msra.mxu0 0.0
  %6866 = vmatprep.subr.mxu0 0.0
  %6867 = vmatpush1.msra.mxu0 0.0
  %6868 = vmatprep.subr.mxu0 0.0
  %6869 = vmatpush1.msra.mxu0 0.0
  %6870 = vmatprep.mubr.f32.mxu0 0.0
  %6871 = vmatmul.mubr.f32.gmra.mrb[0].mxu0 %v6801
  %v6872 = vpop.f32.mrb[0].mxu0
  %v6873 = vadd.f32 0.0, %v6872
  %v6874 = vpop.f32.mrb[0].mxu0
  %6875 = vmatprep.mubr.f32.mxu0 0.0
  %6876 = vmatmul.mubr.f32.gmra.mrb[0].mxu0 %v6804
  %v6877 = vpop.f32.mrb[0].mxu0
  %v6878 = vadd.f32 0.0, %v6877
  %v6879 = vpop.f32.mrb[0].mxu0
  %6880 = vdwg.mxu0
  %v6881 = vadd.f32 %v4907, %v6873
  %v6882 = vadd.f32 %v4908, %v6878
  %v6883 = vmul.f32 %v6881, %v27
  %v6884 = vmul.f32 %v6882, %v28
  %v6885 = vsel %vm210, %v6883, 0.0
  %v6886 = vsel %vm210, %v6884, 0.0
  %v6887 = vadd.f32 %v6885, %v6886
  %v6888 = vrot.slane %v6887, 4
  %v6889 = vadd.f32 %v6887, %v6888
  %v6890 = vrot.slane %v6889, 2
  %v6891 = vadd.f32 %v6889, %v6890
  %v6892 = vrot.slane %v6891, 1
  %v6893 = vadd.f32 %v6891, %v6892
  %v6894 = vmul.f32 %v6893, 0.07692308
  %v6895 = vsub.f32 %v6883, %v6894
  %v6896 = vsub.f32 %v6884, %v6894
  %v6897 = vmul.f32 %v6895, %v27
  %v6898 = vmul.f32 %v6896, %v28
  %v6899 = vmul.f32 %v6897, %v6897
  %v6900 = vmul.f32 %v6898, %v6898
  %v6901 = vsel %vm210, %v6899, 0.0
  %v6902 = vsel %vm210, %v6900, 0.0
  %v6903 = vadd.f32 %v6901, %v6902
  %v6904 = vrot.slane %v6903, 4
  %v6905 = vadd.f32 %v6903, %v6904
  %v6906 = vrot.slane %v6905, 2
  %v6907 = vadd.f32 %v6905, %v6906
  %v6908 = vrot.slane %v6907, 1
  %v6909 = vadd.f32 %v6907, %v6908
  %v6910 = vmul.f32 %v6909, 0.07692308
  %v6911 = vadd.f32 %v6910, 1e-05
  %v6912 = vrsqrt.pop %v6911
  %v6913 = vmul.f32 %v6912, %v4933
  %v6914 = vmul.f32 %v6894, %v6913
  %v6915 = vsub.f32 %v4934, %v6914
  %v6916 = vmul.f32 %v6883, %v6913
  %v6917 = vmul.f32 %v6884, %v6913
  %v6918 = vadd.f32 %v6916, %v6915
  %v6919 = vadd.f32 %v6917, %v6915
  %v6920 = vmul.f32 %v6918, %v27
  %v6921 = vmul.f32 %v6919, %v28
  %v6923 = vlaneseq
  %v6924 = vshrl.u32 %v6923, 7
  %v6925 = vsub.s32 0, %v6924
  %v6926 = vrot.slane %v4932, %v6925
  %v6927 = vlaneseq
  %v6928 = vshrl.u32 %v6927, 7
  %v6929 = vsub.s32 1, %v6928
  %v6930 = vrot.slane %v4932, %v6929
  %v6931 = vlaneseq
  %v6932 = vshrl.u32 %v6931, 7
  %v6933 = vsub.s32 2, %v6932
  %v6934 = vrot.slane %v4932, %v6933
  %v6935 = vlaneseq
  %v6936 = vshrl.u32 %v6935, 7
  %v6937 = vsub.s32 3, %v6936
  %v6938 = vrot.slane %v4932, %v6937
  %v6944 = vsel %vm210, %v6920, 0
  %v6947 = vsel %vm210, %v6921, 0
  %6949 = vmatprep.subr.mxu0 %v4916
  %6950 = vmatpush1.msra.mxu0 %v4915
  %6951 = vmatprep.subr.mxu0 %v4920
  %6952 = vmatpush1.msra.mxu0 %v4919
  %6953 = vmatprep.subr.mxu0 %v4924
  %6954 = vmatpush1.msra.mxu0 %v4923
  %6955 = vmatprep.subr.mxu0 %v4928
  %6956 = vmatpush1.msra.mxu0 %v4927
  %6957 = vmatprep.subr.mxu0 0.0
  %6958 = vmatpush1.msra.mxu0 0.0
  %6959 = vmatprep.subr.mxu0 0.0
  %6960 = vmatpush1.msra.mxu0 0.0
  %6961 = vmatprep.subr.mxu0 0.0
  %6962 = vmatpush1.msra.mxu0 0.0
  %6963 = vmatprep.subr.mxu0 0.0
  %6964 = vmatpush1.msra.mxu0 0.0
  %6965 = vmatprep.subr.mxu0 0.0
  %6966 = vmatpush1.msra.mxu0 0.0
  %6967 = vmatprep.subr.mxu0 0.0
  %6968 = vmatpush1.msra.mxu0 0.0
  %6969 = vmatprep.subr.mxu0 0.0
  %6970 = vmatpush1.msra.mxu0 0.0
  %6971 = vmatprep.subr.mxu0 0.0
  %6972 = vmatpush1.msra.mxu0 0.0
  %6973 = vmatprep.subr.mxu0 0.0
  %6974 = vmatpush1.msra.mxu0 0.0
  %6975 = vmatprep.subr.mxu0 0.0
  %6976 = vmatpush1.msra.mxu0 0.0
  %6977 = vmatprep.subr.mxu0 0.0
  %6978 = vmatpush1.msra.mxu0 0.0
  %6979 = vmatprep.subr.mxu0 0.0
  %6980 = vmatpush1.msra.mxu0 0.0
  %6981 = vmatprep.subr.mxu0 0.0
  %6982 = vmatpush1.msra.mxu0 0.0
  %6983 = vmatprep.subr.mxu0 0.0
  %6984 = vmatpush1.msra.mxu0 0.0
  %6985 = vmatprep.subr.mxu0 0.0
  %6986 = vmatpush1.msra.mxu0 0.0
  %6987 = vmatprep.subr.mxu0 0.0
  %6988 = vmatpush1.msra.mxu0 0.0
  %6989 = vmatprep.subr.mxu0 0.0
  %6990 = vmatpush1.msra.mxu0 0.0
  %6991 = vmatprep.subr.mxu0 0.0
  %6992 = vmatpush1.msra.mxu0 0.0
  %6993 = vmatprep.subr.mxu0 0.0
  %6994 = vmatpush1.msra.mxu0 0.0
  %6995 = vmatprep.subr.mxu0 0.0
  %6996 = vmatpush1.msra.mxu0 0.0
  %6997 = vmatprep.subr.mxu0 0.0
  %6998 = vmatpush1.msra.mxu0 0.0
  %6999 = vmatprep.subr.mxu0 0.0
  %7000 = vmatpush1.msra.mxu0 0.0
  %7001 = vmatprep.subr.mxu0 0.0
  %7002 = vmatpush1.msra.mxu0 0.0
  %7003 = vmatprep.subr.mxu0 0.0
  %7004 = vmatpush1.msra.mxu0 0.0
  %7005 = vmatprep.subr.mxu0 0.0
  %7006 = vmatpush1.msra.mxu0 0.0
  %7007 = vmatprep.subr.mxu0 0.0
  %7008 = vmatpush1.msra.mxu0 0.0
  %7009 = vmatprep.subr.mxu0 0.0
  %7010 = vmatpush1.msra.mxu0 0.0
  %7011 = vmatprep.subr.mxu0 0.0
  %7012 = vmatpush1.msra.mxu0 0.0
  %7013 = vmatprep.mubr.f32.mxu0 0.0
  %7014 = vmatmul.mubr.f32.gmra.mrb[0].mxu0 %v6944
  %v7015 = vpop.f32.mrb[0].mxu0
  %v7016 = vadd.f32 %v6926, %v7015
  %v7017 = vpop.f32.mrb[0].mxu0
  %v7018 = vadd.f32 %v6930, %v7017
  %7019 = vmatprep.mubr.f32.mxu0 0.0
  %7020 = vmatmul.mubr.f32.gmra.mrb[0].mxu0 %v6947
  %v7021 = vpop.f32.mrb[0].mxu0
  %v7022 = vadd.f32 %v6926, %v7021
  %v7023 = vpop.f32.mrb[0].mxu0
  %v7024 = vadd.f32 %v6930, %v7023
  %7025 = vdwg.mxu0
  %7026 = vmatprep.subr.mxu0 %v4918
  %7027 = vmatpush1.msra.mxu0 %v4917
  %7028 = vmatprep.subr.mxu0 %v4922
  %7029 = vmatpush1.msra.mxu0 %v4921
  %7030 = vmatprep.subr.mxu0 %v4926
  %7031 = vmatpush1.msra.mxu0 %v4925
  %7032 = vmatprep.subr.mxu0 %v4930
  %7033 = vmatpush1.msra.mxu0 %v4929
  %7034 = vmatprep.subr.mxu0 0.0
  %7035 = vmatpush1.msra.mxu0 0.0
  %7036 = vmatprep.subr.mxu0 0.0
  %7037 = vmatpush1.msra.mxu0 0.0
  %7038 = vmatprep.subr.mxu0 0.0
  %7039 = vmatpush1.msra.mxu0 0.0
  %7040 = vmatprep.subr.mxu0 0.0
  %7041 = vmatpush1.msra.mxu0 0.0
  %7042 = vmatprep.subr.mxu0 0.0
  %7043 = vmatpush1.msra.mxu0 0.0
  %7044 = vmatprep.subr.mxu0 0.0
  %7045 = vmatpush1.msra.mxu0 0.0
  %7046 = vmatprep.subr.mxu0 0.0
  %7047 = vmatpush1.msra.mxu0 0.0
  %7048 = vmatprep.subr.mxu0 0.0
  %7049 = vmatpush1.msra.mxu0 0.0
  %7050 = vmatprep.subr.mxu0 0.0
  %7051 = vmatpush1.msra.mxu0 0.0
  %7052 = vmatprep.subr.mxu0 0.0
  %7053 = vmatpush1.msra.mxu0 0.0
  %7054 = vmatprep.subr.mxu0 0.0
  %7055 = vmatpush1.msra.mxu0 0.0
  %7056 = vmatprep.subr.mxu0 0.0
  %7057 = vmatpush1.msra.mxu0 0.0
  %7058 = vmatprep.subr.mxu0 0.0
  %7059 = vmatpush1.msra.mxu0 0.0
  %7060 = vmatprep.subr.mxu0 0.0
  %7061 = vmatpush1.msra.mxu0 0.0
  %7062 = vmatprep.subr.mxu0 0.0
  %7063 = vmatpush1.msra.mxu0 0.0
  %7064 = vmatprep.subr.mxu0 0.0
  %7065 = vmatpush1.msra.mxu0 0.0
  %7066 = vmatprep.subr.mxu0 0.0
  %7067 = vmatpush1.msra.mxu0 0.0
  %7068 = vmatprep.subr.mxu0 0.0
  %7069 = vmatpush1.msra.mxu0 0.0
  %7070 = vmatprep.subr.mxu0 0.0
  %7071 = vmatpush1.msra.mxu0 0.0
  %7072 = vmatprep.subr.mxu0 0.0
  %7073 = vmatpush1.msra.mxu0 0.0
  %7074 = vmatprep.subr.mxu0 0.0
  %7075 = vmatpush1.msra.mxu0 0.0
  %7076 = vmatprep.subr.mxu0 0.0
  %7077 = vmatpush1.msra.mxu0 0.0
  %7078 = vmatprep.subr.mxu0 0.0
  %7079 = vmatpush1.msra.mxu0 0.0
  %7080 = vmatprep.subr.mxu0 0.0
  %7081 = vmatpush1.msra.mxu0 0.0
  %7082 = vmatprep.subr.mxu0 0.0
  %7083 = vmatpush1.msra.mxu0 0.0
  %7084 = vmatprep.subr.mxu0 0.0
  %7085 = vmatpush1.msra.mxu0 0.0
  %7086 = vmatprep.subr.mxu0 0.0
  %7087 = vmatpush1.msra.mxu0 0.0
  %7088 = vmatprep.subr.mxu0 0.0
  %7089 = vmatpush1.msra.mxu0 0.0
  %7090 = vmatprep.mubr.f32.mxu0 0.0
  %7091 = vmatmul.mubr.f32.gmra.mrb[0].mxu0 %v6944
  %v7092 = vpop.f32.mrb[0].mxu0
  %v7093 = vadd.f32 %v6934, %v7092
  %v7094 = vpop.f32.mrb[0].mxu0
  %v7095 = vadd.f32 %v6938, %v7094
  %7096 = vmatprep.mubr.f32.mxu0 0.0
  %7097 = vmatmul.mubr.f32.gmra.mrb[0].mxu0 %v6947
  %v7098 = vpop.f32.mrb[0].mxu0
  %v7099 = vadd.f32 %v6934, %v7098
  %v7100 = vpop.f32.mrb[0].mxu0
  %v7101 = vadd.f32 %v6938, %v7100
  %7102 = vdwg.mxu0
  %v7103 = vmax.f32 %v7016, 0.0
  %v7104 = vmax.f32 %v7018, 0.0
  %v7105 = vmax.f32 %v7093, 0.0
  %v7106 = vmax.f32 %v7095, 0.0
  %v7107 = vmax.f32 %v7022, 0.0
  %v7108 = vmax.f32 %v7024, 0.0
  %v7109 = vmax.f32 %v7099, 0.0
  %v7110 = vmax.f32 %v7101, 0.0
  %7111 = vmatprep.subr.mxu0 0.0
  %7112 = vmatpush1.msra.mxu0 %v4939
  %7113 = vmatprep.subr.mxu0 0.0
  %7114 = vmatpush1.msra.mxu0 %v4940
  %7115 = vmatprep.subr.mxu0 0.0
  %7116 = vmatpush1.msra.mxu0 %v4941
  %7117 = vmatprep.subr.mxu0 0.0
  %7118 = vmatpush1.msra.mxu0 %v4942
  %7119 = vmatprep.subr.mxu0 0.0
  %7120 = vmatpush1.msra.mxu0 %v4943
  %7121 = vmatprep.subr.mxu0 0.0
  %7122 = vmatpush1.msra.mxu0 %v4944
  %7123 = vmatprep.subr.mxu0 0.0
  %7124 = vmatpush1.msra.mxu0 %v4945
  %7125 = vmatprep.subr.mxu0 0.0
  %7126 = vmatpush1.msra.mxu0 %v4946
  %7127 = vmatprep.subr.mxu0 0.0
  %7128 = vmatpush1.msra.mxu0 %v4947
  %7129 = vmatprep.subr.mxu0 0.0
  %7130 = vmatpush1.msra.mxu0 %v4948
  %7131 = vmatprep.subr.mxu0 0.0
  %7132 = vmatpush1.msra.mxu0 %v4949
  %7133 = vmatprep.subr.mxu0 0.0
  %7134 = vmatpush1.msra.mxu0 %v4950
  %7135 = vmatprep.subr.mxu0 0.0
  %7136 = vmatpush1.msra.mxu0 %v4951
  %7137 = vmatprep.subr.mxu0 0.0
  %7138 = vmatpush1.msra.mxu0 %v4952
  %7139 = vmatprep.subr.mxu0 0.0
  %7140 = vmatpush1.msra.mxu0 %v4953
  %7141 = vmatprep.subr.mxu0 0.0
  %7142 = vmatpush1.msra.mxu0 %v4954
  %7143 = vmatprep.subr.mxu0 0.0
  %7144 = vmatpush1.msra.mxu0 %v4955
  %7145 = vmatprep.subr.mxu0 0.0
  %7146 = vmatpush1.msra.mxu0 %v4956
  %7147 = vmatprep.subr.mxu0 0.0
  %7148 = vmatpush1.msra.mxu0 %v4957
  %7149 = vmatprep.subr.mxu0 0.0
  %7150 = vmatpush1.msra.mxu0 %v4958
  %7151 = vmatprep.subr.mxu0 0.0
  %7152 = vmatpush1.msra.mxu0 %v4959
  %7153 = vmatprep.subr.mxu0 0.0
  %7154 = vmatpush1.msra.mxu0 %v4960
  %7155 = vmatprep.subr.mxu0 0.0
  %7156 = vmatpush1.msra.mxu0 %v4961
  %7157 = vmatprep.subr.mxu0 0.0
  %7158 = vmatpush1.msra.mxu0 %v4962
  %7159 = vmatprep.subr.mxu0 0.0
  %7160 = vmatpush1.msra.mxu0 %v4963
  %7161 = vmatprep.subr.mxu0 0.0
  %7162 = vmatpush1.msra.mxu0 %v4964
  %7163 = vmatprep.subr.mxu0 0.0
  %7164 = vmatpush1.msra.mxu0 %v4965
  %7165 = vmatprep.subr.mxu0 0.0
  %7166 = vmatpush1.msra.mxu0 %v4966
  %7167 = vmatprep.subr.mxu0 0.0
  %7168 = vmatpush1.msra.mxu0 %v4967
  %7169 = vmatprep.subr.mxu0 0.0
  %7170 = vmatpush1.msra.mxu0 %v4968
  %7171 = vmatprep.subr.mxu0 0.0
  %7172 = vmatpush1.msra.mxu0 %v4969
  %7173 = vmatprep.subr.mxu0 0.0
  %7174 = vmatpush1.msra.mxu0 %v4970
  %7175 = vmatprep.mubr.f32.mxu0 %v7104
  %7176 = vmatmul.mubr.f32.gmra.mrb[0].mxu0 %v7103
  %v7177 = vpop.f32.mrb[0].mxu0
  %v7178 = vadd.f32 %v4937, %v7177
  %v7179 = vpop.f32.mrb[0].mxu0
  %7180 = vmatprep.mubr.f32.mxu0 %v7108
  %7181 = vmatmul.mubr.f32.gmra.mrb[0].mxu0 %v7107
  %v7182 = vpop.f32.mrb[0].mxu0
  %v7183 = vadd.f32 %v4937, %v7182
  %v7184 = vpop.f32.mrb[0].mxu0
  %7185 = vdwg.mxu0
  %7186 = vmatprep.subr.mxu0 0.0
  %7187 = vmatpush1.msra.mxu0 %v4971
  %7188 = vmatprep.subr.mxu0 0.0
  %7189 = vmatpush1.msra.mxu0 %v4972
  %7190 = vmatprep.subr.mxu0 0.0
  %7191 = vmatpush1.msra.mxu0 %v4973
  %7192 = vmatprep.subr.mxu0 0.0
  %7193 = vmatpush1.msra.mxu0 %v4974
  %7194 = vmatprep.subr.mxu0 0.0
  %7195 = vmatpush1.msra.mxu0 %v4975
  %7196 = vmatprep.subr.mxu0 0.0
  %7197 = vmatpush1.msra.mxu0 %v4976
  %7198 = vmatprep.subr.mxu0 0.0
  %7199 = vmatpush1.msra.mxu0 %v4977
  %7200 = vmatprep.subr.mxu0 0.0
  %7201 = vmatpush1.msra.mxu0 %v4978
  %7202 = vmatprep.subr.mxu0 0.0
  %7203 = vmatpush1.msra.mxu0 %v4979
  %7204 = vmatprep.subr.mxu0 0.0
  %7205 = vmatpush1.msra.mxu0 %v4980
  %7206 = vmatprep.subr.mxu0 0.0
  %7207 = vmatpush1.msra.mxu0 %v4981
  %7208 = vmatprep.subr.mxu0 0.0
  %7209 = vmatpush1.msra.mxu0 %v4982
  %7210 = vmatprep.subr.mxu0 0.0
  %7211 = vmatpush1.msra.mxu0 %v4983
  %7212 = vmatprep.subr.mxu0 0.0
  %7213 = vmatpush1.msra.mxu0 %v4984
  %7214 = vmatprep.subr.mxu0 0.0
  %7215 = vmatpush1.msra.mxu0 %v4985
  %7216 = vmatprep.subr.mxu0 0.0
  %7217 = vmatpush1.msra.mxu0 %v4986
  %7218 = vmatprep.subr.mxu0 0.0
  %7219 = vmatpush1.msra.mxu0 %v4987
  %7220 = vmatprep.subr.mxu0 0.0
  %7221 = vmatpush1.msra.mxu0 %v4988
  %7222 = vmatprep.subr.mxu0 0.0
  %7223 = vmatpush1.msra.mxu0 %v4989
  %7224 = vmatprep.subr.mxu0 0.0
  %7225 = vmatpush1.msra.mxu0 %v4990
  %7226 = vmatprep.subr.mxu0 0.0
  %7227 = vmatpush1.msra.mxu0 %v4991
  %7228 = vmatprep.subr.mxu0 0.0
  %7229 = vmatpush1.msra.mxu0 %v4992
  %7230 = vmatprep.subr.mxu0 0.0
  %7231 = vmatpush1.msra.mxu0 %v4993
  %7232 = vmatprep.subr.mxu0 0.0
  %7233 = vmatpush1.msra.mxu0 %v4994
  %7234 = vmatprep.subr.mxu0 0.0
  %7235 = vmatpush1.msra.mxu0 %v4995
  %7236 = vmatprep.subr.mxu0 0.0
  %7237 = vmatpush1.msra.mxu0 %v4996
  %7238 = vmatprep.subr.mxu0 0.0
  %7239 = vmatpush1.msra.mxu0 %v4997
  %7240 = vmatprep.subr.mxu0 0.0
  %7241 = vmatpush1.msra.mxu0 %v4998
  %7242 = vmatprep.subr.mxu0 0.0
  %7243 = vmatpush1.msra.mxu0 %v4999
  %7244 = vmatprep.subr.mxu0 0.0
  %7245 = vmatpush1.msra.mxu0 %v5000
  %7246 = vmatprep.subr.mxu0 0.0
  %7247 = vmatpush1.msra.mxu0 %v5001
  %7248 = vmatprep.subr.mxu0 0.0
  %7249 = vmatpush1.msra.mxu0 %v5002
  %7250 = vmatprep.mubr.f32.mxu0 %v7106
  %7251 = vmatmul.mubr.f32.gmra.mrb[0].mxu0 %v7105
  %v7252 = vpop.f32.mrb[0].mxu0
  %v7253 = vadd.f32 %v7178, %v7252
  %v7254 = vpop.f32.mrb[0].mxu0
  %7255 = vmatprep.mubr.f32.mxu0 %v7110
  %7256 = vmatmul.mubr.f32.gmra.mrb[0].mxu0 %v7109
  %v7257 = vpop.f32.mrb[0].mxu0
  %v7258 = vadd.f32 %v7183, %v7257
  %v7259 = vpop.f32.mrb[0].mxu0
  %7260 = vdwg.mxu0
  %v7261 = vadd.f32 %v6920, %v7253
  %v7262 = vadd.f32 %v6921, %v7258
  %v7263 = vmul.f32 %v7261, %v27
  %v7264 = vmul.f32 %v7262, %v28
  %v7265 = vsel %vm210, %v7263, 0.0
  %v7266 = vsel %vm210, %v7264, 0.0
  %v7267 = vadd.f32 %v7265, %v7266
  %v7268 = vrot.slane %v7267, 4
  %v7269 = vadd.f32 %v7267, %v7268
  %v7270 = vrot.slane %v7269, 2
  %v7271 = vadd.f32 %v7269, %v7270
  %v7272 = vrot.slane %v7271, 1
  %v7273 = vadd.f32 %v7271, %v7272
  %v7274 = vmul.f32 %v7273, 0.07692308
  %v7275 = vsub.f32 %v7263, %v7274
  %v7276 = vsub.f32 %v7264, %v7274
  %v7277 = vmul.f32 %v7275, %v27
  %v7278 = vmul.f32 %v7276, %v28
  %v7279 = vmul.f32 %v7277, %v7277
  %v7280 = vmul.f32 %v7278, %v7278
  %v7281 = vsel %vm210, %v7279, 0.0
  %v7282 = vsel %vm210, %v7280, 0.0
  %v7283 = vadd.f32 %v7281, %v7282
  %v7284 = vrot.slane %v7283, 4
  %v7285 = vadd.f32 %v7283, %v7284
  %v7286 = vrot.slane %v7285, 2
  %v7287 = vadd.f32 %v7285, %v7286
  %v7288 = vrot.slane %v7287, 1
  %v7289 = vadd.f32 %v7287, %v7288
  %v7290 = vmul.f32 %v7289, 0.07692308
  %v7291 = vadd.f32 %v7290, 1e-05
  %v7292 = vrsqrt.pop %v7291
  %v7293 = vmul.f32 %v7292, %v4935
  %v7294 = vmul.f32 %v7274, %v7293
  %v7295 = vsub.f32 %v4936, %v7294
  %v7296 = vmul.f32 %v7263, %v7293
  %v7297 = vmul.f32 %v7264, %v7293
  %v7298 = vadd.f32 %v7296, %v7295
  %v7299 = vadd.f32 %v7297, %v7295
  %v7300 = vmul.f32 %v7298, %v27
  %v7301 = vmul.f32 %v7299, %v28
  %v7302 = vsel %vm210, %v7300, 0.0
  %v7303 = vsel %vm210, %v7301, 0.0
  %v7304 = vadd.f32 %v7302, %v7303
  %v7305 = vrot.slane %v7304, 4
  %v7306 = vadd.f32 %v7304, %v7305
  %v7307 = vrot.slane %v7306, 2
  %v7308 = vadd.f32 %v7306, %v7307
  %v7309 = vrot.slane %v7308, 1
  %v7310 = vadd.f32 %v7308, %v7309
  %v7311 = vmul.f32 %v7310, 0.07692308
  %s7312 = scalar_lea.vmem %s1, 32
  %v7313 = vld [vmem:[%s7312] sm:$0xff]
  %v7314 = vld [vmem:[%s7312 + $0x8] sm:$0xff]
  %v7315 = vld [vmem:[%s7312 + $0x10] sm:$0xff]
  %v7316 = vld [vmem:[%s7312 + $0x18] sm:$0xff]
  %s7317 = scalar_lea.vmem %s1, 64
  %v7318 = vld [vmem:[%s7317] sm:$0xff]
  %v7319 = vld [vmem:[%s7317 + $0x8] sm:$0xff]
  %v7320 = vld [vmem:[%s7317 + $0x10] sm:$0xff]
  %v7321 = vld [vmem:[%s7317 + $0x18] sm:$0xff]
  %v7323 = vsel %vm210, %v7311, 0
  %7325 = vmatprep.subr.mxu0 0.0
  %7326 = vmatpush1.msra.mxu0 %v7318
  %7327 = vmatprep.subr.mxu0 0.0
  %7328 = vmatpush1.msra.mxu0 %v7319
  %7329 = vmatprep.subr.mxu0 0.0
  %7330 = vmatpush1.msra.mxu0 %v7320
  %7331 = vmatprep.subr.mxu0 0.0
  %7332 = vmatpush1.msra.mxu0 %v7321
  %7333 = vmatprep.subr.mxu0 0.0
  %7334 = vmatpush1.msra.mxu0 0.0
  %7335 = vmatprep.subr.mxu0 0.0
  %7336 = vmatpush1.msra.mxu0 0.0
  %7337 = vmatprep.subr.mxu0 0.0
  %7338 = vmatpush1.msra.mxu0 0.0
  %7339 = vmatprep.subr.mxu0 0.0
  %7340 = vmatpush1.msra.mxu0 0.0
  %7341 = vmatprep.subr.mxu0 0.0
  %7342 = vmatpush1.msra.mxu0 0.0
  %7343 = vmatprep.subr.mxu0 0.0
  %7344 = vmatpush1.msra.mxu0 0.0
  %7345 = vmatprep.subr.mxu0 0.0
  %7346 = vmatpush1.msra.mxu0 0.0
  %7347 = vmatprep.subr.mxu0 0.0
  %7348 = vmatpush1.msra.mxu0 0.0
  %7349 = vmatprep.subr.mxu0 0.0
  %7350 = vmatpush1.msra.mxu0 0.0
  %7351 = vmatprep.subr.mxu0 0.0
  %7352 = vmatpush1.msra.mxu0 0.0
  %7353 = vmatprep.subr.mxu0 0.0
  %7354 = vmatpush1.msra.mxu0 0.0
  %7355 = vmatprep.subr.mxu0 0.0
  %7356 = vmatpush1.msra.mxu0 0.0
  %7357 = vmatprep.subr.mxu0 0.0
  %7358 = vmatpush1.msra.mxu0 0.0
  %7359 = vmatprep.subr.mxu0 0.0
  %7360 = vmatpush1.msra.mxu0 0.0
  %7361 = vmatprep.subr.mxu0 0.0
  %7362 = vmatpush1.msra.mxu0 0.0
  %7363 = vmatprep.subr.mxu0 0.0
  %7364 = vmatpush1.msra.mxu0 0.0
  %7365 = vmatprep.subr.mxu0 0.0
  %7366 = vmatpush1.msra.mxu0 0.0
  %7367 = vmatprep.subr.mxu0 0.0
  %7368 = vmatpush1.msra.mxu0 0.0
  %7369 = vmatprep.subr.mxu0 0.0
  %7370 = vmatpush1.msra.mxu0 0.0
  %7371 = vmatprep.subr.mxu0 0.0
  %7372 = vmatpush1.msra.mxu0 0.0
  %7373 = vmatprep.subr.mxu0 0.0
  %7374 = vmatpush1.msra.mxu0 0.0
  %7375 = vmatprep.subr.mxu0 0.0
  %7376 = vmatpush1.msra.mxu0 0.0
  %7377 = vmatprep.subr.mxu0 0.0
  %7378 = vmatpush1.msra.mxu0 0.0
  %7379 = vmatprep.subr.mxu0 0.0
  %7380 = vmatpush1.msra.mxu0 0.0
  %7381 = vmatprep.subr.mxu0 0.0
  %7382 = vmatpush1.msra.mxu0 0.0
  %7383 = vmatprep.subr.mxu0 0.0
  %7384 = vmatpush1.msra.mxu0 0.0
  %7385 = vmatprep.subr.mxu0 0.0
  %7386 = vmatpush1.msra.mxu0 0.0
  %7387 = vmatprep.subr.mxu0 0.0
  %7388 = vmatpush1.msra.mxu0 0.0
  %7389 = vmatprep.mubr.f32.mxu0 0.0
  %7390 = vmatmul.mubr.f32.gmra.mrb[0].mxu0 %v7323
  %v7391 = vpop.f32.mrb[0].mxu0
  %v7392 = vadd.f32 0.0, %v7391
  %v7393 = vpop.f32.mrb[0].mxu0
  %7394 = vdwg.mxu0
  %v7395 = vlaneseq
  %v7396 = vshrl.u32 %v7395, 7
  %v7397 = vsub.s32 0, %v7396
  %v7398 = vrot.slane %v7392, %v7397
  %v7400 = vsel %vm210, %v7300, 0
  %v7403 = vsel %vm210, %v7301, 0
  %7405 = vmatprep.subr.mxu0 0.0
  %7406 = vmatpush1.msra.mxu0 %v7313
  %7407 = vmatprep.subr.mxu0 0.0
  %7408 = vmatpush1.msra.mxu0 %v7314
  %7409 = vmatprep.subr.mxu0 0.0
  %7410 = vmatpush1.msra.mxu0 %v7315
  %7411 = vmatprep.subr.mxu0 0.0
  %7412 = vmatpush1.msra.mxu0 %v7316
  %7413 = vmatprep.subr.mxu0 0.0
  %7414 = vmatpush1.msra.mxu0 0.0
  %7415 = vmatprep.subr.mxu0 0.0
  %7416 = vmatpush1.msra.mxu0 0.0
  %7417 = vmatprep.subr.mxu0 0.0
  %7418 = vmatpush1.msra.mxu0 0.0
  %7419 = vmatprep.subr.mxu0 0.0
  %7420 = vmatpush1.msra.mxu0 0.0
  %7421 = vmatprep.subr.mxu0 0.0
  %7422 = vmatpush1.msra.mxu0 0.0
  %7423 = vmatprep.subr.mxu0 0.0
  %7424 = vmatpush1.msra.mxu0 0.0
  %7425 = vmatprep.subr.mxu0 0.0
  %7426 = vmatpush1.msra.mxu0 0.0
  %7427 = vmatprep.subr.mxu0 0.0
  %7428 = vmatpush1.msra.mxu0 0.0
  %7429 = vmatprep.subr.mxu0 0.0
  %7430 = vmatpush1.msra.mxu0 0.0
  %7431 = vmatprep.subr.mxu0 0.0
  %7432 = vmatpush1.msra.mxu0 0.0
  %7433 = vmatprep.subr.mxu0 0.0
  %7434 = vmatpush1.msra.mxu0 0.0
  %7435 = vmatprep.subr.mxu0 0.0
  %7436 = vmatpush1.msra.mxu0 0.0
  %7437 = vmatprep.subr.mxu0 0.0
  %7438 = vmatpush1.msra.mxu0 0.0
  %7439 = vmatprep.subr.mxu0 0.0
  %7440 = vmatpush1.msra.mxu0 0.0
  %7441 = vmatprep.subr.mxu0 0.0
  %7442 = vmatpush1.msra.mxu0 0.0
  %7443 = vmatprep.subr.mxu0 0.0
  %7444 = vmatpush1.msra.mxu0 0.0
  %7445 = vmatprep.subr.mxu0 0.0
  %7446 = vmatpush1.msra.mxu0 0.0
  %7447 = vmatprep.subr.mxu0 0.0
  %7448 = vmatpush1.msra.mxu0 0.0
  %7449 = vmatprep.subr.mxu0 0.0
  %7450 = vmatpush1.msra.mxu0 0.0
  %7451 = vmatprep.subr.mxu0 0.0
  %7452 = vmatpush1.msra.mxu0 0.0
  %7453 = vmatprep.subr.mxu0 0.0
  %7454 = vmatpush1.msra.mxu0 0.0
  %7455 = vmatprep.subr.mxu0 0.0
  %7456 = vmatpush1.msra.mxu0 0.0
  %7457 = vmatprep.subr.mxu0 0.0
  %7458 = vmatpush1.msra.mxu0 0.0
  %7459 = vmatprep.subr.mxu0 0.0
  %7460 = vmatpush1.msra.mxu0 0.0
  %7461 = vmatprep.subr.mxu0 0.0
  %7462 = vmatpush1.msra.mxu0 0.0
  %7463 = vmatprep.subr.mxu0 0.0
  %7464 = vmatpush1.msra.mxu0 0.0
  %7465 = vmatprep.subr.mxu0 0.0
  %7466 = vmatpush1.msra.mxu0 0.0
  %7467 = vmatprep.subr.mxu0 0.0
  %7468 = vmatpush1.msra.mxu0 0.0
  %7469 = vmatprep.mubr.f32.mxu0 0.0
  %7470 = vmatmul.mubr.f32.gmra.mrb[0].mxu0 %v7400
  %v7471 = vpop.f32.mrb[0].mxu0
  %v7472 = vadd.f32 %v7398, %v7471
  %v7473 = vpop.f32.mrb[0].mxu0
  %7474 = vmatprep.mubr.f32.mxu0 0.0
  %7475 = vmatmul.mubr.f32.gmra.mrb[0].mxu0 %v7403
  %v7476 = vpop.f32.mrb[0].mxu0
  %v7477 = vadd.f32 %v7398, %v7476
  %v7478 = vpop.f32.mrb[0].mxu0
  %7479 = vdwg.mxu0
  %7480 = vst [vmem:[%s5] sm:$0xff] %v7472
  %7481 = vst [vmem:[%s5 + $0x8] sm:$0xff] %v7477
  // Predicated region
  $region22: #{encoder_forward.1} parent=0 // pred_check
    _
  $region23: #{encoder_forward.1} parent=0 // pred_check_branch
    %7483 = sbr.rel (0) target = $region25
  $region24: #{encoder_forward.1} parent=0 // pred_region
    _
  $region25: #{encoder_forward.1} parent=0 // pred_fallthru
    _
  // Predicated region
  $region26: #{encoder_forward.1} parent=0 // pred_check
    _
  $region27: #{encoder_forward.1} parent=0 // pred_check_branch
    %7485 = sbr.rel (0) target = $region29
  $region28: #{encoder_forward.1} parent=0 // pred_region
    _
  $region29: #{encoder_forward.1} parent=0 // pred_fallthru
    _

</llo_original>
